<compile_context>
chip_gen: v5e
topology: v5e:2x2
jax: 0.10.0
libtpu: 0.0.40
codegen_flags: <defaults>
</compile_context>

<pallas_src>
import math
from functools import partial

import numpy as np
import jax
import jax.numpy as jnp
from jax import lax
from jax.experimental import pallas as pl
from jax.experimental.pallas import tpu as pltpu


# --------------------------------------------------------------------------------------
# kernel
# --------------------------------------------------------------------------------------
def _accum_w(coord, size_f, idx):
    """Accumulated 1-D bilinear weight for one sample (aligned RoIAlign boundary handling)."""
    outside = (coord < -1.0) | (coord > size_f)          # sample contributes 0
    c = jnp.maximum(coord, 0.0)
    fl = jnp.floor(c)
    low = jnp.minimum(fl, size_f - 1.0)
    frac = jnp.where(fl >= size_f - 1.0, 0.0, c - low)
    high = jnp.minimum(low + 1.0, size_f - 1.0)
    w = jnp.where(idx == low, 1.0 - frac, 0.0) + jnp.where(idx == high, frac, 0.0)
    return jnp.where(outside, 0.0, w)


def _roi_align_level_kernel(block_img_ref, prm_ref, feat_ref, out_ref, t_ref,
                            *, B, P, S, C, H, W, compute_dtype):
    """One grid step pools B boxes, all from one image of one FPN level.

    prm_ref : (B, 8)  f32     per-box (y0, x0, bin_h, bin_w, 0, 0, 0, 0)
    feat_ref: (1, W, C*H)     image feature slab, lanes = (c, h), dtype = compute_dtype
    out_ref : (B*P*P, C)      rows ordered (px, b, py) (store-dense; undone on the host)
    t_ref   : (P*B, C, H)     separable intermediate, rows ordered (px, b)
    """
    del block_img_ref                          # consumed only by the feature index_map
    f32 = jnp.float32
    inv_s = 1.0 / float(S)
    Hf, Wf = float(H), float(W)

    prm = prm_ref[...].astype(f32)             # (B, 8)
    y0 = prm[:, 0:1]                           # (B, 1)
    x0 = prm[:, 1:2]
    bh = prm[:, 2:3]
    bw = prm[:, 3:4]

    # ---- x interpolation weights, rows ordered (px, b): sx[px, b, w] ----
    px_idx = lax.broadcasted_iota(jnp.int32, (P, B, W), 0).astype(f32)
    w_idx = lax.broadcasted_iota(jnp.int32, (P, B, W), 2).astype(f32)
    x0b, bwb = x0[None], bw[None]              # (1, B, 1)
    sx = jnp.zeros((P, B, W), f32)
    for s in range(S):                         # S static -> unrolled
        cx = x0b + (px_idx + (s + 0.5) * inv_s) * bwb
        sx = sx + _accum_w(cx, Wf, w_idx)
    sx = sx * inv_s

    # ---- y interpolation weights, once per box (deduplicated): sy[b, py, h] ----
    py_idx = lax.broadcasted_iota(jnp.int32, (B, P, H), 1).astype(f32)
    h_idx = lax.broadcasted_iota(jnp.int32, (B, P, H), 2).astype(f32)
    y0b, bhb = y0[:, :, None], bh[:, :, None]  # (B, 1, 1)
    sy = jnp.zeros((B, P, H), f32)
    for s in range(S):
        cy = y0b + (py_idx + (s + 0.5) * inv_s) * bhb
        sy = sy + _accum_w(cy, Hf, h_idx)
    sy = sy * inv_s

    # ---- stage 1 (MXU): one fused matmul contracting W against the whole (W, C*H) slab ----
    sx_mm = sx.reshape(P * B, W).astype(compute_dtype)
    t = jnp.dot(sx_mm, feat_ref[0], preferred_element_type=jnp.float32)    # (P*B, C*H)
    t_ref[...] = t.reshape(P * B, C, H).astype(t_ref.dtype)                # single store

    # ---- stage 2 (MXU): per output column px, a B-batched NT matmul contracting H ----
    sy_mm = sy.astype(compute_dtype)
    for px in range(P):                        # static 7-iteration loop
        t_px = t_ref[pl.ds(px * B, B)].astype(compute_dtype)               # (B, C, H)
        o_px = lax.dot_general(sy_mm, t_px,
                               dimension_numbers=(((2,), (2,)), ((0,), (0,))),
                               preferred_element_type=jnp.float32)         # (B, Py, C)
        out_ref[pl.ds(px * B * P, B * P), :] = (
            o_px.reshape(B * P, C).astype(out_ref.dtype))


# --------------------------------------------------------------------------------------
# host-side preparation
# --------------------------------------------------------------------------------------
def _assign_levels(boxes_np, scales, canonical_box_size, canonical_level):
    min_level = int(round(-math.log2(scales[0])))
    max_level = int(round(-math.log2(scales[-1])))
    area = np.maximum((boxes_np[:, 2] - boxes_np[:, 0]) * (boxes_np[:, 3] - boxes_np[:, 1]), 0.0)
    sizes = np.sqrt(area)
    lvl = np.floor(canonical_level + np.log(sizes / canonical_box_size + 1e-8) / math.log(2))
    lvl = np.clip(lvl, min_level, max_level).astype(np.int64) - min_level
    return lvl


def _flatten_boxes(box_lists):
    counts = [int(b.shape[0]) for b in box_lists]
    if sum(counts) == 0:
        return np.zeros((0, 4), np.float32), np.zeros((0,), np.int64), counts
    boxes = np.concatenate([np.asarray(b, np.float32).reshape(-1, 4) for b in box_lists], 0)
    batch = np.concatenate([np.full((c,), i, np.int64) for i, c in enumerate(counts)])
    return boxes, batch, counts


def roi_pooler_forward(feature_maps, box_lists, *, output_size, scales, sampling_ratio,
                       canonical_box_size=224, canonical_level=4, block_boxes=16,
                       compute_dtype=None):
    """ROIPooler.forward with pooler_type='ROIAlignV2' (aligned=True).

    Pass compute_dtype=jnp.bfloat16 for production FPN sizes (halves slab VMEM/DMA, native
    bf16 MXU rate on v6e/v7x); bilinear weight math stays in f32 either way.
    """
    assert sampling_ratio > 0  # TODO(synk): adaptive sampling (sampling_ratio<=0) not implemented
    P = output_size if isinstance(output_size, int) else int(output_size[0])
    S = int(sampling_ratio)
    L = len(scales)
    N, C = int(feature_maps[0].shape[0]), int(feature_maps[0].shape[1])
    out_dtype = feature_maps[0].dtype
    cdt = jnp.dtype(compute_dtype) if compute_dtype is not None else jnp.dtype(out_dtype)

    boxes_np, batch_np, _ = _flatten_boxes(box_lists)
    M = int(boxes_np.shape[0])
    if M == 0:
        return jnp.zeros((0, C, P, P), dtype=out_dtype)
    lvl_np = _assign_levels(boxes_np, scales, canonical_box_size, canonical_level)

    # B boxes per grid step; B multiple of 8 keeps every sublane dim (B*P, B*P*P) 8-aligned.
    B = max(8, 8 * ((int(block_boxes) + 7) // 8))

    out = jnp.zeros((M, C, P, P), dtype=out_dtype)

    for l in range(L):
        inds = np.nonzero(lvl_np == l)[0]
        if inds.size == 0:
            continue
        f = feature_maps[l]
        H, W = int(f.shape[2]), int(f.shape[3])
        scale = float(scales[l])

        # group this level's boxes by image; pad each image's boxes to a multiple of B so a
        # block never straddles two images (-> the image slab stays VMEM-resident across blocks)
        imgs = batch_np[inds]
        order = np.argsort(imgs, kind="stable")
        inds_sorted = inds[order]
        imgs_sorted = imgs[order]
        cnt = np.bincount(imgs_sorted, minlength=N)
        padded = ((cnt + B - 1) // B) * B
        starts = np.concatenate([[0], np.cumsum(padded)[:-1]]).astype(np.int64)
        cum = np.concatenate([[0], np.cumsum(cnt)[:-1]]).astype(np.int64)
        rank = np.arange(inds_sorted.size, dtype=np.int64) - cum[imgs_sorted]
        slots = (starts[imgs_sorted] + rank).astype(np.int64)
        M_pad = int(padded.sum())
        NB = M_pad // B

        block_img = np.zeros((NB,), np.int32)
        for n in range(N):
            b0, nb = int(starts[n]) // B, int(padded[n]) // B
            block_img[b0:b0 + nb] = n

        # per-slot parameters (padding slots keep harmless zeros; their output is discarded)
        bx = boxes_np[inds_sorted]
        prm = np.zeros((M_pad, 8), np.float32)
        prm[slots, 0] = bx[:, 1] * scale - 0.5                     # y0
        prm[slots, 1] = bx[:, 0] * scale - 0.5                     # x0
        prm[slots, 2] = (bx[:, 3] - bx[:, 1]) * scale / P          # bin_h
        prm[slots, 3] = (bx[:, 2] - bx[:, 0]) * scale / P          # bin_w

        # feature slab at native size, lanes = (c, h) so stage 1 is a single plain matmul
        feat = jnp.transpose(f, (0, 3, 1, 2)).reshape(N, W, C * H).astype(cdt)

        # VMEM budget: double-buffered slab + t scratch + out blocks + headroom (not pinned at
        # physical capacity -- leaves room for Mosaic internal scratch on v7x)
        e = jnp.dtype(cdt).itemsize
        need = (2 * W * C * H * e + P * B * C * H * e
                + 2 * B * P * P * C * jnp.dtype(out_dtype).itemsize + (2 << 20))
        vmem_limit = int(min(96 * 2**20, max(32 * 2**20, need + (8 << 20))))

        kernel = partial(_roi_align_level_kernel, B=B, P=P, S=S, C=C, H=H, W=W,
                         compute_dtype=cdt)
        grid_spec = pltpu.PrefetchScalarGridSpec(
            num_scalar_prefetch=1,                        # per-block image index
            grid=(NB,),
            in_specs=[
                pl.BlockSpec((B, 8), lambda i, bi: (i, 0)),
                # TODO(synk): on v7x add pipeline_mode=pl.Buffered(1) here (slab stays resident)
                pl.BlockSpec((1, W, C * H), lambda i, bi: (bi[i], 0, 0)),
            ],
            out_specs=pl.BlockSpec((B * P * P, C), lambda i, bi: (i, 0)),
            scratch_shapes=[pltpu.VMEM((P * B, C, H), cdt)],
        )
        out_pad = pl.pallas_call(
            kernel,
            out_shape=jax.ShapeDtypeStruct((M_pad * P * P, C), out_dtype),
            grid_spec=grid_spec,
            compiler_params=pltpu.CompilerParams(
                dimension_semantics=("parallel",),        # disjoint output blocks -> megacore-able
                vmem_limit_bytes=vmem_limit),
        )(jnp.asarray(block_img), jnp.asarray(prm), feat)

        # undo the store-dense packing: rows were ordered (block, px, b, py)
        o5 = out_pad.reshape(NB, P, B, P, C)              # (blk, px, b, py, c)
        o5 = jnp.transpose(o5, (0, 2, 4, 3, 1))           # (blk, b, c, py, px)
        o_slots = o5.reshape(M_pad, C, P, P)
        out = out.at[inds_sorted].set(o_slots[slots].astype(out_dtype))

    return out


# --------------------------------------------------------------------------------------
# pure-JAX gather-based reference (for verification)
# --------------------------------------------------------------------------------------
def _roi_align_ref_box(F, prm, P, S):
    y0, x0, bh, bw, Hf, Wf = prm[0], prm[1], prm[2], prm[3], prm[4], prm[5]
    sub = (jnp.arange(S, dtype=jnp.float32) + 0.5) / S
    grid = jnp.arange(P, dtype=jnp.float32)[:, None] + sub[None, :]
    ys = y0 + grid * bh
    xs = x0 + grid * bw

    def prep(coord, size_f):
        outside = (coord < -1.0) | (coord > size_f)
        c = jnp.maximum(coord, 0.0)
        fl = jnp.floor(c)
        low = jnp.minimum(fl, size_f - 1.0)
        frac = jnp.where(fl >= size_f - 1.0, 0.0, c - low)
        high = jnp.minimum(low + 1.0, size_f - 1.0)
        return low.astype(jnp.int32), high.astype(jnp.int32), frac, outside

    yl, yh, ly, oy = prep(ys, Hf)
    xl, xh, lx, ox = prep(xs, Wf)
    hy, hx = 1.0 - ly, 1.0 - lx

    def g(yi, xi):
        return F[:, yi[:, :, None, None], xi[None, None, :, :]]   # (C,P,S,P,S)

    val = (hy[:, :, None, None] * hx[None, None, :, :] * g(yl, xl)
           + hy[:, :, None, None] * lx[None, None, :, :] * g(yl, xh)
           + ly[:, :, None, None] * hx[None, None, :, :] * g(yh, xl)
           + ly[:, :, None, None] * lx[None, None, :, :] * g(yh, xh))
    valid = (~oy)[:, :, None, None] & (~ox)[None, None, :, :]
    val = jnp.where(valid, val, 0.0)
    return val.sum(axis=(2, 4)) / float(S * S)


def roi_pooler_reference(feature_maps, box_lists, *, output_size, scales, sampling_ratio,
                         canonical_box_size=224, canonical_level=4):
    P = output_size if isinstance(output_size, int) else int(output_size[0])
    S = int(sampling_ratio)
    C = int(feature_maps[0].shape[1])
    boxes_np, batch_np, _ = _flatten_boxes(box_lists)
    M = int(boxes_np.shape[0])
    if M == 0:
        return jnp.zeros((0, C, P, P), feature_maps[0].dtype)
    lvl_np = _assign_levels(boxes_np, scales, canonical_box_size, canonical_level)
    outs = []
    for i in range(M):
        l = int(lvl_np[i])
        n = int(batch_np[i])
        F = feature_maps[l][n].astype(jnp.float32)                 # (C, H, W)
        H, W = int(F.shape[1]), int(F.shape[2])
        scale = float(scales[l])
        prm = jnp.asarray([boxes_np[i, 1] * scale - 0.5,
                           boxes_np[i, 0] * scale - 0.5,
                           (boxes_np[i, 3] - boxes_np[i, 1]) * scale / P,
                           (boxes_np[i, 2] - boxes_np[i, 0]) * scale / P,
                           float(H), float(W)], dtype=jnp.float32)
        outs.append(_roi_align_ref_box(F, prm, P, S))
    return jnp.stack(outs).astype(feature_maps[0].dtype)


if __name__ == "__main__":
    key = jax.random.PRNGKey(0)
    N, C = 2, 4
    scales = (1.0 / 4.0, 1.0 / 8.0)       # FPN levels: 16x16 and 8x8 for a 64x64 image
    output_size = 7
    sampling_ratio = 2
    canonical_box_size = 16
    canonical_level = 3

    kf1, kf2, kb = jax.random.split(key, 3)
    feature_maps = [
        jax.random.normal(kf1, (N, C, 16, 16), jnp.float32),
        jax.random.normal(kf2, (N, C, 8, 8), jnp.float32),
    ]

    box_lists = []
    for i in range(N):
        ki = jax.random.fold_in(kb, i)
        xy = jax.random.uniform(ki, (3, 2), minval=0.0, maxval=40.0)
        wh = jax.random.uniform(jax.random.fold_in(ki, 1), (3, 2), minval=4.0, maxval=24.0)
        box_lists.append(jnp.concatenate([xy, xy + wh], axis=1))   # (x0, y0, x1, y1)

    out = roi_pooler_forward(feature_maps, box_lists, output_size=output_size, scales=scales,
                             sampling_ratio=sampling_ratio,
                             canonical_box_size=canonical_box_size,
                             canonical_level=canonical_level)
    out = jax.block_until_ready(out)

    ref = roi_pooler_reference(feature_maps, box_lists, output_size=output_size, scales=scales,
                               sampling_ratio=sampling_ratio,
                               canonical_box_size=canonical_box_size,
                               canonical_level=canonical_level)
    ref = jax.block_until_ready(ref)

    assert out.shape == (6, C, output_size, output_size), out.shape
    assert bool(jnp.all(jnp.isfinite(out)))
    max_err = float(jnp.max(jnp.abs(out - ref)))
    assert max_err < 2e-3, f"max abs err {max_err}"
    print("KERNEL_OK")
</pallas_src>

<mosaic_0001>
module attributes {stable_mosaic.version = 11 : i64} {
  func.func @_roi_align_level_kernel(%arg0: i32, %arg1: memref<2xi32, #tpu.memory_space<smem>>, %arg2: memref<16x8xf32, #tpu.memory_space<vmem>>, %arg3: memref<1x16x64xf32, #tpu.memory_space<vmem>>, %arg4: memref<784x4xf32, #tpu.memory_space<vmem>>, %arg5: memref<112x4x16xf32, #tpu.memory_space<vmem>>) attributes {dimension_semantics = [#tpu.dimension_semantics<parallel>], iteration_bounds = array<i64: 2>, scalar_prefetch = 1 : i64, scratch_operands = 1 : i64, tpu.core_type = #tpu.core_type<tc>, window_params = [{transform_indices = @transform_0, window_bounds = array<i64: 16, 8>}, {transform_indices = @transform_1, window_bounds = array<i64: 1, 16, 64>}, {transform_indices = @transform_2, window_bounds = array<i64: 784, 4>}]} {
    %c0 = arith.constant 0 : index
    %c0_0 = arith.constant 0 : index
    %0 = vector.load %arg2[%c0, %c0_0] : memref<16x8xf32, #tpu.memory_space<vmem>>, vector<16x8xf32>
    %1 = vector.extract_strided_slice %0 {offsets = [0, 0], sizes = [16, 1], strides = [1, 1]} : vector<16x8xf32> to vector<16x1xf32>
    %2 = vector.extract_strided_slice %0 {offsets = [0, 1], sizes = [16, 1], strides = [1, 1]} : vector<16x8xf32> to vector<16x1xf32>
    %3 = vector.extract_strided_slice %0 {offsets = [0, 2], sizes = [16, 1], strides = [1, 1]} : vector<16x8xf32> to vector<16x1xf32>
    %4 = vector.extract_strided_slice %0 {offsets = [0, 3], sizes = [16, 1], strides = [1, 1]} : vector<16x8xf32> to vector<16x1xf32>
    %5 = tpu.iota {dimensions = array<i32: 0>} : vector<7x16x16xi32>
    %6 = arith.sitofp %5 : vector<7x16x16xi32> to vector<7x16x16xf32>
    %7 = tpu.iota {dimensions = array<i32: 2>} : vector<7x16x16xi32>
    %8 = arith.sitofp %7 : vector<7x16x16xi32> to vector<7x16x16xf32>
    %9 = vector.shape_cast %2 : vector<16x1xf32> to vector<1x16x1xf32>
    %10 = vector.shape_cast %4 : vector<16x1xf32> to vector<1x16x1xf32>
    %cst = arith.constant 0.000000e+00 : f32
    %11 = vector.broadcast %cst : f32 to vector<7x16x16xf32>
    %cst_1 = arith.constant 2.500000e-01 : f32
    %12 = vector.broadcast %cst_1 : f32 to vector<7x16x16xf32>
    %13 = arith.addf %6, %12 : vector<7x16x16xf32>
    %14 = vector.broadcast %10 : vector<1x16x1xf32> to vector<7x16x16xf32>
    %15 = arith.mulf %13, %14 : vector<7x16x16xf32>
    %16 = vector.broadcast %9 : vector<1x16x1xf32> to vector<7x16x16xf32>
    %17 = arith.addf %16, %15 : vector<7x16x16xf32>
    %cst_2 = arith.constant -1.000000e+00 : f32
    %18 = vector.broadcast %cst_2 : f32 to vector<7x16x16xf32>
    %19 = arith.cmpf olt, %17, %18 : vector<7x16x16xf32>
    %cst_3 = arith.constant 1.600000e+01 : f32
    %20 = vector.broadcast %cst_3 : f32 to vector<7x16x16xf32>
    %21 = arith.cmpf ogt, %17, %20 : vector<7x16x16xf32>
    %22 = arith.ori %19, %21 : vector<7x16x16xi1>
    %cst_4 = arith.constant 0.000000e+00 : f32
    %23 = vector.broadcast %cst_4 : f32 to vector<7x16x16xf32>
    %24 = arith.maximumf %17, %23 : vector<7x16x16xf32>
    %25 = math.floor %24 : vector<7x16x16xf32>
    %cst_5 = arith.constant 1.500000e+01 : f32
    %26 = vector.broadcast %cst_5 : f32 to vector<7x16x16xf32>
    %27 = arith.minimumf %25, %26 : vector<7x16x16xf32>
    %cst_6 = arith.constant 1.500000e+01 : f32
    %28 = vector.broadcast %cst_6 : f32 to vector<7x16x16xf32>
    %29 = arith.cmpf oge, %25, %28 : vector<7x16x16xf32>
    %30 = arith.subf %24, %27 : vector<7x16x16xf32>
    %cst_7 = arith.constant 0.000000e+00 : f32
    %31 = vector.broadcast %cst_7 : f32 to vector<7x16x16xf32>
    %32 = arith.select %29, %31, %30 : vector<7x16x16xi1>, vector<7x16x16xf32>
    %cst_8 = arith.constant 1.000000e+00 : f32
    %33 = vector.broadcast %cst_8 : f32 to vector<7x16x16xf32>
    %34 = arith.addf %27, %33 : vector<7x16x16xf32>
    %cst_9 = arith.constant 1.500000e+01 : f32
    %35 = vector.broadcast %cst_9 : f32 to vector<7x16x16xf32>
    %36 = arith.minimumf %34, %35 : vector<7x16x16xf32>
    %37 = arith.cmpf oeq, %8, %27 : vector<7x16x16xf32>
    %cst_10 = arith.constant 1.000000e+00 : f32
    %38 = vector.broadcast %cst_10 : f32 to vector<7x16x16xf32>
    %39 = arith.subf %38, %32 : vector<7x16x16xf32>
    %cst_11 = arith.constant 0.000000e+00 : f32
    %40 = vector.broadcast %cst_11 : f32 to vector<7x16x16xf32>
    %41 = arith.select %37, %39, %40 : vector<7x16x16xi1>, vector<7x16x16xf32>
    %42 = arith.cmpf oeq, %8, %36 : vector<7x16x16xf32>
    %cst_12 = arith.constant 0.000000e+00 : f32
    %43 = vector.broadcast %cst_12 : f32 to vector<7x16x16xf32>
    %44 = arith.select %42, %32, %43 : vector<7x16x16xi1>, vector<7x16x16xf32>
    %45 = arith.addf %41, %44 : vector<7x16x16xf32>
    %cst_13 = arith.constant 0.000000e+00 : f32
    %46 = vector.broadcast %cst_13 : f32 to vector<7x16x16xf32>
    %47 = arith.select %22, %46, %45 : vector<7x16x16xi1>, vector<7x16x16xf32>
    %48 = arith.addf %11, %47 : vector<7x16x16xf32>
    %cst_14 = arith.constant 7.500000e-01 : f32
    %49 = vector.broadcast %cst_14 : f32 to vector<7x16x16xf32>
    %50 = arith.addf %6, %49 : vector<7x16x16xf32>
    %51 = vector.broadcast %10 : vector<1x16x1xf32> to vector<7x16x16xf32>
    %52 = arith.mulf %50, %51 : vector<7x16x16xf32>
    %53 = vector.broadcast %9 : vector<1x16x1xf32> to vector<7x16x16xf32>
    %54 = arith.addf %53, %52 : vector<7x16x16xf32>
    %cst_15 = arith.constant -1.000000e+00 : f32
    %55 = vector.broadcast %cst_15 : f32 to vector<7x16x16xf32>
    %56 = arith.cmpf olt, %54, %55 : vector<7x16x16xf32>
    %cst_16 = arith.constant 1.600000e+01 : f32
    %57 = vector.broadcast %cst_16 : f32 to vector<7x16x16xf32>
    %58 = arith.cmpf ogt, %54, %57 : vector<7x16x16xf32>
    %59 = arith.ori %56, %58 : vector<7x16x16xi1>
    %cst_17 = arith.constant 0.000000e+00 : f32
    %60 = vector.broadcast %cst_17 : f32 to vector<7x16x16xf32>
    %61 = arith.maximumf %54, %60 : vector<7x16x16xf32>
    %62 = math.floor %61 : vector<7x16x16xf32>
    %cst_18 = arith.constant 1.500000e+01 : f32
    %63 = vector.broadcast %cst_18 : f32 to vector<7x16x16xf32>
    %64 = arith.minimumf %62, %63 : vector<7x16x16xf32>
    %cst_19 = arith.constant 1.500000e+01 : f32
    %65 = vector.broadcast %cst_19 : f32 to vector<7x16x16xf32>
    %66 = arith.cmpf oge, %62, %65 : vector<7x16x16xf32>
    %67 = arith.subf %61, %64 : vector<7x16x16xf32>
    %cst_20 = arith.constant 0.000000e+00 : f32
    %68 = vector.broadcast %cst_20 : f32 to vector<7x16x16xf32>
    %69 = arith.select %66, %68, %67 : vector<7x16x16xi1>, vector<7x16x16xf32>
    %cst_21 = arith.constant 1.000000e+00 : f32
    %70 = vector.broadcast %cst_21 : f32 to vector<7x16x16xf32>
    %71 = arith.addf %64, %70 : vector<7x16x16xf32>
    %cst_22 = arith.constant 1.500000e+01 : f32
    %72 = vector.broadcast %cst_22 : f32 to vector<7x16x16xf32>
    %73 = arith.minimumf %71, %72 : vector<7x16x16xf32>
    %74 = arith.cmpf oeq, %8, %64 : vector<7x16x16xf32>
    %cst_23 = arith.constant 1.000000e+00 : f32
    %75 = vector.broadcast %cst_23 : f32 to vector<7x16x16xf32>
    %76 = arith.subf %75, %69 : vector<7x16x16xf32>
    %cst_24 = arith.constant 0.000000e+00 : f32
    %77 = vector.broadcast %cst_24 : f32 to vector<7x16x16xf32>
    %78 = arith.select %74, %76, %77 : vector<7x16x16xi1>, vector<7x16x16xf32>
    %79 = arith.cmpf oeq, %8, %73 : vector<7x16x16xf32>
    %cst_25 = arith.constant 0.000000e+00 : f32
    %80 = vector.broadcast %cst_25 : f32 to vector<7x16x16xf32>
    %81 = arith.select %79, %69, %80 : vector<7x16x16xi1>, vector<7x16x16xf32>
    %82 = arith.addf %78, %81 : vector<7x16x16xf32>
    %cst_26 = arith.constant 0.000000e+00 : f32
    %83 = vector.broadcast %cst_26 : f32 to vector<7x16x16xf32>
    %84 = arith.select %59, %83, %82 : vector<7x16x16xi1>, vector<7x16x16xf32>
    %85 = arith.addf %48, %84 : vector<7x16x16xf32>
    %cst_27 = arith.constant 5.000000e-01 : f32
    %86 = vector.broadcast %cst_27 : f32 to vector<7x16x16xf32>
    %87 = arith.mulf %85, %86 : vector<7x16x16xf32>
    %88 = tpu.iota {dimensions = array<i32: 1>} : vector<16x7x16xi32>
    %89 = arith.sitofp %88 : vector<16x7x16xi32> to vector<16x7x16xf32>
    %90 = tpu.iota {dimensions = array<i32: 2>} : vector<16x7x16xi32>
    %91 = arith.sitofp %90 : vector<16x7x16xi32> to vector<16x7x16xf32>
    %92 = vector.shape_cast %1 : vector<16x1xf32> to vector<16x1x1xf32>
    %93 = vector.shape_cast %3 : vector<16x1xf32> to vector<16x1x1xf32>
    %cst_28 = arith.constant 0.000000e+00 : f32
    %94 = vector.broadcast %cst_28 : f32 to vector<16x7x16xf32>
    %cst_29 = arith.constant 2.500000e-01 : f32
    %95 = vector.broadcast %cst_29 : f32 to vector<16x7x16xf32>
    %96 = arith.addf %89, %95 : vector<16x7x16xf32>
    %97 = vector.broadcast %93 : vector<16x1x1xf32> to vector<16x7x16xf32>
    %98 = arith.mulf %96, %97 : vector<16x7x16xf32>
    %99 = vector.broadcast %92 : vector<16x1x1xf32> to vector<16x7x16xf32>
    %100 = arith.addf %99, %98 : vector<16x7x16xf32>
    %cst_30 = arith.constant -1.000000e+00 : f32
    %101 = vector.broadcast %cst_30 : f32 to vector<16x7x16xf32>
    %102 = arith.cmpf olt, %100, %101 : vector<16x7x16xf32>
    %cst_31 = arith.constant 1.600000e+01 : f32
    %103 = vector.broadcast %cst_31 : f32 to vector<16x7x16xf32>
    %104 = arith.cmpf ogt, %100, %103 : vector<16x7x16xf32>
    %105 = arith.ori %102, %104 : vector<16x7x16xi1>
    %cst_32 = arith.constant 0.000000e+00 : f32
    %106 = vector.broadcast %cst_32 : f32 to vector<16x7x16xf32>
    %107 = arith.maximumf %100, %106 : vector<16x7x16xf32>
    %108 = math.floor %107 : vector<16x7x16xf32>
    %cst_33 = arith.constant 1.500000e+01 : f32
    %109 = vector.broadcast %cst_33 : f32 to vector<16x7x16xf32>
    %110 = arith.minimumf %108, %109 : vector<16x7x16xf32>
    %cst_34 = arith.constant 1.500000e+01 : f32
    %111 = vector.broadcast %cst_34 : f32 to vector<16x7x16xf32>
    %112 = arith.cmpf oge, %108, %111 : vector<16x7x16xf32>
    %113 = arith.subf %107, %110 : vector<16x7x16xf32>
    %cst_35 = arith.constant 0.000000e+00 : f32
    %114 = vector.broadcast %cst_35 : f32 to vector<16x7x16xf32>
    %115 = arith.select %112, %114, %113 : vector<16x7x16xi1>, vector<16x7x16xf32>
    %cst_36 = arith.constant 1.000000e+00 : f32
    %116 = vector.broadcast %cst_36 : f32 to vector<16x7x16xf32>
    %117 = arith.addf %110, %116 : vector<16x7x16xf32>
    %cst_37 = arith.constant 1.500000e+01 : f32
    %118 = vector.broadcast %cst_37 : f32 to vector<16x7x16xf32>
    %119 = arith.minimumf %117, %118 : vector<16x7x16xf32>
    %120 = arith.cmpf oeq, %91, %110 : vector<16x7x16xf32>
    %cst_38 = arith.constant 1.000000e+00 : f32
    %121 = vector.broadcast %cst_38 : f32 to vector<16x7x16xf32>
    %122 = arith.subf %121, %115 : vector<16x7x16xf32>
    %cst_39 = arith.constant 0.000000e+00 : f32
    %123 = vector.broadcast %cst_39 : f32 to vector<16x7x16xf32>
    %124 = arith.select %120, %122, %123 : vector<16x7x16xi1>, vector<16x7x16xf32>
    %125 = arith.cmpf oeq, %91, %119 : vector<16x7x16xf32>
    %cst_40 = arith.constant 0.000000e+00 : f32
    %126 = vector.broadcast %cst_40 : f32 to vector<16x7x16xf32>
    %127 = arith.select %125, %115, %126 : vector<16x7x16xi1>, vector<16x7x16xf32>
    %128 = arith.addf %124, %127 : vector<16x7x16xf32>
    %cst_41 = arith.constant 0.000000e+00 : f32
    %129 = vector.broadcast %cst_41 : f32 to vector<16x7x16xf32>
    %130 = arith.select %105, %129, %128 : vector<16x7x16xi1>, vector<16x7x16xf32>
    %131 = arith.addf %94, %130 : vector<16x7x16xf32>
    %cst_42 = arith.constant 7.500000e-01 : f32
    %132 = vector.broadcast %cst_42 : f32 to vector<16x7x16xf32>
    %133 = arith.addf %89, %132 : vector<16x7x16xf32>
    %134 = vector.broadcast %93 : vector<16x1x1xf32> to vector<16x7x16xf32>
    %135 = arith.mulf %133, %134 : vector<16x7x16xf32>
    %136 = vector.broadcast %92 : vector<16x1x1xf32> to vector<16x7x16xf32>
    %137 = arith.addf %136, %135 : vector<16x7x16xf32>
    %cst_43 = arith.constant -1.000000e+00 : f32
    %138 = vector.broadcast %cst_43 : f32 to vector<16x7x16xf32>
    %139 = arith.cmpf olt, %137, %138 : vector<16x7x16xf32>
    %cst_44 = arith.constant 1.600000e+01 : f32
    %140 = vector.broadcast %cst_44 : f32 to vector<16x7x16xf32>
    %141 = arith.cmpf ogt, %137, %140 : vector<16x7x16xf32>
    %142 = arith.ori %139, %141 : vector<16x7x16xi1>
    %cst_45 = arith.constant 0.000000e+00 : f32
    %143 = vector.broadcast %cst_45 : f32 to vector<16x7x16xf32>
    %144 = arith.maximumf %137, %143 : vector<16x7x16xf32>
    %145 = math.floor %144 : vector<16x7x16xf32>
    %cst_46 = arith.constant 1.500000e+01 : f32
    %146 = vector.broadcast %cst_46 : f32 to vector<16x7x16xf32>
    %147 = arith.minimumf %145, %146 : vector<16x7x16xf32>
    %cst_47 = arith.constant 1.500000e+01 : f32
    %148 = vector.broadcast %cst_47 : f32 to vector<16x7x16xf32>
    %149 = arith.cmpf oge, %145, %148 : vector<16x7x16xf32>
    %150 = arith.subf %144, %147 : vector<16x7x16xf32>
    %cst_48 = arith.constant 0.000000e+00 : f32
    %151 = vector.broadcast %cst_48 : f32 to vector<16x7x16xf32>
    %152 = arith.select %149, %151, %150 : vector<16x7x16xi1>, vector<16x7x16xf32>
    %cst_49 = arith.constant 1.000000e+00 : f32
    %153 = vector.broadcast %cst_49 : f32 to vector<16x7x16xf32>
    %154 = arith.addf %147, %153 : vector<16x7x16xf32>
    %cst_50 = arith.constant 1.500000e+01 : f32
    %155 = vector.broadcast %cst_50 : f32 to vector<16x7x16xf32>
    %156 = arith.minimumf %154, %155 : vector<16x7x16xf32>
    %157 = arith.cmpf oeq, %91, %147 : vector<16x7x16xf32>
    %cst_51 = arith.constant 1.000000e+00 : f32
    %158 = vector.broadcast %cst_51 : f32 to vector<16x7x16xf32>
    %159 = arith.subf %158, %152 : vector<16x7x16xf32>
    %cst_52 = arith.constant 0.000000e+00 : f32
    %160 = vector.broadcast %cst_52 : f32 to vector<16x7x16xf32>
    %161 = arith.select %157, %159, %160 : vector<16x7x16xi1>, vector<16x7x16xf32>
    %162 = arith.cmpf oeq, %91, %156 : vector<16x7x16xf32>
    %cst_53 = arith.constant 0.000000e+00 : f32
    %163 = vector.broadcast %cst_53 : f32 to vector<16x7x16xf32>
    %164 = arith.select %162, %152, %163 : vector<16x7x16xi1>, vector<16x7x16xf32>
    %165 = arith.addf %161, %164 : vector<16x7x16xf32>
    %cst_54 = arith.constant 0.000000e+00 : f32
    %166 = vector.broadcast %cst_54 : f32 to vector<16x7x16xf32>
    %167 = arith.select %142, %166, %165 : vector<16x7x16xi1>, vector<16x7x16xf32>
    %168 = arith.addf %131, %167 : vector<16x7x16xf32>
    %cst_55 = arith.constant 5.000000e-01 : f32
    %169 = vector.broadcast %cst_55 : f32 to vector<16x7x16xf32>
    %170 = arith.mulf %168, %169 : vector<16x7x16xf32>
    %171 = vector.shape_cast %87 : vector<7x16x16xf32> to vector<112x16xf32>
    %c0_56 = arith.constant 0 : index
    %c0_57 = arith.constant 0 : index
    %c0_58 = arith.constant 0 : index
    %172 = vector.load %arg3[%c0_56, %c0_57, %c0_58] : memref<1x16x64xf32, #tpu.memory_space<vmem>>, vector<1x16x64xf32>
    %173 = vector.shape_cast %172 : vector<1x16x64xf32> to vector<16x64xf32>
    %cst_59 = arith.constant dense<0.000000e+00> : vector<112x64xf32>
    %174 = tpu.matmul %171, %173, %cst_59 {dimension_numbers = #tpu.dot_dimension_numbers<[1], [0], [0], [1], [0, 0, 1, 1], [], []>} : vector<112x16xf32>, vector<16x64xf32>, vector<112x64xf32> -> vector<112x64xf32>
    %175 = vector.shape_cast %174 : vector<112x64xf32> to vector<112x4x16xf32>
    %c0_60 = arith.constant 0 : index
    %c0_61 = arith.constant 0 : index
    %c0_62 = arith.constant 0 : index
    %176 = vector.load %arg5[%c0_60, %c0_61, %c0_62] : memref<112x4x16xf32, #tpu.memory_space<vmem>>, vector<112x4x16xf32>
    tpu.vector_store %arg5[%c0_60, %c0_61, %c0_62], %175 {strides = array<i32>} : memref<112x4x16xf32, #tpu.memory_space<vmem>>, vector<112x4x16xf32>,
    %c0_63 = arith.constant 0 : index
    %c0_64 = arith.constant 0 : index
    %c0_65 = arith.constant 0 : index
    %177 = vector.load %arg5[%c0_63, %c0_64, %c0_65] : memref<112x4x16xf32, #tpu.memory_space<vmem>>, vector<16x4x16xf32>
    %cst_66 = arith.constant dense<0.000000e+00> : vector<16x7x4xf32>
    %178 = tpu.matmul %170, %177, %cst_66 {dimension_numbers = #tpu.dot_dimension_numbers<[2], [2], [1], [1], [0, 0, 0, 1, 1, 1], [0], [0]>} : vector<16x7x16xf32>, vector<16x4x16xf32>, vector<16x7x4xf32> -> vector<16x7x4xf32>
    %179 = vector.shape_cast %178 : vector<16x7x4xf32> to vector<112x4xf32>
    %c0_67 = arith.constant 0 : index
    %c0_68 = arith.constant 0 : index
    %180 = vector.load %arg4[%c0_67, %c0_68] : memref<784x4xf32, #tpu.memory_space<vmem>>, vector<112x4xf32>
    tpu.vector_store %arg4[%c0_67, %c0_68], %179 {strides = array<i32>} : memref<784x4xf32, #tpu.memory_space<vmem>>, vector<112x4xf32>,
    %c16 = arith.constant 16 : index
    %c0_69 = arith.constant 0 : index
    %c0_70 = arith.constant 0 : index
    %181 = vector.load %arg5[%c16, %c0_69, %c0_70] : memref<112x4x16xf32, #tpu.memory_space<vmem>>, vector<16x4x16xf32>
    %cst_71 = arith.constant dense<0.000000e+00> : vector<16x7x4xf32>
    %182 = tpu.matmul %170, %181, %cst_71 {dimension_numbers = #tpu.dot_dimension_numbers<[2], [2], [1], [1], [0, 0, 0, 1, 1, 1], [0], [0]>} : vector<16x7x16xf32>, vector<16x4x16xf32>, vector<16x7x4xf32> -> vector<16x7x4xf32>
    %183 = vector.shape_cast %182 : vector<16x7x4xf32> to vector<112x4xf32>
    %c112 = arith.constant 112 : index
    %c0_72 = arith.constant 0 : index
    %184 = vector.load %arg4[%c112, %c0_72] : memref<784x4xf32, #tpu.memory_space<vmem>>, vector<112x4xf32>
    tpu.vector_store %arg4[%c112, %c0_72], %183 {strides = array<i32>} : memref<784x4xf32, #tpu.memory_space<vmem>>, vector<112x4xf32>,
    %c32 = arith.constant 32 : index
    %c0_73 = arith.constant 0 : index
    %c0_74 = arith.constant 0 : index
    %185 = vector.load %arg5[%c32, %c0_73, %c0_74] : memref<112x4x16xf32, #tpu.memory_space<vmem>>, vector<16x4x16xf32>
    %cst_75 = arith.constant dense<0.000000e+00> : vector<16x7x4xf32>
    %186 = tpu.matmul %170, %185, %cst_75 {dimension_numbers = #tpu.dot_dimension_numbers<[2], [2], [1], [1], [0, 0, 0, 1, 1, 1], [0], [0]>} : vector<16x7x16xf32>, vector<16x4x16xf32>, vector<16x7x4xf32> -> vector<16x7x4xf32>
    %187 = vector.shape_cast %186 : vector<16x7x4xf32> to vector<112x4xf32>
    %c224 = arith.constant 224 : index
    %c0_76 = arith.constant 0 : index
    %188 = vector.load %arg4[%c224, %c0_76] : memref<784x4xf32, #tpu.memory_space<vmem>>, vector<112x4xf32>
    tpu.vector_store %arg4[%c224, %c0_76], %187 {strides = array<i32>} : memref<784x4xf32, #tpu.memory_space<vmem>>, vector<112x4xf32>,
    %c48 = arith.constant 48 : index
    %c0_77 = arith.constant 0 : index
    %c0_78 = arith.constant 0 : index
    %189 = vector.load %arg5[%c48, %c0_77, %c0_78] : memref<112x4x16xf32, #tpu.memory_space<vmem>>, vector<16x4x16xf32>
    %cst_79 = arith.constant dense<0.000000e+00> : vector<16x7x4xf32>
    %190 = tpu.matmul %170, %189, %cst_79 {dimension_numbers = #tpu.dot_dimension_numbers<[2], [2], [1], [1], [0, 0, 0, 1, 1, 1], [0], [0]>} : vector<16x7x16xf32>, vector<16x4x16xf32>, vector<16x7x4xf32> -> vector<16x7x4xf32>
    %191 = vector.shape_cast %190 : vector<16x7x4xf32> to vector<112x4xf32>
    %c336 = arith.constant 336 : index
    %c0_80 = arith.constant 0 : index
    %192 = vector.load %arg4[%c336, %c0_80] : memref<784x4xf32, #tpu.memory_space<vmem>>, vector<112x4xf32>
    tpu.vector_store %arg4[%c336, %c0_80], %191 {strides = array<i32>} : memref<784x4xf32, #tpu.memory_space<vmem>>, vector<112x4xf32>,
    %c64 = arith.constant 64 : index
    %c0_81 = arith.constant 0 : index
    %c0_82 = arith.constant 0 : index
    %193 = vector.load %arg5[%c64, %c0_81, %c0_82] : memref<112x4x16xf32, #tpu.memory_space<vmem>>, vector<16x4x16xf32>
    %cst_83 = arith.constant dense<0.000000e+00> : vector<16x7x4xf32>
    %194 = tpu.matmul %170, %193, %cst_83 {dimension_numbers = #tpu.dot_dimension_numbers<[2], [2], [1], [1], [0, 0, 0, 1, 1, 1], [0], [0]>} : vector<16x7x16xf32>, vector<16x4x16xf32>, vector<16x7x4xf32> -> vector<16x7x4xf32>
    %195 = vector.shape_cast %194 : vector<16x7x4xf32> to vector<112x4xf32>
    %c448 = arith.constant 448 : index
    %c0_84 = arith.constant 0 : index
    %196 = vector.load %arg4[%c448, %c0_84] : memref<784x4xf32, #tpu.memory_space<vmem>>, vector<112x4xf32>
    tpu.vector_store %arg4[%c448, %c0_84], %195 {strides = array<i32>} : memref<784x4xf32, #tpu.memory_space<vmem>>, vector<112x4xf32>,
    %c80 = arith.constant 80 : index
    %c0_85 = arith.constant 0 : index
    %c0_86 = arith.constant 0 : index
    %197 = vector.load %arg5[%c80, %c0_85, %c0_86] : memref<112x4x16xf32, #tpu.memory_space<vmem>>, vector<16x4x16xf32>
    %cst_87 = arith.constant dense<0.000000e+00> : vector<16x7x4xf32>
    %198 = tpu.matmul %170, %197, %cst_87 {dimension_numbers = #tpu.dot_dimension_numbers<[2], [2], [1], [1], [0, 0, 0, 1, 1, 1], [0], [0]>} : vector<16x7x16xf32>, vector<16x4x16xf32>, vector<16x7x4xf32> -> vector<16x7x4xf32>
    %199 = vector.shape_cast %198 : vector<16x7x4xf32> to vector<112x4xf32>
    %c560 = arith.constant 560 : index
    %c0_88 = arith.constant 0 : index
    %200 = vector.load %arg4[%c560, %c0_88] : memref<784x4xf32, #tpu.memory_space<vmem>>, vector<112x4xf32>
    tpu.vector_store %arg4[%c560, %c0_88], %199 {strides = array<i32>} : memref<784x4xf32, #tpu.memory_space<vmem>>, vector<112x4xf32>,
    %c96 = arith.constant 96 : index
    %c0_89 = arith.constant 0 : index
    %c0_90 = arith.constant 0 : index
    %201 = vector.load %arg5[%c96, %c0_89, %c0_90] : memref<112x4x16xf32, #tpu.memory_space<vmem>>, vector<16x4x16xf32>
    %cst_91 = arith.constant dense<0.000000e+00> : vector<16x7x4xf32>
    %202 = tpu.matmul %170, %201, %cst_91 {dimension_numbers = #tpu.dot_dimension_numbers<[2], [2], [1], [1], [0, 0, 0, 1, 1, 1], [0], [0]>} : vector<16x7x16xf32>, vector<16x4x16xf32>, vector<16x7x4xf32> -> vector<16x7x4xf32>
    %203 = vector.shape_cast %202 : vector<16x7x4xf32> to vector<112x4xf32>
    %c672 = arith.constant 672 : index
    %c0_92 = arith.constant 0 : index
    %204 = vector.load %arg4[%c672, %c0_92] : memref<784x4xf32, #tpu.memory_space<vmem>>, vector<112x4xf32>
    tpu.vector_store %arg4[%c672, %c0_92], %203 {strides = array<i32>} : memref<784x4xf32, #tpu.memory_space<vmem>>, vector<112x4xf32>,
    return
  }
  func.func @transform_0(%arg0: i32, %arg1: memref<2xi32, #tpu.memory_space<smem>>) -> (i32, i32) {
    %c0_i32 = arith.constant 0 : i32
    %c0_i32_0 = arith.constant 0 : i32
    return %arg0, %c0_i32 : i32, i32
  }
  func.func @transform_1(%arg0: i32, %arg1: memref<2xi32, #tpu.memory_space<smem>>) -> (i32, i32, i32) {
    %0 = arith.index_cast %arg0 : i32 to index
    %1 = memref.load %arg1[%0] : memref<2xi32, #tpu.memory_space<smem>>
    %c0_i32 = arith.constant 0 : i32
    %c0_i32_0 = arith.constant 0 : i32
    %c0_i32_1 = arith.constant 0 : i32
    return %1, %c0_i32, %c0_i32_0 : i32, i32, i32
  }
  func.func @transform_2(%arg0: i32, %arg1: memref<2xi32, #tpu.memory_space<smem>>) -> (i32, i32) {
    %c0_i32 = arith.constant 0 : i32
    %c0_i32_0 = arith.constant 0 : i32
    return %arg0, %c0_i32 : i32, i32
  }
}

</mosaic_0001>

<llo_original>
// kernel: tpu_custom_call.1
$region0: #{tpu_custom_call.1}
  #allocation0 [shape = 'u32[]', space=smem, size = 0x4, offset = 0x4, fixed_abs, tag = 'smem constant byte address 0x4 - core index']
  #allocation1 [shape = 'u32[72,128]{1,0:T(1,128)}', space=vmem, size = 0x9000, scoped, tag = 'internal scratch']
  #allocation2 [shape = 'f32[112,4,16]{2,1,0:T(4,128)}', space=vmem, size = 0x38000, scoped, tag = 'scratch operand']
  #allocation3 [shape = 's32[1]{0}', space=sflag, size = 0x4, scoped, tag = 'scoped memory for tpu_custom_call.1']
  #allocation4 [shape = 'u8[512]{0}', space=smem, size = 0x200, scoped, tag = 'prefetched SMEM operand 0']
  %s0 = inlined_call_operand.vmem [shape: s32[2], index: 0, kind: input, shape index: {}]
  %s1 = inlined_call_operand.vmem [shape: f32[32,8], index: 1, kind: input, shape index: {}]
  %s2 = inlined_call_operand.vmem [shape: f32[2,16,64], index: 2, kind: input, shape index: {}]
  %s3 = inlined_call_operand.vmem [shape: f32[1568,4], index: 3, kind: output, shape index: {}]
  %s4 = sld [smem:[#allocation0]]
  $region41: #{tpu_custom_call.1} parent=0
    _
  %s6 = ssub.s32 1, %s4
  %s7 = scalar_select 0, %s6, %s4
  %s9 = sshll.u32 %s0, 4
  %s10 = int_to_ptr.vmem [resolvable:$true] %s9
  %12 = dma.vmem_to_smem %s10, 16, [#allocation4], [#allocation3]
  %14 = dma.done [#allocation3], 16
  %15 = sfence
  loop: start=0, step=1, limit=4
  $region2: #{tpu_custom_call.1} parent=0 // loop_pre_header
    _
  $region3: #{tpu_custom_call.1} parent=0 // loop_header
    %s17 = sphi 0, %s21
    %p18 = scmp.ge.s32.totalorder %s17, 4
    %s27 = sphi 0, %s29
    %s30 = sphi 0, %s27
    %s31 = sphi 0, %s30
    %s47 = sphi 0, %s31
    %s55 = sphi 0, %s57
    %s58 = sphi 0, %s55
    %s59 = sphi 0, %s58
    %s75 = sphi 0, %s59
    %s81 = sphi 0, %s83
    %s84 = sphi 0, %s81
    %s85 = sphi 0, %s84
    %s101 = sphi 0, %s85
  $region4: #{tpu_custom_call.1} parent=0 // loop_header_branch
    %20 = sbr.rel (%p18) target = $region8
  $region5: #{tpu_custom_call.1} parent=0 // loop_body
    %s22 = ssub.s32 %s17, 1
    %s23 = ssub.s32 %s17, 2
    %s24 = sadd.s32 %s17, 1
    %s25 = ssub.s32 %s17, %s24
    %p26 = scmp.eq.s32.totalorder %s25, 0
    %s28 = sadd.s32 %s27, 1
    %s29 = scalar_select %p26, %s27, %s28
    %p32 = pneg %p26
    %p33 = scmp.eq.s32.totalorder %s17, 1
    %p34 = por %p32, %p33
    %p35 = scmp.ne.s32.totalorder %s27, %s30
    %p36 = scmp.eq.s32.totalorder %s17, 0
    %p37 = por %p35, %p36
    %p38 = scmp.ne.s32.totalorder %s27, %s30
    %p39 = scmp.eq.s32.totalorder %s22, 1
    %p40 = por %p38, %p39
    %p41 = scmp.ne.s32.totalorder %s30, %s31
    %p42 = scmp.eq.s32.totalorder %s22, 0
    %p43 = por %p41, %p42
    %p44 = scmp.ne.s32.totalorder %s30, %s31
    %p45 = scmp.eq.s32.totalorder %s23, 1
    %p46 = por %p44, %p45
    %p48 = scmp.ne.s32.totalorder %s31, %s47
    %p49 = scmp.eq.s32.totalorder %s23, 0
    %p50 = por %p48, %p49
    %s51 = sld [smem:[#allocation4 + %s17]]
    %s52 = sld [smem:[#allocation4 + %s24]]
    %s53 = ssub.s32 %s51, %s52
    %p54 = scmp.eq.s32.totalorder %s53, 0
    %s56 = sadd.s32 %s55, 1
    %s57 = scalar_select %p54, %s55, %s56
    %p60 = pneg %p54
    %p61 = scmp.eq.s32.totalorder %s17, 1
    %p62 = por %p60, %p61
    %p63 = scmp.ne.s32.totalorder %s55, %s58
    %p64 = scmp.eq.s32.totalorder %s17, 0
    %p65 = por %p63, %p64
    %p66 = scmp.ne.s32.totalorder %s55, %s58
    %p67 = scmp.eq.s32.totalorder %s22, 1
    %p68 = por %p66, %p67
    %p69 = scmp.ne.s32.totalorder %s58, %s59
    %p70 = scmp.eq.s32.totalorder %s22, 0
    %p71 = por %p69, %p70
    %p72 = scmp.ne.s32.totalorder %s58, %s59
    %p73 = scmp.eq.s32.totalorder %s23, 1
    %p74 = por %p72, %p73
    %p76 = scmp.ne.s32.totalorder %s59, %s75
    %p77 = scmp.eq.s32.totalorder %s23, 0
    %p78 = por %p76, %p77
    %s79 = ssub.s32 %s17, %s24
    %p80 = scmp.eq.s32.totalorder %s79, 0
    %s82 = sadd.s32 %s81, 1
    %s83 = scalar_select %p80, %s81, %s82
    %p86 = pneg %p80
    %p87 = scmp.eq.s32.totalorder %s17, 1
    %p88 = por %p86, %p87
    %p89 = scmp.ne.s32.totalorder %s81, %s84
    %p90 = scmp.eq.s32.totalorder %s17, 0
    %p91 = por %p89, %p90
    %p92 = scmp.ne.s32.totalorder %s81, %s84
    %p93 = scmp.eq.s32.totalorder %s22, 1
    %p94 = por %p92, %p93
    %p95 = scmp.ne.s32.totalorder %s84, %s85
    %p96 = scmp.eq.s32.totalorder %s22, 0
    %p97 = por %p95, %p96
    %p98 = scmp.ne.s32.totalorder %s84, %s85
    %p99 = scmp.eq.s32.totalorder %s23, 1
    %p100 = por %p98, %p99
    %p102 = scmp.ne.s32.totalorder %s85, %s101
    %p103 = scmp.eq.s32.totalorder %s23, 0
    %p104 = por %p102, %p103
    %p105 = scmp.le.s32.totalorder 1, %s17
    %p106 = scmp.lt.s32.totalorder %s17, 3
    %p107 = pnand %p105, %p106
    %p108 = pneg %p107
    // Predicated region
    $region9: #{tpu_custom_call.1} parent=5 // pred_check
      _
    $region10: #{tpu_custom_call.1} parent=5 // pred_check_branch
      %110 = sbr.rel (%p107) target = $region12
    $region11: #{tpu_custom_call.1} parent=5 // pred_region
      %s111 = ssub.s32 %s17, 1
    $region12: #{tpu_custom_call.1} parent=5 // pred_fallthru
      _
    %p112 = scmp.lt.s32.totalorder %s17, 2
    // Predicated region
    $region13: #{tpu_custom_call.1} parent=5 // pred_check
      %p113 = pneg %p112
    $region14: #{tpu_custom_call.1} parent=5 // pred_check_branch
      %115 = sbr.rel (%p113) target = $region16
    $region15: #{tpu_custom_call.1} parent=5 // pred_region
      // Predicated region
      $region17: #{tpu_custom_call.1} parent=15 // pred_check
        %p116 = pneg %p37
      $region18: #{tpu_custom_call.1} parent=15 // pred_check_branch
        %118 = sbr.rel (%p116) target = $region20
      $region19: #{tpu_custom_call.1} parent=15 // pred_region
        %s119 = smul.u32 2, %s17
        %p120 = scmp.lt.s32.totalorder %s119, 3
        %s121 = scalar_select %p120, %s119, 3
        %s122 = smul.addr %s121, 8
        %s123 = scalar_lea.vmem %s1, %s122
        %s124 = smul.u32 2, %s17
      $region20: #{tpu_custom_call.1} parent=15 // pred_fallthru
        _
      // Predicated region
      $region21: #{tpu_custom_call.1} parent=15 // pred_check
        %p125 = pneg %p65
      $region22: #{tpu_custom_call.1} parent=15 // pred_check_branch
        %127 = sbr.rel (%p125) target = $region24
      $region23: #{tpu_custom_call.1} parent=15 // pred_region
        %s128 = sld [smem:[#allocation4 + %s17]]
        %p129 = scmp.lt.s32.totalorder %s128, 1
        %s130 = scalar_select %p129, %s128, 1
        %s131 = smul.addr %s130, 2
        %s132 = smul.addr %s131, 8
        %s133 = scalar_lea.vmem %s2, %s132
        %s134 = sld [smem:[#allocation4 + %s17]]
      $region24: #{tpu_custom_call.1} parent=15 // pred_fallthru
        _
    $region16: #{tpu_custom_call.1} parent=5 // pred_fallthru
      _
    %p135 = scmp.le.s32.totalorder 1, %s17
    %p136 = scmp.lt.s32.totalorder %s17, 3
    %p137 = pnand %p135, %p136
    %p138 = pneg %p137
    // Predicated region
    $region25: #{tpu_custom_call.1} parent=5 // pred_check
      _
    $region26: #{tpu_custom_call.1} parent=5 // pred_check_branch
      %140 = sbr.rel (%p137) target = $region28
    $region27: #{tpu_custom_call.1} parent=5 // pred_region
      %s141 = ssub.s32 %s17, 1
      %s142 = smul.u32 2, %s22
      %p143 = scmp.lt.s32.totalorder %s142, 3
      %s144 = scalar_select %p143, %s142, 3
      %s145 = smul.addr %s144, 8
      %s146 = scalar_lea.vmem %s1, %s145
      %p147 = pneg %p43
      %p148 = pneg %p40
      %s149 = sld [smem:[#allocation4 + %s22]]
      %p150 = scmp.lt.s32.totalorder %s149, 1
      %s151 = scalar_select %p150, %s149, 1
      %s152 = smul.addr %s151, 2
      %s153 = smul.addr %s152, 8
      %s154 = scalar_lea.vmem %s2, %s153
      %p155 = pneg %p71
      %p156 = pneg %p68
      %p157 = pneg %p97
      %p158 = pneg %p94
      %s159 = smul.u32 98, %s22
      %p160 = scmp.lt.s32.totalorder %s159, 195
      %s161 = scalar_select %p160, %s159, 195
      %s162 = smul.addr %s161, 8
      %s163 = scalar_lea.vmem %s3, %s162
      %s164 = smul.u32 2, %s22
      %p165 = scmp.lt.s32.totalorder %s164, 3
      %s166 = scalar_select %p165, %s164, 3
      %s167 = smul.addr %s166, 8
      %s168 = scalar_lea.vmem %s1, %s167
      %s169 = smul.u32 2, %s22
      %s170 = sld [smem:[#allocation4 + %s22]]
      %p171 = scmp.lt.s32.totalorder %s170, 1
      %s172 = scalar_select %p171, %s170, 1
      %s173 = smul.addr %s172, 2
      %s174 = smul.addr %s173, 8
      %s175 = scalar_lea.vmem %s2, %s174
      %s176 = sld [smem:[#allocation4 + %s22]]
      %s177 = smul.u32 98, %s22
      %p178 = scmp.lt.s32.totalorder %s177, 195
      %s179 = scalar_select %p178, %s177, 195
      %s180 = smul.addr %s179, 8
      %s181 = scalar_lea.vmem %s3, %s180
      %s182 = smul.u32 98, %s22
      %v183 = vld [vmem:[%s168] sm:$0xff]
      %v184 = vld [vmem:[%s168 + $0x8] sm:$0xff]
      %v185 = vcvt.s32.f32 0
      %v186 = vcvt.s32.f32 1
      %v187 = vcvt.s32.f32 2
      %v188 = vcvt.s32.f32 3
      %v189 = vcvt.s32.f32 4
      %v190 = vcvt.s32.f32 5
      %v191 = vcvt.s32.f32 6
      %v192 = vlaneseq
      %v193 = vand.u32 %v192, 127
      %v194 = vcvt.s32.f32 %v193
      %v195 = vadd.f32 %v185, 0.25
      %v196 = vadd.f32 %v186, 0.25
      %v197 = vadd.f32 %v187, 0.25
      %v198 = vadd.f32 %v188, 0.25
      %v199 = vadd.f32 %v189, 0.25
      %v200 = vadd.f32 %v190, 0.25
      %v201 = vadd.f32 %v191, 0.25
      %203 = vset.pattern.permute.xlu0 3
      %204 = vperm.xlu0 %203, %v183
      %v205 = vpop.permute.xlu0 %204
      %208 = vset.pattern.permute.xlu0 3
      %209 = vperm.xlu0 %208, %v184
      %v210 = vpop.permute.xlu0 %209
      %v212 = vmul.f32 %v195, %v205
      %v213 = vmul.f32 %v195, %v210
      %v214 = vmul.f32 %v196, %v205
      %v215 = vmul.f32 %v196, %v210
      %v216 = vmul.f32 %v197, %v205
      %v217 = vmul.f32 %v197, %v210
      %v218 = vmul.f32 %v198, %v205
      %v219 = vmul.f32 %v198, %v210
      %v220 = vmul.f32 %v199, %v205
      %v221 = vmul.f32 %v199, %v210
      %v222 = vmul.f32 %v200, %v205
      %v223 = vmul.f32 %v200, %v210
      %v224 = vmul.f32 %v201, %v205
      %v225 = vmul.f32 %v201, %v210
      %226 = vset.pattern.permute.xlu0 1
      %227 = vperm.xlu0 %226, %v183
      %v228 = vpop.permute.xlu0 %227
      %230 = vset.pattern.permute.xlu0 1
      %231 = vperm.xlu0 %230, %v184
      %v232 = vpop.permute.xlu0 %231
      %v234 = vadd.f32 %v228, %v212
      %v235 = vadd.f32 %v232, %v213
      %v236 = vadd.f32 %v228, %v214
      %v237 = vadd.f32 %v232, %v215
      %v238 = vadd.f32 %v228, %v216
      %v239 = vadd.f32 %v232, %v217
      %v240 = vadd.f32 %v228, %v218
      %v241 = vadd.f32 %v232, %v219
      %v242 = vadd.f32 %v228, %v220
      %v243 = vadd.f32 %v232, %v221
      %v244 = vadd.f32 %v228, %v222
      %v245 = vadd.f32 %v232, %v223
      %v246 = vadd.f32 %v228, %v224
      %v247 = vadd.f32 %v232, %v225
      %vm248 = vcmp.lt.f32.partialorder %v234, -1.0
      %vm249 = vcmp.lt.f32.partialorder %v235, -1.0
      %vm250 = vcmp.lt.f32.partialorder %v236, -1.0
      %vm251 = vcmp.lt.f32.partialorder %v237, -1.0
      %vm252 = vcmp.lt.f32.partialorder %v238, -1.0
      %vm253 = vcmp.lt.f32.partialorder %v239, -1.0
      %vm254 = vcmp.lt.f32.partialorder %v240, -1.0
      %vm255 = vcmp.lt.f32.partialorder %v241, -1.0
      %vm256 = vcmp.lt.f32.partialorder %v242, -1.0
      %vm257 = vcmp.lt.f32.partialorder %v243, -1.0
      %vm258 = vcmp.lt.f32.partialorder %v244, -1.0
      %vm259 = vcmp.lt.f32.partialorder %v245, -1.0
      %vm260 = vcmp.lt.f32.partialorder %v246, -1.0
      %vm261 = vcmp.lt.f32.partialorder %v247, -1.0
      %vm262 = vcmp.gt.f32.partialorder %v234, 16.0
      %vm263 = vcmp.gt.f32.partialorder %v235, 16.0
      %vm264 = vcmp.gt.f32.partialorder %v236, 16.0
      %vm265 = vcmp.gt.f32.partialorder %v237, 16.0
      %vm266 = vcmp.gt.f32.partialorder %v238, 16.0
      %vm267 = vcmp.gt.f32.partialorder %v239, 16.0
      %vm268 = vcmp.gt.f32.partialorder %v240, 16.0
      %vm269 = vcmp.gt.f32.partialorder %v241, 16.0
      %vm270 = vcmp.gt.f32.partialorder %v242, 16.0
      %vm271 = vcmp.gt.f32.partialorder %v243, 16.0
      %vm272 = vcmp.gt.f32.partialorder %v244, 16.0
      %vm273 = vcmp.gt.f32.partialorder %v245, 16.0
      %vm274 = vcmp.gt.f32.partialorder %v246, 16.0
      %vm275 = vcmp.gt.f32.partialorder %v247, 16.0
      %vm276 = vmor %vm248, %vm262
      %vm277 = vmor %vm249, %vm263
      %vm278 = vmor %vm250, %vm264
      %vm279 = vmor %vm251, %vm265
      %vm280 = vmor %vm252, %vm266
      %vm281 = vmor %vm253, %vm267
      %vm282 = vmor %vm254, %vm268
      %vm283 = vmor %vm255, %vm269
      %vm284 = vmor %vm256, %vm270
      %vm285 = vmor %vm257, %vm271
      %vm286 = vmor %vm258, %vm272
      %vm287 = vmor %vm259, %vm273
      %vm288 = vmor %vm260, %vm274
      %vm289 = vmor %vm261, %vm275
      %v290 = vmax.f32 %v234, 0.0
      %v291 = vmax.f32 %v235, 0.0
      %v292 = vmax.f32 %v236, 0.0
      %v293 = vmax.f32 %v237, 0.0
      %v294 = vmax.f32 %v238, 0.0
      %v295 = vmax.f32 %v239, 0.0
      %v296 = vmax.f32 %v240, 0.0
      %v297 = vmax.f32 %v241, 0.0
      %v298 = vmax.f32 %v242, 0.0
      %v299 = vmax.f32 %v243, 0.0
      %v300 = vmax.f32 %v244, 0.0
      %v301 = vmax.f32 %v245, 0.0
      %v302 = vmax.f32 %v246, 0.0
      %v303 = vmax.f32 %v247, 0.0
      %v304 = vfloor.f32 %v290
      %v305 = vfloor.f32 %v291
      %v306 = vfloor.f32 %v292
      %v307 = vfloor.f32 %v293
      %v308 = vfloor.f32 %v294
      %v309 = vfloor.f32 %v295
      %v310 = vfloor.f32 %v296
      %v311 = vfloor.f32 %v297
      %v312 = vfloor.f32 %v298
      %v313 = vfloor.f32 %v299
      %v314 = vfloor.f32 %v300
      %v315 = vfloor.f32 %v301
      %v316 = vfloor.f32 %v302
      %v317 = vfloor.f32 %v303
      %v318 = vmin.f32 %v304, 15.0
      %v319 = vmin.f32 %v305, 15.0
      %v320 = vmin.f32 %v306, 15.0
      %v321 = vmin.f32 %v307, 15.0
      %v322 = vmin.f32 %v308, 15.0
      %v323 = vmin.f32 %v309, 15.0
      %v324 = vmin.f32 %v310, 15.0
      %v325 = vmin.f32 %v311, 15.0
      %v326 = vmin.f32 %v312, 15.0
      %v327 = vmin.f32 %v313, 15.0
      %v328 = vmin.f32 %v314, 15.0
      %v329 = vmin.f32 %v315, 15.0
      %v330 = vmin.f32 %v316, 15.0
      %v331 = vmin.f32 %v317, 15.0
      %vm332 = vcmp.ge.f32.partialorder %v304, 15.0
      %vm333 = vcmp.ge.f32.partialorder %v305, 15.0
      %vm334 = vcmp.ge.f32.partialorder %v306, 15.0
      %vm335 = vcmp.ge.f32.partialorder %v307, 15.0
      %vm336 = vcmp.ge.f32.partialorder %v308, 15.0
      %vm337 = vcmp.ge.f32.partialorder %v309, 15.0
      %vm338 = vcmp.ge.f32.partialorder %v310, 15.0
      %vm339 = vcmp.ge.f32.partialorder %v311, 15.0
      %vm340 = vcmp.ge.f32.partialorder %v312, 15.0
      %vm341 = vcmp.ge.f32.partialorder %v313, 15.0
      %vm342 = vcmp.ge.f32.partialorder %v314, 15.0
      %vm343 = vcmp.ge.f32.partialorder %v315, 15.0
      %vm344 = vcmp.ge.f32.partialorder %v316, 15.0
      %vm345 = vcmp.ge.f32.partialorder %v317, 15.0
      %v346 = vsub.f32 %v290, %v318
      %v347 = vsub.f32 %v291, %v319
      %v348 = vsub.f32 %v292, %v320
      %v349 = vsub.f32 %v293, %v321
      %v350 = vsub.f32 %v294, %v322
      %v351 = vsub.f32 %v295, %v323
      %v352 = vsub.f32 %v296, %v324
      %v353 = vsub.f32 %v297, %v325
      %v354 = vsub.f32 %v298, %v326
      %v355 = vsub.f32 %v299, %v327
      %v356 = vsub.f32 %v300, %v328
      %v357 = vsub.f32 %v301, %v329
      %v358 = vsub.f32 %v302, %v330
      %v359 = vsub.f32 %v303, %v331
      %v360 = vsel %vm332, 0.0, %v346
      %v361 = vsel %vm333, 0.0, %v347
      %v362 = vsel %vm334, 0.0, %v348
      %v363 = vsel %vm335, 0.0, %v349
      %v364 = vsel %vm336, 0.0, %v350
      %v365 = vsel %vm337, 0.0, %v351
      %v366 = vsel %vm338, 0.0, %v352
      %v367 = vsel %vm339, 0.0, %v353
      %v368 = vsel %vm340, 0.0, %v354
      %v369 = vsel %vm341, 0.0, %v355
      %v370 = vsel %vm342, 0.0, %v356
      %v371 = vsel %vm343, 0.0, %v357
      %v372 = vsel %vm344, 0.0, %v358
      %v373 = vsel %vm345, 0.0, %v359
      %v374 = vadd.f32 %v318, 1.0
      %v375 = vadd.f32 %v319, 1.0
      %v376 = vadd.f32 %v320, 1.0
      %v377 = vadd.f32 %v321, 1.0
      %v378 = vadd.f32 %v322, 1.0
      %v379 = vadd.f32 %v323, 1.0
      %v380 = vadd.f32 %v324, 1.0
      %v381 = vadd.f32 %v325, 1.0
      %v382 = vadd.f32 %v326, 1.0
      %v383 = vadd.f32 %v327, 1.0
      %v384 = vadd.f32 %v328, 1.0
      %v385 = vadd.f32 %v329, 1.0
      %v386 = vadd.f32 %v330, 1.0
      %v387 = vadd.f32 %v331, 1.0
      %v388 = vmin.f32 %v374, 15.0
      %v389 = vmin.f32 %v375, 15.0
      %v390 = vmin.f32 %v376, 15.0
      %v391 = vmin.f32 %v377, 15.0
      %v392 = vmin.f32 %v378, 15.0
      %v393 = vmin.f32 %v379, 15.0
      %v394 = vmin.f32 %v380, 15.0
      %v395 = vmin.f32 %v381, 15.0
      %v396 = vmin.f32 %v382, 15.0
      %v397 = vmin.f32 %v383, 15.0
      %v398 = vmin.f32 %v384, 15.0
      %v399 = vmin.f32 %v385, 15.0
      %v400 = vmin.f32 %v386, 15.0
      %v401 = vmin.f32 %v387, 15.0
      %vm402 = vcmp.eq.f32.partialorder %v194, %v318
      %vm403 = vcmp.eq.f32.partialorder %v194, %v319
      %vm404 = vcmp.eq.f32.partialorder %v194, %v320
      %vm405 = vcmp.eq.f32.partialorder %v194, %v321
      %vm406 = vcmp.eq.f32.partialorder %v194, %v322
      %vm407 = vcmp.eq.f32.partialorder %v194, %v323
      %vm408 = vcmp.eq.f32.partialorder %v194, %v324
      %vm409 = vcmp.eq.f32.partialorder %v194, %v325
      %vm410 = vcmp.eq.f32.partialorder %v194, %v326
      %vm411 = vcmp.eq.f32.partialorder %v194, %v327
      %vm412 = vcmp.eq.f32.partialorder %v194, %v328
      %vm413 = vcmp.eq.f32.partialorder %v194, %v329
      %vm414 = vcmp.eq.f32.partialorder %v194, %v330
      %vm415 = vcmp.eq.f32.partialorder %v194, %v331
      %v416 = vsub.f32 1.0, %v360
      %v417 = vsub.f32 1.0, %v361
      %v418 = vsub.f32 1.0, %v362
      %v419 = vsub.f32 1.0, %v363
      %v420 = vsub.f32 1.0, %v364
      %v421 = vsub.f32 1.0, %v365
      %v422 = vsub.f32 1.0, %v366
      %v423 = vsub.f32 1.0, %v367
      %v424 = vsub.f32 1.0, %v368
      %v425 = vsub.f32 1.0, %v369
      %v426 = vsub.f32 1.0, %v370
      %v427 = vsub.f32 1.0, %v371
      %v428 = vsub.f32 1.0, %v372
      %v429 = vsub.f32 1.0, %v373
      %v430 = vsel %vm402, %v416, 0.0
      %v431 = vsel %vm403, %v417, 0.0
      %v432 = vsel %vm404, %v418, 0.0
      %v433 = vsel %vm405, %v419, 0.0
      %v434 = vsel %vm406, %v420, 0.0
      %v435 = vsel %vm407, %v421, 0.0
      %v436 = vsel %vm408, %v422, 0.0
      %v437 = vsel %vm409, %v423, 0.0
      %v438 = vsel %vm410, %v424, 0.0
      %v439 = vsel %vm411, %v425, 0.0
      %v440 = vsel %vm412, %v426, 0.0
      %v441 = vsel %vm413, %v427, 0.0
      %v442 = vsel %vm414, %v428, 0.0
      %v443 = vsel %vm415, %v429, 0.0
      %vm444 = vcmp.eq.f32.partialorder %v194, %v388
      %vm445 = vcmp.eq.f32.partialorder %v194, %v389
      %vm446 = vcmp.eq.f32.partialorder %v194, %v390
      %vm447 = vcmp.eq.f32.partialorder %v194, %v391
      %vm448 = vcmp.eq.f32.partialorder %v194, %v392
      %vm449 = vcmp.eq.f32.partialorder %v194, %v393
      %vm450 = vcmp.eq.f32.partialorder %v194, %v394
      %vm451 = vcmp.eq.f32.partialorder %v194, %v395
      %vm452 = vcmp.eq.f32.partialorder %v194, %v396
      %vm453 = vcmp.eq.f32.partialorder %v194, %v397
      %vm454 = vcmp.eq.f32.partialorder %v194, %v398
      %vm455 = vcmp.eq.f32.partialorder %v194, %v399
      %vm456 = vcmp.eq.f32.partialorder %v194, %v400
      %vm457 = vcmp.eq.f32.partialorder %v194, %v401
      %v458 = vsel %vm444, %v360, 0.0
      %v459 = vsel %vm445, %v361, 0.0
      %v460 = vsel %vm446, %v362, 0.0
      %v461 = vsel %vm447, %v363, 0.0
      %v462 = vsel %vm448, %v364, 0.0
      %v463 = vsel %vm449, %v365, 0.0
      %v464 = vsel %vm450, %v366, 0.0
      %v465 = vsel %vm451, %v367, 0.0
      %v466 = vsel %vm452, %v368, 0.0
      %v467 = vsel %vm453, %v369, 0.0
      %v468 = vsel %vm454, %v370, 0.0
      %v469 = vsel %vm455, %v371, 0.0
      %v470 = vsel %vm456, %v372, 0.0
      %v471 = vsel %vm457, %v373, 0.0
      %v472 = vadd.f32 %v430, %v458
      %v473 = vadd.f32 %v431, %v459
      %v474 = vadd.f32 %v432, %v460
      %v475 = vadd.f32 %v433, %v461
      %v476 = vadd.f32 %v434, %v462
      %v477 = vadd.f32 %v435, %v463
      %v478 = vadd.f32 %v436, %v464
      %v479 = vadd.f32 %v437, %v465
      %v480 = vadd.f32 %v438, %v466
      %v481 = vadd.f32 %v439, %v467
      %v482 = vadd.f32 %v440, %v468
      %v483 = vadd.f32 %v441, %v469
      %v484 = vadd.f32 %v442, %v470
      %v485 = vadd.f32 %v443, %v471
      %v486 = vsel %vm276, 0.0, %v472
      %v487 = vsel %vm277, 0.0, %v473
      %v488 = vsel %vm278, 0.0, %v474
      %v489 = vsel %vm279, 0.0, %v475
      %v490 = vsel %vm280, 0.0, %v476
      %v491 = vsel %vm281, 0.0, %v477
      %v492 = vsel %vm282, 0.0, %v478
      %v493 = vsel %vm283, 0.0, %v479
      %v494 = vsel %vm284, 0.0, %v480
      %v495 = vsel %vm285, 0.0, %v481
      %v496 = vsel %vm286, 0.0, %v482
      %v497 = vsel %vm287, 0.0, %v483
      %v498 = vsel %vm288, 0.0, %v484
      %v499 = vsel %vm289, 0.0, %v485
      %v500 = vadd.f32 %v486, 0.0
      %v501 = vadd.f32 %v487, 0.0
      %v502 = vadd.f32 %v488, 0.0
      %v503 = vadd.f32 %v489, 0.0
      %v504 = vadd.f32 %v490, 0.0
      %v505 = vadd.f32 %v491, 0.0
      %v506 = vadd.f32 %v492, 0.0
      %v507 = vadd.f32 %v493, 0.0
      %v508 = vadd.f32 %v494, 0.0
      %v509 = vadd.f32 %v495, 0.0
      %v510 = vadd.f32 %v496, 0.0
      %v511 = vadd.f32 %v497, 0.0
      %v512 = vadd.f32 %v498, 0.0
      %v513 = vadd.f32 %v499, 0.0
      %v514 = vadd.f32 %v185, 0.75
      %v515 = vadd.f32 %v186, 0.75
      %v516 = vadd.f32 %v187, 0.75
      %v517 = vadd.f32 %v188, 0.75
      %v518 = vadd.f32 %v189, 0.75
      %v519 = vadd.f32 %v190, 0.75
      %v520 = vadd.f32 %v191, 0.75
      %v521 = vmul.f32 %v514, %v205
      %v522 = vmul.f32 %v514, %v210
      %v523 = vmul.f32 %v515, %v205
      %v524 = vmul.f32 %v515, %v210
      %v525 = vmul.f32 %v516, %v205
      %v526 = vmul.f32 %v516, %v210
      %v527 = vmul.f32 %v517, %v205
      %v528 = vmul.f32 %v517, %v210
      %v529 = vmul.f32 %v518, %v205
      %v530 = vmul.f32 %v518, %v210
      %v531 = vmul.f32 %v519, %v205
      %v532 = vmul.f32 %v519, %v210
      %v533 = vmul.f32 %v520, %v205
      %v534 = vmul.f32 %v520, %v210
      %v535 = vadd.f32 %v228, %v521
      %v536 = vadd.f32 %v232, %v522
      %v537 = vadd.f32 %v228, %v523
      %v538 = vadd.f32 %v232, %v524
      %v539 = vadd.f32 %v228, %v525
      %v540 = vadd.f32 %v232, %v526
      %v541 = vadd.f32 %v228, %v527
      %v542 = vadd.f32 %v232, %v528
      %v543 = vadd.f32 %v228, %v529
      %v544 = vadd.f32 %v232, %v530
      %v545 = vadd.f32 %v228, %v531
      %v546 = vadd.f32 %v232, %v532
      %v547 = vadd.f32 %v228, %v533
      %v548 = vadd.f32 %v232, %v534
      %vm549 = vcmp.lt.f32.partialorder %v535, -1.0
      %vm550 = vcmp.lt.f32.partialorder %v536, -1.0
      %vm551 = vcmp.lt.f32.partialorder %v537, -1.0
      %vm552 = vcmp.lt.f32.partialorder %v538, -1.0
      %vm553 = vcmp.lt.f32.partialorder %v539, -1.0
      %vm554 = vcmp.lt.f32.partialorder %v540, -1.0
      %vm555 = vcmp.lt.f32.partialorder %v541, -1.0
      %vm556 = vcmp.lt.f32.partialorder %v542, -1.0
      %vm557 = vcmp.lt.f32.partialorder %v543, -1.0
      %vm558 = vcmp.lt.f32.partialorder %v544, -1.0
      %vm559 = vcmp.lt.f32.partialorder %v545, -1.0
      %vm560 = vcmp.lt.f32.partialorder %v546, -1.0
      %vm561 = vcmp.lt.f32.partialorder %v547, -1.0
      %vm562 = vcmp.lt.f32.partialorder %v548, -1.0
      %vm563 = vcmp.gt.f32.partialorder %v535, 16.0
      %vm564 = vcmp.gt.f32.partialorder %v536, 16.0
      %vm565 = vcmp.gt.f32.partialorder %v537, 16.0
      %vm566 = vcmp.gt.f32.partialorder %v538, 16.0
      %vm567 = vcmp.gt.f32.partialorder %v539, 16.0
      %vm568 = vcmp.gt.f32.partialorder %v540, 16.0
      %vm569 = vcmp.gt.f32.partialorder %v541, 16.0
      %vm570 = vcmp.gt.f32.partialorder %v542, 16.0
      %vm571 = vcmp.gt.f32.partialorder %v543, 16.0
      %vm572 = vcmp.gt.f32.partialorder %v544, 16.0
      %vm573 = vcmp.gt.f32.partialorder %v545, 16.0
      %vm574 = vcmp.gt.f32.partialorder %v546, 16.0
      %vm575 = vcmp.gt.f32.partialorder %v547, 16.0
      %vm576 = vcmp.gt.f32.partialorder %v548, 16.0
      %vm577 = vmor %vm549, %vm563
      %vm578 = vmor %vm550, %vm564
      %vm579 = vmor %vm551, %vm565
      %vm580 = vmor %vm552, %vm566
      %vm581 = vmor %vm553, %vm567
      %vm582 = vmor %vm554, %vm568
      %vm583 = vmor %vm555, %vm569
      %vm584 = vmor %vm556, %vm570
      %vm585 = vmor %vm557, %vm571
      %vm586 = vmor %vm558, %vm572
      %vm587 = vmor %vm559, %vm573
      %vm588 = vmor %vm560, %vm574
      %vm589 = vmor %vm561, %vm575
      %vm590 = vmor %vm562, %vm576
      %v591 = vmax.f32 %v535, 0.0
      %v592 = vmax.f32 %v536, 0.0
      %v593 = vmax.f32 %v537, 0.0
      %v594 = vmax.f32 %v538, 0.0
      %v595 = vmax.f32 %v539, 0.0
      %v596 = vmax.f32 %v540, 0.0
      %v597 = vmax.f32 %v541, 0.0
      %v598 = vmax.f32 %v542, 0.0
      %v599 = vmax.f32 %v543, 0.0
      %v600 = vmax.f32 %v544, 0.0
      %v601 = vmax.f32 %v545, 0.0
      %v602 = vmax.f32 %v546, 0.0
      %v603 = vmax.f32 %v547, 0.0
      %v604 = vmax.f32 %v548, 0.0
      %v605 = vfloor.f32 %v591
      %v606 = vfloor.f32 %v592
      %v607 = vfloor.f32 %v593
      %v608 = vfloor.f32 %v594
      %v609 = vfloor.f32 %v595
      %v610 = vfloor.f32 %v596
      %v611 = vfloor.f32 %v597
      %v612 = vfloor.f32 %v598
      %v613 = vfloor.f32 %v599
      %v614 = vfloor.f32 %v600
      %v615 = vfloor.f32 %v601
      %v616 = vfloor.f32 %v602
      %v617 = vfloor.f32 %v603
      %v618 = vfloor.f32 %v604
      %v619 = vmin.f32 %v605, 15.0
      %v620 = vmin.f32 %v606, 15.0
      %v621 = vmin.f32 %v607, 15.0
      %v622 = vmin.f32 %v608, 15.0
      %v623 = vmin.f32 %v609, 15.0
      %v624 = vmin.f32 %v610, 15.0
      %v625 = vmin.f32 %v611, 15.0
      %v626 = vmin.f32 %v612, 15.0
      %v627 = vmin.f32 %v613, 15.0
      %v628 = vmin.f32 %v614, 15.0
      %v629 = vmin.f32 %v615, 15.0
      %v630 = vmin.f32 %v616, 15.0
      %v631 = vmin.f32 %v617, 15.0
      %v632 = vmin.f32 %v618, 15.0
      %vm633 = vcmp.ge.f32.partialorder %v605, 15.0
      %vm634 = vcmp.ge.f32.partialorder %v606, 15.0
      %vm635 = vcmp.ge.f32.partialorder %v607, 15.0
      %vm636 = vcmp.ge.f32.partialorder %v608, 15.0
      %vm637 = vcmp.ge.f32.partialorder %v609, 15.0
      %vm638 = vcmp.ge.f32.partialorder %v610, 15.0
      %vm639 = vcmp.ge.f32.partialorder %v611, 15.0
      %vm640 = vcmp.ge.f32.partialorder %v612, 15.0
      %vm641 = vcmp.ge.f32.partialorder %v613, 15.0
      %vm642 = vcmp.ge.f32.partialorder %v614, 15.0
      %vm643 = vcmp.ge.f32.partialorder %v615, 15.0
      %vm644 = vcmp.ge.f32.partialorder %v616, 15.0
      %vm645 = vcmp.ge.f32.partialorder %v617, 15.0
      %vm646 = vcmp.ge.f32.partialorder %v618, 15.0
      %v647 = vsub.f32 %v591, %v619
      %v648 = vsub.f32 %v592, %v620
      %v649 = vsub.f32 %v593, %v621
      %v650 = vsub.f32 %v594, %v622
      %v651 = vsub.f32 %v595, %v623
      %v652 = vsub.f32 %v596, %v624
      %v653 = vsub.f32 %v597, %v625
      %v654 = vsub.f32 %v598, %v626
      %v655 = vsub.f32 %v599, %v627
      %v656 = vsub.f32 %v600, %v628
      %v657 = vsub.f32 %v601, %v629
      %v658 = vsub.f32 %v602, %v630
      %v659 = vsub.f32 %v603, %v631
      %v660 = vsub.f32 %v604, %v632
      %v661 = vsel %vm633, 0.0, %v647
      %v662 = vsel %vm634, 0.0, %v648
      %v663 = vsel %vm635, 0.0, %v649
      %v664 = vsel %vm636, 0.0, %v650
      %v665 = vsel %vm637, 0.0, %v651
      %v666 = vsel %vm638, 0.0, %v652
      %v667 = vsel %vm639, 0.0, %v653
      %v668 = vsel %vm640, 0.0, %v654
      %v669 = vsel %vm641, 0.0, %v655
      %v670 = vsel %vm642, 0.0, %v656
      %v671 = vsel %vm643, 0.0, %v657
      %v672 = vsel %vm644, 0.0, %v658
      %v673 = vsel %vm645, 0.0, %v659
      %v674 = vsel %vm646, 0.0, %v660
      %v675 = vadd.f32 %v619, 1.0
      %v676 = vadd.f32 %v620, 1.0
      %v677 = vadd.f32 %v621, 1.0
      %v678 = vadd.f32 %v622, 1.0
      %v679 = vadd.f32 %v623, 1.0
      %v680 = vadd.f32 %v624, 1.0
      %v681 = vadd.f32 %v625, 1.0
      %v682 = vadd.f32 %v626, 1.0
      %v683 = vadd.f32 %v627, 1.0
      %v684 = vadd.f32 %v628, 1.0
      %v685 = vadd.f32 %v629, 1.0
      %v686 = vadd.f32 %v630, 1.0
      %v687 = vadd.f32 %v631, 1.0
      %v688 = vadd.f32 %v632, 1.0
      %v689 = vmin.f32 %v675, 15.0
      %v690 = vmin.f32 %v676, 15.0
      %v691 = vmin.f32 %v677, 15.0
      %v692 = vmin.f32 %v678, 15.0
      %v693 = vmin.f32 %v679, 15.0
      %v694 = vmin.f32 %v680, 15.0
      %v695 = vmin.f32 %v681, 15.0
      %v696 = vmin.f32 %v682, 15.0
      %v697 = vmin.f32 %v683, 15.0
      %v698 = vmin.f32 %v684, 15.0
      %v699 = vmin.f32 %v685, 15.0
      %v700 = vmin.f32 %v686, 15.0
      %v701 = vmin.f32 %v687, 15.0
      %v702 = vmin.f32 %v688, 15.0
      %vm703 = vcmp.eq.f32.partialorder %v194, %v619
      %vm704 = vcmp.eq.f32.partialorder %v194, %v620
      %vm705 = vcmp.eq.f32.partialorder %v194, %v621
      %vm706 = vcmp.eq.f32.partialorder %v194, %v622
      %vm707 = vcmp.eq.f32.partialorder %v194, %v623
      %vm708 = vcmp.eq.f32.partialorder %v194, %v624
      %vm709 = vcmp.eq.f32.partialorder %v194, %v625
      %vm710 = vcmp.eq.f32.partialorder %v194, %v626
      %vm711 = vcmp.eq.f32.partialorder %v194, %v627
      %vm712 = vcmp.eq.f32.partialorder %v194, %v628
      %vm713 = vcmp.eq.f32.partialorder %v194, %v629
      %vm714 = vcmp.eq.f32.partialorder %v194, %v630
      %vm715 = vcmp.eq.f32.partialorder %v194, %v631
      %vm716 = vcmp.eq.f32.partialorder %v194, %v632
      %v717 = vsub.f32 1.0, %v661
      %v718 = vsub.f32 1.0, %v662
      %v719 = vsub.f32 1.0, %v663
      %v720 = vsub.f32 1.0, %v664
      %v721 = vsub.f32 1.0, %v665
      %v722 = vsub.f32 1.0, %v666
      %v723 = vsub.f32 1.0, %v667
      %v724 = vsub.f32 1.0, %v668
      %v725 = vsub.f32 1.0, %v669
      %v726 = vsub.f32 1.0, %v670
      %v727 = vsub.f32 1.0, %v671
      %v728 = vsub.f32 1.0, %v672
      %v729 = vsub.f32 1.0, %v673
      %v730 = vsub.f32 1.0, %v674
      %v731 = vsel %vm703, %v717, 0.0
      %v732 = vsel %vm704, %v718, 0.0
      %v733 = vsel %vm705, %v719, 0.0
      %v734 = vsel %vm706, %v720, 0.0
      %v735 = vsel %vm707, %v721, 0.0
      %v736 = vsel %vm708, %v722, 0.0
      %v737 = vsel %vm709, %v723, 0.0
      %v738 = vsel %vm710, %v724, 0.0
      %v739 = vsel %vm711, %v725, 0.0
      %v740 = vsel %vm712, %v726, 0.0
      %v741 = vsel %vm713, %v727, 0.0
      %v742 = vsel %vm714, %v728, 0.0
      %v743 = vsel %vm715, %v729, 0.0
      %v744 = vsel %vm716, %v730, 0.0
      %vm745 = vcmp.eq.f32.partialorder %v194, %v689
      %vm746 = vcmp.eq.f32.partialorder %v194, %v690
      %vm747 = vcmp.eq.f32.partialorder %v194, %v691
      %vm748 = vcmp.eq.f32.partialorder %v194, %v692
      %vm749 = vcmp.eq.f32.partialorder %v194, %v693
      %vm750 = vcmp.eq.f32.partialorder %v194, %v694
      %vm751 = vcmp.eq.f32.partialorder %v194, %v695
      %vm752 = vcmp.eq.f32.partialorder %v194, %v696
      %vm753 = vcmp.eq.f32.partialorder %v194, %v697
      %vm754 = vcmp.eq.f32.partialorder %v194, %v698
      %vm755 = vcmp.eq.f32.partialorder %v194, %v699
      %vm756 = vcmp.eq.f32.partialorder %v194, %v700
      %vm757 = vcmp.eq.f32.partialorder %v194, %v701
      %vm758 = vcmp.eq.f32.partialorder %v194, %v702
      %v759 = vsel %vm745, %v661, 0.0
      %v760 = vsel %vm746, %v662, 0.0
      %v761 = vsel %vm747, %v663, 0.0
      %v762 = vsel %vm748, %v664, 0.0
      %v763 = vsel %vm749, %v665, 0.0
      %v764 = vsel %vm750, %v666, 0.0
      %v765 = vsel %vm751, %v667, 0.0
      %v766 = vsel %vm752, %v668, 0.0
      %v767 = vsel %vm753, %v669, 0.0
      %v768 = vsel %vm754, %v670, 0.0
      %v769 = vsel %vm755, %v671, 0.0
      %v770 = vsel %vm756, %v672, 0.0
      %v771 = vsel %vm757, %v673, 0.0
      %v772 = vsel %vm758, %v674, 0.0
      %v773 = vadd.f32 %v731, %v759
      %v774 = vadd.f32 %v732, %v760
      %v775 = vadd.f32 %v733, %v761
      %v776 = vadd.f32 %v734, %v762
      %v777 = vadd.f32 %v735, %v763
      %v778 = vadd.f32 %v736, %v764
      %v779 = vadd.f32 %v737, %v765
      %v780 = vadd.f32 %v738, %v766
      %v781 = vadd.f32 %v739, %v767
      %v782 = vadd.f32 %v740, %v768
      %v783 = vadd.f32 %v741, %v769
      %v784 = vadd.f32 %v742, %v770
      %v785 = vadd.f32 %v743, %v771
      %v786 = vadd.f32 %v744, %v772
      %v787 = vsel %vm577, 0.0, %v773
      %v788 = vsel %vm578, 0.0, %v774
      %v789 = vsel %vm579, 0.0, %v775
      %v790 = vsel %vm580, 0.0, %v776
      %v791 = vsel %vm581, 0.0, %v777
      %v792 = vsel %vm582, 0.0, %v778
      %v793 = vsel %vm583, 0.0, %v779
      %v794 = vsel %vm584, 0.0, %v780
      %v795 = vsel %vm585, 0.0, %v781
      %v796 = vsel %vm586, 0.0, %v782
      %v797 = vsel %vm587, 0.0, %v783
      %v798 = vsel %vm588, 0.0, %v784
      %v799 = vsel %vm589, 0.0, %v785
      %v800 = vsel %vm590, 0.0, %v786
      %v801 = vadd.f32 %v500, %v787
      %v802 = vadd.f32 %v501, %v788
      %v803 = vadd.f32 %v502, %v789
      %v804 = vadd.f32 %v503, %v790
      %v805 = vadd.f32 %v504, %v791
      %v806 = vadd.f32 %v505, %v792
      %v807 = vadd.f32 %v506, %v793
      %v808 = vadd.f32 %v507, %v794
      %v809 = vadd.f32 %v508, %v795
      %v810 = vadd.f32 %v509, %v796
      %v811 = vadd.f32 %v510, %v797
      %v812 = vadd.f32 %v511, %v798
      %v813 = vadd.f32 %v512, %v799
      %v814 = vadd.f32 %v513, %v800
      %v815 = vmul.f32 %v801, 0.5
      %v816 = vmul.f32 %v802, 0.5
      %v817 = vmul.f32 %v803, 0.5
      %v818 = vmul.f32 %v804, 0.5
      %v819 = vmul.f32 %v805, 0.5
      %v820 = vmul.f32 %v806, 0.5
      %v821 = vmul.f32 %v807, 0.5
      %v822 = vmul.f32 %v808, 0.5
      %v823 = vmul.f32 %v809, 0.5
      %v824 = vmul.f32 %v810, 0.5
      %v825 = vmul.f32 %v811, 0.5
      %v826 = vmul.f32 %v812, 0.5
      %v827 = vmul.f32 %v813, 0.5
      %v828 = vmul.f32 %v814, 0.5
      %v829 = vlaneseq
      %v830 = vshrl.u32 %v829, 7
      %v831 = vcvt.s32.f32 %v830
      %v832 = vrot.slane %v183, 1
      %v833 = vrot.slane %v183, 2
      %v834 = vrot.slane %v183, 3
      %v835 = vrot.slane %v183, 4
      %v836 = vrot.slane %v183, 5
      %v837 = vrot.slane %v183, 6
      %v838 = vrot.slane %v183, 7
      %v839 = vrot.slane %v184, 1
      %v840 = vrot.slane %v184, 2
      %v841 = vrot.slane %v184, 3
      %v842 = vrot.slane %v184, 4
      %v843 = vrot.slane %v184, 5
      %v844 = vrot.slane %v184, 6
      %v845 = vrot.slane %v184, 7
      %v846 = vadd.f32 %v831, 0.25
      %v847 = vperm.slane %v183, 0
      %v848 = vperm.slane %v832, 0
      %v849 = vperm.slane %v833, 0
      %v850 = vperm.slane %v834, 0
      %v851 = vperm.slane %v835, 0
      %v852 = vperm.slane %v836, 0
      %v853 = vperm.slane %v837, 0
      %v854 = vperm.slane %v838, 0
      %v855 = vperm.slane %v184, 0
      %v856 = vperm.slane %v839, 0
      %v857 = vperm.slane %v840, 0
      %v858 = vperm.slane %v841, 0
      %v859 = vperm.slane %v842, 0
      %v860 = vperm.slane %v843, 0
      %v861 = vperm.slane %v844, 0
      %v862 = vperm.slane %v845, 0
      %863 = vset.pattern.permute.xlu0 2
      %864 = vperm.xlu0 %863, %v847
      %v865 = vpop.permute.xlu0 %864
      %867 = vset.pattern.permute.xlu0 2
      %868 = vperm.xlu0 %867, %v848
      %v869 = vpop.permute.xlu0 %868
      %871 = vset.pattern.permute.xlu0 2
      %872 = vperm.xlu0 %871, %v849
      %v873 = vpop.permute.xlu0 %872
      %875 = vset.pattern.permute.xlu0 2
      %876 = vperm.xlu0 %875, %v850
      %v877 = vpop.permute.xlu0 %876
      %879 = vset.pattern.permute.xlu0 2
      %880 = vperm.xlu0 %879, %v851
      %v881 = vpop.permute.xlu0 %880
      %883 = vset.pattern.permute.xlu0 2
      %884 = vperm.xlu0 %883, %v852
      %v885 = vpop.permute.xlu0 %884
      %887 = vset.pattern.permute.xlu0 2
      %888 = vperm.xlu0 %887, %v853
      %v889 = vpop.permute.xlu0 %888
      %891 = vset.pattern.permute.xlu0 2
      %892 = vperm.xlu0 %891, %v854
      %v893 = vpop.permute.xlu0 %892
      %895 = vset.pattern.permute.xlu0 2
      %896 = vperm.xlu0 %895, %v855
      %v897 = vpop.permute.xlu0 %896
      %899 = vset.pattern.permute.xlu0 2
      %900 = vperm.xlu0 %899, %v856
      %v901 = vpop.permute.xlu0 %900
      %903 = vset.pattern.permute.xlu0 2
      %904 = vperm.xlu0 %903, %v857
      %v905 = vpop.permute.xlu0 %904
      %907 = vset.pattern.permute.xlu0 2
      %908 = vperm.xlu0 %907, %v858
      %v909 = vpop.permute.xlu0 %908
      %911 = vset.pattern.permute.xlu0 2
      %912 = vperm.xlu0 %911, %v859
      %v913 = vpop.permute.xlu0 %912
      %915 = vset.pattern.permute.xlu0 2
      %916 = vperm.xlu0 %915, %v860
      %v917 = vpop.permute.xlu0 %916
      %919 = vset.pattern.permute.xlu0 2
      %920 = vperm.xlu0 %919, %v861
      %v921 = vpop.permute.xlu0 %920
      %923 = vset.pattern.permute.xlu0 2
      %924 = vperm.xlu0 %923, %v862
      %v925 = vpop.permute.xlu0 %924
      %v927 = vmul.f32 %v846, %v865
      %v928 = vmul.f32 %v846, %v869
      %v929 = vmul.f32 %v846, %v873
      %v930 = vmul.f32 %v846, %v877
      %v931 = vmul.f32 %v846, %v881
      %v932 = vmul.f32 %v846, %v885
      %v933 = vmul.f32 %v846, %v889
      %v934 = vmul.f32 %v846, %v893
      %v935 = vmul.f32 %v846, %v897
      %v936 = vmul.f32 %v846, %v901
      %v937 = vmul.f32 %v846, %v905
      %v938 = vmul.f32 %v846, %v909
      %v939 = vmul.f32 %v846, %v913
      %v940 = vmul.f32 %v846, %v917
      %v941 = vmul.f32 %v846, %v921
      %v942 = vmul.f32 %v846, %v925
      %943 = vset.pattern.permute.xlu0 0
      %944 = vperm.xlu0 %943, %v847
      %v945 = vpop.permute.xlu0 %944
      %947 = vset.pattern.permute.xlu0 0
      %948 = vperm.xlu0 %947, %v848
      %v949 = vpop.permute.xlu0 %948
      %951 = vset.pattern.permute.xlu0 0
      %952 = vperm.xlu0 %951, %v849
      %v953 = vpop.permute.xlu0 %952
      %955 = vset.pattern.permute.xlu0 0
      %956 = vperm.xlu0 %955, %v850
      %v957 = vpop.permute.xlu0 %956
      %959 = vset.pattern.permute.xlu0 0
      %960 = vperm.xlu0 %959, %v851
      %v961 = vpop.permute.xlu0 %960
      %963 = vset.pattern.permute.xlu0 0
      %964 = vperm.xlu0 %963, %v852
      %v965 = vpop.permute.xlu0 %964
      %967 = vset.pattern.permute.xlu0 0
      %968 = vperm.xlu0 %967, %v853
      %v969 = vpop.permute.xlu0 %968
      %971 = vset.pattern.permute.xlu0 0
      %972 = vperm.xlu0 %971, %v854
      %v973 = vpop.permute.xlu0 %972
      %975 = vset.pattern.permute.xlu0 0
      %976 = vperm.xlu0 %975, %v855
      %v977 = vpop.permute.xlu0 %976
      %979 = vset.pattern.permute.xlu0 0
      %980 = vperm.xlu0 %979, %v856
      %v981 = vpop.permute.xlu0 %980
      %983 = vset.pattern.permute.xlu0 0
      %984 = vperm.xlu0 %983, %v857
      %v985 = vpop.permute.xlu0 %984
      %987 = vset.pattern.permute.xlu0 0
      %988 = vperm.xlu0 %987, %v858
      %v989 = vpop.permute.xlu0 %988
      %991 = vset.pattern.permute.xlu0 0
      %992 = vperm.xlu0 %991, %v859
      %v993 = vpop.permute.xlu0 %992
      %995 = vset.pattern.permute.xlu0 0
      %996 = vperm.xlu0 %995, %v860
      %v997 = vpop.permute.xlu0 %996
      %999 = vset.pattern.permute.xlu0 0
      %1000 = vperm.xlu0 %999, %v861
      %v1001 = vpop.permute.xlu0 %1000
      %1003 = vset.pattern.permute.xlu0 0
      %1004 = vperm.xlu0 %1003, %v862
      %v1005 = vpop.permute.xlu0 %1004
      %v1007 = vadd.f32 %v945, %v927
      %v1008 = vadd.f32 %v949, %v928
      %v1009 = vadd.f32 %v953, %v929
      %v1010 = vadd.f32 %v957, %v930
      %v1011 = vadd.f32 %v961, %v931
      %v1012 = vadd.f32 %v965, %v932
      %v1013 = vadd.f32 %v969, %v933
      %v1014 = vadd.f32 %v973, %v934
      %v1015 = vadd.f32 %v977, %v935
      %v1016 = vadd.f32 %v981, %v936
      %v1017 = vadd.f32 %v985, %v937
      %v1018 = vadd.f32 %v989, %v938
      %v1019 = vadd.f32 %v993, %v939
      %v1020 = vadd.f32 %v997, %v940
      %v1021 = vadd.f32 %v1001, %v941
      %v1022 = vadd.f32 %v1005, %v942
      %vm1023 = vcmp.lt.f32.partialorder %v1007, -1.0
      %vm1024 = vcmp.lt.f32.partialorder %v1008, -1.0
      %vm1025 = vcmp.lt.f32.partialorder %v1009, -1.0
      %vm1026 = vcmp.lt.f32.partialorder %v1010, -1.0
      %vm1027 = vcmp.lt.f32.partialorder %v1011, -1.0
      %vm1028 = vcmp.lt.f32.partialorder %v1012, -1.0
      %vm1029 = vcmp.lt.f32.partialorder %v1013, -1.0
      %vm1030 = vcmp.lt.f32.partialorder %v1014, -1.0
      %vm1031 = vcmp.lt.f32.partialorder %v1015, -1.0
      %vm1032 = vcmp.lt.f32.partialorder %v1016, -1.0
      %vm1033 = vcmp.lt.f32.partialorder %v1017, -1.0
      %vm1034 = vcmp.lt.f32.partialorder %v1018, -1.0
      %vm1035 = vcmp.lt.f32.partialorder %v1019, -1.0
      %vm1036 = vcmp.lt.f32.partialorder %v1020, -1.0
      %vm1037 = vcmp.lt.f32.partialorder %v1021, -1.0
      %vm1038 = vcmp.lt.f32.partialorder %v1022, -1.0
      %vm1039 = vcmp.gt.f32.partialorder %v1007, 16.0
      %vm1040 = vcmp.gt.f32.partialorder %v1008, 16.0
      %vm1041 = vcmp.gt.f32.partialorder %v1009, 16.0
      %vm1042 = vcmp.gt.f32.partialorder %v1010, 16.0
      %vm1043 = vcmp.gt.f32.partialorder %v1011, 16.0
      %vm1044 = vcmp.gt.f32.partialorder %v1012, 16.0
      %vm1045 = vcmp.gt.f32.partialorder %v1013, 16.0
      %vm1046 = vcmp.gt.f32.partialorder %v1014, 16.0
      %vm1047 = vcmp.gt.f32.partialorder %v1015, 16.0
      %vm1048 = vcmp.gt.f32.partialorder %v1016, 16.0
      %vm1049 = vcmp.gt.f32.partialorder %v1017, 16.0
      %vm1050 = vcmp.gt.f32.partialorder %v1018, 16.0
      %vm1051 = vcmp.gt.f32.partialorder %v1019, 16.0
      %vm1052 = vcmp.gt.f32.partialorder %v1020, 16.0
      %vm1053 = vcmp.gt.f32.partialorder %v1021, 16.0
      %vm1054 = vcmp.gt.f32.partialorder %v1022, 16.0
      %vm1055 = vmor %vm1023, %vm1039
      %vm1056 = vmor %vm1024, %vm1040
      %vm1057 = vmor %vm1025, %vm1041
      %vm1058 = vmor %vm1026, %vm1042
      %vm1059 = vmor %vm1027, %vm1043
      %vm1060 = vmor %vm1028, %vm1044
      %vm1061 = vmor %vm1029, %vm1045
      %vm1062 = vmor %vm1030, %vm1046
      %vm1063 = vmor %vm1031, %vm1047
      %vm1064 = vmor %vm1032, %vm1048
      %vm1065 = vmor %vm1033, %vm1049
      %vm1066 = vmor %vm1034, %vm1050
      %vm1067 = vmor %vm1035, %vm1051
      %vm1068 = vmor %vm1036, %vm1052
      %vm1069 = vmor %vm1037, %vm1053
      %vm1070 = vmor %vm1038, %vm1054
      %v1071 = vmax.f32 %v1007, 0.0
      %v1072 = vmax.f32 %v1008, 0.0
      %v1073 = vmax.f32 %v1009, 0.0
      %v1074 = vmax.f32 %v1010, 0.0
      %v1075 = vmax.f32 %v1011, 0.0
      %v1076 = vmax.f32 %v1012, 0.0
      %v1077 = vmax.f32 %v1013, 0.0
      %v1078 = vmax.f32 %v1014, 0.0
      %v1079 = vmax.f32 %v1015, 0.0
      %v1080 = vmax.f32 %v1016, 0.0
      %v1081 = vmax.f32 %v1017, 0.0
      %v1082 = vmax.f32 %v1018, 0.0
      %v1083 = vmax.f32 %v1019, 0.0
      %v1084 = vmax.f32 %v1020, 0.0
      %v1085 = vmax.f32 %v1021, 0.0
      %v1086 = vmax.f32 %v1022, 0.0
      %v1087 = vfloor.f32 %v1071
      %v1088 = vfloor.f32 %v1072
      %v1089 = vfloor.f32 %v1073
      %v1090 = vfloor.f32 %v1074
      %v1091 = vfloor.f32 %v1075
      %v1092 = vfloor.f32 %v1076
      %v1093 = vfloor.f32 %v1077
      %v1094 = vfloor.f32 %v1078
      %v1095 = vfloor.f32 %v1079
      %v1096 = vfloor.f32 %v1080
      %v1097 = vfloor.f32 %v1081
      %v1098 = vfloor.f32 %v1082
      %v1099 = vfloor.f32 %v1083
      %v1100 = vfloor.f32 %v1084
      %v1101 = vfloor.f32 %v1085
      %v1102 = vfloor.f32 %v1086
      %v1103 = vmin.f32 %v1087, 15.0
      %v1104 = vmin.f32 %v1088, 15.0
      %v1105 = vmin.f32 %v1089, 15.0
      %v1106 = vmin.f32 %v1090, 15.0
      %v1107 = vmin.f32 %v1091, 15.0
      %v1108 = vmin.f32 %v1092, 15.0
      %v1109 = vmin.f32 %v1093, 15.0
      %v1110 = vmin.f32 %v1094, 15.0
      %v1111 = vmin.f32 %v1095, 15.0
      %v1112 = vmin.f32 %v1096, 15.0
      %v1113 = vmin.f32 %v1097, 15.0
      %v1114 = vmin.f32 %v1098, 15.0
      %v1115 = vmin.f32 %v1099, 15.0
      %v1116 = vmin.f32 %v1100, 15.0
      %v1117 = vmin.f32 %v1101, 15.0
      %v1118 = vmin.f32 %v1102, 15.0
      %vm1119 = vcmp.ge.f32.partialorder %v1087, 15.0
      %vm1120 = vcmp.ge.f32.partialorder %v1088, 15.0
      %vm1121 = vcmp.ge.f32.partialorder %v1089, 15.0
      %vm1122 = vcmp.ge.f32.partialorder %v1090, 15.0
      %vm1123 = vcmp.ge.f32.partialorder %v1091, 15.0
      %vm1124 = vcmp.ge.f32.partialorder %v1092, 15.0
      %vm1125 = vcmp.ge.f32.partialorder %v1093, 15.0
      %vm1126 = vcmp.ge.f32.partialorder %v1094, 15.0
      %vm1127 = vcmp.ge.f32.partialorder %v1095, 15.0
      %vm1128 = vcmp.ge.f32.partialorder %v1096, 15.0
      %vm1129 = vcmp.ge.f32.partialorder %v1097, 15.0
      %vm1130 = vcmp.ge.f32.partialorder %v1098, 15.0
      %vm1131 = vcmp.ge.f32.partialorder %v1099, 15.0
      %vm1132 = vcmp.ge.f32.partialorder %v1100, 15.0
      %vm1133 = vcmp.ge.f32.partialorder %v1101, 15.0
      %vm1134 = vcmp.ge.f32.partialorder %v1102, 15.0
      %v1135 = vsub.f32 %v1071, %v1103
      %v1136 = vsub.f32 %v1072, %v1104
      %v1137 = vsub.f32 %v1073, %v1105
      %v1138 = vsub.f32 %v1074, %v1106
      %v1139 = vsub.f32 %v1075, %v1107
      %v1140 = vsub.f32 %v1076, %v1108
      %v1141 = vsub.f32 %v1077, %v1109
      %v1142 = vsub.f32 %v1078, %v1110
      %v1143 = vsub.f32 %v1079, %v1111
      %v1144 = vsub.f32 %v1080, %v1112
      %v1145 = vsub.f32 %v1081, %v1113
      %v1146 = vsub.f32 %v1082, %v1114
      %v1147 = vsub.f32 %v1083, %v1115
      %v1148 = vsub.f32 %v1084, %v1116
      %v1149 = vsub.f32 %v1085, %v1117
      %v1150 = vsub.f32 %v1086, %v1118
      %v1151 = vsel %vm1119, 0.0, %v1135
      %v1152 = vsel %vm1120, 0.0, %v1136
      %v1153 = vsel %vm1121, 0.0, %v1137
      %v1154 = vsel %vm1122, 0.0, %v1138
      %v1155 = vsel %vm1123, 0.0, %v1139
      %v1156 = vsel %vm1124, 0.0, %v1140
      %v1157 = vsel %vm1125, 0.0, %v1141
      %v1158 = vsel %vm1126, 0.0, %v1142
      %v1159 = vsel %vm1127, 0.0, %v1143
      %v1160 = vsel %vm1128, 0.0, %v1144
      %v1161 = vsel %vm1129, 0.0, %v1145
      %v1162 = vsel %vm1130, 0.0, %v1146
      %v1163 = vsel %vm1131, 0.0, %v1147
      %v1164 = vsel %vm1132, 0.0, %v1148
      %v1165 = vsel %vm1133, 0.0, %v1149
      %v1166 = vsel %vm1134, 0.0, %v1150
      %v1167 = vadd.f32 %v1103, 1.0
      %v1168 = vadd.f32 %v1104, 1.0
      %v1169 = vadd.f32 %v1105, 1.0
      %v1170 = vadd.f32 %v1106, 1.0
      %v1171 = vadd.f32 %v1107, 1.0
      %v1172 = vadd.f32 %v1108, 1.0
      %v1173 = vadd.f32 %v1109, 1.0
      %v1174 = vadd.f32 %v1110, 1.0
      %v1175 = vadd.f32 %v1111, 1.0
      %v1176 = vadd.f32 %v1112, 1.0
      %v1177 = vadd.f32 %v1113, 1.0
      %v1178 = vadd.f32 %v1114, 1.0
      %v1179 = vadd.f32 %v1115, 1.0
      %v1180 = vadd.f32 %v1116, 1.0
      %v1181 = vadd.f32 %v1117, 1.0
      %v1182 = vadd.f32 %v1118, 1.0
      %v1183 = vmin.f32 %v1167, 15.0
      %v1184 = vmin.f32 %v1168, 15.0
      %v1185 = vmin.f32 %v1169, 15.0
      %v1186 = vmin.f32 %v1170, 15.0
      %v1187 = vmin.f32 %v1171, 15.0
      %v1188 = vmin.f32 %v1172, 15.0
      %v1189 = vmin.f32 %v1173, 15.0
      %v1190 = vmin.f32 %v1174, 15.0
      %v1191 = vmin.f32 %v1175, 15.0
      %v1192 = vmin.f32 %v1176, 15.0
      %v1193 = vmin.f32 %v1177, 15.0
      %v1194 = vmin.f32 %v1178, 15.0
      %v1195 = vmin.f32 %v1179, 15.0
      %v1196 = vmin.f32 %v1180, 15.0
      %v1197 = vmin.f32 %v1181, 15.0
      %v1198 = vmin.f32 %v1182, 15.0
      %vm1199 = vcmp.eq.f32.partialorder %v194, %v1103
      %vm1200 = vcmp.eq.f32.partialorder %v194, %v1104
      %vm1201 = vcmp.eq.f32.partialorder %v194, %v1105
      %vm1202 = vcmp.eq.f32.partialorder %v194, %v1106
      %vm1203 = vcmp.eq.f32.partialorder %v194, %v1107
      %vm1204 = vcmp.eq.f32.partialorder %v194, %v1108
      %vm1205 = vcmp.eq.f32.partialorder %v194, %v1109
      %vm1206 = vcmp.eq.f32.partialorder %v194, %v1110
      %vm1207 = vcmp.eq.f32.partialorder %v194, %v1111
      %vm1208 = vcmp.eq.f32.partialorder %v194, %v1112
      %vm1209 = vcmp.eq.f32.partialorder %v194, %v1113
      %vm1210 = vcmp.eq.f32.partialorder %v194, %v1114
      %vm1211 = vcmp.eq.f32.partialorder %v194, %v1115
      %vm1212 = vcmp.eq.f32.partialorder %v194, %v1116
      %vm1213 = vcmp.eq.f32.partialorder %v194, %v1117
      %vm1214 = vcmp.eq.f32.partialorder %v194, %v1118
      %v1215 = vsub.f32 1.0, %v1151
      %v1216 = vsub.f32 1.0, %v1152
      %v1217 = vsub.f32 1.0, %v1153
      %v1218 = vsub.f32 1.0, %v1154
      %v1219 = vsub.f32 1.0, %v1155
      %v1220 = vsub.f32 1.0, %v1156
      %v1221 = vsub.f32 1.0, %v1157
      %v1222 = vsub.f32 1.0, %v1158
      %v1223 = vsub.f32 1.0, %v1159
      %v1224 = vsub.f32 1.0, %v1160
      %v1225 = vsub.f32 1.0, %v1161
      %v1226 = vsub.f32 1.0, %v1162
      %v1227 = vsub.f32 1.0, %v1163
      %v1228 = vsub.f32 1.0, %v1164
      %v1229 = vsub.f32 1.0, %v1165
      %v1230 = vsub.f32 1.0, %v1166
      %v1231 = vsel %vm1199, %v1215, 0.0
      %v1232 = vsel %vm1200, %v1216, 0.0
      %v1233 = vsel %vm1201, %v1217, 0.0
      %v1234 = vsel %vm1202, %v1218, 0.0
      %v1235 = vsel %vm1203, %v1219, 0.0
      %v1236 = vsel %vm1204, %v1220, 0.0
      %v1237 = vsel %vm1205, %v1221, 0.0
      %v1238 = vsel %vm1206, %v1222, 0.0
      %v1239 = vsel %vm1207, %v1223, 0.0
      %v1240 = vsel %vm1208, %v1224, 0.0
      %v1241 = vsel %vm1209, %v1225, 0.0
      %v1242 = vsel %vm1210, %v1226, 0.0
      %v1243 = vsel %vm1211, %v1227, 0.0
      %v1244 = vsel %vm1212, %v1228, 0.0
      %v1245 = vsel %vm1213, %v1229, 0.0
      %v1246 = vsel %vm1214, %v1230, 0.0
      %vm1247 = vcmp.eq.f32.partialorder %v194, %v1183
      %vm1248 = vcmp.eq.f32.partialorder %v194, %v1184
      %vm1249 = vcmp.eq.f32.partialorder %v194, %v1185
      %vm1250 = vcmp.eq.f32.partialorder %v194, %v1186
      %vm1251 = vcmp.eq.f32.partialorder %v194, %v1187
      %vm1252 = vcmp.eq.f32.partialorder %v194, %v1188
      %vm1253 = vcmp.eq.f32.partialorder %v194, %v1189
      %vm1254 = vcmp.eq.f32.partialorder %v194, %v1190
      %vm1255 = vcmp.eq.f32.partialorder %v194, %v1191
      %vm1256 = vcmp.eq.f32.partialorder %v194, %v1192
      %vm1257 = vcmp.eq.f32.partialorder %v194, %v1193
      %vm1258 = vcmp.eq.f32.partialorder %v194, %v1194
      %vm1259 = vcmp.eq.f32.partialorder %v194, %v1195
      %vm1260 = vcmp.eq.f32.partialorder %v194, %v1196
      %vm1261 = vcmp.eq.f32.partialorder %v194, %v1197
      %vm1262 = vcmp.eq.f32.partialorder %v194, %v1198
      %v1263 = vsel %vm1247, %v1151, 0.0
      %v1264 = vsel %vm1248, %v1152, 0.0
      %v1265 = vsel %vm1249, %v1153, 0.0
      %v1266 = vsel %vm1250, %v1154, 0.0
      %v1267 = vsel %vm1251, %v1155, 0.0
      %v1268 = vsel %vm1252, %v1156, 0.0
      %v1269 = vsel %vm1253, %v1157, 0.0
      %v1270 = vsel %vm1254, %v1158, 0.0
      %v1271 = vsel %vm1255, %v1159, 0.0
      %v1272 = vsel %vm1256, %v1160, 0.0
      %v1273 = vsel %vm1257, %v1161, 0.0
      %v1274 = vsel %vm1258, %v1162, 0.0
      %v1275 = vsel %vm1259, %v1163, 0.0
      %v1276 = vsel %vm1260, %v1164, 0.0
      %v1277 = vsel %vm1261, %v1165, 0.0
      %v1278 = vsel %vm1262, %v1166, 0.0
      %v1279 = vadd.f32 %v1231, %v1263
      %v1280 = vadd.f32 %v1232, %v1264
      %v1281 = vadd.f32 %v1233, %v1265
      %v1282 = vadd.f32 %v1234, %v1266
      %v1283 = vadd.f32 %v1235, %v1267
      %v1284 = vadd.f32 %v1236, %v1268
      %v1285 = vadd.f32 %v1237, %v1269
      %v1286 = vadd.f32 %v1238, %v1270
      %v1287 = vadd.f32 %v1239, %v1271
      %v1288 = vadd.f32 %v1240, %v1272
      %v1289 = vadd.f32 %v1241, %v1273
      %v1290 = vadd.f32 %v1242, %v1274
      %v1291 = vadd.f32 %v1243, %v1275
      %v1292 = vadd.f32 %v1244, %v1276
      %v1293 = vadd.f32 %v1245, %v1277
      %v1294 = vadd.f32 %v1246, %v1278
      %v1295 = vsel %vm1055, 0.0, %v1279
      %v1296 = vsel %vm1056, 0.0, %v1280
      %v1297 = vsel %vm1057, 0.0, %v1281
      %v1298 = vsel %vm1058, 0.0, %v1282
      %v1299 = vsel %vm1059, 0.0, %v1283
      %v1300 = vsel %vm1060, 0.0, %v1284
      %v1301 = vsel %vm1061, 0.0, %v1285
      %v1302 = vsel %vm1062, 0.0, %v1286
      %v1303 = vsel %vm1063, 0.0, %v1287
      %v1304 = vsel %vm1064, 0.0, %v1288
      %v1305 = vsel %vm1065, 0.0, %v1289
      %v1306 = vsel %vm1066, 0.0, %v1290
      %v1307 = vsel %vm1067, 0.0, %v1291
      %v1308 = vsel %vm1068, 0.0, %v1292
      %v1309 = vsel %vm1069, 0.0, %v1293
      %v1310 = vsel %vm1070, 0.0, %v1294
      %v1311 = vadd.f32 %v1295, 0.0
      %v1312 = vadd.f32 %v1296, 0.0
      %v1313 = vadd.f32 %v1297, 0.0
      %v1314 = vadd.f32 %v1298, 0.0
      %v1315 = vadd.f32 %v1299, 0.0
      %v1316 = vadd.f32 %v1300, 0.0
      %v1317 = vadd.f32 %v1301, 0.0
      %v1318 = vadd.f32 %v1302, 0.0
      %v1319 = vadd.f32 %v1303, 0.0
      %v1320 = vadd.f32 %v1304, 0.0
      %v1321 = vadd.f32 %v1305, 0.0
      %v1322 = vadd.f32 %v1306, 0.0
      %v1323 = vadd.f32 %v1307, 0.0
      %v1324 = vadd.f32 %v1308, 0.0
      %v1325 = vadd.f32 %v1309, 0.0
      %v1326 = vadd.f32 %v1310, 0.0
      %v1327 = vadd.f32 %v831, 0.75
      %v1328 = vmul.f32 %v1327, %v865
      %v1329 = vmul.f32 %v1327, %v869
      %v1330 = vmul.f32 %v1327, %v873
      %v1331 = vmul.f32 %v1327, %v877
      %v1332 = vmul.f32 %v1327, %v881
      %v1333 = vmul.f32 %v1327, %v885
      %v1334 = vmul.f32 %v1327, %v889
      %v1335 = vmul.f32 %v1327, %v893
      %v1336 = vmul.f32 %v1327, %v897
      %v1337 = vmul.f32 %v1327, %v901
      %v1338 = vmul.f32 %v1327, %v905
      %v1339 = vmul.f32 %v1327, %v909
      %v1340 = vmul.f32 %v1327, %v913
      %v1341 = vmul.f32 %v1327, %v917
      %v1342 = vmul.f32 %v1327, %v921
      %v1343 = vmul.f32 %v1327, %v925
      %v1344 = vadd.f32 %v945, %v1328
      %v1345 = vadd.f32 %v949, %v1329
      %v1346 = vadd.f32 %v953, %v1330
      %v1347 = vadd.f32 %v957, %v1331
      %v1348 = vadd.f32 %v961, %v1332
      %v1349 = vadd.f32 %v965, %v1333
      %v1350 = vadd.f32 %v969, %v1334
      %v1351 = vadd.f32 %v973, %v1335
      %v1352 = vadd.f32 %v977, %v1336
      %v1353 = vadd.f32 %v981, %v1337
      %v1354 = vadd.f32 %v985, %v1338
      %v1355 = vadd.f32 %v989, %v1339
      %v1356 = vadd.f32 %v993, %v1340
      %v1357 = vadd.f32 %v997, %v1341
      %v1358 = vadd.f32 %v1001, %v1342
      %v1359 = vadd.f32 %v1005, %v1343
      %vm1360 = vcmp.lt.f32.partialorder %v1344, -1.0
      %vm1361 = vcmp.lt.f32.partialorder %v1345, -1.0
      %vm1362 = vcmp.lt.f32.partialorder %v1346, -1.0
      %vm1363 = vcmp.lt.f32.partialorder %v1347, -1.0
      %vm1364 = vcmp.lt.f32.partialorder %v1348, -1.0
      %vm1365 = vcmp.lt.f32.partialorder %v1349, -1.0
      %vm1366 = vcmp.lt.f32.partialorder %v1350, -1.0
      %vm1367 = vcmp.lt.f32.partialorder %v1351, -1.0
      %vm1368 = vcmp.lt.f32.partialorder %v1352, -1.0
      %vm1369 = vcmp.lt.f32.partialorder %v1353, -1.0
      %vm1370 = vcmp.lt.f32.partialorder %v1354, -1.0
      %vm1371 = vcmp.lt.f32.partialorder %v1355, -1.0
      %vm1372 = vcmp.lt.f32.partialorder %v1356, -1.0
      %vm1373 = vcmp.lt.f32.partialorder %v1357, -1.0
      %vm1374 = vcmp.lt.f32.partialorder %v1358, -1.0
      %vm1375 = vcmp.lt.f32.partialorder %v1359, -1.0
      %vm1376 = vcmp.gt.f32.partialorder %v1344, 16.0
      %vm1377 = vcmp.gt.f32.partialorder %v1345, 16.0
      %vm1378 = vcmp.gt.f32.partialorder %v1346, 16.0
      %vm1379 = vcmp.gt.f32.partialorder %v1347, 16.0
      %vm1380 = vcmp.gt.f32.partialorder %v1348, 16.0
      %vm1381 = vcmp.gt.f32.partialorder %v1349, 16.0
      %vm1382 = vcmp.gt.f32.partialorder %v1350, 16.0
      %vm1383 = vcmp.gt.f32.partialorder %v1351, 16.0
      %vm1384 = vcmp.gt.f32.partialorder %v1352, 16.0
      %vm1385 = vcmp.gt.f32.partialorder %v1353, 16.0
      %vm1386 = vcmp.gt.f32.partialorder %v1354, 16.0
      %vm1387 = vcmp.gt.f32.partialorder %v1355, 16.0
      %vm1388 = vcmp.gt.f32.partialorder %v1356, 16.0
      %vm1389 = vcmp.gt.f32.partialorder %v1357, 16.0
      %vm1390 = vcmp.gt.f32.partialorder %v1358, 16.0
      %vm1391 = vcmp.gt.f32.partialorder %v1359, 16.0
      %vm1392 = vmor %vm1360, %vm1376
      %vm1393 = vmor %vm1361, %vm1377
      %vm1394 = vmor %vm1362, %vm1378
      %vm1395 = vmor %vm1363, %vm1379
      %vm1396 = vmor %vm1364, %vm1380
      %vm1397 = vmor %vm1365, %vm1381
      %vm1398 = vmor %vm1366, %vm1382
      %vm1399 = vmor %vm1367, %vm1383
      %vm1400 = vmor %vm1368, %vm1384
      %vm1401 = vmor %vm1369, %vm1385
      %vm1402 = vmor %vm1370, %vm1386
      %vm1403 = vmor %vm1371, %vm1387
      %vm1404 = vmor %vm1372, %vm1388
      %vm1405 = vmor %vm1373, %vm1389
      %vm1406 = vmor %vm1374, %vm1390
      %vm1407 = vmor %vm1375, %vm1391
      %v1408 = vmax.f32 %v1344, 0.0
      %v1409 = vmax.f32 %v1345, 0.0
      %v1410 = vmax.f32 %v1346, 0.0
      %v1411 = vmax.f32 %v1347, 0.0
      %v1412 = vmax.f32 %v1348, 0.0
      %v1413 = vmax.f32 %v1349, 0.0
      %v1414 = vmax.f32 %v1350, 0.0
      %v1415 = vmax.f32 %v1351, 0.0
      %v1416 = vmax.f32 %v1352, 0.0
      %v1417 = vmax.f32 %v1353, 0.0
      %v1418 = vmax.f32 %v1354, 0.0
      %v1419 = vmax.f32 %v1355, 0.0
      %v1420 = vmax.f32 %v1356, 0.0
      %v1421 = vmax.f32 %v1357, 0.0
      %v1422 = vmax.f32 %v1358, 0.0
      %v1423 = vmax.f32 %v1359, 0.0
      %v1424 = vfloor.f32 %v1408
      %v1425 = vfloor.f32 %v1409
      %v1426 = vfloor.f32 %v1410
      %v1427 = vfloor.f32 %v1411
      %v1428 = vfloor.f32 %v1412
      %v1429 = vfloor.f32 %v1413
      %v1430 = vfloor.f32 %v1414
      %v1431 = vfloor.f32 %v1415
      %v1432 = vfloor.f32 %v1416
      %v1433 = vfloor.f32 %v1417
      %v1434 = vfloor.f32 %v1418
      %v1435 = vfloor.f32 %v1419
      %v1436 = vfloor.f32 %v1420
      %v1437 = vfloor.f32 %v1421
      %v1438 = vfloor.f32 %v1422
      %v1439 = vfloor.f32 %v1423
      %v1440 = vmin.f32 %v1424, 15.0
      %v1441 = vmin.f32 %v1425, 15.0
      %v1442 = vmin.f32 %v1426, 15.0
      %v1443 = vmin.f32 %v1427, 15.0
      %v1444 = vmin.f32 %v1428, 15.0
      %v1445 = vmin.f32 %v1429, 15.0
      %v1446 = vmin.f32 %v1430, 15.0
      %v1447 = vmin.f32 %v1431, 15.0
      %v1448 = vmin.f32 %v1432, 15.0
      %v1449 = vmin.f32 %v1433, 15.0
      %v1450 = vmin.f32 %v1434, 15.0
      %v1451 = vmin.f32 %v1435, 15.0
      %v1452 = vmin.f32 %v1436, 15.0
      %v1453 = vmin.f32 %v1437, 15.0
      %v1454 = vmin.f32 %v1438, 15.0
      %v1455 = vmin.f32 %v1439, 15.0
      %vm1456 = vcmp.ge.f32.partialorder %v1424, 15.0
      %vm1457 = vcmp.ge.f32.partialorder %v1425, 15.0
      %vm1458 = vcmp.ge.f32.partialorder %v1426, 15.0
      %vm1459 = vcmp.ge.f32.partialorder %v1427, 15.0
      %vm1460 = vcmp.ge.f32.partialorder %v1428, 15.0
      %vm1461 = vcmp.ge.f32.partialorder %v1429, 15.0
      %vm1462 = vcmp.ge.f32.partialorder %v1430, 15.0
      %vm1463 = vcmp.ge.f32.partialorder %v1431, 15.0
      %vm1464 = vcmp.ge.f32.partialorder %v1432, 15.0
      %vm1465 = vcmp.ge.f32.partialorder %v1433, 15.0
      %vm1466 = vcmp.ge.f32.partialorder %v1434, 15.0
      %vm1467 = vcmp.ge.f32.partialorder %v1435, 15.0
      %vm1468 = vcmp.ge.f32.partialorder %v1436, 15.0
      %vm1469 = vcmp.ge.f32.partialorder %v1437, 15.0
      %vm1470 = vcmp.ge.f32.partialorder %v1438, 15.0
      %vm1471 = vcmp.ge.f32.partialorder %v1439, 15.0
      %v1472 = vsub.f32 %v1408, %v1440
      %v1473 = vsub.f32 %v1409, %v1441
      %v1474 = vsub.f32 %v1410, %v1442
      %v1475 = vsub.f32 %v1411, %v1443
      %v1476 = vsub.f32 %v1412, %v1444
      %v1477 = vsub.f32 %v1413, %v1445
      %v1478 = vsub.f32 %v1414, %v1446
      %v1479 = vsub.f32 %v1415, %v1447
      %v1480 = vsub.f32 %v1416, %v1448
      %v1481 = vsub.f32 %v1417, %v1449
      %v1482 = vsub.f32 %v1418, %v1450
      %v1483 = vsub.f32 %v1419, %v1451
      %v1484 = vsub.f32 %v1420, %v1452
      %v1485 = vsub.f32 %v1421, %v1453
      %v1486 = vsub.f32 %v1422, %v1454
      %v1487 = vsub.f32 %v1423, %v1455
      %v1488 = vsel %vm1456, 0.0, %v1472
      %v1489 = vsel %vm1457, 0.0, %v1473
      %v1490 = vsel %vm1458, 0.0, %v1474
      %v1491 = vsel %vm1459, 0.0, %v1475
      %v1492 = vsel %vm1460, 0.0, %v1476
      %v1493 = vsel %vm1461, 0.0, %v1477
      %v1494 = vsel %vm1462, 0.0, %v1478
      %v1495 = vsel %vm1463, 0.0, %v1479
      %v1496 = vsel %vm1464, 0.0, %v1480
      %v1497 = vsel %vm1465, 0.0, %v1481
      %v1498 = vsel %vm1466, 0.0, %v1482
      %v1499 = vsel %vm1467, 0.0, %v1483
      %v1500 = vsel %vm1468, 0.0, %v1484
      %v1501 = vsel %vm1469, 0.0, %v1485
      %v1502 = vsel %vm1470, 0.0, %v1486
      %v1503 = vsel %vm1471, 0.0, %v1487
      %v1504 = vadd.f32 %v1440, 1.0
      %v1505 = vadd.f32 %v1441, 1.0
      %v1506 = vadd.f32 %v1442, 1.0
      %v1507 = vadd.f32 %v1443, 1.0
      %v1508 = vadd.f32 %v1444, 1.0
      %v1509 = vadd.f32 %v1445, 1.0
      %v1510 = vadd.f32 %v1446, 1.0
      %v1511 = vadd.f32 %v1447, 1.0
      %v1512 = vadd.f32 %v1448, 1.0
      %v1513 = vadd.f32 %v1449, 1.0
      %v1514 = vadd.f32 %v1450, 1.0
      %v1515 = vadd.f32 %v1451, 1.0
      %v1516 = vadd.f32 %v1452, 1.0
      %v1517 = vadd.f32 %v1453, 1.0
      %v1518 = vadd.f32 %v1454, 1.0
      %v1519 = vadd.f32 %v1455, 1.0
      %v1520 = vmin.f32 %v1504, 15.0
      %v1521 = vmin.f32 %v1505, 15.0
      %v1522 = vmin.f32 %v1506, 15.0
      %v1523 = vmin.f32 %v1507, 15.0
      %v1524 = vmin.f32 %v1508, 15.0
      %v1525 = vmin.f32 %v1509, 15.0
      %v1526 = vmin.f32 %v1510, 15.0
      %v1527 = vmin.f32 %v1511, 15.0
      %v1528 = vmin.f32 %v1512, 15.0
      %v1529 = vmin.f32 %v1513, 15.0
      %v1530 = vmin.f32 %v1514, 15.0
      %v1531 = vmin.f32 %v1515, 15.0
      %v1532 = vmin.f32 %v1516, 15.0
      %v1533 = vmin.f32 %v1517, 15.0
      %v1534 = vmin.f32 %v1518, 15.0
      %v1535 = vmin.f32 %v1519, 15.0
      %vm1536 = vcmp.eq.f32.partialorder %v194, %v1440
      %vm1537 = vcmp.eq.f32.partialorder %v194, %v1441
      %vm1538 = vcmp.eq.f32.partialorder %v194, %v1442
      %vm1539 = vcmp.eq.f32.partialorder %v194, %v1443
      %vm1540 = vcmp.eq.f32.partialorder %v194, %v1444
      %vm1541 = vcmp.eq.f32.partialorder %v194, %v1445
      %vm1542 = vcmp.eq.f32.partialorder %v194, %v1446
      %vm1543 = vcmp.eq.f32.partialorder %v194, %v1447
      %vm1544 = vcmp.eq.f32.partialorder %v194, %v1448
      %vm1545 = vcmp.eq.f32.partialorder %v194, %v1449
      %vm1546 = vcmp.eq.f32.partialorder %v194, %v1450
      %vm1547 = vcmp.eq.f32.partialorder %v194, %v1451
      %vm1548 = vcmp.eq.f32.partialorder %v194, %v1452
      %vm1549 = vcmp.eq.f32.partialorder %v194, %v1453
      %vm1550 = vcmp.eq.f32.partialorder %v194, %v1454
      %vm1551 = vcmp.eq.f32.partialorder %v194, %v1455
      %v1552 = vsub.f32 1.0, %v1488
      %v1553 = vsub.f32 1.0, %v1489
      %v1554 = vsub.f32 1.0, %v1490
      %v1555 = vsub.f32 1.0, %v1491
      %v1556 = vsub.f32 1.0, %v1492
      %v1557 = vsub.f32 1.0, %v1493
      %v1558 = vsub.f32 1.0, %v1494
      %v1559 = vsub.f32 1.0, %v1495
      %v1560 = vsub.f32 1.0, %v1496
      %v1561 = vsub.f32 1.0, %v1497
      %v1562 = vsub.f32 1.0, %v1498
      %v1563 = vsub.f32 1.0, %v1499
      %v1564 = vsub.f32 1.0, %v1500
      %v1565 = vsub.f32 1.0, %v1501
      %v1566 = vsub.f32 1.0, %v1502
      %v1567 = vsub.f32 1.0, %v1503
      %v1568 = vsel %vm1536, %v1552, 0.0
      %v1569 = vsel %vm1537, %v1553, 0.0
      %v1570 = vsel %vm1538, %v1554, 0.0
      %v1571 = vsel %vm1539, %v1555, 0.0
      %v1572 = vsel %vm1540, %v1556, 0.0
      %v1573 = vsel %vm1541, %v1557, 0.0
      %v1574 = vsel %vm1542, %v1558, 0.0
      %v1575 = vsel %vm1543, %v1559, 0.0
      %v1576 = vsel %vm1544, %v1560, 0.0
      %v1577 = vsel %vm1545, %v1561, 0.0
      %v1578 = vsel %vm1546, %v1562, 0.0
      %v1579 = vsel %vm1547, %v1563, 0.0
      %v1580 = vsel %vm1548, %v1564, 0.0
      %v1581 = vsel %vm1549, %v1565, 0.0
      %v1582 = vsel %vm1550, %v1566, 0.0
      %v1583 = vsel %vm1551, %v1567, 0.0
      %vm1584 = vcmp.eq.f32.partialorder %v194, %v1520
      %vm1585 = vcmp.eq.f32.partialorder %v194, %v1521
      %vm1586 = vcmp.eq.f32.partialorder %v194, %v1522
      %vm1587 = vcmp.eq.f32.partialorder %v194, %v1523
      %vm1588 = vcmp.eq.f32.partialorder %v194, %v1524
      %vm1589 = vcmp.eq.f32.partialorder %v194, %v1525
      %vm1590 = vcmp.eq.f32.partialorder %v194, %v1526
      %vm1591 = vcmp.eq.f32.partialorder %v194, %v1527
      %vm1592 = vcmp.eq.f32.partialorder %v194, %v1528
      %vm1593 = vcmp.eq.f32.partialorder %v194, %v1529
      %vm1594 = vcmp.eq.f32.partialorder %v194, %v1530
      %vm1595 = vcmp.eq.f32.partialorder %v194, %v1531
      %vm1596 = vcmp.eq.f32.partialorder %v194, %v1532
      %vm1597 = vcmp.eq.f32.partialorder %v194, %v1533
      %vm1598 = vcmp.eq.f32.partialorder %v194, %v1534
      %vm1599 = vcmp.eq.f32.partialorder %v194, %v1535
      %v1600 = vsel %vm1584, %v1488, 0.0
      %v1601 = vsel %vm1585, %v1489, 0.0
      %v1602 = vsel %vm1586, %v1490, 0.0
      %v1603 = vsel %vm1587, %v1491, 0.0
      %v1604 = vsel %vm1588, %v1492, 0.0
      %v1605 = vsel %vm1589, %v1493, 0.0
      %v1606 = vsel %vm1590, %v1494, 0.0
      %v1607 = vsel %vm1591, %v1495, 0.0
      %v1608 = vsel %vm1592, %v1496, 0.0
      %v1609 = vsel %vm1593, %v1497, 0.0
      %v1610 = vsel %vm1594, %v1498, 0.0
      %v1611 = vsel %vm1595, %v1499, 0.0
      %v1612 = vsel %vm1596, %v1500, 0.0
      %v1613 = vsel %vm1597, %v1501, 0.0
      %v1614 = vsel %vm1598, %v1502, 0.0
      %v1615 = vsel %vm1599, %v1503, 0.0
      %v1616 = vadd.f32 %v1568, %v1600
      %v1617 = vadd.f32 %v1569, %v1601
      %v1618 = vadd.f32 %v1570, %v1602
      %v1619 = vadd.f32 %v1571, %v1603
      %v1620 = vadd.f32 %v1572, %v1604
      %v1621 = vadd.f32 %v1573, %v1605
      %v1622 = vadd.f32 %v1574, %v1606
      %v1623 = vadd.f32 %v1575, %v1607
      %v1624 = vadd.f32 %v1576, %v1608
      %v1625 = vadd.f32 %v1577, %v1609
      %v1626 = vadd.f32 %v1578, %v1610
      %v1627 = vadd.f32 %v1579, %v1611
      %v1628 = vadd.f32 %v1580, %v1612
      %v1629 = vadd.f32 %v1581, %v1613
      %v1630 = vadd.f32 %v1582, %v1614
      %v1631 = vadd.f32 %v1583, %v1615
      %v1632 = vsel %vm1392, 0.0, %v1616
      %v1633 = vsel %vm1393, 0.0, %v1617
      %v1634 = vsel %vm1394, 0.0, %v1618
      %v1635 = vsel %vm1395, 0.0, %v1619
      %v1636 = vsel %vm1396, 0.0, %v1620
      %v1637 = vsel %vm1397, 0.0, %v1621
      %v1638 = vsel %vm1398, 0.0, %v1622
      %v1639 = vsel %vm1399, 0.0, %v1623
      %v1640 = vsel %vm1400, 0.0, %v1624
      %v1641 = vsel %vm1401, 0.0, %v1625
      %v1642 = vsel %vm1402, 0.0, %v1626
      %v1643 = vsel %vm1403, 0.0, %v1627
      %v1644 = vsel %vm1404, 0.0, %v1628
      %v1645 = vsel %vm1405, 0.0, %v1629
      %v1646 = vsel %vm1406, 0.0, %v1630
      %v1647 = vsel %vm1407, 0.0, %v1631
      %v1648 = vadd.f32 %v1311, %v1632
      %v1649 = vadd.f32 %v1312, %v1633
      %v1650 = vadd.f32 %v1313, %v1634
      %v1651 = vadd.f32 %v1314, %v1635
      %v1652 = vadd.f32 %v1315, %v1636
      %v1653 = vadd.f32 %v1316, %v1637
      %v1654 = vadd.f32 %v1317, %v1638
      %v1655 = vadd.f32 %v1318, %v1639
      %v1656 = vadd.f32 %v1319, %v1640
      %v1657 = vadd.f32 %v1320, %v1641
      %v1658 = vadd.f32 %v1321, %v1642
      %v1659 = vadd.f32 %v1322, %v1643
      %v1660 = vadd.f32 %v1323, %v1644
      %v1661 = vadd.f32 %v1324, %v1645
      %v1662 = vadd.f32 %v1325, %v1646
      %v1663 = vadd.f32 %v1326, %v1647
      %v1664 = vmul.f32 %v1648, 0.5
      %v1665 = vmul.f32 %v1649, 0.5
      %v1666 = vmul.f32 %v1650, 0.5
      %v1667 = vmul.f32 %v1651, 0.5
      %v1668 = vmul.f32 %v1652, 0.5
      %v1669 = vmul.f32 %v1653, 0.5
      %v1670 = vmul.f32 %v1654, 0.5
      %v1671 = vmul.f32 %v1655, 0.5
      %v1672 = vmul.f32 %v1656, 0.5
      %v1673 = vmul.f32 %v1657, 0.5
      %v1674 = vmul.f32 %v1658, 0.5
      %v1675 = vmul.f32 %v1659, 0.5
      %v1676 = vmul.f32 %v1660, 0.5
      %v1677 = vmul.f32 %v1661, 0.5
      %v1678 = vmul.f32 %v1662, 0.5
      %v1679 = vmul.f32 %v1663, 0.5
      %v1680 = vld [vmem:[%s175] sm:$0xff]
      %v1681 = vld [vmem:[%s175 + $0x8] sm:$0xff]
      %vm1682 = vcmask 130048
      %v1684 = vsel %vm1682, %v815, 0
      %v1687 = vsel %vm1682, %v816, 0
      %v1690 = vsel %vm1682, %v817, 0
      %v1693 = vsel %vm1682, %v818, 0
      %v1696 = vsel %vm1682, %v819, 0
      %v1699 = vsel %vm1682, %v820, 0
      %v1702 = vsel %vm1682, %v821, 0
      %v1705 = vsel %vm1682, %v822, 0
      %v1708 = vsel %vm1682, %v823, 0
      %v1711 = vsel %vm1682, %v824, 0
      %v1714 = vsel %vm1682, %v825, 0
      %v1717 = vsel %vm1682, %v826, 0
      %v1720 = vsel %vm1682, %v827, 0
      %v1723 = vsel %vm1682, %v828, 0
      %1725 = vmatpush.msra.mxu0 0.0
      %1726 = vmatpush.msra.mxu0 0.0
      %1727 = vmatpush.msra.mxu0 0.0
      %1728 = vmatpush.msra.mxu0 0.0
      %1729 = vmatpush.msra.mxu0 0.0
      %1730 = vmatpush.msra.mxu0 0.0
      %1731 = vmatpush.msra.mxu0 0.0
      %1732 = vmatpush.msra.mxu0 0.0
      %1733 = vmatpush.msra.mxu0 0.0
      %1734 = vmatpush.msra.mxu0 0.0
      %1735 = vmatpush.msra.mxu0 0.0
      %1736 = vmatpush.msra.mxu0 0.0
      %1737 = vmatpush.msra.mxu0 0.0
      %1738 = vmatpush.msra.mxu0 0.0
      %1739 = vmatpush.msra.mxu0 %v1681
      %1740 = vmatpush.msra.mxu0 %v1680
      %1741 = vmatmul.f32.gmra.mxu0 %v1684
      %v1742 = vpop.f32.mrf.mxu0
      %v1743 = vadd.f32 0.0, %v1742
      %1744 = vmatmul.f32.gmra.mxu0 %v1687
      %v1745 = vpop.f32.mrf.mxu0
      %v1746 = vadd.f32 0.0, %v1745
      %1747 = vmatmul.f32.gmra.mxu0 %v1690
      %v1748 = vpop.f32.mrf.mxu0
      %v1749 = vadd.f32 0.0, %v1748
      %1750 = vmatmul.f32.gmra.mxu0 %v1693
      %v1751 = vpop.f32.mrf.mxu0
      %v1752 = vadd.f32 0.0, %v1751
      %1753 = vmatmul.f32.gmra.mxu0 %v1696
      %v1754 = vpop.f32.mrf.mxu0
      %v1755 = vadd.f32 0.0, %v1754
      %1756 = vmatmul.f32.gmra.mxu0 %v1699
      %v1757 = vpop.f32.mrf.mxu0
      %v1758 = vadd.f32 0.0, %v1757
      %1759 = vmatmul.f32.gmra.mxu0 %v1702
      %v1760 = vpop.f32.mrf.mxu0
      %v1761 = vadd.f32 0.0, %v1760
      %1762 = vmatmul.f32.gmra.mxu0 %v1705
      %v1763 = vpop.f32.mrf.mxu0
      %v1764 = vadd.f32 0.0, %v1763
      %1765 = vmatmul.f32.gmra.mxu0 %v1708
      %v1766 = vpop.f32.mrf.mxu0
      %v1767 = vadd.f32 0.0, %v1766
      %1768 = vmatmul.f32.gmra.mxu0 %v1711
      %v1769 = vpop.f32.mrf.mxu0
      %v1770 = vadd.f32 0.0, %v1769
      %1771 = vmatmul.f32.gmra.mxu0 %v1714
      %v1772 = vpop.f32.mrf.mxu0
      %v1773 = vadd.f32 0.0, %v1772
      %1774 = vmatmul.f32.gmra.mxu0 %v1717
      %v1775 = vpop.f32.mrf.mxu0
      %v1776 = vadd.f32 0.0, %v1775
      %1777 = vmatmul.f32.gmra.mxu0 %v1720
      %v1778 = vpop.f32.mrf.mxu0
      %v1779 = vadd.f32 0.0, %v1778
      %1780 = vmatmul.f32.gmra.mxu0 %v1723
      %v1781 = vpop.f32.mrf.mxu0
      %v1782 = vadd.f32 0.0, %v1781
      %1783 = vdwg.mxu0
      %1798 = vrot.lane.b32.xlu0 %v1743, 112
      %v1799 = vpop.permute.xlu0 %1798
      %1800 = vrot.lane.b32.xlu0 %v1746, 112
      %v1801 = vpop.permute.xlu0 %1800
      %1802 = vrot.lane.b32.xlu0 %v1749, 112
      %v1803 = vpop.permute.xlu0 %1802
      %1804 = vrot.lane.b32.xlu0 %v1752, 112
      %v1805 = vpop.permute.xlu0 %1804
      %1806 = vrot.lane.b32.xlu0 %v1755, 112
      %v1807 = vpop.permute.xlu0 %1806
      %1808 = vrot.lane.b32.xlu0 %v1758, 112
      %v1809 = vpop.permute.xlu0 %1808
      %1810 = vrot.lane.b32.xlu0 %v1761, 112
      %v1811 = vpop.permute.xlu0 %1810
      %1812 = vrot.lane.b32.xlu0 %v1764, 112
      %v1813 = vpop.permute.xlu0 %1812
      %1814 = vrot.lane.b32.xlu0 %v1767, 112
      %v1815 = vpop.permute.xlu0 %1814
      %1816 = vrot.lane.b32.xlu0 %v1770, 112
      %v1817 = vpop.permute.xlu0 %1816
      %1818 = vrot.lane.b32.xlu0 %v1773, 112
      %v1819 = vpop.permute.xlu0 %1818
      %1820 = vrot.lane.b32.xlu0 %v1776, 112
      %v1821 = vpop.permute.xlu0 %1820
      %1822 = vrot.lane.b32.xlu0 %v1779, 112
      %v1823 = vpop.permute.xlu0 %1822
      %1824 = vrot.lane.b32.xlu0 %v1782, 112
      %v1825 = vpop.permute.xlu0 %1824
      %1840 = vrot.lane.b32.xlu0 %v1743, 96
      %v1841 = vpop.permute.xlu0 %1840
      %1842 = vrot.lane.b32.xlu0 %v1746, 96
      %v1843 = vpop.permute.xlu0 %1842
      %1844 = vrot.lane.b32.xlu0 %v1749, 96
      %v1845 = vpop.permute.xlu0 %1844
      %1846 = vrot.lane.b32.xlu0 %v1752, 96
      %v1847 = vpop.permute.xlu0 %1846
      %1848 = vrot.lane.b32.xlu0 %v1755, 96
      %v1849 = vpop.permute.xlu0 %1848
      %1850 = vrot.lane.b32.xlu0 %v1758, 96
      %v1851 = vpop.permute.xlu0 %1850
      %1852 = vrot.lane.b32.xlu0 %v1761, 96
      %v1853 = vpop.permute.xlu0 %1852
      %1854 = vrot.lane.b32.xlu0 %v1764, 96
      %v1855 = vpop.permute.xlu0 %1854
      %1856 = vrot.lane.b32.xlu0 %v1767, 96
      %v1857 = vpop.permute.xlu0 %1856
      %1858 = vrot.lane.b32.xlu0 %v1770, 96
      %v1859 = vpop.permute.xlu0 %1858
      %1860 = vrot.lane.b32.xlu0 %v1773, 96
      %v1861 = vpop.permute.xlu0 %1860
      %1862 = vrot.lane.b32.xlu0 %v1776, 96
      %v1863 = vpop.permute.xlu0 %1862
      %1864 = vrot.lane.b32.xlu0 %v1779, 96
      %v1865 = vpop.permute.xlu0 %1864
      %1866 = vrot.lane.b32.xlu0 %v1782, 96
      %v1867 = vpop.permute.xlu0 %1866
      %1882 = vrot.lane.b32.xlu0 %v1743, 80
      %v1883 = vpop.permute.xlu0 %1882
      %1884 = vrot.lane.b32.xlu0 %v1746, 80
      %v1885 = vpop.permute.xlu0 %1884
      %1886 = vrot.lane.b32.xlu0 %v1749, 80
      %v1887 = vpop.permute.xlu0 %1886
      %1888 = vrot.lane.b32.xlu0 %v1752, 80
      %v1889 = vpop.permute.xlu0 %1888
      %1890 = vrot.lane.b32.xlu0 %v1755, 80
      %v1891 = vpop.permute.xlu0 %1890
      %1892 = vrot.lane.b32.xlu0 %v1758, 80
      %v1893 = vpop.permute.xlu0 %1892
      %1894 = vrot.lane.b32.xlu0 %v1761, 80
      %v1895 = vpop.permute.xlu0 %1894
      %1896 = vrot.lane.b32.xlu0 %v1764, 80
      %v1897 = vpop.permute.xlu0 %1896
      %1898 = vrot.lane.b32.xlu0 %v1767, 80
      %v1899 = vpop.permute.xlu0 %1898
      %1900 = vrot.lane.b32.xlu0 %v1770, 80
      %v1901 = vpop.permute.xlu0 %1900
      %1902 = vrot.lane.b32.xlu0 %v1773, 80
      %v1903 = vpop.permute.xlu0 %1902
      %1904 = vrot.lane.b32.xlu0 %v1776, 80
      %v1905 = vpop.permute.xlu0 %1904
      %1906 = vrot.lane.b32.xlu0 %v1779, 80
      %v1907 = vpop.permute.xlu0 %1906
      %1908 = vrot.lane.b32.xlu0 %v1782, 80
      %v1909 = vpop.permute.xlu0 %1908
      %v1924 = vrot.slane %v1841, 4
      %vm1925 = vcmask 1047556
      %v1926 = vsel %vm1925, %v1924, %v1743
      %v1927 = vrot.slane %v1743, 4
      %v1928 = vsel %vm1925, %v1841, %v1927
      %v1930 = vunpack.c.l.s4 1983009808
      %v1931 = vunpack.c.0.s8 %v1930
      %v1932 = vperm.slane %v1926, %v1931
      %v1934 = vunpack.c.l.s4 1983009808
      %v1935 = vunpack.c.0.s8 %v1934
      %v1936 = vperm.slane %v1928, %v1935
      %v1937 = vrot.slane %v1883, 4
      %v1938 = vsel %vm1925, %v1937, %v1799
      %v1939 = vrot.slane %v1799, 4
      %v1940 = vsel %vm1925, %v1883, %v1939
      %v1942 = vunpack.c.l.s4 1983009808
      %v1943 = vunpack.c.0.s8 %v1942
      %v1944 = vperm.slane %v1938, %v1943
      %v1946 = vunpack.c.l.s4 1983009808
      %v1947 = vunpack.c.0.s8 %v1946
      %v1948 = vperm.slane %v1940, %v1947
      %v1949 = vrot.slane %v1944, 4
      %v1950 = vsel %vm1925, %v1949, %v1932
      %v1951 = vrot.slane %v1932, 4
      %v1952 = vsel %vm1925, %v1944, %v1951
      %v1954 = vunpack.c.l.s4 1934713408
      %v1955 = vunpack.c.0.s8 %v1954
      %v1956 = vperm.slane %v1950, %v1955
      %v1958 = vunpack.c.l.s4 1934713408
      %v1959 = vunpack.c.0.s8 %v1958
      %v1960 = vperm.slane %v1952, %v1959
      %v1961 = vrot.slane %v1948, 4
      %v1962 = vsel %vm1925, %v1961, %v1936
      %v1963 = vrot.slane %v1936, 4
      %v1964 = vsel %vm1925, %v1948, %v1963
      %v1966 = vunpack.c.l.s4 1934713408
      %v1967 = vunpack.c.0.s8 %v1966
      %v1968 = vperm.slane %v1962, %v1967
      %v1970 = vunpack.c.l.s4 1934713408
      %v1971 = vunpack.c.0.s8 %v1970
      %v1972 = vperm.slane %v1964, %v1971
      %v1973 = vrot.slane %v1956, 4
      %v1974 = vsel %vm1925, 0.0, %v1973
      %v1975 = vrot.slane %v1960, 4
      %v1976 = vsel %vm1925, 0.0, %v1975
      %v1977 = vrot.slane %v1968, 4
      %v1978 = vsel %vm1925, 0.0, %v1977
      %v1979 = vrot.slane %v1972, 4
      %v1980 = vsel %vm1925, 0.0, %v1979
      %v1981 = vrot.slane %v1843, 4
      %v1982 = vsel %vm1925, %v1981, %v1746
      %v1983 = vrot.slane %v1746, 4
      %v1984 = vsel %vm1925, %v1843, %v1983
      %v1986 = vunpack.c.l.s4 1983009808
      %v1987 = vunpack.c.0.s8 %v1986
      %v1988 = vperm.slane %v1982, %v1987
      %v1990 = vunpack.c.l.s4 1983009808
      %v1991 = vunpack.c.0.s8 %v1990
      %v1992 = vperm.slane %v1984, %v1991
      %v1993 = vrot.slane %v1885, 4
      %v1994 = vsel %vm1925, %v1993, %v1801
      %v1995 = vrot.slane %v1801, 4
      %v1996 = vsel %vm1925, %v1885, %v1995
      %v1998 = vunpack.c.l.s4 1983009808
      %v1999 = vunpack.c.0.s8 %v1998
      %v2000 = vperm.slane %v1994, %v1999
      %v2002 = vunpack.c.l.s4 1983009808
      %v2003 = vunpack.c.0.s8 %v2002
      %v2004 = vperm.slane %v1996, %v2003
      %v2005 = vrot.slane %v2000, 4
      %v2006 = vsel %vm1925, %v2005, %v1988
      %v2007 = vrot.slane %v1988, 4
      %v2008 = vsel %vm1925, %v2000, %v2007
      %v2010 = vunpack.c.l.s4 1934713408
      %v2011 = vunpack.c.0.s8 %v2010
      %v2012 = vperm.slane %v2006, %v2011
      %v2014 = vunpack.c.l.s4 1934713408
      %v2015 = vunpack.c.0.s8 %v2014
      %v2016 = vperm.slane %v2008, %v2015
      %v2017 = vrot.slane %v2004, 4
      %v2018 = vsel %vm1925, %v2017, %v1992
      %v2019 = vrot.slane %v1992, 4
      %v2020 = vsel %vm1925, %v2004, %v2019
      %v2022 = vunpack.c.l.s4 1934713408
      %v2023 = vunpack.c.0.s8 %v2022
      %v2024 = vperm.slane %v2018, %v2023
      %v2026 = vunpack.c.l.s4 1934713408
      %v2027 = vunpack.c.0.s8 %v2026
      %v2028 = vperm.slane %v2020, %v2027
      %v2029 = vrot.slane %v2012, 4
      %v2030 = vsel %vm1925, 0.0, %v2029
      %v2031 = vrot.slane %v2016, 4
      %v2032 = vsel %vm1925, 0.0, %v2031
      %v2033 = vrot.slane %v2024, 4
      %v2034 = vsel %vm1925, 0.0, %v2033
      %v2035 = vrot.slane %v2028, 4
      %v2036 = vsel %vm1925, 0.0, %v2035
      %v2037 = vrot.slane %v1845, 4
      %v2038 = vsel %vm1925, %v2037, %v1749
      %v2039 = vrot.slane %v1749, 4
      %v2040 = vsel %vm1925, %v1845, %v2039
      %v2042 = vunpack.c.l.s4 1983009808
      %v2043 = vunpack.c.0.s8 %v2042
      %v2044 = vperm.slane %v2038, %v2043
      %v2046 = vunpack.c.l.s4 1983009808
      %v2047 = vunpack.c.0.s8 %v2046
      %v2048 = vperm.slane %v2040, %v2047
      %v2049 = vrot.slane %v1887, 4
      %v2050 = vsel %vm1925, %v2049, %v1803
      %v2051 = vrot.slane %v1803, 4
      %v2052 = vsel %vm1925, %v1887, %v2051
      %v2054 = vunpack.c.l.s4 1983009808
      %v2055 = vunpack.c.0.s8 %v2054
      %v2056 = vperm.slane %v2050, %v2055
      %v2058 = vunpack.c.l.s4 1983009808
      %v2059 = vunpack.c.0.s8 %v2058
      %v2060 = vperm.slane %v2052, %v2059
      %v2061 = vrot.slane %v2056, 4
      %v2062 = vsel %vm1925, %v2061, %v2044
      %v2063 = vrot.slane %v2044, 4
      %v2064 = vsel %vm1925, %v2056, %v2063
      %v2066 = vunpack.c.l.s4 1934713408
      %v2067 = vunpack.c.0.s8 %v2066
      %v2068 = vperm.slane %v2062, %v2067
      %v2070 = vunpack.c.l.s4 1934713408
      %v2071 = vunpack.c.0.s8 %v2070
      %v2072 = vperm.slane %v2064, %v2071
      %v2073 = vrot.slane %v2060, 4
      %v2074 = vsel %vm1925, %v2073, %v2048
      %v2075 = vrot.slane %v2048, 4
      %v2076 = vsel %vm1925, %v2060, %v2075
      %v2078 = vunpack.c.l.s4 1934713408
      %v2079 = vunpack.c.0.s8 %v2078
      %v2080 = vperm.slane %v2074, %v2079
      %v2082 = vunpack.c.l.s4 1934713408
      %v2083 = vunpack.c.0.s8 %v2082
      %v2084 = vperm.slane %v2076, %v2083
      %v2085 = vrot.slane %v2068, 4
      %v2086 = vsel %vm1925, 0.0, %v2085
      %v2087 = vrot.slane %v2072, 4
      %v2088 = vsel %vm1925, 0.0, %v2087
      %v2089 = vrot.slane %v2080, 4
      %v2090 = vsel %vm1925, 0.0, %v2089
      %v2091 = vrot.slane %v2084, 4
      %v2092 = vsel %vm1925, 0.0, %v2091
      %v2093 = vrot.slane %v1847, 4
      %v2094 = vsel %vm1925, %v2093, %v1752
      %v2095 = vrot.slane %v1752, 4
      %v2096 = vsel %vm1925, %v1847, %v2095
      %v2098 = vunpack.c.l.s4 1983009808
      %v2099 = vunpack.c.0.s8 %v2098
      %v2100 = vperm.slane %v2094, %v2099
      %v2102 = vunpack.c.l.s4 1983009808
      %v2103 = vunpack.c.0.s8 %v2102
      %v2104 = vperm.slane %v2096, %v2103
      %v2105 = vrot.slane %v1889, 4
      %v2106 = vsel %vm1925, %v2105, %v1805
      %v2107 = vrot.slane %v1805, 4
      %v2108 = vsel %vm1925, %v1889, %v2107
      %v2110 = vunpack.c.l.s4 1983009808
      %v2111 = vunpack.c.0.s8 %v2110
      %v2112 = vperm.slane %v2106, %v2111
      %v2114 = vunpack.c.l.s4 1983009808
      %v2115 = vunpack.c.0.s8 %v2114
      %v2116 = vperm.slane %v2108, %v2115
      %v2117 = vrot.slane %v2112, 4
      %v2118 = vsel %vm1925, %v2117, %v2100
      %v2119 = vrot.slane %v2100, 4
      %v2120 = vsel %vm1925, %v2112, %v2119
      %v2122 = vunpack.c.l.s4 1934713408
      %v2123 = vunpack.c.0.s8 %v2122
      %v2124 = vperm.slane %v2118, %v2123
      %v2126 = vunpack.c.l.s4 1934713408
      %v2127 = vunpack.c.0.s8 %v2126
      %v2128 = vperm.slane %v2120, %v2127
      %v2129 = vrot.slane %v2116, 4
      %v2130 = vsel %vm1925, %v2129, %v2104
      %v2131 = vrot.slane %v2104, 4
      %v2132 = vsel %vm1925, %v2116, %v2131
      %v2134 = vunpack.c.l.s4 1934713408
      %v2135 = vunpack.c.0.s8 %v2134
      %v2136 = vperm.slane %v2130, %v2135
      %v2138 = vunpack.c.l.s4 1934713408
      %v2139 = vunpack.c.0.s8 %v2138
      %v2140 = vperm.slane %v2132, %v2139
      %v2141 = vrot.slane %v2124, 4
      %v2142 = vsel %vm1925, 0.0, %v2141
      %v2143 = vrot.slane %v2128, 4
      %v2144 = vsel %vm1925, 0.0, %v2143
      %v2145 = vrot.slane %v2136, 4
      %v2146 = vsel %vm1925, 0.0, %v2145
      %v2147 = vrot.slane %v2140, 4
      %v2148 = vsel %vm1925, 0.0, %v2147
      %v2149 = vrot.slane %v1849, 4
      %v2150 = vsel %vm1925, %v2149, %v1755
      %v2151 = vrot.slane %v1755, 4
      %v2152 = vsel %vm1925, %v1849, %v2151
      %v2154 = vunpack.c.l.s4 1983009808
      %v2155 = vunpack.c.0.s8 %v2154
      %v2156 = vperm.slane %v2150, %v2155
      %v2158 = vunpack.c.l.s4 1983009808
      %v2159 = vunpack.c.0.s8 %v2158
      %v2160 = vperm.slane %v2152, %v2159
      %v2161 = vrot.slane %v1891, 4
      %v2162 = vsel %vm1925, %v2161, %v1807
      %v2163 = vrot.slane %v1807, 4
      %v2164 = vsel %vm1925, %v1891, %v2163
      %v2166 = vunpack.c.l.s4 1983009808
      %v2167 = vunpack.c.0.s8 %v2166
      %v2168 = vperm.slane %v2162, %v2167
      %v2170 = vunpack.c.l.s4 1983009808
      %v2171 = vunpack.c.0.s8 %v2170
      %v2172 = vperm.slane %v2164, %v2171
      %v2173 = vrot.slane %v2168, 4
      %v2174 = vsel %vm1925, %v2173, %v2156
      %v2175 = vrot.slane %v2156, 4
      %v2176 = vsel %vm1925, %v2168, %v2175
      %v2178 = vunpack.c.l.s4 1934713408
      %v2179 = vunpack.c.0.s8 %v2178
      %v2180 = vperm.slane %v2174, %v2179
      %v2182 = vunpack.c.l.s4 1934713408
      %v2183 = vunpack.c.0.s8 %v2182
      %v2184 = vperm.slane %v2176, %v2183
      %v2185 = vrot.slane %v2172, 4
      %v2186 = vsel %vm1925, %v2185, %v2160
      %v2187 = vrot.slane %v2160, 4
      %v2188 = vsel %vm1925, %v2172, %v2187
      %v2190 = vunpack.c.l.s4 1934713408
      %v2191 = vunpack.c.0.s8 %v2190
      %v2192 = vperm.slane %v2186, %v2191
      %v2194 = vunpack.c.l.s4 1934713408
      %v2195 = vunpack.c.0.s8 %v2194
      %v2196 = vperm.slane %v2188, %v2195
      %v2197 = vrot.slane %v2180, 4
      %v2198 = vsel %vm1925, 0.0, %v2197
      %v2199 = vrot.slane %v2184, 4
      %v2200 = vsel %vm1925, 0.0, %v2199
      %v2201 = vrot.slane %v2192, 4
      %v2202 = vsel %vm1925, 0.0, %v2201
      %v2203 = vrot.slane %v2196, 4
      %v2204 = vsel %vm1925, 0.0, %v2203
      %v2205 = vrot.slane %v1851, 4
      %v2206 = vsel %vm1925, %v2205, %v1758
      %v2207 = vrot.slane %v1758, 4
      %v2208 = vsel %vm1925, %v1851, %v2207
      %v2210 = vunpack.c.l.s4 1983009808
      %v2211 = vunpack.c.0.s8 %v2210
      %v2212 = vperm.slane %v2206, %v2211
      %v2214 = vunpack.c.l.s4 1983009808
      %v2215 = vunpack.c.0.s8 %v2214
      %v2216 = vperm.slane %v2208, %v2215
      %v2217 = vrot.slane %v1893, 4
      %v2218 = vsel %vm1925, %v2217, %v1809
      %v2219 = vrot.slane %v1809, 4
      %v2220 = vsel %vm1925, %v1893, %v2219
      %v2222 = vunpack.c.l.s4 1983009808
      %v2223 = vunpack.c.0.s8 %v2222
      %v2224 = vperm.slane %v2218, %v2223
      %v2226 = vunpack.c.l.s4 1983009808
      %v2227 = vunpack.c.0.s8 %v2226
      %v2228 = vperm.slane %v2220, %v2227
      %v2229 = vrot.slane %v2224, 4
      %v2230 = vsel %vm1925, %v2229, %v2212
      %v2231 = vrot.slane %v2212, 4
      %v2232 = vsel %vm1925, %v2224, %v2231
      %v2234 = vunpack.c.l.s4 1934713408
      %v2235 = vunpack.c.0.s8 %v2234
      %v2236 = vperm.slane %v2230, %v2235
      %v2238 = vunpack.c.l.s4 1934713408
      %v2239 = vunpack.c.0.s8 %v2238
      %v2240 = vperm.slane %v2232, %v2239
      %v2241 = vrot.slane %v2228, 4
      %v2242 = vsel %vm1925, %v2241, %v2216
      %v2243 = vrot.slane %v2216, 4
      %v2244 = vsel %vm1925, %v2228, %v2243
      %v2246 = vunpack.c.l.s4 1934713408
      %v2247 = vunpack.c.0.s8 %v2246
      %v2248 = vperm.slane %v2242, %v2247
      %v2250 = vunpack.c.l.s4 1934713408
      %v2251 = vunpack.c.0.s8 %v2250
      %v2252 = vperm.slane %v2244, %v2251
      %v2253 = vrot.slane %v2236, 4
      %v2254 = vsel %vm1925, 0.0, %v2253
      %v2255 = vrot.slane %v2240, 4
      %v2256 = vsel %vm1925, 0.0, %v2255
      %v2257 = vrot.slane %v2248, 4
      %v2258 = vsel %vm1925, 0.0, %v2257
      %v2259 = vrot.slane %v2252, 4
      %v2260 = vsel %vm1925, 0.0, %v2259
      %v2261 = vrot.slane %v1853, 4
      %v2262 = vsel %vm1925, %v2261, %v1761
      %v2263 = vrot.slane %v1761, 4
      %v2264 = vsel %vm1925, %v1853, %v2263
      %v2266 = vunpack.c.l.s4 1983009808
      %v2267 = vunpack.c.0.s8 %v2266
      %v2268 = vperm.slane %v2262, %v2267
      %v2270 = vunpack.c.l.s4 1983009808
      %v2271 = vunpack.c.0.s8 %v2270
      %v2272 = vperm.slane %v2264, %v2271
      %v2273 = vrot.slane %v1895, 4
      %v2274 = vsel %vm1925, %v2273, %v1811
      %v2275 = vrot.slane %v1811, 4
      %v2276 = vsel %vm1925, %v1895, %v2275
      %v2278 = vunpack.c.l.s4 1983009808
      %v2279 = vunpack.c.0.s8 %v2278
      %v2280 = vperm.slane %v2274, %v2279
      %v2282 = vunpack.c.l.s4 1983009808
      %v2283 = vunpack.c.0.s8 %v2282
      %v2284 = vperm.slane %v2276, %v2283
      %v2285 = vrot.slane %v2280, 4
      %v2286 = vsel %vm1925, %v2285, %v2268
      %v2287 = vrot.slane %v2268, 4
      %v2288 = vsel %vm1925, %v2280, %v2287
      %v2290 = vunpack.c.l.s4 1934713408
      %v2291 = vunpack.c.0.s8 %v2290
      %v2292 = vperm.slane %v2286, %v2291
      %v2294 = vunpack.c.l.s4 1934713408
      %v2295 = vunpack.c.0.s8 %v2294
      %v2296 = vperm.slane %v2288, %v2295
      %v2297 = vrot.slane %v2284, 4
      %v2298 = vsel %vm1925, %v2297, %v2272
      %v2299 = vrot.slane %v2272, 4
      %v2300 = vsel %vm1925, %v2284, %v2299
      %v2302 = vunpack.c.l.s4 1934713408
      %v2303 = vunpack.c.0.s8 %v2302
      %v2304 = vperm.slane %v2298, %v2303
      %v2306 = vunpack.c.l.s4 1934713408
      %v2307 = vunpack.c.0.s8 %v2306
      %v2308 = vperm.slane %v2300, %v2307
      %v2309 = vrot.slane %v2292, 4
      %v2310 = vsel %vm1925, 0.0, %v2309
      %v2311 = vrot.slane %v2296, 4
      %v2312 = vsel %vm1925, 0.0, %v2311
      %v2313 = vrot.slane %v2304, 4
      %v2314 = vsel %vm1925, 0.0, %v2313
      %v2315 = vrot.slane %v2308, 4
      %v2316 = vsel %vm1925, 0.0, %v2315
      %v2317 = vrot.slane %v1855, 4
      %v2318 = vsel %vm1925, %v2317, %v1764
      %v2319 = vrot.slane %v1764, 4
      %v2320 = vsel %vm1925, %v1855, %v2319
      %v2322 = vunpack.c.l.s4 1983009808
      %v2323 = vunpack.c.0.s8 %v2322
      %v2324 = vperm.slane %v2318, %v2323
      %v2326 = vunpack.c.l.s4 1983009808
      %v2327 = vunpack.c.0.s8 %v2326
      %v2328 = vperm.slane %v2320, %v2327
      %v2329 = vrot.slane %v1897, 4
      %v2330 = vsel %vm1925, %v2329, %v1813
      %v2331 = vrot.slane %v1813, 4
      %v2332 = vsel %vm1925, %v1897, %v2331
      %v2334 = vunpack.c.l.s4 1983009808
      %v2335 = vunpack.c.0.s8 %v2334
      %v2336 = vperm.slane %v2330, %v2335
      %v2338 = vunpack.c.l.s4 1983009808
      %v2339 = vunpack.c.0.s8 %v2338
      %v2340 = vperm.slane %v2332, %v2339
      %v2341 = vrot.slane %v2336, 4
      %v2342 = vsel %vm1925, %v2341, %v2324
      %v2343 = vrot.slane %v2324, 4
      %v2344 = vsel %vm1925, %v2336, %v2343
      %v2346 = vunpack.c.l.s4 1934713408
      %v2347 = vunpack.c.0.s8 %v2346
      %v2348 = vperm.slane %v2342, %v2347
      %v2350 = vunpack.c.l.s4 1934713408
      %v2351 = vunpack.c.0.s8 %v2350
      %v2352 = vperm.slane %v2344, %v2351
      %v2353 = vrot.slane %v2340, 4
      %v2354 = vsel %vm1925, %v2353, %v2328
      %v2355 = vrot.slane %v2328, 4
      %v2356 = vsel %vm1925, %v2340, %v2355
      %v2358 = vunpack.c.l.s4 1934713408
      %v2359 = vunpack.c.0.s8 %v2358
      %v2360 = vperm.slane %v2354, %v2359
      %v2362 = vunpack.c.l.s4 1934713408
      %v2363 = vunpack.c.0.s8 %v2362
      %v2364 = vperm.slane %v2356, %v2363
      %v2365 = vrot.slane %v2348, 4
      %v2366 = vsel %vm1925, 0.0, %v2365
      %v2367 = vrot.slane %v2352, 4
      %v2368 = vsel %vm1925, 0.0, %v2367
      %v2369 = vrot.slane %v2360, 4
      %v2370 = vsel %vm1925, 0.0, %v2369
      %v2371 = vrot.slane %v2364, 4
      %v2372 = vsel %vm1925, 0.0, %v2371
      %v2373 = vrot.slane %v1857, 4
      %v2374 = vsel %vm1925, %v2373, %v1767
      %v2375 = vrot.slane %v1767, 4
      %v2376 = vsel %vm1925, %v1857, %v2375
      %v2378 = vunpack.c.l.s4 1983009808
      %v2379 = vunpack.c.0.s8 %v2378
      %v2380 = vperm.slane %v2374, %v2379
      %v2382 = vunpack.c.l.s4 1983009808
      %v2383 = vunpack.c.0.s8 %v2382
      %v2384 = vperm.slane %v2376, %v2383
      %v2385 = vrot.slane %v1899, 4
      %v2386 = vsel %vm1925, %v2385, %v1815
      %v2387 = vrot.slane %v1815, 4
      %v2388 = vsel %vm1925, %v1899, %v2387
      %v2390 = vunpack.c.l.s4 1983009808
      %v2391 = vunpack.c.0.s8 %v2390
      %v2392 = vperm.slane %v2386, %v2391
      %v2394 = vunpack.c.l.s4 1983009808
      %v2395 = vunpack.c.0.s8 %v2394
      %v2396 = vperm.slane %v2388, %v2395
      %v2397 = vrot.slane %v2392, 4
      %v2398 = vsel %vm1925, %v2397, %v2380
      %v2399 = vrot.slane %v2380, 4
      %v2400 = vsel %vm1925, %v2392, %v2399
      %v2402 = vunpack.c.l.s4 1934713408
      %v2403 = vunpack.c.0.s8 %v2402
      %v2404 = vperm.slane %v2398, %v2403
      %v2406 = vunpack.c.l.s4 1934713408
      %v2407 = vunpack.c.0.s8 %v2406
      %v2408 = vperm.slane %v2400, %v2407
      %v2409 = vrot.slane %v2396, 4
      %v2410 = vsel %vm1925, %v2409, %v2384
      %v2411 = vrot.slane %v2384, 4
      %v2412 = vsel %vm1925, %v2396, %v2411
      %v2414 = vunpack.c.l.s4 1934713408
      %v2415 = vunpack.c.0.s8 %v2414
      %v2416 = vperm.slane %v2410, %v2415
      %v2418 = vunpack.c.l.s4 1934713408
      %v2419 = vunpack.c.0.s8 %v2418
      %v2420 = vperm.slane %v2412, %v2419
      %v2421 = vrot.slane %v2404, 4
      %v2422 = vsel %vm1925, 0.0, %v2421
      %v2423 = vrot.slane %v2408, 4
      %v2424 = vsel %vm1925, 0.0, %v2423
      %v2425 = vrot.slane %v2416, 4
      %v2426 = vsel %vm1925, 0.0, %v2425
      %v2427 = vrot.slane %v2420, 4
      %v2428 = vsel %vm1925, 0.0, %v2427
      %v2429 = vrot.slane %v1859, 4
      %v2430 = vsel %vm1925, %v2429, %v1770
      %v2431 = vrot.slane %v1770, 4
      %v2432 = vsel %vm1925, %v1859, %v2431
      %v2434 = vunpack.c.l.s4 1983009808
      %v2435 = vunpack.c.0.s8 %v2434
      %v2436 = vperm.slane %v2430, %v2435
      %v2438 = vunpack.c.l.s4 1983009808
      %v2439 = vunpack.c.0.s8 %v2438
      %v2440 = vperm.slane %v2432, %v2439
      %v2441 = vrot.slane %v1901, 4
      %v2442 = vsel %vm1925, %v2441, %v1817
      %v2443 = vrot.slane %v1817, 4
      %v2444 = vsel %vm1925, %v1901, %v2443
      %v2446 = vunpack.c.l.s4 1983009808
      %v2447 = vunpack.c.0.s8 %v2446
      %v2448 = vperm.slane %v2442, %v2447
      %v2450 = vunpack.c.l.s4 1983009808
      %v2451 = vunpack.c.0.s8 %v2450
      %v2452 = vperm.slane %v2444, %v2451
      %v2453 = vrot.slane %v2448, 4
      %v2454 = vsel %vm1925, %v2453, %v2436
      %v2455 = vrot.slane %v2436, 4
      %v2456 = vsel %vm1925, %v2448, %v2455
      %v2458 = vunpack.c.l.s4 1934713408
      %v2459 = vunpack.c.0.s8 %v2458
      %v2460 = vperm.slane %v2454, %v2459
      %v2462 = vunpack.c.l.s4 1934713408
      %v2463 = vunpack.c.0.s8 %v2462
      %v2464 = vperm.slane %v2456, %v2463
      %v2465 = vrot.slane %v2452, 4
      %v2466 = vsel %vm1925, %v2465, %v2440
      %v2467 = vrot.slane %v2440, 4
      %v2468 = vsel %vm1925, %v2452, %v2467
      %v2470 = vunpack.c.l.s4 1934713408
      %v2471 = vunpack.c.0.s8 %v2470
      %v2472 = vperm.slane %v2466, %v2471
      %v2474 = vunpack.c.l.s4 1934713408
      %v2475 = vunpack.c.0.s8 %v2474
      %v2476 = vperm.slane %v2468, %v2475
      %v2477 = vrot.slane %v2460, 4
      %v2478 = vsel %vm1925, 0.0, %v2477
      %v2479 = vrot.slane %v2464, 4
      %v2480 = vsel %vm1925, 0.0, %v2479
      %v2481 = vrot.slane %v2472, 4
      %v2482 = vsel %vm1925, 0.0, %v2481
      %v2483 = vrot.slane %v2476, 4
      %v2484 = vsel %vm1925, 0.0, %v2483
      %v2485 = vrot.slane %v1861, 4
      %v2486 = vsel %vm1925, %v2485, %v1773
      %v2487 = vrot.slane %v1773, 4
      %v2488 = vsel %vm1925, %v1861, %v2487
      %v2490 = vunpack.c.l.s4 1983009808
      %v2491 = vunpack.c.0.s8 %v2490
      %v2492 = vperm.slane %v2486, %v2491
      %v2494 = vunpack.c.l.s4 1983009808
      %v2495 = vunpack.c.0.s8 %v2494
      %v2496 = vperm.slane %v2488, %v2495
      %v2497 = vrot.slane %v1903, 4
      %v2498 = vsel %vm1925, %v2497, %v1819
      %v2499 = vrot.slane %v1819, 4
      %v2500 = vsel %vm1925, %v1903, %v2499
      %v2502 = vunpack.c.l.s4 1983009808
      %v2503 = vunpack.c.0.s8 %v2502
      %v2504 = vperm.slane %v2498, %v2503
      %v2506 = vunpack.c.l.s4 1983009808
      %v2507 = vunpack.c.0.s8 %v2506
      %v2508 = vperm.slane %v2500, %v2507
      %v2509 = vrot.slane %v2504, 4
      %v2510 = vsel %vm1925, %v2509, %v2492
      %v2511 = vrot.slane %v2492, 4
      %v2512 = vsel %vm1925, %v2504, %v2511
      %v2514 = vunpack.c.l.s4 1934713408
      %v2515 = vunpack.c.0.s8 %v2514
      %v2516 = vperm.slane %v2510, %v2515
      %v2518 = vunpack.c.l.s4 1934713408
      %v2519 = vunpack.c.0.s8 %v2518
      %v2520 = vperm.slane %v2512, %v2519
      %v2521 = vrot.slane %v2508, 4
      %v2522 = vsel %vm1925, %v2521, %v2496
      %v2523 = vrot.slane %v2496, 4
      %v2524 = vsel %vm1925, %v2508, %v2523
      %v2526 = vunpack.c.l.s4 1934713408
      %v2527 = vunpack.c.0.s8 %v2526
      %v2528 = vperm.slane %v2522, %v2527
      %v2530 = vunpack.c.l.s4 1934713408
      %v2531 = vunpack.c.0.s8 %v2530
      %v2532 = vperm.slane %v2524, %v2531
      %v2533 = vrot.slane %v2516, 4
      %v2534 = vsel %vm1925, 0.0, %v2533
      %v2535 = vrot.slane %v2520, 4
      %v2536 = vsel %vm1925, 0.0, %v2535
      %v2537 = vrot.slane %v2528, 4
      %v2538 = vsel %vm1925, 0.0, %v2537
      %v2539 = vrot.slane %v2532, 4
      %v2540 = vsel %vm1925, 0.0, %v2539
      %v2541 = vrot.slane %v1863, 4
      %v2542 = vsel %vm1925, %v2541, %v1776
      %v2543 = vrot.slane %v1776, 4
      %v2544 = vsel %vm1925, %v1863, %v2543
      %v2546 = vunpack.c.l.s4 1983009808
      %v2547 = vunpack.c.0.s8 %v2546
      %v2548 = vperm.slane %v2542, %v2547
      %v2550 = vunpack.c.l.s4 1983009808
      %v2551 = vunpack.c.0.s8 %v2550
      %v2552 = vperm.slane %v2544, %v2551
      %v2553 = vrot.slane %v1905, 4
      %v2554 = vsel %vm1925, %v2553, %v1821
      %v2555 = vrot.slane %v1821, 4
      %v2556 = vsel %vm1925, %v1905, %v2555
      %v2558 = vunpack.c.l.s4 1983009808
      %v2559 = vunpack.c.0.s8 %v2558
      %v2560 = vperm.slane %v2554, %v2559
      %v2562 = vunpack.c.l.s4 1983009808
      %v2563 = vunpack.c.0.s8 %v2562
      %v2564 = vperm.slane %v2556, %v2563
      %v2565 = vrot.slane %v2560, 4
      %v2566 = vsel %vm1925, %v2565, %v2548
      %v2567 = vrot.slane %v2548, 4
      %v2568 = vsel %vm1925, %v2560, %v2567
      %v2570 = vunpack.c.l.s4 1934713408
      %v2571 = vunpack.c.0.s8 %v2570
      %v2572 = vperm.slane %v2566, %v2571
      %v2574 = vunpack.c.l.s4 1934713408
      %v2575 = vunpack.c.0.s8 %v2574
      %v2576 = vperm.slane %v2568, %v2575
      %v2577 = vrot.slane %v2564, 4
      %v2578 = vsel %vm1925, %v2577, %v2552
      %v2579 = vrot.slane %v2552, 4
      %v2580 = vsel %vm1925, %v2564, %v2579
      %v2582 = vunpack.c.l.s4 1934713408
      %v2583 = vunpack.c.0.s8 %v2582
      %v2584 = vperm.slane %v2578, %v2583
      %v2586 = vunpack.c.l.s4 1934713408
      %v2587 = vunpack.c.0.s8 %v2586
      %v2588 = vperm.slane %v2580, %v2587
      %v2589 = vrot.slane %v2572, 4
      %v2590 = vsel %vm1925, 0.0, %v2589
      %v2591 = vrot.slane %v2576, 4
      %v2592 = vsel %vm1925, 0.0, %v2591
      %v2593 = vrot.slane %v2584, 4
      %v2594 = vsel %vm1925, 0.0, %v2593
      %v2595 = vrot.slane %v2588, 4
      %v2596 = vsel %vm1925, 0.0, %v2595
      %v2597 = vrot.slane %v1865, 4
      %v2598 = vsel %vm1925, %v2597, %v1779
      %v2599 = vrot.slane %v1779, 4
      %v2600 = vsel %vm1925, %v1865, %v2599
      %v2602 = vunpack.c.l.s4 1983009808
      %v2603 = vunpack.c.0.s8 %v2602
      %v2604 = vperm.slane %v2598, %v2603
      %v2606 = vunpack.c.l.s4 1983009808
      %v2607 = vunpack.c.0.s8 %v2606
      %v2608 = vperm.slane %v2600, %v2607
      %v2609 = vrot.slane %v1907, 4
      %v2610 = vsel %vm1925, %v2609, %v1823
      %v2611 = vrot.slane %v1823, 4
      %v2612 = vsel %vm1925, %v1907, %v2611
      %v2614 = vunpack.c.l.s4 1983009808
      %v2615 = vunpack.c.0.s8 %v2614
      %v2616 = vperm.slane %v2610, %v2615
      %v2618 = vunpack.c.l.s4 1983009808
      %v2619 = vunpack.c.0.s8 %v2618
      %v2620 = vperm.slane %v2612, %v2619
      %v2621 = vrot.slane %v2616, 4
      %v2622 = vsel %vm1925, %v2621, %v2604
      %v2623 = vrot.slane %v2604, 4
      %v2624 = vsel %vm1925, %v2616, %v2623
      %v2626 = vunpack.c.l.s4 1934713408
      %v2627 = vunpack.c.0.s8 %v2626
      %v2628 = vperm.slane %v2622, %v2627
      %v2630 = vunpack.c.l.s4 1934713408
      %v2631 = vunpack.c.0.s8 %v2630
      %v2632 = vperm.slane %v2624, %v2631
      %v2633 = vrot.slane %v2620, 4
      %v2634 = vsel %vm1925, %v2633, %v2608
      %v2635 = vrot.slane %v2608, 4
      %v2636 = vsel %vm1925, %v2620, %v2635
      %v2638 = vunpack.c.l.s4 1934713408
      %v2639 = vunpack.c.0.s8 %v2638
      %v2640 = vperm.slane %v2634, %v2639
      %v2642 = vunpack.c.l.s4 1934713408
      %v2643 = vunpack.c.0.s8 %v2642
      %v2644 = vperm.slane %v2636, %v2643
      %v2645 = vrot.slane %v2628, 4
      %v2646 = vsel %vm1925, 0.0, %v2645
      %v2647 = vrot.slane %v2632, 4
      %v2648 = vsel %vm1925, 0.0, %v2647
      %v2649 = vrot.slane %v2640, 4
      %v2650 = vsel %vm1925, 0.0, %v2649
      %v2651 = vrot.slane %v2644, 4
      %v2652 = vsel %vm1925, 0.0, %v2651
      %v2653 = vrot.slane %v1867, 4
      %v2654 = vsel %vm1925, %v2653, %v1782
      %v2655 = vrot.slane %v1782, 4
      %v2656 = vsel %vm1925, %v1867, %v2655
      %v2658 = vunpack.c.l.s4 1983009808
      %v2659 = vunpack.c.0.s8 %v2658
      %v2660 = vperm.slane %v2654, %v2659
      %v2662 = vunpack.c.l.s4 1983009808
      %v2663 = vunpack.c.0.s8 %v2662
      %v2664 = vperm.slane %v2656, %v2663
      %v2665 = vrot.slane %v1909, 4
      %v2666 = vsel %vm1925, %v2665, %v1825
      %v2667 = vrot.slane %v1825, 4
      %v2668 = vsel %vm1925, %v1909, %v2667
      %v2670 = vunpack.c.l.s4 1983009808
      %v2671 = vunpack.c.0.s8 %v2670
      %v2672 = vperm.slane %v2666, %v2671
      %v2674 = vunpack.c.l.s4 1983009808
      %v2675 = vunpack.c.0.s8 %v2674
      %v2676 = vperm.slane %v2668, %v2675
      %v2677 = vrot.slane %v2672, 4
      %v2678 = vsel %vm1925, %v2677, %v2660
      %v2679 = vrot.slane %v2660, 4
      %v2680 = vsel %vm1925, %v2672, %v2679
      %v2682 = vunpack.c.l.s4 1934713408
      %v2683 = vunpack.c.0.s8 %v2682
      %v2684 = vperm.slane %v2678, %v2683
      %v2686 = vunpack.c.l.s4 1934713408
      %v2687 = vunpack.c.0.s8 %v2686
      %v2688 = vperm.slane %v2680, %v2687
      %v2689 = vrot.slane %v2676, 4
      %v2690 = vsel %vm1925, %v2689, %v2664
      %v2691 = vrot.slane %v2664, 4
      %v2692 = vsel %vm1925, %v2676, %v2691
      %v2694 = vunpack.c.l.s4 1934713408
      %v2695 = vunpack.c.0.s8 %v2694
      %v2696 = vperm.slane %v2690, %v2695
      %v2698 = vunpack.c.l.s4 1934713408
      %v2699 = vunpack.c.0.s8 %v2698
      %v2700 = vperm.slane %v2692, %v2699
      %v2701 = vrot.slane %v2684, 4
      %v2702 = vsel %vm1925, 0.0, %v2701
      %v2703 = vrot.slane %v2688, 4
      %v2704 = vsel %vm1925, 0.0, %v2703
      %v2705 = vrot.slane %v2696, 4
      %v2706 = vsel %vm1925, 0.0, %v2705
      %v2707 = vrot.slane %v2700, 4
      %v2708 = vsel %vm1925, 0.0, %v2707
      %vm2709 = vcmask 125952
      %2710 = vst.msk [vmem:[#allocation2] sm:$0xf] %vm2709, %v1956
      %2711 = vst.msk [vmem:[#allocation2 + $0x4] sm:$0xf] %vm2709, %v1974
      %2712 = vst.msk [vmem:[#allocation2 + $0x8] sm:$0xf] %vm2709, %v1960
      %2713 = vst.msk [vmem:[#allocation2 + $0xc] sm:$0xf] %vm2709, %v1976
      %2714 = vst.msk [vmem:[#allocation2 + $0x10] sm:$0xf] %vm2709, %v1968
      %2715 = vst.msk [vmem:[#allocation2 + $0x14] sm:$0xf] %vm2709, %v1978
      %2716 = vst.msk [vmem:[#allocation2 + $0x18] sm:$0xf] %vm2709, %v1972
      %2717 = vst.msk [vmem:[#allocation2 + $0x1c] sm:$0xf] %vm2709, %v1980
      %2718 = vst.msk [vmem:[#allocation2 + $0x20] sm:$0xf] %vm2709, %v2012
      %2719 = vst.msk [vmem:[#allocation2 + $0x24] sm:$0xf] %vm2709, %v2030
      %2720 = vst.msk [vmem:[#allocation2 + $0x28] sm:$0xf] %vm2709, %v2016
      %2721 = vst.msk [vmem:[#allocation2 + $0x2c] sm:$0xf] %vm2709, %v2032
      %2722 = vst.msk [vmem:[#allocation2 + $0x30] sm:$0xf] %vm2709, %v2024
      %2723 = vst.msk [vmem:[#allocation2 + $0x34] sm:$0xf] %vm2709, %v2034
      %2724 = vst.msk [vmem:[#allocation2 + $0x38] sm:$0xf] %vm2709, %v2028
      %2725 = vst.msk [vmem:[#allocation2 + $0x3c] sm:$0xf] %vm2709, %v2036
      %2726 = vst.msk [vmem:[#allocation2 + $0x40] sm:$0xf] %vm2709, %v2068
      %2727 = vst.msk [vmem:[#allocation2 + $0x44] sm:$0xf] %vm2709, %v2086
      %2728 = vst.msk [vmem:[#allocation2 + $0x48] sm:$0xf] %vm2709, %v2072
      %2729 = vst.msk [vmem:[#allocation2 + $0x4c] sm:$0xf] %vm2709, %v2088
      %2730 = vst.msk [vmem:[#allocation2 + $0x50] sm:$0xf] %vm2709, %v2080
      %2731 = vst.msk [vmem:[#allocation2 + $0x54] sm:$0xf] %vm2709, %v2090
      %2732 = vst.msk [vmem:[#allocation2 + $0x58] sm:$0xf] %vm2709, %v2084
      %2733 = vst.msk [vmem:[#allocation2 + $0x5c] sm:$0xf] %vm2709, %v2092
      %2734 = vst.msk [vmem:[#allocation2 + $0x60] sm:$0xf] %vm2709, %v2124
      %2735 = vst.msk [vmem:[#allocation2 + $0x64] sm:$0xf] %vm2709, %v2142
      %2736 = vst.msk [vmem:[#allocation2 + $0x68] sm:$0xf] %vm2709, %v2128
      %2737 = vst.msk [vmem:[#allocation2 + $0x6c] sm:$0xf] %vm2709, %v2144
      %2738 = vst.msk [vmem:[#allocation2 + $0x70] sm:$0xf] %vm2709, %v2136
      %2739 = vst.msk [vmem:[#allocation2 + $0x74] sm:$0xf] %vm2709, %v2146
      %2740 = vst.msk [vmem:[#allocation2 + $0x78] sm:$0xf] %vm2709, %v2140
      %2741 = vst.msk [vmem:[#allocation2 + $0x7c] sm:$0xf] %vm2709, %v2148
      %2742 = vst.msk [vmem:[#allocation2 + $0x80] sm:$0xf] %vm2709, %v2180
      %2743 = vst.msk [vmem:[#allocation2 + $0x84] sm:$0xf] %vm2709, %v2198
      %2744 = vst.msk [vmem:[#allocation2 + $0x88] sm:$0xf] %vm2709, %v2184
      %2745 = vst.msk [vmem:[#allocation2 + $0x8c] sm:$0xf] %vm2709, %v2200
      %2746 = vst.msk [vmem:[#allocation2 + $0x90] sm:$0xf] %vm2709, %v2192
      %2747 = vst.msk [vmem:[#allocation2 + $0x94] sm:$0xf] %vm2709, %v2202
      %2748 = vst.msk [vmem:[#allocation2 + $0x98] sm:$0xf] %vm2709, %v2196
      %2749 = vst.msk [vmem:[#allocation2 + $0x9c] sm:$0xf] %vm2709, %v2204
      %2750 = vst.msk [vmem:[#allocation2 + $0xa0] sm:$0xf] %vm2709, %v2236
      %2751 = vst.msk [vmem:[#allocation2 + $0xa4] sm:$0xf] %vm2709, %v2254
      %2752 = vst.msk [vmem:[#allocation2 + $0xa8] sm:$0xf] %vm2709, %v2240
      %2753 = vst.msk [vmem:[#allocation2 + $0xac] sm:$0xf] %vm2709, %v2256
      %2754 = vst.msk [vmem:[#allocation2 + $0xb0] sm:$0xf] %vm2709, %v2248
      %2755 = vst.msk [vmem:[#allocation2 + $0xb4] sm:$0xf] %vm2709, %v2258
      %2756 = vst.msk [vmem:[#allocation2 + $0xb8] sm:$0xf] %vm2709, %v2252
      %2757 = vst.msk [vmem:[#allocation2 + $0xbc] sm:$0xf] %vm2709, %v2260
      %2758 = vst.msk [vmem:[#allocation2 + $0xc0] sm:$0xf] %vm2709, %v2292
      %2759 = vst.msk [vmem:[#allocation2 + $0xc4] sm:$0xf] %vm2709, %v2310
      %2760 = vst.msk [vmem:[#allocation2 + $0xc8] sm:$0xf] %vm2709, %v2296
      %2761 = vst.msk [vmem:[#allocation2 + $0xcc] sm:$0xf] %vm2709, %v2312
      %2762 = vst.msk [vmem:[#allocation2 + $0xd0] sm:$0xf] %vm2709, %v2304
      %2763 = vst.msk [vmem:[#allocation2 + $0xd4] sm:$0xf] %vm2709, %v2314
      %2764 = vst.msk [vmem:[#allocation2 + $0xd8] sm:$0xf] %vm2709, %v2308
      %2765 = vst.msk [vmem:[#allocation2 + $0xdc] sm:$0xf] %vm2709, %v2316
      %2766 = vst.msk [vmem:[#allocation2 + $0xe0] sm:$0xf] %vm2709, %v2348
      %2767 = vst.msk [vmem:[#allocation2 + $0xe4] sm:$0xf] %vm2709, %v2366
      %2768 = vst.msk [vmem:[#allocation2 + $0xe8] sm:$0xf] %vm2709, %v2352
      %2769 = vst.msk [vmem:[#allocation2 + $0xec] sm:$0xf] %vm2709, %v2368
      %2770 = vst.msk [vmem:[#allocation2 + $0xf0] sm:$0xf] %vm2709, %v2360
      %2771 = vst.msk [vmem:[#allocation2 + $0xf4] sm:$0xf] %vm2709, %v2370
      %2772 = vst.msk [vmem:[#allocation2 + $0xf8] sm:$0xf] %vm2709, %v2364
      %2773 = vst.msk [vmem:[#allocation2 + $0xfc] sm:$0xf] %vm2709, %v2372
      %2774 = vst.msk [vmem:[#allocation2 + $0x100] sm:$0xf] %vm2709, %v2404
      %2775 = vst.msk [vmem:[#allocation2 + $0x104] sm:$0xf] %vm2709, %v2422
      %2776 = vst.msk [vmem:[#allocation2 + $0x108] sm:$0xf] %vm2709, %v2408
      %2777 = vst.msk [vmem:[#allocation2 + $0x10c] sm:$0xf] %vm2709, %v2424
      %2778 = vst.msk [vmem:[#allocation2 + $0x110] sm:$0xf] %vm2709, %v2416
      %2779 = vst.msk [vmem:[#allocation2 + $0x114] sm:$0xf] %vm2709, %v2426
      %2780 = vst.msk [vmem:[#allocation2 + $0x118] sm:$0xf] %vm2709, %v2420
      %2781 = vst.msk [vmem:[#allocation2 + $0x11c] sm:$0xf] %vm2709, %v2428
      %2782 = vst.msk [vmem:[#allocation2 + $0x120] sm:$0xf] %vm2709, %v2460
      %2783 = vst.msk [vmem:[#allocation2 + $0x124] sm:$0xf] %vm2709, %v2478
      %2784 = vst.msk [vmem:[#allocation2 + $0x128] sm:$0xf] %vm2709, %v2464
      %2785 = vst.msk [vmem:[#allocation2 + $0x12c] sm:$0xf] %vm2709, %v2480
      %2786 = vst.msk [vmem:[#allocation2 + $0x130] sm:$0xf] %vm2709, %v2472
      %2787 = vst.msk [vmem:[#allocation2 + $0x134] sm:$0xf] %vm2709, %v2482
      %2788 = vst.msk [vmem:[#allocation2 + $0x138] sm:$0xf] %vm2709, %v2476
      %2789 = vst.msk [vmem:[#allocation2 + $0x13c] sm:$0xf] %vm2709, %v2484
      %2790 = vst.msk [vmem:[#allocation2 + $0x140] sm:$0xf] %vm2709, %v2516
      %2791 = vst.msk [vmem:[#allocation2 + $0x144] sm:$0xf] %vm2709, %v2534
      %2792 = vst.msk [vmem:[#allocation2 + $0x148] sm:$0xf] %vm2709, %v2520
      %2793 = vst.msk [vmem:[#allocation2 + $0x14c] sm:$0xf] %vm2709, %v2536
      %2794 = vst.msk [vmem:[#allocation2 + $0x150] sm:$0xf] %vm2709, %v2528
      %2795 = vst.msk [vmem:[#allocation2 + $0x154] sm:$0xf] %vm2709, %v2538
      %2796 = vst.msk [vmem:[#allocation2 + $0x158] sm:$0xf] %vm2709, %v2532
      %2797 = vst.msk [vmem:[#allocation2 + $0x15c] sm:$0xf] %vm2709, %v2540
      %2798 = vst.msk [vmem:[#allocation2 + $0x160] sm:$0xf] %vm2709, %v2572
      %2799 = vst.msk [vmem:[#allocation2 + $0x164] sm:$0xf] %vm2709, %v2590
      %2800 = vst.msk [vmem:[#allocation2 + $0x168] sm:$0xf] %vm2709, %v2576
      %2801 = vst.msk [vmem:[#allocation2 + $0x16c] sm:$0xf] %vm2709, %v2592
      %2802 = vst.msk [vmem:[#allocation2 + $0x170] sm:$0xf] %vm2709, %v2584
      %2803 = vst.msk [vmem:[#allocation2 + $0x174] sm:$0xf] %vm2709, %v2594
      %2804 = vst.msk [vmem:[#allocation2 + $0x178] sm:$0xf] %vm2709, %v2588
      %2805 = vst.msk [vmem:[#allocation2 + $0x17c] sm:$0xf] %vm2709, %v2596
      %2806 = vst.msk [vmem:[#allocation2 + $0x180] sm:$0xf] %vm2709, %v2628
      %2807 = vst.msk [vmem:[#allocation2 + $0x184] sm:$0xf] %vm2709, %v2646
      %2808 = vst.msk [vmem:[#allocation2 + $0x188] sm:$0xf] %vm2709, %v2632
      %2809 = vst.msk [vmem:[#allocation2 + $0x18c] sm:$0xf] %vm2709, %v2648
      %2810 = vst.msk [vmem:[#allocation2 + $0x190] sm:$0xf] %vm2709, %v2640
      %2811 = vst.msk [vmem:[#allocation2 + $0x194] sm:$0xf] %vm2709, %v2650
      %2812 = vst.msk [vmem:[#allocation2 + $0x198] sm:$0xf] %vm2709, %v2644
      %2813 = vst.msk [vmem:[#allocation2 + $0x19c] sm:$0xf] %vm2709, %v2652
      %2814 = vst.msk [vmem:[#allocation2 + $0x1a0] sm:$0xf] %vm2709, %v2684
      %2815 = vst.msk [vmem:[#allocation2 + $0x1a4] sm:$0xf] %vm2709, %v2702
      %2816 = vst.msk [vmem:[#allocation2 + $0x1a8] sm:$0xf] %vm2709, %v2688
      %2817 = vst.msk [vmem:[#allocation2 + $0x1ac] sm:$0xf] %vm2709, %v2704
      %2818 = vst.msk [vmem:[#allocation2 + $0x1b0] sm:$0xf] %vm2709, %v2696
      %2819 = vst.msk [vmem:[#allocation2 + $0x1b4] sm:$0xf] %vm2709, %v2706
      %2820 = vst.msk [vmem:[#allocation2 + $0x1b8] sm:$0xf] %vm2709, %v2700
      %2821 = vst.msk [vmem:[#allocation2 + $0x1bc] sm:$0xf] %vm2709, %v2708
      %v2822 = vld [vmem:[#allocation2] sm:$0xf]
      %v2823 = vld [vmem:[#allocation2 + $0x4] sm:$0xf]
      %v2824 = vld [vmem:[#allocation2 + $0x8] sm:$0xf]
      %v2825 = vld [vmem:[#allocation2 + $0xc] sm:$0xf]
      %v2826 = vld [vmem:[#allocation2 + $0x10] sm:$0xf]
      %v2827 = vld [vmem:[#allocation2 + $0x14] sm:$0xf]
      %v2828 = vld [vmem:[#allocation2 + $0x18] sm:$0xf]
      %v2829 = vld [vmem:[#allocation2 + $0x1c] sm:$0xf]
      %v2830 = vld [vmem:[#allocation2 + $0x20] sm:$0xf]
      %v2831 = vld [vmem:[#allocation2 + $0x24] sm:$0xf]
      %v2832 = vld [vmem:[#allocation2 + $0x28] sm:$0xf]
      %v2833 = vld [vmem:[#allocation2 + $0x2c] sm:$0xf]
      %v2834 = vld [vmem:[#allocation2 + $0x30] sm:$0xf]
      %v2835 = vld [vmem:[#allocation2 + $0x34] sm:$0xf]
      %v2836 = vld [vmem:[#allocation2 + $0x38] sm:$0xf]
      %v2837 = vld [vmem:[#allocation2 + $0x3c] sm:$0xf]
      %v2839 = vsel %vm1682, %v1664, 0
      %v2842 = vsel %vm1682, %v2822, 0
      %2844 = vmatpush.xpose.msra.mxu0 0.0
      %2845 = vmatpush.xpose.msra.mxu0 0.0
      %2846 = vmatpush.xpose.msra.mxu0 0.0
      %2847 = vmatpush.xpose.msra.mxu0 0.0
      %2848 = vmatpush.xpose.msra.mxu0 0.0
      %2849 = vmatpush.xpose.msra.mxu0 0.0
      %2850 = vmatpush.xpose.msra.mxu0 0.0
      %2851 = vmatpush.xpose.msra.mxu0 0.0
      %2852 = vmatpush.xpose.msra.mxu0 0.0
      %2853 = vmatpush.xpose.msra.mxu0 0.0
      %2854 = vmatpush.xpose.msra.mxu0 0.0
      %2855 = vmatpush.xpose.msra.mxu0 0.0
      %2856 = vmatpush.xpose.msra.mxu0 0.0
      %2857 = vmatpush.xpose.msra.mxu0 0.0
      %2858 = vmatpush.xpose.msra.mxu0 0.0
      %2859 = vmatpush.xpose.msra.mxu0 %v2842
      %2860 = vmatmul.f32.gmra.mxu0 %v2839
      %v2861 = vpop.f32.mrf.mxu0
      %v2862 = vadd.f32 0.0, %v2861
      %2863 = vdwg.mxu0
      %v2865 = vsel %vm1682, %v1665, 0
      %v2868 = vsel %vm1682, %v2823, 0
      %2870 = vmatpush.xpose.msra.mxu0 0.0
      %2871 = vmatpush.xpose.msra.mxu0 0.0
      %2872 = vmatpush.xpose.msra.mxu0 0.0
      %2873 = vmatpush.xpose.msra.mxu0 0.0
      %2874 = vmatpush.xpose.msra.mxu0 0.0
      %2875 = vmatpush.xpose.msra.mxu0 0.0
      %2876 = vmatpush.xpose.msra.mxu0 0.0
      %2877 = vmatpush.xpose.msra.mxu0 0.0
      %2878 = vmatpush.xpose.msra.mxu0 0.0
      %2879 = vmatpush.xpose.msra.mxu0 0.0
      %2880 = vmatpush.xpose.msra.mxu0 0.0
      %2881 = vmatpush.xpose.msra.mxu0 0.0
      %2882 = vmatpush.xpose.msra.mxu0 0.0
      %2883 = vmatpush.xpose.msra.mxu0 0.0
      %2884 = vmatpush.xpose.msra.mxu0 0.0
      %2885 = vmatpush.xpose.msra.mxu0 %v2868
      %2886 = vmatmul.f32.gmra.mxu0 %v2865
      %v2887 = vpop.f32.mrf.mxu0
      %v2888 = vadd.f32 0.0, %v2887
      %2889 = vdwg.mxu0
      %v2891 = vsel %vm1682, %v1666, 0
      %v2894 = vsel %vm1682, %v2824, 0
      %2896 = vmatpush.xpose.msra.mxu0 0.0
      %2897 = vmatpush.xpose.msra.mxu0 0.0
      %2898 = vmatpush.xpose.msra.mxu0 0.0
      %2899 = vmatpush.xpose.msra.mxu0 0.0
      %2900 = vmatpush.xpose.msra.mxu0 0.0
      %2901 = vmatpush.xpose.msra.mxu0 0.0
      %2902 = vmatpush.xpose.msra.mxu0 0.0
      %2903 = vmatpush.xpose.msra.mxu0 0.0
      %2904 = vmatpush.xpose.msra.mxu0 0.0
      %2905 = vmatpush.xpose.msra.mxu0 0.0
      %2906 = vmatpush.xpose.msra.mxu0 0.0
      %2907 = vmatpush.xpose.msra.mxu0 0.0
      %2908 = vmatpush.xpose.msra.mxu0 0.0
      %2909 = vmatpush.xpose.msra.mxu0 0.0
      %2910 = vmatpush.xpose.msra.mxu0 0.0
      %2911 = vmatpush.xpose.msra.mxu0 %v2894
      %2912 = vmatmul.f32.gmra.mxu0 %v2891
      %v2913 = vpop.f32.mrf.mxu0
      %v2914 = vadd.f32 0.0, %v2913
      %2915 = vdwg.mxu0
      %v2917 = vsel %vm1682, %v1667, 0
      %v2920 = vsel %vm1682, %v2825, 0
      %2922 = vmatpush.xpose.msra.mxu0 0.0
      %2923 = vmatpush.xpose.msra.mxu0 0.0
      %2924 = vmatpush.xpose.msra.mxu0 0.0
      %2925 = vmatpush.xpose.msra.mxu0 0.0
      %2926 = vmatpush.xpose.msra.mxu0 0.0
      %2927 = vmatpush.xpose.msra.mxu0 0.0
      %2928 = vmatpush.xpose.msra.mxu0 0.0
      %2929 = vmatpush.xpose.msra.mxu0 0.0
      %2930 = vmatpush.xpose.msra.mxu0 0.0
      %2931 = vmatpush.xpose.msra.mxu0 0.0
      %2932 = vmatpush.xpose.msra.mxu0 0.0
      %2933 = vmatpush.xpose.msra.mxu0 0.0
      %2934 = vmatpush.xpose.msra.mxu0 0.0
      %2935 = vmatpush.xpose.msra.mxu0 0.0
      %2936 = vmatpush.xpose.msra.mxu0 0.0
      %2937 = vmatpush.xpose.msra.mxu0 %v2920
      %2938 = vmatmul.f32.gmra.mxu0 %v2917
      %v2939 = vpop.f32.mrf.mxu0
      %v2940 = vadd.f32 0.0, %v2939
      %2941 = vdwg.mxu0
      %v2943 = vsel %vm1682, %v1668, 0
      %v2946 = vsel %vm1682, %v2826, 0
      %2948 = vmatpush.xpose.msra.mxu0 0.0
      %2949 = vmatpush.xpose.msra.mxu0 0.0
      %2950 = vmatpush.xpose.msra.mxu0 0.0
      %2951 = vmatpush.xpose.msra.mxu0 0.0
      %2952 = vmatpush.xpose.msra.mxu0 0.0
      %2953 = vmatpush.xpose.msra.mxu0 0.0
      %2954 = vmatpush.xpose.msra.mxu0 0.0
      %2955 = vmatpush.xpose.msra.mxu0 0.0
      %2956 = vmatpush.xpose.msra.mxu0 0.0
      %2957 = vmatpush.xpose.msra.mxu0 0.0
      %2958 = vmatpush.xpose.msra.mxu0 0.0
      %2959 = vmatpush.xpose.msra.mxu0 0.0
      %2960 = vmatpush.xpose.msra.mxu0 0.0
      %2961 = vmatpush.xpose.msra.mxu0 0.0
      %2962 = vmatpush.xpose.msra.mxu0 0.0
      %2963 = vmatpush.xpose.msra.mxu0 %v2946
      %2964 = vmatmul.f32.gmra.mxu0 %v2943
      %v2965 = vpop.f32.mrf.mxu0
      %v2966 = vadd.f32 0.0, %v2965
      %2967 = vdwg.mxu0
      %v2969 = vsel %vm1682, %v1669, 0
      %v2972 = vsel %vm1682, %v2827, 0
      %2974 = vmatpush.xpose.msra.mxu0 0.0
      %2975 = vmatpush.xpose.msra.mxu0 0.0
      %2976 = vmatpush.xpose.msra.mxu0 0.0
      %2977 = vmatpush.xpose.msra.mxu0 0.0
      %2978 = vmatpush.xpose.msra.mxu0 0.0
      %2979 = vmatpush.xpose.msra.mxu0 0.0
      %2980 = vmatpush.xpose.msra.mxu0 0.0
      %2981 = vmatpush.xpose.msra.mxu0 0.0
      %2982 = vmatpush.xpose.msra.mxu0 0.0
      %2983 = vmatpush.xpose.msra.mxu0 0.0
      %2984 = vmatpush.xpose.msra.mxu0 0.0
      %2985 = vmatpush.xpose.msra.mxu0 0.0
      %2986 = vmatpush.xpose.msra.mxu0 0.0
      %2987 = vmatpush.xpose.msra.mxu0 0.0
      %2988 = vmatpush.xpose.msra.mxu0 0.0
      %2989 = vmatpush.xpose.msra.mxu0 %v2972
      %2990 = vmatmul.f32.gmra.mxu0 %v2969
      %v2991 = vpop.f32.mrf.mxu0
      %v2992 = vadd.f32 0.0, %v2991
      %2993 = vdwg.mxu0
      %v2995 = vsel %vm1682, %v1670, 0
      %v2998 = vsel %vm1682, %v2828, 0
      %3000 = vmatpush.xpose.msra.mxu0 0.0
      %3001 = vmatpush.xpose.msra.mxu0 0.0
      %3002 = vmatpush.xpose.msra.mxu0 0.0
      %3003 = vmatpush.xpose.msra.mxu0 0.0
      %3004 = vmatpush.xpose.msra.mxu0 0.0
      %3005 = vmatpush.xpose.msra.mxu0 0.0
      %3006 = vmatpush.xpose.msra.mxu0 0.0
      %3007 = vmatpush.xpose.msra.mxu0 0.0
      %3008 = vmatpush.xpose.msra.mxu0 0.0
      %3009 = vmatpush.xpose.msra.mxu0 0.0
      %3010 = vmatpush.xpose.msra.mxu0 0.0
      %3011 = vmatpush.xpose.msra.mxu0 0.0
      %3012 = vmatpush.xpose.msra.mxu0 0.0
      %3013 = vmatpush.xpose.msra.mxu0 0.0
      %3014 = vmatpush.xpose.msra.mxu0 0.0
      %3015 = vmatpush.xpose.msra.mxu0 %v2998
      %3016 = vmatmul.f32.gmra.mxu0 %v2995
      %v3017 = vpop.f32.mrf.mxu0
      %v3018 = vadd.f32 0.0, %v3017
      %3019 = vdwg.mxu0
      %v3021 = vsel %vm1682, %v1671, 0
      %v3024 = vsel %vm1682, %v2829, 0
      %3026 = vmatpush.xpose.msra.mxu0 0.0
      %3027 = vmatpush.xpose.msra.mxu0 0.0
      %3028 = vmatpush.xpose.msra.mxu0 0.0
      %3029 = vmatpush.xpose.msra.mxu0 0.0
      %3030 = vmatpush.xpose.msra.mxu0 0.0
      %3031 = vmatpush.xpose.msra.mxu0 0.0
      %3032 = vmatpush.xpose.msra.mxu0 0.0
      %3033 = vmatpush.xpose.msra.mxu0 0.0
      %3034 = vmatpush.xpose.msra.mxu0 0.0
      %3035 = vmatpush.xpose.msra.mxu0 0.0
      %3036 = vmatpush.xpose.msra.mxu0 0.0
      %3037 = vmatpush.xpose.msra.mxu0 0.0
      %3038 = vmatpush.xpose.msra.mxu0 0.0
      %3039 = vmatpush.xpose.msra.mxu0 0.0
      %3040 = vmatpush.xpose.msra.mxu0 0.0
      %3041 = vmatpush.xpose.msra.mxu0 %v3024
      %3042 = vmatmul.f32.gmra.mxu0 %v3021
      %v3043 = vpop.f32.mrf.mxu0
      %v3044 = vadd.f32 0.0, %v3043
      %3045 = vdwg.mxu0
      %v3047 = vsel %vm1682, %v1672, 0
      %v3050 = vsel %vm1682, %v2830, 0
      %3052 = vmatpush.xpose.msra.mxu0 0.0
      %3053 = vmatpush.xpose.msra.mxu0 0.0
      %3054 = vmatpush.xpose.msra.mxu0 0.0
      %3055 = vmatpush.xpose.msra.mxu0 0.0
      %3056 = vmatpush.xpose.msra.mxu0 0.0
      %3057 = vmatpush.xpose.msra.mxu0 0.0
      %3058 = vmatpush.xpose.msra.mxu0 0.0
      %3059 = vmatpush.xpose.msra.mxu0 0.0
      %3060 = vmatpush.xpose.msra.mxu0 0.0
      %3061 = vmatpush.xpose.msra.mxu0 0.0
      %3062 = vmatpush.xpose.msra.mxu0 0.0
      %3063 = vmatpush.xpose.msra.mxu0 0.0
      %3064 = vmatpush.xpose.msra.mxu0 0.0
      %3065 = vmatpush.xpose.msra.mxu0 0.0
      %3066 = vmatpush.xpose.msra.mxu0 0.0
      %3067 = vmatpush.xpose.msra.mxu0 %v3050
      %3068 = vmatmul.f32.gmra.mxu0 %v3047
      %v3069 = vpop.f32.mrf.mxu0
      %v3070 = vadd.f32 0.0, %v3069
      %3071 = vdwg.mxu0
      %v3073 = vsel %vm1682, %v1673, 0
      %v3076 = vsel %vm1682, %v2831, 0
      %3078 = vmatpush.xpose.msra.mxu0 0.0
      %3079 = vmatpush.xpose.msra.mxu0 0.0
      %3080 = vmatpush.xpose.msra.mxu0 0.0
      %3081 = vmatpush.xpose.msra.mxu0 0.0
      %3082 = vmatpush.xpose.msra.mxu0 0.0
      %3083 = vmatpush.xpose.msra.mxu0 0.0
      %3084 = vmatpush.xpose.msra.mxu0 0.0
      %3085 = vmatpush.xpose.msra.mxu0 0.0
      %3086 = vmatpush.xpose.msra.mxu0 0.0
      %3087 = vmatpush.xpose.msra.mxu0 0.0
      %3088 = vmatpush.xpose.msra.mxu0 0.0
      %3089 = vmatpush.xpose.msra.mxu0 0.0
      %3090 = vmatpush.xpose.msra.mxu0 0.0
      %3091 = vmatpush.xpose.msra.mxu0 0.0
      %3092 = vmatpush.xpose.msra.mxu0 0.0
      %3093 = vmatpush.xpose.msra.mxu0 %v3076
      %3094 = vmatmul.f32.gmra.mxu0 %v3073
      %v3095 = vpop.f32.mrf.mxu0
      %v3096 = vadd.f32 0.0, %v3095
      %3097 = vdwg.mxu0
      %v3099 = vsel %vm1682, %v1674, 0
      %v3102 = vsel %vm1682, %v2832, 0
      %3104 = vmatpush.xpose.msra.mxu0 0.0
      %3105 = vmatpush.xpose.msra.mxu0 0.0
      %3106 = vmatpush.xpose.msra.mxu0 0.0
      %3107 = vmatpush.xpose.msra.mxu0 0.0
      %3108 = vmatpush.xpose.msra.mxu0 0.0
      %3109 = vmatpush.xpose.msra.mxu0 0.0
      %3110 = vmatpush.xpose.msra.mxu0 0.0
      %3111 = vmatpush.xpose.msra.mxu0 0.0
      %3112 = vmatpush.xpose.msra.mxu0 0.0
      %3113 = vmatpush.xpose.msra.mxu0 0.0
      %3114 = vmatpush.xpose.msra.mxu0 0.0
      %3115 = vmatpush.xpose.msra.mxu0 0.0
      %3116 = vmatpush.xpose.msra.mxu0 0.0
      %3117 = vmatpush.xpose.msra.mxu0 0.0
      %3118 = vmatpush.xpose.msra.mxu0 0.0
      %3119 = vmatpush.xpose.msra.mxu0 %v3102
      %3120 = vmatmul.f32.gmra.mxu0 %v3099
      %v3121 = vpop.f32.mrf.mxu0
      %v3122 = vadd.f32 0.0, %v3121
      %3123 = vdwg.mxu0
      %v3125 = vsel %vm1682, %v1675, 0
      %v3128 = vsel %vm1682, %v2833, 0
      %3130 = vmatpush.xpose.msra.mxu0 0.0
      %3131 = vmatpush.xpose.msra.mxu0 0.0
      %3132 = vmatpush.xpose.msra.mxu0 0.0
      %3133 = vmatpush.xpose.msra.mxu0 0.0
      %3134 = vmatpush.xpose.msra.mxu0 0.0
      %3135 = vmatpush.xpose.msra.mxu0 0.0
      %3136 = vmatpush.xpose.msra.mxu0 0.0
      %3137 = vmatpush.xpose.msra.mxu0 0.0
      %3138 = vmatpush.xpose.msra.mxu0 0.0
      %3139 = vmatpush.xpose.msra.mxu0 0.0
      %3140 = vmatpush.xpose.msra.mxu0 0.0
      %3141 = vmatpush.xpose.msra.mxu0 0.0
      %3142 = vmatpush.xpose.msra.mxu0 0.0
      %3143 = vmatpush.xpose.msra.mxu0 0.0
      %3144 = vmatpush.xpose.msra.mxu0 0.0
      %3145 = vmatpush.xpose.msra.mxu0 %v3128
      %3146 = vmatmul.f32.gmra.mxu0 %v3125
      %v3147 = vpop.f32.mrf.mxu0
      %v3148 = vadd.f32 0.0, %v3147
      %3149 = vdwg.mxu0
      %v3151 = vsel %vm1682, %v1676, 0
      %v3154 = vsel %vm1682, %v2834, 0
      %3156 = vmatpush.xpose.msra.mxu0 0.0
      %3157 = vmatpush.xpose.msra.mxu0 0.0
      %3158 = vmatpush.xpose.msra.mxu0 0.0
      %3159 = vmatpush.xpose.msra.mxu0 0.0
      %3160 = vmatpush.xpose.msra.mxu0 0.0
      %3161 = vmatpush.xpose.msra.mxu0 0.0
      %3162 = vmatpush.xpose.msra.mxu0 0.0
      %3163 = vmatpush.xpose.msra.mxu0 0.0
      %3164 = vmatpush.xpose.msra.mxu0 0.0
      %3165 = vmatpush.xpose.msra.mxu0 0.0
      %3166 = vmatpush.xpose.msra.mxu0 0.0
      %3167 = vmatpush.xpose.msra.mxu0 0.0
      %3168 = vmatpush.xpose.msra.mxu0 0.0
      %3169 = vmatpush.xpose.msra.mxu0 0.0
      %3170 = vmatpush.xpose.msra.mxu0 0.0
      %3171 = vmatpush.xpose.msra.mxu0 %v3154
      %3172 = vmatmul.f32.gmra.mxu0 %v3151
      %v3173 = vpop.f32.mrf.mxu0
      %v3174 = vadd.f32 0.0, %v3173
      %3175 = vdwg.mxu0
      %v3177 = vsel %vm1682, %v1677, 0
      %v3180 = vsel %vm1682, %v2835, 0
      %3182 = vmatpush.xpose.msra.mxu0 0.0
      %3183 = vmatpush.xpose.msra.mxu0 0.0
      %3184 = vmatpush.xpose.msra.mxu0 0.0
      %3185 = vmatpush.xpose.msra.mxu0 0.0
      %3186 = vmatpush.xpose.msra.mxu0 0.0
      %3187 = vmatpush.xpose.msra.mxu0 0.0
      %3188 = vmatpush.xpose.msra.mxu0 0.0
      %3189 = vmatpush.xpose.msra.mxu0 0.0
      %3190 = vmatpush.xpose.msra.mxu0 0.0
      %3191 = vmatpush.xpose.msra.mxu0 0.0
      %3192 = vmatpush.xpose.msra.mxu0 0.0
      %3193 = vmatpush.xpose.msra.mxu0 0.0
      %3194 = vmatpush.xpose.msra.mxu0 0.0
      %3195 = vmatpush.xpose.msra.mxu0 0.0
      %3196 = vmatpush.xpose.msra.mxu0 0.0
      %3197 = vmatpush.xpose.msra.mxu0 %v3180
      %3198 = vmatmul.f32.gmra.mxu0 %v3177
      %v3199 = vpop.f32.mrf.mxu0
      %v3200 = vadd.f32 0.0, %v3199
      %3201 = vdwg.mxu0
      %v3203 = vsel %vm1682, %v1678, 0
      %v3206 = vsel %vm1682, %v2836, 0
      %3208 = vmatpush.xpose.msra.mxu0 0.0
      %3209 = vmatpush.xpose.msra.mxu0 0.0
      %3210 = vmatpush.xpose.msra.mxu0 0.0
      %3211 = vmatpush.xpose.msra.mxu0 0.0
      %3212 = vmatpush.xpose.msra.mxu0 0.0
      %3213 = vmatpush.xpose.msra.mxu0 0.0
      %3214 = vmatpush.xpose.msra.mxu0 0.0
      %3215 = vmatpush.xpose.msra.mxu0 0.0
      %3216 = vmatpush.xpose.msra.mxu0 0.0
      %3217 = vmatpush.xpose.msra.mxu0 0.0
      %3218 = vmatpush.xpose.msra.mxu0 0.0
      %3219 = vmatpush.xpose.msra.mxu0 0.0
      %3220 = vmatpush.xpose.msra.mxu0 0.0
      %3221 = vmatpush.xpose.msra.mxu0 0.0
      %3222 = vmatpush.xpose.msra.mxu0 0.0
      %3223 = vmatpush.xpose.msra.mxu0 %v3206
      %3224 = vmatmul.f32.gmra.mxu0 %v3203
      %v3225 = vpop.f32.mrf.mxu0
      %v3226 = vadd.f32 0.0, %v3225
      %3227 = vdwg.mxu0
      %v3229 = vsel %vm1682, %v1679, 0
      %v3232 = vsel %vm1682, %v2837, 0
      %3234 = vmatpush.xpose.msra.mxu0 0.0
      %3235 = vmatpush.xpose.msra.mxu0 0.0
      %3236 = vmatpush.xpose.msra.mxu0 0.0
      %3237 = vmatpush.xpose.msra.mxu0 0.0
      %3238 = vmatpush.xpose.msra.mxu0 0.0
      %3239 = vmatpush.xpose.msra.mxu0 0.0
      %3240 = vmatpush.xpose.msra.mxu0 0.0
      %3241 = vmatpush.xpose.msra.mxu0 0.0
      %3242 = vmatpush.xpose.msra.mxu0 0.0
      %3243 = vmatpush.xpose.msra.mxu0 0.0
      %3244 = vmatpush.xpose.msra.mxu0 0.0
      %3245 = vmatpush.xpose.msra.mxu0 0.0
      %3246 = vmatpush.xpose.msra.mxu0 0.0
      %3247 = vmatpush.xpose.msra.mxu0 0.0
      %3248 = vmatpush.xpose.msra.mxu0 0.0
      %3249 = vmatpush.xpose.msra.mxu0 %v3232
      %3250 = vmatmul.f32.gmra.mxu0 %v3229
      %v3251 = vpop.f32.mrf.mxu0
      %v3252 = vadd.f32 0.0, %v3251
      %3253 = vdwg.mxu0
      %v3270 = vrot.slane %v2862, 1
      %v3271 = vrot.slane %v2862, 2
      %v3272 = vrot.slane %v2862, 3
      %v3273 = vrot.slane %v2862, 4
      %v3274 = vrot.slane %v2862, 5
      %v3275 = vrot.slane %v2862, 6
      %v3276 = vrot.slane %v2888, 1
      %v3277 = vrot.slane %v2888, 2
      %v3278 = vrot.slane %v2888, 3
      %v3279 = vrot.slane %v2888, 4
      %v3280 = vrot.slane %v2888, 5
      %v3281 = vrot.slane %v2888, 6
      %v3282 = vrot.slane %v2914, 1
      %v3283 = vrot.slane %v2914, 2
      %v3284 = vrot.slane %v2914, 3
      %v3285 = vrot.slane %v2914, 4
      %v3286 = vrot.slane %v2914, 5
      %v3287 = vrot.slane %v2914, 6
      %v3288 = vrot.slane %v2940, 1
      %v3289 = vrot.slane %v2940, 2
      %v3290 = vrot.slane %v2940, 3
      %v3291 = vrot.slane %v2940, 4
      %v3292 = vrot.slane %v2940, 5
      %v3293 = vrot.slane %v2940, 6
      %v3294 = vrot.slane %v2966, 1
      %v3295 = vrot.slane %v2966, 2
      %v3296 = vrot.slane %v2966, 3
      %v3297 = vrot.slane %v2966, 4
      %v3298 = vrot.slane %v2966, 5
      %v3299 = vrot.slane %v2966, 6
      %v3300 = vrot.slane %v2992, 1
      %v3301 = vrot.slane %v2992, 2
      %v3302 = vrot.slane %v2992, 3
      %v3303 = vrot.slane %v2992, 4
      %v3304 = vrot.slane %v2992, 5
      %v3305 = vrot.slane %v2992, 6
      %v3306 = vrot.slane %v3018, 1
      %v3307 = vrot.slane %v3018, 2
      %v3308 = vrot.slane %v3018, 3
      %v3309 = vrot.slane %v3018, 4
      %v3310 = vrot.slane %v3018, 5
      %v3311 = vrot.slane %v3018, 6
      %v3312 = vrot.slane %v3044, 1
      %v3313 = vrot.slane %v3044, 2
      %v3314 = vrot.slane %v3044, 3
      %v3315 = vrot.slane %v3044, 4
      %v3316 = vrot.slane %v3044, 5
      %v3317 = vrot.slane %v3044, 6
      %v3318 = vrot.slane %v3070, 1
      %v3319 = vrot.slane %v3070, 2
      %v3320 = vrot.slane %v3070, 3
      %v3321 = vrot.slane %v3070, 4
      %v3322 = vrot.slane %v3070, 5
      %v3323 = vrot.slane %v3070, 6
      %v3324 = vrot.slane %v3096, 1
      %v3325 = vrot.slane %v3096, 2
      %v3326 = vrot.slane %v3096, 3
      %v3327 = vrot.slane %v3096, 4
      %v3328 = vrot.slane %v3096, 5
      %v3329 = vrot.slane %v3096, 6
      %v3330 = vrot.slane %v3122, 1
      %v3331 = vrot.slane %v3122, 2
      %v3332 = vrot.slane %v3122, 3
      %v3333 = vrot.slane %v3122, 4
      %v3334 = vrot.slane %v3122, 5
      %v3335 = vrot.slane %v3122, 6
      %v3336 = vrot.slane %v3148, 1
      %v3337 = vrot.slane %v3148, 2
      %v3338 = vrot.slane %v3148, 3
      %v3339 = vrot.slane %v3148, 4
      %v3340 = vrot.slane %v3148, 5
      %v3341 = vrot.slane %v3148, 6
      %v3342 = vrot.slane %v3174, 1
      %v3343 = vrot.slane %v3174, 2
      %v3344 = vrot.slane %v3174, 3
      %v3345 = vrot.slane %v3174, 4
      %v3346 = vrot.slane %v3174, 5
      %v3347 = vrot.slane %v3174, 6
      %v3348 = vrot.slane %v3200, 1
      %v3349 = vrot.slane %v3200, 2
      %v3350 = vrot.slane %v3200, 3
      %v3351 = vrot.slane %v3200, 4
      %v3352 = vrot.slane %v3200, 5
      %v3353 = vrot.slane %v3200, 6
      %v3354 = vrot.slane %v3226, 1
      %v3355 = vrot.slane %v3226, 2
      %v3356 = vrot.slane %v3226, 3
      %v3357 = vrot.slane %v3226, 4
      %v3358 = vrot.slane %v3226, 5
      %v3359 = vrot.slane %v3226, 6
      %v3360 = vrot.slane %v3252, 1
      %v3361 = vrot.slane %v3252, 2
      %v3362 = vrot.slane %v3252, 3
      %v3363 = vrot.slane %v3252, 4
      %v3364 = vrot.slane %v3252, 5
      %v3365 = vrot.slane %v3252, 6
      %3366 = vst [vmem:[#allocation1] ss:$9 sm:$0xff] %v2862
      %s3367 = scalar_lea.vmem [#allocation1], 1
      %3368 = vst [vmem:[%s3367] ss:$9 sm:$0xff] %v3270
      %s3369 = scalar_lea.vmem [#allocation1], 2
      %3370 = vst [vmem:[%s3369] ss:$9 sm:$0xff] %v3271
      %s3371 = scalar_lea.vmem [#allocation1], 3
      %3372 = vst [vmem:[%s3371] ss:$9 sm:$0xff] %v3272
      %s3373 = scalar_lea.vmem [#allocation1], 4
      %3374 = vst [vmem:[%s3373] ss:$9 sm:$0xff] %v3273
      %s3375 = scalar_lea.vmem [#allocation1], 5
      %3376 = vst [vmem:[%s3375] ss:$9 sm:$0xff] %v3274
      %s3377 = scalar_lea.vmem [#allocation1], 6
      %3378 = vst [vmem:[%s3377] ss:$9 sm:$0xff] %v3275
      %s3379 = scalar_lea.vmem [#allocation1], 7
      %3380 = vst [vmem:[%s3379] ss:$9 sm:$0xff] %v2888
      %v3381 = vld [vmem:[#allocation1] sm:$0xff]
      %3382 = vst [vmem:[#allocation1] ss:$9 sm:$0xff] %v3276
      %3383 = vst [vmem:[%s3367] ss:$9 sm:$0xff] %v3277
      %3384 = vst [vmem:[%s3369] ss:$9 sm:$0xff] %v3278
      %3385 = vst [vmem:[%s3371] ss:$9 sm:$0xff] %v3279
      %3386 = vst [vmem:[%s3373] ss:$9 sm:$0xff] %v3280
      %3387 = vst [vmem:[%s3375] ss:$9 sm:$0xff] %v3281
      %3388 = vst [vmem:[%s3377] ss:$9 sm:$0xff] %v2914
      %3389 = vst [vmem:[%s3379] ss:$9 sm:$0xff] %v3282
      %v3390 = vld [vmem:[#allocation1] sm:$0xff]
      %3391 = vst [vmem:[#allocation1] ss:$9 sm:$0xff] %v3283
      %3392 = vst [vmem:[%s3367] ss:$9 sm:$0xff] %v3284
      %3393 = vst [vmem:[%s3369] ss:$9 sm:$0xff] %v3285
      %3394 = vst [vmem:[%s3371] ss:$9 sm:$0xff] %v3286
      %3395 = vst [vmem:[%s3373] ss:$9 sm:$0xff] %v3287
      %3396 = vst [vmem:[%s3375] ss:$9 sm:$0xff] %v2940
      %3397 = vst [vmem:[%s3377] ss:$9 sm:$0xff] %v3288
      %3398 = vst [vmem:[%s3379] ss:$9 sm:$0xff] %v3289
      %v3399 = vld [vmem:[#allocation1] sm:$0xff]
      %3400 = vst [vmem:[#allocation1] ss:$9 sm:$0xff] %v3290
      %3401 = vst [vmem:[%s3367] ss:$9 sm:$0xff] %v3291
      %3402 = vst [vmem:[%s3369] ss:$9 sm:$0xff] %v3292
      %3403 = vst [vmem:[%s3371] ss:$9 sm:$0xff] %v3293
      %3404 = vst [vmem:[%s3373] ss:$9 sm:$0xff] %v2966
      %3405 = vst [vmem:[%s3375] ss:$9 sm:$0xff] %v3294
      %3406 = vst [vmem:[%s3377] ss:$9 sm:$0xff] %v3295
      %3407 = vst [vmem:[%s3379] ss:$9 sm:$0xff] %v3296
      %v3408 = vld [vmem:[#allocation1] sm:$0xff]
      %3409 = vst [vmem:[#allocation1] ss:$9 sm:$0xff] %v3297
      %3410 = vst [vmem:[%s3367] ss:$9 sm:$0xff] %v3298
      %3411 = vst [vmem:[%s3369] ss:$9 sm:$0xff] %v3299
      %3412 = vst [vmem:[%s3371] ss:$9 sm:$0xff] %v2992
      %3413 = vst [vmem:[%s3373] ss:$9 sm:$0xff] %v3300
      %3414 = vst [vmem:[%s3375] ss:$9 sm:$0xff] %v3301
      %3415 = vst [vmem:[%s3377] ss:$9 sm:$0xff] %v3302
      %3416 = vst [vmem:[%s3379] ss:$9 sm:$0xff] %v3303
      %v3417 = vld [vmem:[#allocation1] sm:$0xff]
      %3418 = vst [vmem:[#allocation1] ss:$9 sm:$0xff] %v3304
      %3419 = vst [vmem:[%s3367] ss:$9 sm:$0xff] %v3305
      %3420 = vst [vmem:[%s3369] ss:$9 sm:$0xff] %v3018
      %3421 = vst [vmem:[%s3371] ss:$9 sm:$0xff] %v3306
      %3422 = vst [vmem:[%s3373] ss:$9 sm:$0xff] %v3307
      %3423 = vst [vmem:[%s3375] ss:$9 sm:$0xff] %v3308
      %3424 = vst [vmem:[%s3377] ss:$9 sm:$0xff] %v3309
      %3425 = vst [vmem:[%s3379] ss:$9 sm:$0xff] %v3310
      %v3426 = vld [vmem:[#allocation1] sm:$0xff]
      %3427 = vst [vmem:[#allocation1] ss:$9 sm:$0xff] %v3311
      %3428 = vst [vmem:[%s3367] ss:$9 sm:$0xff] %v3044
      %3429 = vst [vmem:[%s3369] ss:$9 sm:$0xff] %v3312
      %3430 = vst [vmem:[%s3371] ss:$9 sm:$0xff] %v3313
      %3431 = vst [vmem:[%s3373] ss:$9 sm:$0xff] %v3314
      %3432 = vst [vmem:[%s3375] ss:$9 sm:$0xff] %v3315
      %3433 = vst [vmem:[%s3377] ss:$9 sm:$0xff] %v3316
      %3434 = vst [vmem:[%s3379] ss:$9 sm:$0xff] %v3317
      %v3435 = vld [vmem:[#allocation1] sm:$0xff]
      %3436 = vst [vmem:[#allocation1] ss:$9 sm:$0xff] %v3070
      %3437 = vst [vmem:[%s3367] ss:$9 sm:$0xff] %v3318
      %3438 = vst [vmem:[%s3369] ss:$9 sm:$0xff] %v3319
      %3439 = vst [vmem:[%s3371] ss:$9 sm:$0xff] %v3320
      %3440 = vst [vmem:[%s3373] ss:$9 sm:$0xff] %v3321
      %3441 = vst [vmem:[%s3375] ss:$9 sm:$0xff] %v3322
      %3442 = vst [vmem:[%s3377] ss:$9 sm:$0xff] %v3323
      %3443 = vst [vmem:[%s3379] ss:$9 sm:$0xff] %v3096
      %v3444 = vld [vmem:[#allocation1] sm:$0xff]
      %3445 = vst [vmem:[#allocation1] ss:$9 sm:$0xff] %v3324
      %3446 = vst [vmem:[%s3367] ss:$9 sm:$0xff] %v3325
      %3447 = vst [vmem:[%s3369] ss:$9 sm:$0xff] %v3326
      %3448 = vst [vmem:[%s3371] ss:$9 sm:$0xff] %v3327
      %3449 = vst [vmem:[%s3373] ss:$9 sm:$0xff] %v3328
      %3450 = vst [vmem:[%s3375] ss:$9 sm:$0xff] %v3329
      %3451 = vst [vmem:[%s3377] ss:$9 sm:$0xff] %v3122
      %3452 = vst [vmem:[%s3379] ss:$9 sm:$0xff] %v3330
      %v3453 = vld [vmem:[#allocation1] sm:$0xff]
      %3454 = vst [vmem:[#allocation1] ss:$9 sm:$0xff] %v3331
      %3455 = vst [vmem:[%s3367] ss:$9 sm:$0xff] %v3332
      %3456 = vst [vmem:[%s3369] ss:$9 sm:$0xff] %v3333
      %3457 = vst [vmem:[%s3371] ss:$9 sm:$0xff] %v3334
      %3458 = vst [vmem:[%s3373] ss:$9 sm:$0xff] %v3335
      %3459 = vst [vmem:[%s3375] ss:$9 sm:$0xff] %v3148
      %3460 = vst [vmem:[%s3377] ss:$9 sm:$0xff] %v3336
      %3461 = vst [vmem:[%s3379] ss:$9 sm:$0xff] %v3337
      %v3462 = vld [vmem:[#allocation1] sm:$0xff]
      %3463 = vst [vmem:[#allocation1] ss:$9 sm:$0xff] %v3338
      %3464 = vst [vmem:[%s3367] ss:$9 sm:$0xff] %v3339
      %3465 = vst [vmem:[%s3369] ss:$9 sm:$0xff] %v3340
      %3466 = vst [vmem:[%s3371] ss:$9 sm:$0xff] %v3341
      %3467 = vst [vmem:[%s3373] ss:$9 sm:$0xff] %v3174
      %3468 = vst [vmem:[%s3375] ss:$9 sm:$0xff] %v3342
      %3469 = vst [vmem:[%s3377] ss:$9 sm:$0xff] %v3343
      %3470 = vst [vmem:[%s3379] ss:$9 sm:$0xff] %v3344
      %v3471 = vld [vmem:[#allocation1] sm:$0xff]
      %3472 = vst [vmem:[#allocation1] ss:$9 sm:$0xff] %v3345
      %3473 = vst [vmem:[%s3367] ss:$9 sm:$0xff] %v3346
      %3474 = vst [vmem:[%s3369] ss:$9 sm:$0xff] %v3347
      %3475 = vst [vmem:[%s3371] ss:$9 sm:$0xff] %v3200
      %3476 = vst [vmem:[%s3373] ss:$9 sm:$0xff] %v3348
      %3477 = vst [vmem:[%s3375] ss:$9 sm:$0xff] %v3349
      %3478 = vst [vmem:[%s3377] ss:$9 sm:$0xff] %v3350
      %3479 = vst [vmem:[%s3379] ss:$9 sm:$0xff] %v3351
      %v3480 = vld [vmem:[#allocation1] sm:$0xff]
      %3481 = vst [vmem:[#allocation1] ss:$9 sm:$0xff] %v3352
      %3482 = vst [vmem:[%s3367] ss:$9 sm:$0xff] %v3353
      %3483 = vst [vmem:[%s3369] ss:$9 sm:$0xff] %v3226
      %3484 = vst [vmem:[%s3371] ss:$9 sm:$0xff] %v3354
      %3485 = vst [vmem:[%s3373] ss:$9 sm:$0xff] %v3355
      %3486 = vst [vmem:[%s3375] ss:$9 sm:$0xff] %v3356
      %3487 = vst [vmem:[%s3377] ss:$9 sm:$0xff] %v3357
      %3488 = vst [vmem:[%s3379] ss:$9 sm:$0xff] %v3358
      %v3489 = vld [vmem:[#allocation1] sm:$0xff]
      %3490 = vst [vmem:[#allocation1] ss:$9 sm:$0xff] %v3359
      %3491 = vst [vmem:[%s3367] ss:$9 sm:$0xff] %v3252
      %3492 = vst [vmem:[%s3369] ss:$9 sm:$0xff] %v3360
      %3493 = vst [vmem:[%s3371] ss:$9 sm:$0xff] %v3361
      %3494 = vst [vmem:[%s3373] ss:$9 sm:$0xff] %v3362
      %3495 = vst [vmem:[%s3375] ss:$9 sm:$0xff] %v3363
      %3496 = vst [vmem:[%s3377] ss:$9 sm:$0xff] %v3364
      %3497 = vst [vmem:[%s3379] ss:$9 sm:$0xff] %v3365
      %v3498 = vld [vmem:[#allocation1] sm:$0xff]
      %vm3513 = vcmask 31744
      %3514 = vst.msk [vmem:[%s181] sm:$0xff] %vm3513, %v3381
      %3515 = vst.msk [vmem:[%s181 + $0x8] sm:$0xff] %vm3513, %v3390
      %3516 = vst.msk [vmem:[%s181 + $0x10] sm:$0xff] %vm3513, %v3399
      %3517 = vst.msk [vmem:[%s181 + $0x18] sm:$0xff] %vm3513, %v3408
      %3518 = vst.msk [vmem:[%s181 + $0x20] sm:$0xff] %vm3513, %v3417
      %3519 = vst.msk [vmem:[%s181 + $0x28] sm:$0xff] %vm3513, %v3426
      %3520 = vst.msk [vmem:[%s181 + $0x30] sm:$0xff] %vm3513, %v3435
      %3521 = vst.msk [vmem:[%s181 + $0x38] sm:$0xff] %vm3513, %v3444
      %3522 = vst.msk [vmem:[%s181 + $0x40] sm:$0xff] %vm3513, %v3453
      %3523 = vst.msk [vmem:[%s181 + $0x48] sm:$0xff] %vm3513, %v3462
      %3524 = vst.msk [vmem:[%s181 + $0x50] sm:$0xff] %vm3513, %v3471
      %3525 = vst.msk [vmem:[%s181 + $0x58] sm:$0xff] %vm3513, %v3480
      %3526 = vst.msk [vmem:[%s181 + $0x60] sm:$0xff] %vm3513, %v3489
      %3527 = vst.msk [vmem:[%s181 + $0x68] sm:$0xff] %vm3513, %v3498
      %s3528 = scalar_lea.vmem [#allocation2], 64
      %v3529 = vld [vmem:[%s3528] sm:$0xf]
      %v3530 = vld [vmem:[%s3528 + $0x4] sm:$0xf]
      %v3531 = vld [vmem:[%s3528 + $0x8] sm:$0xf]
      %v3532 = vld [vmem:[%s3528 + $0xc] sm:$0xf]
      %v3533 = vld [vmem:[%s3528 + $0x10] sm:$0xf]
      %v3534 = vld [vmem:[%s3528 + $0x14] sm:$0xf]
      %v3535 = vld [vmem:[%s3528 + $0x18] sm:$0xf]
      %v3536 = vld [vmem:[%s3528 + $0x1c] sm:$0xf]
      %v3537 = vld [vmem:[%s3528 + $0x20] sm:$0xf]
      %v3538 = vld [vmem:[%s3528 + $0x24] sm:$0xf]
      %v3539 = vld [vmem:[%s3528 + $0x28] sm:$0xf]
      %v3540 = vld [vmem:[%s3528 + $0x2c] sm:$0xf]
      %v3541 = vld [vmem:[%s3528 + $0x30] sm:$0xf]
      %v3542 = vld [vmem:[%s3528 + $0x34] sm:$0xf]
      %v3543 = vld [vmem:[%s3528 + $0x38] sm:$0xf]
      %v3544 = vld [vmem:[%s3528 + $0x3c] sm:$0xf]
      %v3546 = vsel %vm1682, %v3529, 0
      %3548 = vmatpush.xpose.msra.mxu0 0.0
      %3549 = vmatpush.xpose.msra.mxu0 0.0
      %3550 = vmatpush.xpose.msra.mxu0 0.0
      %3551 = vmatpush.xpose.msra.mxu0 0.0
      %3552 = vmatpush.xpose.msra.mxu0 0.0
      %3553 = vmatpush.xpose.msra.mxu0 0.0
      %3554 = vmatpush.xpose.msra.mxu0 0.0
      %3555 = vmatpush.xpose.msra.mxu0 0.0
      %3556 = vmatpush.xpose.msra.mxu0 0.0
      %3557 = vmatpush.xpose.msra.mxu0 0.0
      %3558 = vmatpush.xpose.msra.mxu0 0.0
      %3559 = vmatpush.xpose.msra.mxu0 0.0
      %3560 = vmatpush.xpose.msra.mxu0 0.0
      %3561 = vmatpush.xpose.msra.mxu0 0.0
      %3562 = vmatpush.xpose.msra.mxu0 0.0
      %3563 = vmatpush.xpose.msra.mxu0 %v3546
      %3564 = vmatmul.f32.gmra.mxu0 %v2839
      %v3565 = vpop.f32.mrf.mxu0
      %v3566 = vadd.f32 0.0, %v3565
      %3567 = vdwg.mxu0
      %v3569 = vsel %vm1682, %v3530, 0
      %3571 = vmatpush.xpose.msra.mxu0 0.0
      %3572 = vmatpush.xpose.msra.mxu0 0.0
      %3573 = vmatpush.xpose.msra.mxu0 0.0
      %3574 = vmatpush.xpose.msra.mxu0 0.0
      %3575 = vmatpush.xpose.msra.mxu0 0.0
      %3576 = vmatpush.xpose.msra.mxu0 0.0
      %3577 = vmatpush.xpose.msra.mxu0 0.0
      %3578 = vmatpush.xpose.msra.mxu0 0.0
      %3579 = vmatpush.xpose.msra.mxu0 0.0
      %3580 = vmatpush.xpose.msra.mxu0 0.0
      %3581 = vmatpush.xpose.msra.mxu0 0.0
      %3582 = vmatpush.xpose.msra.mxu0 0.0
      %3583 = vmatpush.xpose.msra.mxu0 0.0
      %3584 = vmatpush.xpose.msra.mxu0 0.0
      %3585 = vmatpush.xpose.msra.mxu0 0.0
      %3586 = vmatpush.xpose.msra.mxu0 %v3569
      %3587 = vmatmul.f32.gmra.mxu0 %v2865
      %v3588 = vpop.f32.mrf.mxu0
      %v3589 = vadd.f32 0.0, %v3588
      %3590 = vdwg.mxu0
      %v3592 = vsel %vm1682, %v3531, 0
      %3594 = vmatpush.xpose.msra.mxu0 0.0
      %3595 = vmatpush.xpose.msra.mxu0 0.0
      %3596 = vmatpush.xpose.msra.mxu0 0.0
      %3597 = vmatpush.xpose.msra.mxu0 0.0
      %3598 = vmatpush.xpose.msra.mxu0 0.0
      %3599 = vmatpush.xpose.msra.mxu0 0.0
      %3600 = vmatpush.xpose.msra.mxu0 0.0
      %3601 = vmatpush.xpose.msra.mxu0 0.0
      %3602 = vmatpush.xpose.msra.mxu0 0.0
      %3603 = vmatpush.xpose.msra.mxu0 0.0
      %3604 = vmatpush.xpose.msra.mxu0 0.0
      %3605 = vmatpush.xpose.msra.mxu0 0.0
      %3606 = vmatpush.xpose.msra.mxu0 0.0
      %3607 = vmatpush.xpose.msra.mxu0 0.0
      %3608 = vmatpush.xpose.msra.mxu0 0.0
      %3609 = vmatpush.xpose.msra.mxu0 %v3592
      %3610 = vmatmul.f32.gmra.mxu0 %v2891
      %v3611 = vpop.f32.mrf.mxu0
      %v3612 = vadd.f32 0.0, %v3611
      %3613 = vdwg.mxu0
      %v3615 = vsel %vm1682, %v3532, 0
      %3617 = vmatpush.xpose.msra.mxu0 0.0
      %3618 = vmatpush.xpose.msra.mxu0 0.0
      %3619 = vmatpush.xpose.msra.mxu0 0.0
      %3620 = vmatpush.xpose.msra.mxu0 0.0
      %3621 = vmatpush.xpose.msra.mxu0 0.0
      %3622 = vmatpush.xpose.msra.mxu0 0.0
      %3623 = vmatpush.xpose.msra.mxu0 0.0
      %3624 = vmatpush.xpose.msra.mxu0 0.0
      %3625 = vmatpush.xpose.msra.mxu0 0.0
      %3626 = vmatpush.xpose.msra.mxu0 0.0
      %3627 = vmatpush.xpose.msra.mxu0 0.0
      %3628 = vmatpush.xpose.msra.mxu0 0.0
      %3629 = vmatpush.xpose.msra.mxu0 0.0
      %3630 = vmatpush.xpose.msra.mxu0 0.0
      %3631 = vmatpush.xpose.msra.mxu0 0.0
      %3632 = vmatpush.xpose.msra.mxu0 %v3615
      %3633 = vmatmul.f32.gmra.mxu0 %v2917
      %v3634 = vpop.f32.mrf.mxu0
      %v3635 = vadd.f32 0.0, %v3634
      %3636 = vdwg.mxu0
      %v3638 = vsel %vm1682, %v3533, 0
      %3640 = vmatpush.xpose.msra.mxu0 0.0
      %3641 = vmatpush.xpose.msra.mxu0 0.0
      %3642 = vmatpush.xpose.msra.mxu0 0.0
      %3643 = vmatpush.xpose.msra.mxu0 0.0
      %3644 = vmatpush.xpose.msra.mxu0 0.0
      %3645 = vmatpush.xpose.msra.mxu0 0.0
      %3646 = vmatpush.xpose.msra.mxu0 0.0
      %3647 = vmatpush.xpose.msra.mxu0 0.0
      %3648 = vmatpush.xpose.msra.mxu0 0.0
      %3649 = vmatpush.xpose.msra.mxu0 0.0
      %3650 = vmatpush.xpose.msra.mxu0 0.0
      %3651 = vmatpush.xpose.msra.mxu0 0.0
      %3652 = vmatpush.xpose.msra.mxu0 0.0
      %3653 = vmatpush.xpose.msra.mxu0 0.0
      %3654 = vmatpush.xpose.msra.mxu0 0.0
      %3655 = vmatpush.xpose.msra.mxu0 %v3638
      %3656 = vmatmul.f32.gmra.mxu0 %v2943
      %v3657 = vpop.f32.mrf.mxu0
      %v3658 = vadd.f32 0.0, %v3657
      %3659 = vdwg.mxu0
      %v3661 = vsel %vm1682, %v3534, 0
      %3663 = vmatpush.xpose.msra.mxu0 0.0
      %3664 = vmatpush.xpose.msra.mxu0 0.0
      %3665 = vmatpush.xpose.msra.mxu0 0.0
      %3666 = vmatpush.xpose.msra.mxu0 0.0
      %3667 = vmatpush.xpose.msra.mxu0 0.0
      %3668 = vmatpush.xpose.msra.mxu0 0.0
      %3669 = vmatpush.xpose.msra.mxu0 0.0
      %3670 = vmatpush.xpose.msra.mxu0 0.0
      %3671 = vmatpush.xpose.msra.mxu0 0.0
      %3672 = vmatpush.xpose.msra.mxu0 0.0
      %3673 = vmatpush.xpose.msra.mxu0 0.0
      %3674 = vmatpush.xpose.msra.mxu0 0.0
      %3675 = vmatpush.xpose.msra.mxu0 0.0
      %3676 = vmatpush.xpose.msra.mxu0 0.0
      %3677 = vmatpush.xpose.msra.mxu0 0.0
      %3678 = vmatpush.xpose.msra.mxu0 %v3661
      %3679 = vmatmul.f32.gmra.mxu0 %v2969
      %v3680 = vpop.f32.mrf.mxu0
      %v3681 = vadd.f32 0.0, %v3680
      %3682 = vdwg.mxu0
      %v3684 = vsel %vm1682, %v3535, 0
      %3686 = vmatpush.xpose.msra.mxu0 0.0
      %3687 = vmatpush.xpose.msra.mxu0 0.0
      %3688 = vmatpush.xpose.msra.mxu0 0.0
      %3689 = vmatpush.xpose.msra.mxu0 0.0
      %3690 = vmatpush.xpose.msra.mxu0 0.0
      %3691 = vmatpush.xpose.msra.mxu0 0.0
      %3692 = vmatpush.xpose.msra.mxu0 0.0
      %3693 = vmatpush.xpose.msra.mxu0 0.0
      %3694 = vmatpush.xpose.msra.mxu0 0.0
      %3695 = vmatpush.xpose.msra.mxu0 0.0
      %3696 = vmatpush.xpose.msra.mxu0 0.0
      %3697 = vmatpush.xpose.msra.mxu0 0.0
      %3698 = vmatpush.xpose.msra.mxu0 0.0
      %3699 = vmatpush.xpose.msra.mxu0 0.0
      %3700 = vmatpush.xpose.msra.mxu0 0.0
      %3701 = vmatpush.xpose.msra.mxu0 %v3684
      %3702 = vmatmul.f32.gmra.mxu0 %v2995
      %v3703 = vpop.f32.mrf.mxu0
      %v3704 = vadd.f32 0.0, %v3703
      %3705 = vdwg.mxu0
      %v3707 = vsel %vm1682, %v3536, 0
      %3709 = vmatpush.xpose.msra.mxu0 0.0
      %3710 = vmatpush.xpose.msra.mxu0 0.0
      %3711 = vmatpush.xpose.msra.mxu0 0.0
      %3712 = vmatpush.xpose.msra.mxu0 0.0
      %3713 = vmatpush.xpose.msra.mxu0 0.0
      %3714 = vmatpush.xpose.msra.mxu0 0.0
      %3715 = vmatpush.xpose.msra.mxu0 0.0
      %3716 = vmatpush.xpose.msra.mxu0 0.0
      %3717 = vmatpush.xpose.msra.mxu0 0.0
      %3718 = vmatpush.xpose.msra.mxu0 0.0
      %3719 = vmatpush.xpose.msra.mxu0 0.0
      %3720 = vmatpush.xpose.msra.mxu0 0.0
      %3721 = vmatpush.xpose.msra.mxu0 0.0
      %3722 = vmatpush.xpose.msra.mxu0 0.0
      %3723 = vmatpush.xpose.msra.mxu0 0.0
      %3724 = vmatpush.xpose.msra.mxu0 %v3707
      %3725 = vmatmul.f32.gmra.mxu0 %v3021
      %v3726 = vpop.f32.mrf.mxu0
      %v3727 = vadd.f32 0.0, %v3726
      %3728 = vdwg.mxu0
      %v3730 = vsel %vm1682, %v3537, 0
      %3732 = vmatpush.xpose.msra.mxu0 0.0
      %3733 = vmatpush.xpose.msra.mxu0 0.0
      %3734 = vmatpush.xpose.msra.mxu0 0.0
      %3735 = vmatpush.xpose.msra.mxu0 0.0
      %3736 = vmatpush.xpose.msra.mxu0 0.0
      %3737 = vmatpush.xpose.msra.mxu0 0.0
      %3738 = vmatpush.xpose.msra.mxu0 0.0
      %3739 = vmatpush.xpose.msra.mxu0 0.0
      %3740 = vmatpush.xpose.msra.mxu0 0.0
      %3741 = vmatpush.xpose.msra.mxu0 0.0
      %3742 = vmatpush.xpose.msra.mxu0 0.0
      %3743 = vmatpush.xpose.msra.mxu0 0.0
      %3744 = vmatpush.xpose.msra.mxu0 0.0
      %3745 = vmatpush.xpose.msra.mxu0 0.0
      %3746 = vmatpush.xpose.msra.mxu0 0.0
      %3747 = vmatpush.xpose.msra.mxu0 %v3730
      %3748 = vmatmul.f32.gmra.mxu0 %v3047
      %v3749 = vpop.f32.mrf.mxu0
      %v3750 = vadd.f32 0.0, %v3749
      %3751 = vdwg.mxu0
      %v3753 = vsel %vm1682, %v3538, 0
      %3755 = vmatpush.xpose.msra.mxu0 0.0
      %3756 = vmatpush.xpose.msra.mxu0 0.0
      %3757 = vmatpush.xpose.msra.mxu0 0.0
      %3758 = vmatpush.xpose.msra.mxu0 0.0
      %3759 = vmatpush.xpose.msra.mxu0 0.0
      %3760 = vmatpush.xpose.msra.mxu0 0.0
      %3761 = vmatpush.xpose.msra.mxu0 0.0
      %3762 = vmatpush.xpose.msra.mxu0 0.0
      %3763 = vmatpush.xpose.msra.mxu0 0.0
      %3764 = vmatpush.xpose.msra.mxu0 0.0
      %3765 = vmatpush.xpose.msra.mxu0 0.0
      %3766 = vmatpush.xpose.msra.mxu0 0.0
      %3767 = vmatpush.xpose.msra.mxu0 0.0
      %3768 = vmatpush.xpose.msra.mxu0 0.0
      %3769 = vmatpush.xpose.msra.mxu0 0.0
      %3770 = vmatpush.xpose.msra.mxu0 %v3753
      %3771 = vmatmul.f32.gmra.mxu0 %v3073
      %v3772 = vpop.f32.mrf.mxu0
      %v3773 = vadd.f32 0.0, %v3772
      %3774 = vdwg.mxu0
      %v3776 = vsel %vm1682, %v3539, 0
      %3778 = vmatpush.xpose.msra.mxu0 0.0
      %3779 = vmatpush.xpose.msra.mxu0 0.0
      %3780 = vmatpush.xpose.msra.mxu0 0.0
      %3781 = vmatpush.xpose.msra.mxu0 0.0
      %3782 = vmatpush.xpose.msra.mxu0 0.0
      %3783 = vmatpush.xpose.msra.mxu0 0.0
      %3784 = vmatpush.xpose.msra.mxu0 0.0
      %3785 = vmatpush.xpose.msra.mxu0 0.0
      %3786 = vmatpush.xpose.msra.mxu0 0.0
      %3787 = vmatpush.xpose.msra.mxu0 0.0
      %3788 = vmatpush.xpose.msra.mxu0 0.0
      %3789 = vmatpush.xpose.msra.mxu0 0.0
      %3790 = vmatpush.xpose.msra.mxu0 0.0
      %3791 = vmatpush.xpose.msra.mxu0 0.0
      %3792 = vmatpush.xpose.msra.mxu0 0.0
      %3793 = vmatpush.xpose.msra.mxu0 %v3776
      %3794 = vmatmul.f32.gmra.mxu0 %v3099
      %v3795 = vpop.f32.mrf.mxu0
      %v3796 = vadd.f32 0.0, %v3795
      %3797 = vdwg.mxu0
      %v3799 = vsel %vm1682, %v3540, 0
      %3801 = vmatpush.xpose.msra.mxu0 0.0
      %3802 = vmatpush.xpose.msra.mxu0 0.0
      %3803 = vmatpush.xpose.msra.mxu0 0.0
      %3804 = vmatpush.xpose.msra.mxu0 0.0
      %3805 = vmatpush.xpose.msra.mxu0 0.0
      %3806 = vmatpush.xpose.msra.mxu0 0.0
      %3807 = vmatpush.xpose.msra.mxu0 0.0
      %3808 = vmatpush.xpose.msra.mxu0 0.0
      %3809 = vmatpush.xpose.msra.mxu0 0.0
      %3810 = vmatpush.xpose.msra.mxu0 0.0
      %3811 = vmatpush.xpose.msra.mxu0 0.0
      %3812 = vmatpush.xpose.msra.mxu0 0.0
      %3813 = vmatpush.xpose.msra.mxu0 0.0
      %3814 = vmatpush.xpose.msra.mxu0 0.0
      %3815 = vmatpush.xpose.msra.mxu0 0.0
      %3816 = vmatpush.xpose.msra.mxu0 %v3799
      %3817 = vmatmul.f32.gmra.mxu0 %v3125
      %v3818 = vpop.f32.mrf.mxu0
      %v3819 = vadd.f32 0.0, %v3818
      %3820 = vdwg.mxu0
      %v3822 = vsel %vm1682, %v3541, 0
      %3824 = vmatpush.xpose.msra.mxu0 0.0
      %3825 = vmatpush.xpose.msra.mxu0 0.0
      %3826 = vmatpush.xpose.msra.mxu0 0.0
      %3827 = vmatpush.xpose.msra.mxu0 0.0
      %3828 = vmatpush.xpose.msra.mxu0 0.0
      %3829 = vmatpush.xpose.msra.mxu0 0.0
      %3830 = vmatpush.xpose.msra.mxu0 0.0
      %3831 = vmatpush.xpose.msra.mxu0 0.0
      %3832 = vmatpush.xpose.msra.mxu0 0.0
      %3833 = vmatpush.xpose.msra.mxu0 0.0
      %3834 = vmatpush.xpose.msra.mxu0 0.0
      %3835 = vmatpush.xpose.msra.mxu0 0.0
      %3836 = vmatpush.xpose.msra.mxu0 0.0
      %3837 = vmatpush.xpose.msra.mxu0 0.0
      %3838 = vmatpush.xpose.msra.mxu0 0.0
      %3839 = vmatpush.xpose.msra.mxu0 %v3822
      %3840 = vmatmul.f32.gmra.mxu0 %v3151
      %v3841 = vpop.f32.mrf.mxu0
      %v3842 = vadd.f32 0.0, %v3841
      %3843 = vdwg.mxu0
      %v3845 = vsel %vm1682, %v3542, 0
      %3847 = vmatpush.xpose.msra.mxu0 0.0
      %3848 = vmatpush.xpose.msra.mxu0 0.0
      %3849 = vmatpush.xpose.msra.mxu0 0.0
      %3850 = vmatpush.xpose.msra.mxu0 0.0
      %3851 = vmatpush.xpose.msra.mxu0 0.0
      %3852 = vmatpush.xpose.msra.mxu0 0.0
      %3853 = vmatpush.xpose.msra.mxu0 0.0
      %3854 = vmatpush.xpose.msra.mxu0 0.0
      %3855 = vmatpush.xpose.msra.mxu0 0.0
      %3856 = vmatpush.xpose.msra.mxu0 0.0
      %3857 = vmatpush.xpose.msra.mxu0 0.0
      %3858 = vmatpush.xpose.msra.mxu0 0.0
      %3859 = vmatpush.xpose.msra.mxu0 0.0
      %3860 = vmatpush.xpose.msra.mxu0 0.0
      %3861 = vmatpush.xpose.msra.mxu0 0.0
      %3862 = vmatpush.xpose.msra.mxu0 %v3845
      %3863 = vmatmul.f32.gmra.mxu0 %v3177
      %v3864 = vpop.f32.mrf.mxu0
      %v3865 = vadd.f32 0.0, %v3864
      %3866 = vdwg.mxu0
      %v3868 = vsel %vm1682, %v3543, 0
      %3870 = vmatpush.xpose.msra.mxu0 0.0
      %3871 = vmatpush.xpose.msra.mxu0 0.0
      %3872 = vmatpush.xpose.msra.mxu0 0.0
      %3873 = vmatpush.xpose.msra.mxu0 0.0
      %3874 = vmatpush.xpose.msra.mxu0 0.0
      %3875 = vmatpush.xpose.msra.mxu0 0.0
      %3876 = vmatpush.xpose.msra.mxu0 0.0
      %3877 = vmatpush.xpose.msra.mxu0 0.0
      %3878 = vmatpush.xpose.msra.mxu0 0.0
      %3879 = vmatpush.xpose.msra.mxu0 0.0
      %3880 = vmatpush.xpose.msra.mxu0 0.0
      %3881 = vmatpush.xpose.msra.mxu0 0.0
      %3882 = vmatpush.xpose.msra.mxu0 0.0
      %3883 = vmatpush.xpose.msra.mxu0 0.0
      %3884 = vmatpush.xpose.msra.mxu0 0.0
      %3885 = vmatpush.xpose.msra.mxu0 %v3868
      %3886 = vmatmul.f32.gmra.mxu0 %v3203
      %v3887 = vpop.f32.mrf.mxu0
      %v3888 = vadd.f32 0.0, %v3887
      %3889 = vdwg.mxu0
      %v3891 = vsel %vm1682, %v3544, 0
      %3893 = vmatpush.xpose.msra.mxu0 0.0
      %3894 = vmatpush.xpose.msra.mxu0 0.0
      %3895 = vmatpush.xpose.msra.mxu0 0.0
      %3896 = vmatpush.xpose.msra.mxu0 0.0
      %3897 = vmatpush.xpose.msra.mxu0 0.0
      %3898 = vmatpush.xpose.msra.mxu0 0.0
      %3899 = vmatpush.xpose.msra.mxu0 0.0
      %3900 = vmatpush.xpose.msra.mxu0 0.0
      %3901 = vmatpush.xpose.msra.mxu0 0.0
      %3902 = vmatpush.xpose.msra.mxu0 0.0
      %3903 = vmatpush.xpose.msra.mxu0 0.0
      %3904 = vmatpush.xpose.msra.mxu0 0.0
      %3905 = vmatpush.xpose.msra.mxu0 0.0
      %3906 = vmatpush.xpose.msra.mxu0 0.0
      %3907 = vmatpush.xpose.msra.mxu0 0.0
      %3908 = vmatpush.xpose.msra.mxu0 %v3891
      %3909 = vmatmul.f32.gmra.mxu0 %v3229
      %v3910 = vpop.f32.mrf.mxu0
      %v3911 = vadd.f32 0.0, %v3910
      %3912 = vdwg.mxu0
      %v3929 = vrot.slane %v3566, 1
      %v3930 = vrot.slane %v3566, 2
      %v3931 = vrot.slane %v3566, 3
      %v3932 = vrot.slane %v3566, 4
      %v3933 = vrot.slane %v3566, 5
      %v3934 = vrot.slane %v3566, 6
      %v3935 = vrot.slane %v3589, 1
      %v3936 = vrot.slane %v3589, 2
      %v3937 = vrot.slane %v3589, 3
      %v3938 = vrot.slane %v3589, 4
      %v3939 = vrot.slane %v3589, 5
      %v3940 = vrot.slane %v3589, 6
      %v3941 = vrot.slane %v3612, 1
      %v3942 = vrot.slane %v3612, 2
      %v3943 = vrot.slane %v3612, 3
      %v3944 = vrot.slane %v3612, 4
      %v3945 = vrot.slane %v3612, 5
      %v3946 = vrot.slane %v3612, 6
      %v3947 = vrot.slane %v3635, 1
      %v3948 = vrot.slane %v3635, 2
      %v3949 = vrot.slane %v3635, 3
      %v3950 = vrot.slane %v3635, 4
      %v3951 = vrot.slane %v3635, 5
      %v3952 = vrot.slane %v3635, 6
      %v3953 = vrot.slane %v3658, 1
      %v3954 = vrot.slane %v3658, 2
      %v3955 = vrot.slane %v3658, 3
      %v3956 = vrot.slane %v3658, 4
      %v3957 = vrot.slane %v3658, 5
      %v3958 = vrot.slane %v3658, 6
      %v3959 = vrot.slane %v3681, 1
      %v3960 = vrot.slane %v3681, 2
      %v3961 = vrot.slane %v3681, 3
      %v3962 = vrot.slane %v3681, 4
      %v3963 = vrot.slane %v3681, 5
      %v3964 = vrot.slane %v3681, 6
      %v3965 = vrot.slane %v3704, 1
      %v3966 = vrot.slane %v3704, 2
      %v3967 = vrot.slane %v3704, 3
      %v3968 = vrot.slane %v3704, 4
      %v3969 = vrot.slane %v3704, 5
      %v3970 = vrot.slane %v3704, 6
      %v3971 = vrot.slane %v3727, 1
      %v3972 = vrot.slane %v3727, 2
      %v3973 = vrot.slane %v3727, 3
      %v3974 = vrot.slane %v3727, 4
      %v3975 = vrot.slane %v3727, 5
      %v3976 = vrot.slane %v3727, 6
      %v3977 = vrot.slane %v3750, 1
      %v3978 = vrot.slane %v3750, 2
      %v3979 = vrot.slane %v3750, 3
      %v3980 = vrot.slane %v3750, 4
      %v3981 = vrot.slane %v3750, 5
      %v3982 = vrot.slane %v3750, 6
      %v3983 = vrot.slane %v3773, 1
      %v3984 = vrot.slane %v3773, 2
      %v3985 = vrot.slane %v3773, 3
      %v3986 = vrot.slane %v3773, 4
      %v3987 = vrot.slane %v3773, 5
      %v3988 = vrot.slane %v3773, 6
      %v3989 = vrot.slane %v3796, 1
      %v3990 = vrot.slane %v3796, 2
      %v3991 = vrot.slane %v3796, 3
      %v3992 = vrot.slane %v3796, 4
      %v3993 = vrot.slane %v3796, 5
      %v3994 = vrot.slane %v3796, 6
      %v3995 = vrot.slane %v3819, 1
      %v3996 = vrot.slane %v3819, 2
      %v3997 = vrot.slane %v3819, 3
      %v3998 = vrot.slane %v3819, 4
      %v3999 = vrot.slane %v3819, 5
      %v4000 = vrot.slane %v3819, 6
      %v4001 = vrot.slane %v3842, 1
      %v4002 = vrot.slane %v3842, 2
      %v4003 = vrot.slane %v3842, 3
      %v4004 = vrot.slane %v3842, 4
      %v4005 = vrot.slane %v3842, 5
      %v4006 = vrot.slane %v3842, 6
      %v4007 = vrot.slane %v3865, 1
      %v4008 = vrot.slane %v3865, 2
      %v4009 = vrot.slane %v3865, 3
      %v4010 = vrot.slane %v3865, 4
      %v4011 = vrot.slane %v3865, 5
      %v4012 = vrot.slane %v3865, 6
      %v4013 = vrot.slane %v3888, 1
      %v4014 = vrot.slane %v3888, 2
      %v4015 = vrot.slane %v3888, 3
      %v4016 = vrot.slane %v3888, 4
      %v4017 = vrot.slane %v3888, 5
      %v4018 = vrot.slane %v3888, 6
      %v4019 = vrot.slane %v3911, 1
      %v4020 = vrot.slane %v3911, 2
      %v4021 = vrot.slane %v3911, 3
      %v4022 = vrot.slane %v3911, 4
      %v4023 = vrot.slane %v3911, 5
      %v4024 = vrot.slane %v3911, 6
      %4025 = vst [vmem:[#allocation1] ss:$9 sm:$0xff] %v3566
      %s4026 = scalar_lea.vmem [#allocation1], 1
      %4027 = vst [vmem:[%s4026] ss:$9 sm:$0xff] %v3929
      %s4028 = scalar_lea.vmem [#allocation1], 2
      %4029 = vst [vmem:[%s4028] ss:$9 sm:$0xff] %v3930
      %s4030 = scalar_lea.vmem [#allocation1], 3
      %4031 = vst [vmem:[%s4030] ss:$9 sm:$0xff] %v3931
      %s4032 = scalar_lea.vmem [#allocation1], 4
      %4033 = vst [vmem:[%s4032] ss:$9 sm:$0xff] %v3932
      %s4034 = scalar_lea.vmem [#allocation1], 5
      %4035 = vst [vmem:[%s4034] ss:$9 sm:$0xff] %v3933
      %s4036 = scalar_lea.vmem [#allocation1], 6
      %4037 = vst [vmem:[%s4036] ss:$9 sm:$0xff] %v3934
      %s4038 = scalar_lea.vmem [#allocation1], 7
      %4039 = vst [vmem:[%s4038] ss:$9 sm:$0xff] %v3589
      %v4040 = vld [vmem:[#allocation1] sm:$0xff]
      %4041 = vst [vmem:[#allocation1] ss:$9 sm:$0xff] %v3935
      %4042 = vst [vmem:[%s4026] ss:$9 sm:$0xff] %v3936
      %4043 = vst [vmem:[%s4028] ss:$9 sm:$0xff] %v3937
      %4044 = vst [vmem:[%s4030] ss:$9 sm:$0xff] %v3938
      %4045 = vst [vmem:[%s4032] ss:$9 sm:$0xff] %v3939
      %4046 = vst [vmem:[%s4034] ss:$9 sm:$0xff] %v3940
      %4047 = vst [vmem:[%s4036] ss:$9 sm:$0xff] %v3612
      %4048 = vst [vmem:[%s4038] ss:$9 sm:$0xff] %v3941
      %v4049 = vld [vmem:[#allocation1] sm:$0xff]
      %4050 = vst [vmem:[#allocation1] ss:$9 sm:$0xff] %v3942
      %4051 = vst [vmem:[%s4026] ss:$9 sm:$0xff] %v3943
      %4052 = vst [vmem:[%s4028] ss:$9 sm:$0xff] %v3944
      %4053 = vst [vmem:[%s4030] ss:$9 sm:$0xff] %v3945
      %4054 = vst [vmem:[%s4032] ss:$9 sm:$0xff] %v3946
      %4055 = vst [vmem:[%s4034] ss:$9 sm:$0xff] %v3635
      %4056 = vst [vmem:[%s4036] ss:$9 sm:$0xff] %v3947
      %4057 = vst [vmem:[%s4038] ss:$9 sm:$0xff] %v3948
      %v4058 = vld [vmem:[#allocation1] sm:$0xff]
      %4059 = vst [vmem:[#allocation1] ss:$9 sm:$0xff] %v3949
      %4060 = vst [vmem:[%s4026] ss:$9 sm:$0xff] %v3950
      %4061 = vst [vmem:[%s4028] ss:$9 sm:$0xff] %v3951
      %4062 = vst [vmem:[%s4030] ss:$9 sm:$0xff] %v3952
      %4063 = vst [vmem:[%s4032] ss:$9 sm:$0xff] %v3658
      %4064 = vst [vmem:[%s4034] ss:$9 sm:$0xff] %v3953
      %4065 = vst [vmem:[%s4036] ss:$9 sm:$0xff] %v3954
      %4066 = vst [vmem:[%s4038] ss:$9 sm:$0xff] %v3955
      %v4067 = vld [vmem:[#allocation1] sm:$0xff]
      %4068 = vst [vmem:[#allocation1] ss:$9 sm:$0xff] %v3956
      %4069 = vst [vmem:[%s4026] ss:$9 sm:$0xff] %v3957
      %4070 = vst [vmem:[%s4028] ss:$9 sm:$0xff] %v3958
      %4071 = vst [vmem:[%s4030] ss:$9 sm:$0xff] %v3681
      %4072 = vst [vmem:[%s4032] ss:$9 sm:$0xff] %v3959
      %4073 = vst [vmem:[%s4034] ss:$9 sm:$0xff] %v3960
      %4074 = vst [vmem:[%s4036] ss:$9 sm:$0xff] %v3961
      %4075 = vst [vmem:[%s4038] ss:$9 sm:$0xff] %v3962
      %v4076 = vld [vmem:[#allocation1] sm:$0xff]
      %4077 = vst [vmem:[#allocation1] ss:$9 sm:$0xff] %v3963
      %4078 = vst [vmem:[%s4026] ss:$9 sm:$0xff] %v3964
      %4079 = vst [vmem:[%s4028] ss:$9 sm:$0xff] %v3704
      %4080 = vst [vmem:[%s4030] ss:$9 sm:$0xff] %v3965
      %4081 = vst [vmem:[%s4032] ss:$9 sm:$0xff] %v3966
      %4082 = vst [vmem:[%s4034] ss:$9 sm:$0xff] %v3967
      %4083 = vst [vmem:[%s4036] ss:$9 sm:$0xff] %v3968
      %4084 = vst [vmem:[%s4038] ss:$9 sm:$0xff] %v3969
      %v4085 = vld [vmem:[#allocation1] sm:$0xff]
      %4086 = vst [vmem:[#allocation1] ss:$9 sm:$0xff] %v3970
      %4087 = vst [vmem:[%s4026] ss:$9 sm:$0xff] %v3727
      %4088 = vst [vmem:[%s4028] ss:$9 sm:$0xff] %v3971
      %4089 = vst [vmem:[%s4030] ss:$9 sm:$0xff] %v3972
      %4090 = vst [vmem:[%s4032] ss:$9 sm:$0xff] %v3973
      %4091 = vst [vmem:[%s4034] ss:$9 sm:$0xff] %v3974
      %4092 = vst [vmem:[%s4036] ss:$9 sm:$0xff] %v3975
      %4093 = vst [vmem:[%s4038] ss:$9 sm:$0xff] %v3976
      %v4094 = vld [vmem:[#allocation1] sm:$0xff]
      %4095 = vst [vmem:[#allocation1] ss:$9 sm:$0xff] %v3750
      %4096 = vst [vmem:[%s4026] ss:$9 sm:$0xff] %v3977
      %4097 = vst [vmem:[%s4028] ss:$9 sm:$0xff] %v3978
      %4098 = vst [vmem:[%s4030] ss:$9 sm:$0xff] %v3979
      %4099 = vst [vmem:[%s4032] ss:$9 sm:$0xff] %v3980
      %4100 = vst [vmem:[%s4034] ss:$9 sm:$0xff] %v3981
      %4101 = vst [vmem:[%s4036] ss:$9 sm:$0xff] %v3982
      %4102 = vst [vmem:[%s4038] ss:$9 sm:$0xff] %v3773
      %v4103 = vld [vmem:[#allocation1] sm:$0xff]
      %4104 = vst [vmem:[#allocation1] ss:$9 sm:$0xff] %v3983
      %4105 = vst [vmem:[%s4026] ss:$9 sm:$0xff] %v3984
      %4106 = vst [vmem:[%s4028] ss:$9 sm:$0xff] %v3985
      %4107 = vst [vmem:[%s4030] ss:$9 sm:$0xff] %v3986
      %4108 = vst [vmem:[%s4032] ss:$9 sm:$0xff] %v3987
      %4109 = vst [vmem:[%s4034] ss:$9 sm:$0xff] %v3988
      %4110 = vst [vmem:[%s4036] ss:$9 sm:$0xff] %v3796
      %4111 = vst [vmem:[%s4038] ss:$9 sm:$0xff] %v3989
      %v4112 = vld [vmem:[#allocation1] sm:$0xff]
      %4113 = vst [vmem:[#allocation1] ss:$9 sm:$0xff] %v3990
      %4114 = vst [vmem:[%s4026] ss:$9 sm:$0xff] %v3991
      %4115 = vst [vmem:[%s4028] ss:$9 sm:$0xff] %v3992
      %4116 = vst [vmem:[%s4030] ss:$9 sm:$0xff] %v3993
      %4117 = vst [vmem:[%s4032] ss:$9 sm:$0xff] %v3994
      %4118 = vst [vmem:[%s4034] ss:$9 sm:$0xff] %v3819
      %4119 = vst [vmem:[%s4036] ss:$9 sm:$0xff] %v3995
      %4120 = vst [vmem:[%s4038] ss:$9 sm:$0xff] %v3996
      %v4121 = vld [vmem:[#allocation1] sm:$0xff]
      %4122 = vst [vmem:[#allocation1] ss:$9 sm:$0xff] %v3997
      %4123 = vst [vmem:[%s4026] ss:$9 sm:$0xff] %v3998
      %4124 = vst [vmem:[%s4028] ss:$9 sm:$0xff] %v3999
      %4125 = vst [vmem:[%s4030] ss:$9 sm:$0xff] %v4000
      %4126 = vst [vmem:[%s4032] ss:$9 sm:$0xff] %v3842
      %4127 = vst [vmem:[%s4034] ss:$9 sm:$0xff] %v4001
      %4128 = vst [vmem:[%s4036] ss:$9 sm:$0xff] %v4002
      %4129 = vst [vmem:[%s4038] ss:$9 sm:$0xff] %v4003
      %v4130 = vld [vmem:[#allocation1] sm:$0xff]
      %4131 = vst [vmem:[#allocation1] ss:$9 sm:$0xff] %v4004
      %4132 = vst [vmem:[%s4026] ss:$9 sm:$0xff] %v4005
      %4133 = vst [vmem:[%s4028] ss:$9 sm:$0xff] %v4006
      %4134 = vst [vmem:[%s4030] ss:$9 sm:$0xff] %v3865
      %4135 = vst [vmem:[%s4032] ss:$9 sm:$0xff] %v4007
      %4136 = vst [vmem:[%s4034] ss:$9 sm:$0xff] %v4008
      %4137 = vst [vmem:[%s4036] ss:$9 sm:$0xff] %v4009
      %4138 = vst [vmem:[%s4038] ss:$9 sm:$0xff] %v4010
      %v4139 = vld [vmem:[#allocation1] sm:$0xff]
      %4140 = vst [vmem:[#allocation1] ss:$9 sm:$0xff] %v4011
      %4141 = vst [vmem:[%s4026] ss:$9 sm:$0xff] %v4012
      %4142 = vst [vmem:[%s4028] ss:$9 sm:$0xff] %v3888
      %4143 = vst [vmem:[%s4030] ss:$9 sm:$0xff] %v4013
      %4144 = vst [vmem:[%s4032] ss:$9 sm:$0xff] %v4014
      %4145 = vst [vmem:[%s4034] ss:$9 sm:$0xff] %v4015
      %4146 = vst [vmem:[%s4036] ss:$9 sm:$0xff] %v4016
      %4147 = vst [vmem:[%s4038] ss:$9 sm:$0xff] %v4017
      %v4148 = vld [vmem:[#allocation1] sm:$0xff]
      %4149 = vst [vmem:[#allocation1] ss:$9 sm:$0xff] %v4018
      %4150 = vst [vmem:[%s4026] ss:$9 sm:$0xff] %v3911
      %4151 = vst [vmem:[%s4028] ss:$9 sm:$0xff] %v4019
      %4152 = vst [vmem:[%s4030] ss:$9 sm:$0xff] %v4020
      %4153 = vst [vmem:[%s4032] ss:$9 sm:$0xff] %v4021
      %4154 = vst [vmem:[%s4034] ss:$9 sm:$0xff] %v4022
      %4155 = vst [vmem:[%s4036] ss:$9 sm:$0xff] %v4023
      %4156 = vst [vmem:[%s4038] ss:$9 sm:$0xff] %v4024
      %v4157 = vld [vmem:[#allocation1] sm:$0xff]
      %4172 = vst.msk [vmem:[%s181 + $0x70] sm:$0xff] %vm3513, %v4040
      %4173 = vst.msk [vmem:[%s181 + $0x78] sm:$0xff] %vm3513, %v4049
      %4174 = vst.msk [vmem:[%s181 + $0x80] sm:$0xff] %vm3513, %v4058
      %4175 = vst.msk [vmem:[%s181 + $0x88] sm:$0xff] %vm3513, %v4067
      %4176 = vst.msk [vmem:[%s181 + $0x90] sm:$0xff] %vm3513, %v4076
      %4177 = vst.msk [vmem:[%s181 + $0x98] sm:$0xff] %vm3513, %v4085
      %4178 = vst.msk [vmem:[%s181 + $0xa0] sm:$0xff] %vm3513, %v4094
      %4179 = vst.msk [vmem:[%s181 + $0xa8] sm:$0xff] %vm3513, %v4103
      %4180 = vst.msk [vmem:[%s181 + $0xb0] sm:$0xff] %vm3513, %v4112
      %4181 = vst.msk [vmem:[%s181 + $0xb8] sm:$0xff] %vm3513, %v4121
      %4182 = vst.msk [vmem:[%s181 + $0xc0] sm:$0xff] %vm3513, %v4130
      %4183 = vst.msk [vmem:[%s181 + $0xc8] sm:$0xff] %vm3513, %v4139
      %4184 = vst.msk [vmem:[%s181 + $0xd0] sm:$0xff] %vm3513, %v4148
      %4185 = vst.msk [vmem:[%s181 + $0xd8] sm:$0xff] %vm3513, %v4157
      %s4186 = scalar_lea.vmem [#allocation2], 128
      %v4187 = vld [vmem:[%s4186] sm:$0xf]
      %v4188 = vld [vmem:[%s4186 + $0x4] sm:$0xf]
      %v4189 = vld [vmem:[%s4186 + $0x8] sm:$0xf]
      %v4190 = vld [vmem:[%s4186 + $0xc] sm:$0xf]
      %v4191 = vld [vmem:[%s4186 + $0x10] sm:$0xf]
      %v4192 = vld [vmem:[%s4186 + $0x14] sm:$0xf]
      %v4193 = vld [vmem:[%s4186 + $0x18] sm:$0xf]
      %v4194 = vld [vmem:[%s4186 + $0x1c] sm:$0xf]
      %v4195 = vld [vmem:[%s4186 + $0x20] sm:$0xf]
      %v4196 = vld [vmem:[%s4186 + $0x24] sm:$0xf]
      %v4197 = vld [vmem:[%s4186 + $0x28] sm:$0xf]
      %v4198 = vld [vmem:[%s4186 + $0x2c] sm:$0xf]
      %v4199 = vld [vmem:[%s4186 + $0x30] sm:$0xf]
      %v4200 = vld [vmem:[%s4186 + $0x34] sm:$0xf]
      %v4201 = vld [vmem:[%s4186 + $0x38] sm:$0xf]
      %v4202 = vld [vmem:[%s4186 + $0x3c] sm:$0xf]
      %v4204 = vsel %vm1682, %v4187, 0
      %4206 = vmatpush.xpose.msra.mxu0 0.0
      %4207 = vmatpush.xpose.msra.mxu0 0.0
      %4208 = vmatpush.xpose.msra.mxu0 0.0
      %4209 = vmatpush.xpose.msra.mxu0 0.0
      %4210 = vmatpush.xpose.msra.mxu0 0.0
      %4211 = vmatpush.xpose.msra.mxu0 0.0
      %4212 = vmatpush.xpose.msra.mxu0 0.0
      %4213 = vmatpush.xpose.msra.mxu0 0.0
      %4214 = vmatpush.xpose.msra.mxu0 0.0
      %4215 = vmatpush.xpose.msra.mxu0 0.0
      %4216 = vmatpush.xpose.msra.mxu0 0.0
      %4217 = vmatpush.xpose.msra.mxu0 0.0
      %4218 = vmatpush.xpose.msra.mxu0 0.0
      %4219 = vmatpush.xpose.msra.mxu0 0.0
      %4220 = vmatpush.xpose.msra.mxu0 0.0
      %4221 = vmatpush.xpose.msra.mxu0 %v4204
      %4222 = vmatmul.f32.gmra.mxu0 %v2839
      %v4223 = vpop.f32.mrf.mxu0
      %v4224 = vadd.f32 0.0, %v4223
      %4225 = vdwg.mxu0
      %v4227 = vsel %vm1682, %v4188, 0
      %4229 = vmatpush.xpose.msra.mxu0 0.0
      %4230 = vmatpush.xpose.msra.mxu0 0.0
      %4231 = vmatpush.xpose.msra.mxu0 0.0
      %4232 = vmatpush.xpose.msra.mxu0 0.0
      %4233 = vmatpush.xpose.msra.mxu0 0.0
      %4234 = vmatpush.xpose.msra.mxu0 0.0
      %4235 = vmatpush.xpose.msra.mxu0 0.0
      %4236 = vmatpush.xpose.msra.mxu0 0.0
      %4237 = vmatpush.xpose.msra.mxu0 0.0
      %4238 = vmatpush.xpose.msra.mxu0 0.0
      %4239 = vmatpush.xpose.msra.mxu0 0.0
      %4240 = vmatpush.xpose.msra.mxu0 0.0
      %4241 = vmatpush.xpose.msra.mxu0 0.0
      %4242 = vmatpush.xpose.msra.mxu0 0.0
      %4243 = vmatpush.xpose.msra.mxu0 0.0
      %4244 = vmatpush.xpose.msra.mxu0 %v4227
      %4245 = vmatmul.f32.gmra.mxu0 %v2865
      %v4246 = vpop.f32.mrf.mxu0
      %v4247 = vadd.f32 0.0, %v4246
      %4248 = vdwg.mxu0
      %v4250 = vsel %vm1682, %v4189, 0
      %4252 = vmatpush.xpose.msra.mxu0 0.0
      %4253 = vmatpush.xpose.msra.mxu0 0.0
      %4254 = vmatpush.xpose.msra.mxu0 0.0
      %4255 = vmatpush.xpose.msra.mxu0 0.0
      %4256 = vmatpush.xpose.msra.mxu0 0.0
      %4257 = vmatpush.xpose.msra.mxu0 0.0
      %4258 = vmatpush.xpose.msra.mxu0 0.0
      %4259 = vmatpush.xpose.msra.mxu0 0.0
      %4260 = vmatpush.xpose.msra.mxu0 0.0
      %4261 = vmatpush.xpose.msra.mxu0 0.0
      %4262 = vmatpush.xpose.msra.mxu0 0.0
      %4263 = vmatpush.xpose.msra.mxu0 0.0
      %4264 = vmatpush.xpose.msra.mxu0 0.0
      %4265 = vmatpush.xpose.msra.mxu0 0.0
      %4266 = vmatpush.xpose.msra.mxu0 0.0
      %4267 = vmatpush.xpose.msra.mxu0 %v4250
      %4268 = vmatmul.f32.gmra.mxu0 %v2891
      %v4269 = vpop.f32.mrf.mxu0
      %v4270 = vadd.f32 0.0, %v4269
      %4271 = vdwg.mxu0
      %v4273 = vsel %vm1682, %v4190, 0
      %4275 = vmatpush.xpose.msra.mxu0 0.0
      %4276 = vmatpush.xpose.msra.mxu0 0.0
      %4277 = vmatpush.xpose.msra.mxu0 0.0
      %4278 = vmatpush.xpose.msra.mxu0 0.0
      %4279 = vmatpush.xpose.msra.mxu0 0.0
      %4280 = vmatpush.xpose.msra.mxu0 0.0
      %4281 = vmatpush.xpose.msra.mxu0 0.0
      %4282 = vmatpush.xpose.msra.mxu0 0.0
      %4283 = vmatpush.xpose.msra.mxu0 0.0
      %4284 = vmatpush.xpose.msra.mxu0 0.0
      %4285 = vmatpush.xpose.msra.mxu0 0.0
      %4286 = vmatpush.xpose.msra.mxu0 0.0
      %4287 = vmatpush.xpose.msra.mxu0 0.0
      %4288 = vmatpush.xpose.msra.mxu0 0.0
      %4289 = vmatpush.xpose.msra.mxu0 0.0
      %4290 = vmatpush.xpose.msra.mxu0 %v4273
      %4291 = vmatmul.f32.gmra.mxu0 %v2917
      %v4292 = vpop.f32.mrf.mxu0
      %v4293 = vadd.f32 0.0, %v4292
      %4294 = vdwg.mxu0
      %v4296 = vsel %vm1682, %v4191, 0
      %4298 = vmatpush.xpose.msra.mxu0 0.0
      %4299 = vmatpush.xpose.msra.mxu0 0.0
      %4300 = vmatpush.xpose.msra.mxu0 0.0
      %4301 = vmatpush.xpose.msra.mxu0 0.0
      %4302 = vmatpush.xpose.msra.mxu0 0.0
      %4303 = vmatpush.xpose.msra.mxu0 0.0
      %4304 = vmatpush.xpose.msra.mxu0 0.0
      %4305 = vmatpush.xpose.msra.mxu0 0.0
      %4306 = vmatpush.xpose.msra.mxu0 0.0
      %4307 = vmatpush.xpose.msra.mxu0 0.0
      %4308 = vmatpush.xpose.msra.mxu0 0.0
      %4309 = vmatpush.xpose.msra.mxu0 0.0
      %4310 = vmatpush.xpose.msra.mxu0 0.0
      %4311 = vmatpush.xpose.msra.mxu0 0.0
      %4312 = vmatpush.xpose.msra.mxu0 0.0
      %4313 = vmatpush.xpose.msra.mxu0 %v4296
      %4314 = vmatmul.f32.gmra.mxu0 %v2943
      %v4315 = vpop.f32.mrf.mxu0
      %v4316 = vadd.f32 0.0, %v4315
      %4317 = vdwg.mxu0
      %v4319 = vsel %vm1682, %v4192, 0
      %4321 = vmatpush.xpose.msra.mxu0 0.0
      %4322 = vmatpush.xpose.msra.mxu0 0.0
      %4323 = vmatpush.xpose.msra.mxu0 0.0
      %4324 = vmatpush.xpose.msra.mxu0 0.0
      %4325 = vmatpush.xpose.msra.mxu0 0.0
      %4326 = vmatpush.xpose.msra.mxu0 0.0
      %4327 = vmatpush.xpose.msra.mxu0 0.0
      %4328 = vmatpush.xpose.msra.mxu0 0.0
      %4329 = vmatpush.xpose.msra.mxu0 0.0
      %4330 = vmatpush.xpose.msra.mxu0 0.0
      %4331 = vmatpush.xpose.msra.mxu0 0.0
      %4332 = vmatpush.xpose.msra.mxu0 0.0
      %4333 = vmatpush.xpose.msra.mxu0 0.0
      %4334 = vmatpush.xpose.msra.mxu0 0.0
      %4335 = vmatpush.xpose.msra.mxu0 0.0
      %4336 = vmatpush.xpose.msra.mxu0 %v4319
      %4337 = vmatmul.f32.gmra.mxu0 %v2969
      %v4338 = vpop.f32.mrf.mxu0
      %v4339 = vadd.f32 0.0, %v4338
      %4340 = vdwg.mxu0
      %v4342 = vsel %vm1682, %v4193, 0
      %4344 = vmatpush.xpose.msra.mxu0 0.0
      %4345 = vmatpush.xpose.msra.mxu0 0.0
      %4346 = vmatpush.xpose.msra.mxu0 0.0
      %4347 = vmatpush.xpose.msra.mxu0 0.0
      %4348 = vmatpush.xpose.msra.mxu0 0.0
      %4349 = vmatpush.xpose.msra.mxu0 0.0
      %4350 = vmatpush.xpose.msra.mxu0 0.0
      %4351 = vmatpush.xpose.msra.mxu0 0.0
      %4352 = vmatpush.xpose.msra.mxu0 0.0
      %4353 = vmatpush.xpose.msra.mxu0 0.0
      %4354 = vmatpush.xpose.msra.mxu0 0.0
      %4355 = vmatpush.xpose.msra.mxu0 0.0
      %4356 = vmatpush.xpose.msra.mxu0 0.0
      %4357 = vmatpush.xpose.msra.mxu0 0.0
      %4358 = vmatpush.xpose.msra.mxu0 0.0
      %4359 = vmatpush.xpose.msra.mxu0 %v4342
      %4360 = vmatmul.f32.gmra.mxu0 %v2995
      %v4361 = vpop.f32.mrf.mxu0
      %v4362 = vadd.f32 0.0, %v4361
      %4363 = vdwg.mxu0
      %v4365 = vsel %vm1682, %v4194, 0
      %4367 = vmatpush.xpose.msra.mxu0 0.0
      %4368 = vmatpush.xpose.msra.mxu0 0.0
      %4369 = vmatpush.xpose.msra.mxu0 0.0
      %4370 = vmatpush.xpose.msra.mxu0 0.0
      %4371 = vmatpush.xpose.msra.mxu0 0.0
      %4372 = vmatpush.xpose.msra.mxu0 0.0
      %4373 = vmatpush.xpose.msra.mxu0 0.0
      %4374 = vmatpush.xpose.msra.mxu0 0.0
      %4375 = vmatpush.xpose.msra.mxu0 0.0
      %4376 = vmatpush.xpose.msra.mxu0 0.0
      %4377 = vmatpush.xpose.msra.mxu0 0.0
      %4378 = vmatpush.xpose.msra.mxu0 0.0
      %4379 = vmatpush.xpose.msra.mxu0 0.0
      %4380 = vmatpush.xpose.msra.mxu0 0.0
      %4381 = vmatpush.xpose.msra.mxu0 0.0
      %4382 = vmatpush.xpose.msra.mxu0 %v4365
      %4383 = vmatmul.f32.gmra.mxu0 %v3021
      %v4384 = vpop.f32.mrf.mxu0
      %v4385 = vadd.f32 0.0, %v4384
      %4386 = vdwg.mxu0
      %v4388 = vsel %vm1682, %v4195, 0
      %4390 = vmatpush.xpose.msra.mxu0 0.0
      %4391 = vmatpush.xpose.msra.mxu0 0.0
      %4392 = vmatpush.xpose.msra.mxu0 0.0
      %4393 = vmatpush.xpose.msra.mxu0 0.0
      %4394 = vmatpush.xpose.msra.mxu0 0.0
      %4395 = vmatpush.xpose.msra.mxu0 0.0
      %4396 = vmatpush.xpose.msra.mxu0 0.0
      %4397 = vmatpush.xpose.msra.mxu0 0.0
      %4398 = vmatpush.xpose.msra.mxu0 0.0
      %4399 = vmatpush.xpose.msra.mxu0 0.0
      %4400 = vmatpush.xpose.msra.mxu0 0.0
      %4401 = vmatpush.xpose.msra.mxu0 0.0
      %4402 = vmatpush.xpose.msra.mxu0 0.0
      %4403 = vmatpush.xpose.msra.mxu0 0.0
      %4404 = vmatpush.xpose.msra.mxu0 0.0
      %4405 = vmatpush.xpose.msra.mxu0 %v4388
      %4406 = vmatmul.f32.gmra.mxu0 %v3047
      %v4407 = vpop.f32.mrf.mxu0
      %v4408 = vadd.f32 0.0, %v4407
      %4409 = vdwg.mxu0
      %v4411 = vsel %vm1682, %v4196, 0
      %4413 = vmatpush.xpose.msra.mxu0 0.0
      %4414 = vmatpush.xpose.msra.mxu0 0.0
      %4415 = vmatpush.xpose.msra.mxu0 0.0
      %4416 = vmatpush.xpose.msra.mxu0 0.0
      %4417 = vmatpush.xpose.msra.mxu0 0.0
      %4418 = vmatpush.xpose.msra.mxu0 0.0
      %4419 = vmatpush.xpose.msra.mxu0 0.0
      %4420 = vmatpush.xpose.msra.mxu0 0.0
      %4421 = vmatpush.xpose.msra.mxu0 0.0
      %4422 = vmatpush.xpose.msra.mxu0 0.0
      %4423 = vmatpush.xpose.msra.mxu0 0.0
      %4424 = vmatpush.xpose.msra.mxu0 0.0
      %4425 = vmatpush.xpose.msra.mxu0 0.0
      %4426 = vmatpush.xpose.msra.mxu0 0.0
      %4427 = vmatpush.xpose.msra.mxu0 0.0
      %4428 = vmatpush.xpose.msra.mxu0 %v4411
      %4429 = vmatmul.f32.gmra.mxu0 %v3073
      %v4430 = vpop.f32.mrf.mxu0
      %v4431 = vadd.f32 0.0, %v4430
      %4432 = vdwg.mxu0
      %v4434 = vsel %vm1682, %v4197, 0
      %4436 = vmatpush.xpose.msra.mxu0 0.0
      %4437 = vmatpush.xpose.msra.mxu0 0.0
      %4438 = vmatpush.xpose.msra.mxu0 0.0
      %4439 = vmatpush.xpose.msra.mxu0 0.0
      %4440 = vmatpush.xpose.msra.mxu0 0.0
      %4441 = vmatpush.xpose.msra.mxu0 0.0
      %4442 = vmatpush.xpose.msra.mxu0 0.0
      %4443 = vmatpush.xpose.msra.mxu0 0.0
      %4444 = vmatpush.xpose.msra.mxu0 0.0
      %4445 = vmatpush.xpose.msra.mxu0 0.0
      %4446 = vmatpush.xpose.msra.mxu0 0.0
      %4447 = vmatpush.xpose.msra.mxu0 0.0
      %4448 = vmatpush.xpose.msra.mxu0 0.0
      %4449 = vmatpush.xpose.msra.mxu0 0.0
      %4450 = vmatpush.xpose.msra.mxu0 0.0
      %4451 = vmatpush.xpose.msra.mxu0 %v4434
      %4452 = vmatmul.f32.gmra.mxu0 %v3099
      %v4453 = vpop.f32.mrf.mxu0
      %v4454 = vadd.f32 0.0, %v4453
      %4455 = vdwg.mxu0
      %v4457 = vsel %vm1682, %v4198, 0
      %4459 = vmatpush.xpose.msra.mxu0 0.0
      %4460 = vmatpush.xpose.msra.mxu0 0.0
      %4461 = vmatpush.xpose.msra.mxu0 0.0
      %4462 = vmatpush.xpose.msra.mxu0 0.0
      %4463 = vmatpush.xpose.msra.mxu0 0.0
      %4464 = vmatpush.xpose.msra.mxu0 0.0
      %4465 = vmatpush.xpose.msra.mxu0 0.0
      %4466 = vmatpush.xpose.msra.mxu0 0.0
      %4467 = vmatpush.xpose.msra.mxu0 0.0
      %4468 = vmatpush.xpose.msra.mxu0 0.0
      %4469 = vmatpush.xpose.msra.mxu0 0.0
      %4470 = vmatpush.xpose.msra.mxu0 0.0
      %4471 = vmatpush.xpose.msra.mxu0 0.0
      %4472 = vmatpush.xpose.msra.mxu0 0.0
      %4473 = vmatpush.xpose.msra.mxu0 0.0
      %4474 = vmatpush.xpose.msra.mxu0 %v4457
      %4475 = vmatmul.f32.gmra.mxu0 %v3125
      %v4476 = vpop.f32.mrf.mxu0
      %v4477 = vadd.f32 0.0, %v4476
      %4478 = vdwg.mxu0
      %v4480 = vsel %vm1682, %v4199, 0
      %4482 = vmatpush.xpose.msra.mxu0 0.0
      %4483 = vmatpush.xpose.msra.mxu0 0.0
      %4484 = vmatpush.xpose.msra.mxu0 0.0
      %4485 = vmatpush.xpose.msra.mxu0 0.0
      %4486 = vmatpush.xpose.msra.mxu0 0.0
      %4487 = vmatpush.xpose.msra.mxu0 0.0
      %4488 = vmatpush.xpose.msra.mxu0 0.0
      %4489 = vmatpush.xpose.msra.mxu0 0.0
      %4490 = vmatpush.xpose.msra.mxu0 0.0
      %4491 = vmatpush.xpose.msra.mxu0 0.0
      %4492 = vmatpush.xpose.msra.mxu0 0.0
      %4493 = vmatpush.xpose.msra.mxu0 0.0
      %4494 = vmatpush.xpose.msra.mxu0 0.0
      %4495 = vmatpush.xpose.msra.mxu0 0.0
      %4496 = vmatpush.xpose.msra.mxu0 0.0
      %4497 = vmatpush.xpose.msra.mxu0 %v4480
      %4498 = vmatmul.f32.gmra.mxu0 %v3151
      %v4499 = vpop.f32.mrf.mxu0
      %v4500 = vadd.f32 0.0, %v4499
      %4501 = vdwg.mxu0
      %v4503 = vsel %vm1682, %v4200, 0
      %4505 = vmatpush.xpose.msra.mxu0 0.0
      %4506 = vmatpush.xpose.msra.mxu0 0.0
      %4507 = vmatpush.xpose.msra.mxu0 0.0
      %4508 = vmatpush.xpose.msra.mxu0 0.0
      %4509 = vmatpush.xpose.msra.mxu0 0.0
      %4510 = vmatpush.xpose.msra.mxu0 0.0
      %4511 = vmatpush.xpose.msra.mxu0 0.0
      %4512 = vmatpush.xpose.msra.mxu0 0.0
      %4513 = vmatpush.xpose.msra.mxu0 0.0
      %4514 = vmatpush.xpose.msra.mxu0 0.0
      %4515 = vmatpush.xpose.msra.mxu0 0.0
      %4516 = vmatpush.xpose.msra.mxu0 0.0
      %4517 = vmatpush.xpose.msra.mxu0 0.0
      %4518 = vmatpush.xpose.msra.mxu0 0.0
      %4519 = vmatpush.xpose.msra.mxu0 0.0
      %4520 = vmatpush.xpose.msra.mxu0 %v4503
      %4521 = vmatmul.f32.gmra.mxu0 %v3177
      %v4522 = vpop.f32.mrf.mxu0
      %v4523 = vadd.f32 0.0, %v4522
      %4524 = vdwg.mxu0
      %v4526 = vsel %vm1682, %v4201, 0
      %4528 = vmatpush.xpose.msra.mxu0 0.0
      %4529 = vmatpush.xpose.msra.mxu0 0.0
      %4530 = vmatpush.xpose.msra.mxu0 0.0
      %4531 = vmatpush.xpose.msra.mxu0 0.0
      %4532 = vmatpush.xpose.msra.mxu0 0.0
      %4533 = vmatpush.xpose.msra.mxu0 0.0
      %4534 = vmatpush.xpose.msra.mxu0 0.0
      %4535 = vmatpush.xpose.msra.mxu0 0.0
      %4536 = vmatpush.xpose.msra.mxu0 0.0
      %4537 = vmatpush.xpose.msra.mxu0 0.0
      %4538 = vmatpush.xpose.msra.mxu0 0.0
      %4539 = vmatpush.xpose.msra.mxu0 0.0
      %4540 = vmatpush.xpose.msra.mxu0 0.0
      %4541 = vmatpush.xpose.msra.mxu0 0.0
      %4542 = vmatpush.xpose.msra.mxu0 0.0
      %4543 = vmatpush.xpose.msra.mxu0 %v4526
      %4544 = vmatmul.f32.gmra.mxu0 %v3203
      %v4545 = vpop.f32.mrf.mxu0
      %v4546 = vadd.f32 0.0, %v4545
      %4547 = vdwg.mxu0
      %v4549 = vsel %vm1682, %v4202, 0
      %4551 = vmatpush.xpose.msra.mxu0 0.0
      %4552 = vmatpush.xpose.msra.mxu0 0.0
      %4553 = vmatpush.xpose.msra.mxu0 0.0
      %4554 = vmatpush.xpose.msra.mxu0 0.0
      %4555 = vmatpush.xpose.msra.mxu0 0.0
      %4556 = vmatpush.xpose.msra.mxu0 0.0
      %4557 = vmatpush.xpose.msra.mxu0 0.0
      %4558 = vmatpush.xpose.msra.mxu0 0.0
      %4559 = vmatpush.xpose.msra.mxu0 0.0
      %4560 = vmatpush.xpose.msra.mxu0 0.0
      %4561 = vmatpush.xpose.msra.mxu0 0.0
      %4562 = vmatpush.xpose.msra.mxu0 0.0
      %4563 = vmatpush.xpose.msra.mxu0 0.0
      %4564 = vmatpush.xpose.msra.mxu0 0.0
      %4565 = vmatpush.xpose.msra.mxu0 0.0
      %4566 = vmatpush.xpose.msra.mxu0 %v4549
      %4567 = vmatmul.f32.gmra.mxu0 %v3229
      %v4568 = vpop.f32.mrf.mxu0
      %v4569 = vadd.f32 0.0, %v4568
      %4570 = vdwg.mxu0
      %v4587 = vrot.slane %v4224, 1
      %v4588 = vrot.slane %v4224, 2
      %v4589 = vrot.slane %v4224, 3
      %v4590 = vrot.slane %v4224, 4
      %v4591 = vrot.slane %v4224, 5
      %v4592 = vrot.slane %v4224, 6
      %v4593 = vrot.slane %v4247, 1
      %v4594 = vrot.slane %v4247, 2
      %v4595 = vrot.slane %v4247, 3
      %v4596 = vrot.slane %v4247, 4
      %v4597 = vrot.slane %v4247, 5
      %v4598 = vrot.slane %v4247, 6
      %v4599 = vrot.slane %v4270, 1
      %v4600 = vrot.slane %v4270, 2
      %v4601 = vrot.slane %v4270, 3
      %v4602 = vrot.slane %v4270, 4
      %v4603 = vrot.slane %v4270, 5
      %v4604 = vrot.slane %v4270, 6
      %v4605 = vrot.slane %v4293, 1
      %v4606 = vrot.slane %v4293, 2
      %v4607 = vrot.slane %v4293, 3
      %v4608 = vrot.slane %v4293, 4
      %v4609 = vrot.slane %v4293, 5
      %v4610 = vrot.slane %v4293, 6
      %v4611 = vrot.slane %v4316, 1
      %v4612 = vrot.slane %v4316, 2
      %v4613 = vrot.slane %v4316, 3
      %v4614 = vrot.slane %v4316, 4
      %v4615 = vrot.slane %v4316, 5
      %v4616 = vrot.slane %v4316, 6
      %v4617 = vrot.slane %v4339, 1
      %v4618 = vrot.slane %v4339, 2
      %v4619 = vrot.slane %v4339, 3
      %v4620 = vrot.slane %v4339, 4
      %v4621 = vrot.slane %v4339, 5
      %v4622 = vrot.slane %v4339, 6
      %v4623 = vrot.slane %v4362, 1
      %v4624 = vrot.slane %v4362, 2
      %v4625 = vrot.slane %v4362, 3
      %v4626 = vrot.slane %v4362, 4
      %v4627 = vrot.slane %v4362, 5
      %v4628 = vrot.slane %v4362, 6
      %v4629 = vrot.slane %v4385, 1
      %v4630 = vrot.slane %v4385, 2
      %v4631 = vrot.slane %v4385, 3
      %v4632 = vrot.slane %v4385, 4
      %v4633 = vrot.slane %v4385, 5
      %v4634 = vrot.slane %v4385, 6
      %v4635 = vrot.slane %v4408, 1
      %v4636 = vrot.slane %v4408, 2
      %v4637 = vrot.slane %v4408, 3
      %v4638 = vrot.slane %v4408, 4
      %v4639 = vrot.slane %v4408, 5
      %v4640 = vrot.slane %v4408, 6
      %v4641 = vrot.slane %v4431, 1
      %v4642 = vrot.slane %v4431, 2
      %v4643 = vrot.slane %v4431, 3
      %v4644 = vrot.slane %v4431, 4
      %v4645 = vrot.slane %v4431, 5
      %v4646 = vrot.slane %v4431, 6
      %v4647 = vrot.slane %v4454, 1
      %v4648 = vrot.slane %v4454, 2
      %v4649 = vrot.slane %v4454, 3
      %v4650 = vrot.slane %v4454, 4
      %v4651 = vrot.slane %v4454, 5
      %v4652 = vrot.slane %v4454, 6
      %v4653 = vrot.slane %v4477, 1
      %v4654 = vrot.slane %v4477, 2
      %v4655 = vrot.slane %v4477, 3
      %v4656 = vrot.slane %v4477, 4
      %v4657 = vrot.slane %v4477, 5
      %v4658 = vrot.slane %v4477, 6
      %v4659 = vrot.slane %v4500, 1
      %v4660 = vrot.slane %v4500, 2
      %v4661 = vrot.slane %v4500, 3
      %v4662 = vrot.slane %v4500, 4
      %v4663 = vrot.slane %v4500, 5
      %v4664 = vrot.slane %v4500, 6
      %v4665 = vrot.slane %v4523, 1
      %v4666 = vrot.slane %v4523, 2
      %v4667 = vrot.slane %v4523, 3
      %v4668 = vrot.slane %v4523, 4
      %v4669 = vrot.slane %v4523, 5
      %v4670 = vrot.slane %v4523, 6
      %v4671 = vrot.slane %v4546, 1
      %v4672 = vrot.slane %v4546, 2
      %v4673 = vrot.slane %v4546, 3
      %v4674 = vrot.slane %v4546, 4
      %v4675 = vrot.slane %v4546, 5
      %v4676 = vrot.slane %v4546, 6
      %v4677 = vrot.slane %v4569, 1
      %v4678 = vrot.slane %v4569, 2
      %v4679 = vrot.slane %v4569, 3
      %v4680 = vrot.slane %v4569, 4
      %v4681 = vrot.slane %v4569, 5
      %v4682 = vrot.slane %v4569, 6
      %4683 = vst [vmem:[#allocation1] ss:$9 sm:$0xff] %v4224
      %s4684 = scalar_lea.vmem [#allocation1], 1
      %4685 = vst [vmem:[%s4684] ss:$9 sm:$0xff] %v4587
      %s4686 = scalar_lea.vmem [#allocation1], 2
      %4687 = vst [vmem:[%s4686] ss:$9 sm:$0xff] %v4588
      %s4688 = scalar_lea.vmem [#allocation1], 3
      %4689 = vst [vmem:[%s4688] ss:$9 sm:$0xff] %v4589
      %s4690 = scalar_lea.vmem [#allocation1], 4
      %4691 = vst [vmem:[%s4690] ss:$9 sm:$0xff] %v4590
      %s4692 = scalar_lea.vmem [#allocation1], 5
      %4693 = vst [vmem:[%s4692] ss:$9 sm:$0xff] %v4591
      %s4694 = scalar_lea.vmem [#allocation1], 6
      %4695 = vst [vmem:[%s4694] ss:$9 sm:$0xff] %v4592
      %s4696 = scalar_lea.vmem [#allocation1], 7
      %4697 = vst [vmem:[%s4696] ss:$9 sm:$0xff] %v4247
      %v4698 = vld [vmem:[#allocation1] sm:$0xff]
      %4699 = vst [vmem:[#allocation1] ss:$9 sm:$0xff] %v4593
      %4700 = vst [vmem:[%s4684] ss:$9 sm:$0xff] %v4594
      %4701 = vst [vmem:[%s4686] ss:$9 sm:$0xff] %v4595
      %4702 = vst [vmem:[%s4688] ss:$9 sm:$0xff] %v4596
      %4703 = vst [vmem:[%s4690] ss:$9 sm:$0xff] %v4597
      %4704 = vst [vmem:[%s4692] ss:$9 sm:$0xff] %v4598
      %4705 = vst [vmem:[%s4694] ss:$9 sm:$0xff] %v4270
      %4706 = vst [vmem:[%s4696] ss:$9 sm:$0xff] %v4599
      %v4707 = vld [vmem:[#allocation1] sm:$0xff]
      %4708 = vst [vmem:[#allocation1] ss:$9 sm:$0xff] %v4600
      %4709 = vst [vmem:[%s4684] ss:$9 sm:$0xff] %v4601
      %4710 = vst [vmem:[%s4686] ss:$9 sm:$0xff] %v4602
      %4711 = vst [vmem:[%s4688] ss:$9 sm:$0xff] %v4603
      %4712 = vst [vmem:[%s4690] ss:$9 sm:$0xff] %v4604
      %4713 = vst [vmem:[%s4692] ss:$9 sm:$0xff] %v4293
      %4714 = vst [vmem:[%s4694] ss:$9 sm:$0xff] %v4605
      %4715 = vst [vmem:[%s4696] ss:$9 sm:$0xff] %v4606
      %v4716 = vld [vmem:[#allocation1] sm:$0xff]
      %4717 = vst [vmem:[#allocation1] ss:$9 sm:$0xff] %v4607
      %4718 = vst [vmem:[%s4684] ss:$9 sm:$0xff] %v4608
      %4719 = vst [vmem:[%s4686] ss:$9 sm:$0xff] %v4609
      %4720 = vst [vmem:[%s4688] ss:$9 sm:$0xff] %v4610
      %4721 = vst [vmem:[%s4690] ss:$9 sm:$0xff] %v4316
      %4722 = vst [vmem:[%s4692] ss:$9 sm:$0xff] %v4611
      %4723 = vst [vmem:[%s4694] ss:$9 sm:$0xff] %v4612
      %4724 = vst [vmem:[%s4696] ss:$9 sm:$0xff] %v4613
      %v4725 = vld [vmem:[#allocation1] sm:$0xff]
      %4726 = vst [vmem:[#allocation1] ss:$9 sm:$0xff] %v4614
      %4727 = vst [vmem:[%s4684] ss:$9 sm:$0xff] %v4615
      %4728 = vst [vmem:[%s4686] ss:$9 sm:$0xff] %v4616
      %4729 = vst [vmem:[%s4688] ss:$9 sm:$0xff] %v4339
      %4730 = vst [vmem:[%s4690] ss:$9 sm:$0xff] %v4617
      %4731 = vst [vmem:[%s4692] ss:$9 sm:$0xff] %v4618
      %4732 = vst [vmem:[%s4694] ss:$9 sm:$0xff] %v4619
      %4733 = vst [vmem:[%s4696] ss:$9 sm:$0xff] %v4620
      %v4734 = vld [vmem:[#allocation1] sm:$0xff]
      %4735 = vst [vmem:[#allocation1] ss:$9 sm:$0xff] %v4621
      %4736 = vst [vmem:[%s4684] ss:$9 sm:$0xff] %v4622
      %4737 = vst [vmem:[%s4686] ss:$9 sm:$0xff] %v4362
      %4738 = vst [vmem:[%s4688] ss:$9 sm:$0xff] %v4623
      %4739 = vst [vmem:[%s4690] ss:$9 sm:$0xff] %v4624
      %4740 = vst [vmem:[%s4692] ss:$9 sm:$0xff] %v4625
      %4741 = vst [vmem:[%s4694] ss:$9 sm:$0xff] %v4626
      %4742 = vst [vmem:[%s4696] ss:$9 sm:$0xff] %v4627
      %v4743 = vld [vmem:[#allocation1] sm:$0xff]
      %4744 = vst [vmem:[#allocation1] ss:$9 sm:$0xff] %v4628
      %4745 = vst [vmem:[%s4684] ss:$9 sm:$0xff] %v4385
      %4746 = vst [vmem:[%s4686] ss:$9 sm:$0xff] %v4629
      %4747 = vst [vmem:[%s4688] ss:$9 sm:$0xff] %v4630
      %4748 = vst [vmem:[%s4690] ss:$9 sm:$0xff] %v4631
      %4749 = vst [vmem:[%s4692] ss:$9 sm:$0xff] %v4632
      %4750 = vst [vmem:[%s4694] ss:$9 sm:$0xff] %v4633
      %4751 = vst [vmem:[%s4696] ss:$9 sm:$0xff] %v4634
      %v4752 = vld [vmem:[#allocation1] sm:$0xff]
      %4753 = vst [vmem:[#allocation1] ss:$9 sm:$0xff] %v4408
      %4754 = vst [vmem:[%s4684] ss:$9 sm:$0xff] %v4635
      %4755 = vst [vmem:[%s4686] ss:$9 sm:$0xff] %v4636
      %4756 = vst [vmem:[%s4688] ss:$9 sm:$0xff] %v4637
      %4757 = vst [vmem:[%s4690] ss:$9 sm:$0xff] %v4638
      %4758 = vst [vmem:[%s4692] ss:$9 sm:$0xff] %v4639
      %4759 = vst [vmem:[%s4694] ss:$9 sm:$0xff] %v4640
      %4760 = vst [vmem:[%s4696] ss:$9 sm:$0xff] %v4431
      %v4761 = vld [vmem:[#allocation1] sm:$0xff]
      %4762 = vst [vmem:[#allocation1] ss:$9 sm:$0xff] %v4641
      %4763 = vst [vmem:[%s4684] ss:$9 sm:$0xff] %v4642
      %4764 = vst [vmem:[%s4686] ss:$9 sm:$0xff] %v4643
      %4765 = vst [vmem:[%s4688] ss:$9 sm:$0xff] %v4644
      %4766 = vst [vmem:[%s4690] ss:$9 sm:$0xff] %v4645
      %4767 = vst [vmem:[%s4692] ss:$9 sm:$0xff] %v4646
      %4768 = vst [vmem:[%s4694] ss:$9 sm:$0xff] %v4454
      %4769 = vst [vmem:[%s4696] ss:$9 sm:$0xff] %v4647
      %v4770 = vld [vmem:[#allocation1] sm:$0xff]
      %4771 = vst [vmem:[#allocation1] ss:$9 sm:$0xff] %v4648
      %4772 = vst [vmem:[%s4684] ss:$9 sm:$0xff] %v4649
      %4773 = vst [vmem:[%s4686] ss:$9 sm:$0xff] %v4650
      %4774 = vst [vmem:[%s4688] ss:$9 sm:$0xff] %v4651
      %4775 = vst [vmem:[%s4690] ss:$9 sm:$0xff] %v4652
      %4776 = vst [vmem:[%s4692] ss:$9 sm:$0xff] %v4477
      %4777 = vst [vmem:[%s4694] ss:$9 sm:$0xff] %v4653
      %4778 = vst [vmem:[%s4696] ss:$9 sm:$0xff] %v4654
      %v4779 = vld [vmem:[#allocation1] sm:$0xff]
      %4780 = vst [vmem:[#allocation1] ss:$9 sm:$0xff] %v4655
      %4781 = vst [vmem:[%s4684] ss:$9 sm:$0xff] %v4656
      %4782 = vst [vmem:[%s4686] ss:$9 sm:$0xff] %v4657
      %4783 = vst [vmem:[%s4688] ss:$9 sm:$0xff] %v4658
      %4784 = vst [vmem:[%s4690] ss:$9 sm:$0xff] %v4500
      %4785 = vst [vmem:[%s4692] ss:$9 sm:$0xff] %v4659
      %4786 = vst [vmem:[%s4694] ss:$9 sm:$0xff] %v4660
      %4787 = vst [vmem:[%s4696] ss:$9 sm:$0xff] %v4661
      %v4788 = vld [vmem:[#allocation1] sm:$0xff]
      %4789 = vst [vmem:[#allocation1] ss:$9 sm:$0xff] %v4662
      %4790 = vst [vmem:[%s4684] ss:$9 sm:$0xff] %v4663
      %4791 = vst [vmem:[%s4686] ss:$9 sm:$0xff] %v4664
      %4792 = vst [vmem:[%s4688] ss:$9 sm:$0xff] %v4523
      %4793 = vst [vmem:[%s4690] ss:$9 sm:$0xff] %v4665
      %4794 = vst [vmem:[%s4692] ss:$9 sm:$0xff] %v4666
      %4795 = vst [vmem:[%s4694] ss:$9 sm:$0xff] %v4667
      %4796 = vst [vmem:[%s4696] ss:$9 sm:$0xff] %v4668
      %v4797 = vld [vmem:[#allocation1] sm:$0xff]
      %4798 = vst [vmem:[#allocation1] ss:$9 sm:$0xff] %v4669
      %4799 = vst [vmem:[%s4684] ss:$9 sm:$0xff] %v4670
      %4800 = vst [vmem:[%s4686] ss:$9 sm:$0xff] %v4546
      %4801 = vst [vmem:[%s4688] ss:$9 sm:$0xff] %v4671
      %4802 = vst [vmem:[%s4690] ss:$9 sm:$0xff] %v4672
      %4803 = vst [vmem:[%s4692] ss:$9 sm:$0xff] %v4673
      %4804 = vst [vmem:[%s4694] ss:$9 sm:$0xff] %v4674
      %4805 = vst [vmem:[%s4696] ss:$9 sm:$0xff] %v4675
      %v4806 = vld [vmem:[#allocation1] sm:$0xff]
      %4807 = vst [vmem:[#allocation1] ss:$9 sm:$0xff] %v4676
      %4808 = vst [vmem:[%s4684] ss:$9 sm:$0xff] %v4569
      %4809 = vst [vmem:[%s4686] ss:$9 sm:$0xff] %v4677
      %4810 = vst [vmem:[%s4688] ss:$9 sm:$0xff] %v4678
      %4811 = vst [vmem:[%s4690] ss:$9 sm:$0xff] %v4679
      %4812 = vst [vmem:[%s4692] ss:$9 sm:$0xff] %v4680
      %4813 = vst [vmem:[%s4694] ss:$9 sm:$0xff] %v4681
      %4814 = vst [vmem:[%s4696] ss:$9 sm:$0xff] %v4682
      %v4815 = vld [vmem:[#allocation1] sm:$0xff]
      %4830 = vst.msk [vmem:[%s181 + $0xe0] sm:$0xff] %vm3513, %v4698
      %4831 = vst.msk [vmem:[%s181 + $0xe8] sm:$0xff] %vm3513, %v4707
      %4832 = vst.msk [vmem:[%s181 + $0xf0] sm:$0xff] %vm3513, %v4716
      %4833 = vst.msk [vmem:[%s181 + $0xf8] sm:$0xff] %vm3513, %v4725
      %4834 = vst.msk [vmem:[%s181 + $0x100] sm:$0xff] %vm3513, %v4734
      %4835 = vst.msk [vmem:[%s181 + $0x108] sm:$0xff] %vm3513, %v4743
      %4836 = vst.msk [vmem:[%s181 + $0x110] sm:$0xff] %vm3513, %v4752
      %4837 = vst.msk [vmem:[%s181 + $0x118] sm:$0xff] %vm3513, %v4761
      %4838 = vst.msk [vmem:[%s181 + $0x120] sm:$0xff] %vm3513, %v4770
      %4839 = vst.msk [vmem:[%s181 + $0x128] sm:$0xff] %vm3513, %v4779
      %4840 = vst.msk [vmem:[%s181 + $0x130] sm:$0xff] %vm3513, %v4788
      %4841 = vst.msk [vmem:[%s181 + $0x138] sm:$0xff] %vm3513, %v4797
      %4842 = vst.msk [vmem:[%s181 + $0x140] sm:$0xff] %vm3513, %v4806
      %4843 = vst.msk [vmem:[%s181 + $0x148] sm:$0xff] %vm3513, %v4815
      %s4844 = scalar_lea.vmem [#allocation2], 192
      %v4845 = vld [vmem:[%s4844] sm:$0xf]
      %v4846 = vld [vmem:[%s4844 + $0x4] sm:$0xf]
      %v4847 = vld [vmem:[%s4844 + $0x8] sm:$0xf]
      %v4848 = vld [vmem:[%s4844 + $0xc] sm:$0xf]
      %v4849 = vld [vmem:[%s4844 + $0x10] sm:$0xf]
      %v4850 = vld [vmem:[%s4844 + $0x14] sm:$0xf]
      %v4851 = vld [vmem:[%s4844 + $0x18] sm:$0xf]
      %v4852 = vld [vmem:[%s4844 + $0x1c] sm:$0xf]
      %v4853 = vld [vmem:[%s4844 + $0x20] sm:$0xf]
      %v4854 = vld [vmem:[%s4844 + $0x24] sm:$0xf]
      %v4855 = vld [vmem:[%s4844 + $0x28] sm:$0xf]
      %v4856 = vld [vmem:[%s4844 + $0x2c] sm:$0xf]
      %v4857 = vld [vmem:[%s4844 + $0x30] sm:$0xf]
      %v4858 = vld [vmem:[%s4844 + $0x34] sm:$0xf]
      %v4859 = vld [vmem:[%s4844 + $0x38] sm:$0xf]
      %v4860 = vld [vmem:[%s4844 + $0x3c] sm:$0xf]
      %v4862 = vsel %vm1682, %v4845, 0
      %4864 = vmatpush.xpose.msra.mxu0 0.0
      %4865 = vmatpush.xpose.msra.mxu0 0.0
      %4866 = vmatpush.xpose.msra.mxu0 0.0
      %4867 = vmatpush.xpose.msra.mxu0 0.0
      %4868 = vmatpush.xpose.msra.mxu0 0.0
      %4869 = vmatpush.xpose.msra.mxu0 0.0
      %4870 = vmatpush.xpose.msra.mxu0 0.0
      %4871 = vmatpush.xpose.msra.mxu0 0.0
      %4872 = vmatpush.xpose.msra.mxu0 0.0
      %4873 = vmatpush.xpose.msra.mxu0 0.0
      %4874 = vmatpush.xpose.msra.mxu0 0.0
      %4875 = vmatpush.xpose.msra.mxu0 0.0
      %4876 = vmatpush.xpose.msra.mxu0 0.0
      %4877 = vmatpush.xpose.msra.mxu0 0.0
      %4878 = vmatpush.xpose.msra.mxu0 0.0
      %4879 = vmatpush.xpose.msra.mxu0 %v4862
      %4880 = vmatmul.f32.gmra.mxu0 %v2839
      %v4881 = vpop.f32.mrf.mxu0
      %v4882 = vadd.f32 0.0, %v4881
      %4883 = vdwg.mxu0
      %v4885 = vsel %vm1682, %v4846, 0
      %4887 = vmatpush.xpose.msra.mxu0 0.0
      %4888 = vmatpush.xpose.msra.mxu0 0.0
      %4889 = vmatpush.xpose.msra.mxu0 0.0
      %4890 = vmatpush.xpose.msra.mxu0 0.0
      %4891 = vmatpush.xpose.msra.mxu0 0.0
      %4892 = vmatpush.xpose.msra.mxu0 0.0
      %4893 = vmatpush.xpose.msra.mxu0 0.0
      %4894 = vmatpush.xpose.msra.mxu0 0.0
      %4895 = vmatpush.xpose.msra.mxu0 0.0
      %4896 = vmatpush.xpose.msra.mxu0 0.0
      %4897 = vmatpush.xpose.msra.mxu0 0.0
      %4898 = vmatpush.xpose.msra.mxu0 0.0
      %4899 = vmatpush.xpose.msra.mxu0 0.0
      %4900 = vmatpush.xpose.msra.mxu0 0.0
      %4901 = vmatpush.xpose.msra.mxu0 0.0
      %4902 = vmatpush.xpose.msra.mxu0 %v4885
      %4903 = vmatmul.f32.gmra.mxu0 %v2865
      %v4904 = vpop.f32.mrf.mxu0
      %v4905 = vadd.f32 0.0, %v4904
      %4906 = vdwg.mxu0
      %v4908 = vsel %vm1682, %v4847, 0
      %4910 = vmatpush.xpose.msra.mxu0 0.0
      %4911 = vmatpush.xpose.msra.mxu0 0.0
      %4912 = vmatpush.xpose.msra.mxu0 0.0
      %4913 = vmatpush.xpose.msra.mxu0 0.0
      %4914 = vmatpush.xpose.msra.mxu0 0.0
      %4915 = vmatpush.xpose.msra.mxu0 0.0
      %4916 = vmatpush.xpose.msra.mxu0 0.0
      %4917 = vmatpush.xpose.msra.mxu0 0.0
      %4918 = vmatpush.xpose.msra.mxu0 0.0
      %4919 = vmatpush.xpose.msra.mxu0 0.0
      %4920 = vmatpush.xpose.msra.mxu0 0.0
      %4921 = vmatpush.xpose.msra.mxu0 0.0
      %4922 = vmatpush.xpose.msra.mxu0 0.0
      %4923 = vmatpush.xpose.msra.mxu0 0.0
      %4924 = vmatpush.xpose.msra.mxu0 0.0
      %4925 = vmatpush.xpose.msra.mxu0 %v4908
      %4926 = vmatmul.f32.gmra.mxu0 %v2891
      %v4927 = vpop.f32.mrf.mxu0
      %v4928 = vadd.f32 0.0, %v4927
      %4929 = vdwg.mxu0
      %v4931 = vsel %vm1682, %v4848, 0
      %4933 = vmatpush.xpose.msra.mxu0 0.0
      %4934 = vmatpush.xpose.msra.mxu0 0.0
      %4935 = vmatpush.xpose.msra.mxu0 0.0
      %4936 = vmatpush.xpose.msra.mxu0 0.0
      %4937 = vmatpush.xpose.msra.mxu0 0.0
      %4938 = vmatpush.xpose.msra.mxu0 0.0
      %4939 = vmatpush.xpose.msra.mxu0 0.0
      %4940 = vmatpush.xpose.msra.mxu0 0.0
      %4941 = vmatpush.xpose.msra.mxu0 0.0
      %4942 = vmatpush.xpose.msra.mxu0 0.0
      %4943 = vmatpush.xpose.msra.mxu0 0.0
      %4944 = vmatpush.xpose.msra.mxu0 0.0
      %4945 = vmatpush.xpose.msra.mxu0 0.0
      %4946 = vmatpush.xpose.msra.mxu0 0.0
      %4947 = vmatpush.xpose.msra.mxu0 0.0
      %4948 = vmatpush.xpose.msra.mxu0 %v4931
      %4949 = vmatmul.f32.gmra.mxu0 %v2917
      %v4950 = vpop.f32.mrf.mxu0
      %v4951 = vadd.f32 0.0, %v4950
      %4952 = vdwg.mxu0
      %v4954 = vsel %vm1682, %v4849, 0
      %4956 = vmatpush.xpose.msra.mxu0 0.0
      %4957 = vmatpush.xpose.msra.mxu0 0.0
      %4958 = vmatpush.xpose.msra.mxu0 0.0
      %4959 = vmatpush.xpose.msra.mxu0 0.0
      %4960 = vmatpush.xpose.msra.mxu0 0.0
      %4961 = vmatpush.xpose.msra.mxu0 0.0
      %4962 = vmatpush.xpose.msra.mxu0 0.0
      %4963 = vmatpush.xpose.msra.mxu0 0.0
      %4964 = vmatpush.xpose.msra.mxu0 0.0
      %4965 = vmatpush.xpose.msra.mxu0 0.0
      %4966 = vmatpush.xpose.msra.mxu0 0.0
      %4967 = vmatpush.xpose.msra.mxu0 0.0
      %4968 = vmatpush.xpose.msra.mxu0 0.0
      %4969 = vmatpush.xpose.msra.mxu0 0.0
      %4970 = vmatpush.xpose.msra.mxu0 0.0
      %4971 = vmatpush.xpose.msra.mxu0 %v4954
      %4972 = vmatmul.f32.gmra.mxu0 %v2943
      %v4973 = vpop.f32.mrf.mxu0
      %v4974 = vadd.f32 0.0, %v4973
      %4975 = vdwg.mxu0
      %v4977 = vsel %vm1682, %v4850, 0
      %4979 = vmatpush.xpose.msra.mxu0 0.0
      %4980 = vmatpush.xpose.msra.mxu0 0.0
      %4981 = vmatpush.xpose.msra.mxu0 0.0
      %4982 = vmatpush.xpose.msra.mxu0 0.0
      %4983 = vmatpush.xpose.msra.mxu0 0.0
      %4984 = vmatpush.xpose.msra.mxu0 0.0
      %4985 = vmatpush.xpose.msra.mxu0 0.0
      %4986 = vmatpush.xpose.msra.mxu0 0.0
      %4987 = vmatpush.xpose.msra.mxu0 0.0
      %4988 = vmatpush.xpose.msra.mxu0 0.0
      %4989 = vmatpush.xpose.msra.mxu0 0.0
      %4990 = vmatpush.xpose.msra.mxu0 0.0
      %4991 = vmatpush.xpose.msra.mxu0 0.0
      %4992 = vmatpush.xpose.msra.mxu0 0.0
      %4993 = vmatpush.xpose.msra.mxu0 0.0
      %4994 = vmatpush.xpose.msra.mxu0 %v4977
      %4995 = vmatmul.f32.gmra.mxu0 %v2969
      %v4996 = vpop.f32.mrf.mxu0
      %v4997 = vadd.f32 0.0, %v4996
      %4998 = vdwg.mxu0
      %v5000 = vsel %vm1682, %v4851, 0
      %5002 = vmatpush.xpose.msra.mxu0 0.0
      %5003 = vmatpush.xpose.msra.mxu0 0.0
      %5004 = vmatpush.xpose.msra.mxu0 0.0
      %5005 = vmatpush.xpose.msra.mxu0 0.0
      %5006 = vmatpush.xpose.msra.mxu0 0.0
      %5007 = vmatpush.xpose.msra.mxu0 0.0
      %5008 = vmatpush.xpose.msra.mxu0 0.0
      %5009 = vmatpush.xpose.msra.mxu0 0.0
      %5010 = vmatpush.xpose.msra.mxu0 0.0
      %5011 = vmatpush.xpose.msra.mxu0 0.0
      %5012 = vmatpush.xpose.msra.mxu0 0.0
      %5013 = vmatpush.xpose.msra.mxu0 0.0
      %5014 = vmatpush.xpose.msra.mxu0 0.0
      %5015 = vmatpush.xpose.msra.mxu0 0.0
      %5016 = vmatpush.xpose.msra.mxu0 0.0
      %5017 = vmatpush.xpose.msra.mxu0 %v5000
      %5018 = vmatmul.f32.gmra.mxu0 %v2995
      %v5019 = vpop.f32.mrf.mxu0
      %v5020 = vadd.f32 0.0, %v5019
      %5021 = vdwg.mxu0
      %v5023 = vsel %vm1682, %v4852, 0
      %5025 = vmatpush.xpose.msra.mxu0 0.0
      %5026 = vmatpush.xpose.msra.mxu0 0.0
      %5027 = vmatpush.xpose.msra.mxu0 0.0
      %5028 = vmatpush.xpose.msra.mxu0 0.0
      %5029 = vmatpush.xpose.msra.mxu0 0.0
      %5030 = vmatpush.xpose.msra.mxu0 0.0
      %5031 = vmatpush.xpose.msra.mxu0 0.0
      %5032 = vmatpush.xpose.msra.mxu0 0.0
      %5033 = vmatpush.xpose.msra.mxu0 0.0
      %5034 = vmatpush.xpose.msra.mxu0 0.0
      %5035 = vmatpush.xpose.msra.mxu0 0.0
      %5036 = vmatpush.xpose.msra.mxu0 0.0
      %5037 = vmatpush.xpose.msra.mxu0 0.0
      %5038 = vmatpush.xpose.msra.mxu0 0.0
      %5039 = vmatpush.xpose.msra.mxu0 0.0
      %5040 = vmatpush.xpose.msra.mxu0 %v5023
      %5041 = vmatmul.f32.gmra.mxu0 %v3021
      %v5042 = vpop.f32.mrf.mxu0
      %v5043 = vadd.f32 0.0, %v5042
      %5044 = vdwg.mxu0
      %v5046 = vsel %vm1682, %v4853, 0
      %5048 = vmatpush.xpose.msra.mxu0 0.0
      %5049 = vmatpush.xpose.msra.mxu0 0.0
      %5050 = vmatpush.xpose.msra.mxu0 0.0
      %5051 = vmatpush.xpose.msra.mxu0 0.0
      %5052 = vmatpush.xpose.msra.mxu0 0.0
      %5053 = vmatpush.xpose.msra.mxu0 0.0
      %5054 = vmatpush.xpose.msra.mxu0 0.0
      %5055 = vmatpush.xpose.msra.mxu0 0.0
      %5056 = vmatpush.xpose.msra.mxu0 0.0
      %5057 = vmatpush.xpose.msra.mxu0 0.0
      %5058 = vmatpush.xpose.msra.mxu0 0.0
      %5059 = vmatpush.xpose.msra.mxu0 0.0
      %5060 = vmatpush.xpose.msra.mxu0 0.0
      %5061 = vmatpush.xpose.msra.mxu0 0.0
      %5062 = vmatpush.xpose.msra.mxu0 0.0
      %5063 = vmatpush.xpose.msra.mxu0 %v5046
      %5064 = vmatmul.f32.gmra.mxu0 %v3047
      %v5065 = vpop.f32.mrf.mxu0
      %v5066 = vadd.f32 0.0, %v5065
      %5067 = vdwg.mxu0
      %v5069 = vsel %vm1682, %v4854, 0
      %5071 = vmatpush.xpose.msra.mxu0 0.0
      %5072 = vmatpush.xpose.msra.mxu0 0.0
      %5073 = vmatpush.xpose.msra.mxu0 0.0
      %5074 = vmatpush.xpose.msra.mxu0 0.0
      %5075 = vmatpush.xpose.msra.mxu0 0.0
      %5076 = vmatpush.xpose.msra.mxu0 0.0
      %5077 = vmatpush.xpose.msra.mxu0 0.0
      %5078 = vmatpush.xpose.msra.mxu0 0.0
      %5079 = vmatpush.xpose.msra.mxu0 0.0
      %5080 = vmatpush.xpose.msra.mxu0 0.0
      %5081 = vmatpush.xpose.msra.mxu0 0.0
      %5082 = vmatpush.xpose.msra.mxu0 0.0
      %5083 = vmatpush.xpose.msra.mxu0 0.0
      %5084 = vmatpush.xpose.msra.mxu0 0.0
      %5085 = vmatpush.xpose.msra.mxu0 0.0
      %5086 = vmatpush.xpose.msra.mxu0 %v5069
      %5087 = vmatmul.f32.gmra.mxu0 %v3073
      %v5088 = vpop.f32.mrf.mxu0
      %v5089 = vadd.f32 0.0, %v5088
      %5090 = vdwg.mxu0
      %v5092 = vsel %vm1682, %v4855, 0
      %5094 = vmatpush.xpose.msra.mxu0 0.0
      %5095 = vmatpush.xpose.msra.mxu0 0.0
      %5096 = vmatpush.xpose.msra.mxu0 0.0
      %5097 = vmatpush.xpose.msra.mxu0 0.0
      %5098 = vmatpush.xpose.msra.mxu0 0.0
      %5099 = vmatpush.xpose.msra.mxu0 0.0
      %5100 = vmatpush.xpose.msra.mxu0 0.0
      %5101 = vmatpush.xpose.msra.mxu0 0.0
      %5102 = vmatpush.xpose.msra.mxu0 0.0
      %5103 = vmatpush.xpose.msra.mxu0 0.0
      %5104 = vmatpush.xpose.msra.mxu0 0.0
      %5105 = vmatpush.xpose.msra.mxu0 0.0
      %5106 = vmatpush.xpose.msra.mxu0 0.0
      %5107 = vmatpush.xpose.msra.mxu0 0.0
      %5108 = vmatpush.xpose.msra.mxu0 0.0
      %5109 = vmatpush.xpose.msra.mxu0 %v5092
      %5110 = vmatmul.f32.gmra.mxu0 %v3099
      %v5111 = vpop.f32.mrf.mxu0
      %v5112 = vadd.f32 0.0, %v5111
      %5113 = vdwg.mxu0
      %v5115 = vsel %vm1682, %v4856, 0
      %5117 = vmatpush.xpose.msra.mxu0 0.0
      %5118 = vmatpush.xpose.msra.mxu0 0.0
      %5119 = vmatpush.xpose.msra.mxu0 0.0
      %5120 = vmatpush.xpose.msra.mxu0 0.0
      %5121 = vmatpush.xpose.msra.mxu0 0.0
      %5122 = vmatpush.xpose.msra.mxu0 0.0
      %5123 = vmatpush.xpose.msra.mxu0 0.0
      %5124 = vmatpush.xpose.msra.mxu0 0.0
      %5125 = vmatpush.xpose.msra.mxu0 0.0
      %5126 = vmatpush.xpose.msra.mxu0 0.0
      %5127 = vmatpush.xpose.msra.mxu0 0.0
      %5128 = vmatpush.xpose.msra.mxu0 0.0
      %5129 = vmatpush.xpose.msra.mxu0 0.0
      %5130 = vmatpush.xpose.msra.mxu0 0.0
      %5131 = vmatpush.xpose.msra.mxu0 0.0
      %5132 = vmatpush.xpose.msra.mxu0 %v5115
      %5133 = vmatmul.f32.gmra.mxu0 %v3125
      %v5134 = vpop.f32.mrf.mxu0
      %v5135 = vadd.f32 0.0, %v5134
      %5136 = vdwg.mxu0
      %v5138 = vsel %vm1682, %v4857, 0
      %5140 = vmatpush.xpose.msra.mxu0 0.0
      %5141 = vmatpush.xpose.msra.mxu0 0.0
      %5142 = vmatpush.xpose.msra.mxu0 0.0
      %5143 = vmatpush.xpose.msra.mxu0 0.0
      %5144 = vmatpush.xpose.msra.mxu0 0.0
      %5145 = vmatpush.xpose.msra.mxu0 0.0
      %5146 = vmatpush.xpose.msra.mxu0 0.0
      %5147 = vmatpush.xpose.msra.mxu0 0.0
      %5148 = vmatpush.xpose.msra.mxu0 0.0
      %5149 = vmatpush.xpose.msra.mxu0 0.0
      %5150 = vmatpush.xpose.msra.mxu0 0.0
      %5151 = vmatpush.xpose.msra.mxu0 0.0
      %5152 = vmatpush.xpose.msra.mxu0 0.0
      %5153 = vmatpush.xpose.msra.mxu0 0.0
      %5154 = vmatpush.xpose.msra.mxu0 0.0
      %5155 = vmatpush.xpose.msra.mxu0 %v5138
      %5156 = vmatmul.f32.gmra.mxu0 %v3151
      %v5157 = vpop.f32.mrf.mxu0
      %v5158 = vadd.f32 0.0, %v5157
      %5159 = vdwg.mxu0
      %v5161 = vsel %vm1682, %v4858, 0
      %5163 = vmatpush.xpose.msra.mxu0 0.0
      %5164 = vmatpush.xpose.msra.mxu0 0.0
      %5165 = vmatpush.xpose.msra.mxu0 0.0
      %5166 = vmatpush.xpose.msra.mxu0 0.0
      %5167 = vmatpush.xpose.msra.mxu0 0.0
      %5168 = vmatpush.xpose.msra.mxu0 0.0
      %5169 = vmatpush.xpose.msra.mxu0 0.0
      %5170 = vmatpush.xpose.msra.mxu0 0.0
      %5171 = vmatpush.xpose.msra.mxu0 0.0
      %5172 = vmatpush.xpose.msra.mxu0 0.0
      %5173 = vmatpush.xpose.msra.mxu0 0.0
      %5174 = vmatpush.xpose.msra.mxu0 0.0
      %5175 = vmatpush.xpose.msra.mxu0 0.0
      %5176 = vmatpush.xpose.msra.mxu0 0.0
      %5177 = vmatpush.xpose.msra.mxu0 0.0
      %5178 = vmatpush.xpose.msra.mxu0 %v5161
      %5179 = vmatmul.f32.gmra.mxu0 %v3177
      %v5180 = vpop.f32.mrf.mxu0
      %v5181 = vadd.f32 0.0, %v5180
      %5182 = vdwg.mxu0
      %v5184 = vsel %vm1682, %v4859, 0
      %5186 = vmatpush.xpose.msra.mxu0 0.0
      %5187 = vmatpush.xpose.msra.mxu0 0.0
      %5188 = vmatpush.xpose.msra.mxu0 0.0
      %5189 = vmatpush.xpose.msra.mxu0 0.0
      %5190 = vmatpush.xpose.msra.mxu0 0.0
      %5191 = vmatpush.xpose.msra.mxu0 0.0
      %5192 = vmatpush.xpose.msra.mxu0 0.0
      %5193 = vmatpush.xpose.msra.mxu0 0.0
      %5194 = vmatpush.xpose.msra.mxu0 0.0
      %5195 = vmatpush.xpose.msra.mxu0 0.0
      %5196 = vmatpush.xpose.msra.mxu0 0.0
      %5197 = vmatpush.xpose.msra.mxu0 0.0
      %5198 = vmatpush.xpose.msra.mxu0 0.0
      %5199 = vmatpush.xpose.msra.mxu0 0.0
      %5200 = vmatpush.xpose.msra.mxu0 0.0
      %5201 = vmatpush.xpose.msra.mxu0 %v5184
      %5202 = vmatmul.f32.gmra.mxu0 %v3203
      %v5203 = vpop.f32.mrf.mxu0
      %v5204 = vadd.f32 0.0, %v5203
      %5205 = vdwg.mxu0
      %v5207 = vsel %vm1682, %v4860, 0
      %5209 = vmatpush.xpose.msra.mxu0 0.0
      %5210 = vmatpush.xpose.msra.mxu0 0.0
      %5211 = vmatpush.xpose.msra.mxu0 0.0
      %5212 = vmatpush.xpose.msra.mxu0 0.0
      %5213 = vmatpush.xpose.msra.mxu0 0.0
      %5214 = vmatpush.xpose.msra.mxu0 0.0
      %5215 = vmatpush.xpose.msra.mxu0 0.0
      %5216 = vmatpush.xpose.msra.mxu0 0.0
      %5217 = vmatpush.xpose.msra.mxu0 0.0
      %5218 = vmatpush.xpose.msra.mxu0 0.0
      %5219 = vmatpush.xpose.msra.mxu0 0.0
      %5220 = vmatpush.xpose.msra.mxu0 0.0
      %5221 = vmatpush.xpose.msra.mxu0 0.0
      %5222 = vmatpush.xpose.msra.mxu0 0.0
      %5223 = vmatpush.xpose.msra.mxu0 0.0
      %5224 = vmatpush.xpose.msra.mxu0 %v5207
      %5225 = vmatmul.f32.gmra.mxu0 %v3229
      %v5226 = vpop.f32.mrf.mxu0
      %v5227 = vadd.f32 0.0, %v5226
      %5228 = vdwg.mxu0
      %v5245 = vrot.slane %v4882, 1
      %v5246 = vrot.slane %v4882, 2
      %v5247 = vrot.slane %v4882, 3
      %v5248 = vrot.slane %v4882, 4
      %v5249 = vrot.slane %v4882, 5
      %v5250 = vrot.slane %v4882, 6
      %v5251 = vrot.slane %v4905, 1
      %v5252 = vrot.slane %v4905, 2
      %v5253 = vrot.slane %v4905, 3
      %v5254 = vrot.slane %v4905, 4
      %v5255 = vrot.slane %v4905, 5
      %v5256 = vrot.slane %v4905, 6
      %v5257 = vrot.slane %v4928, 1
      %v5258 = vrot.slane %v4928, 2
      %v5259 = vrot.slane %v4928, 3
      %v5260 = vrot.slane %v4928, 4
      %v5261 = vrot.slane %v4928, 5
      %v5262 = vrot.slane %v4928, 6
      %v5263 = vrot.slane %v4951, 1
      %v5264 = vrot.slane %v4951, 2
      %v5265 = vrot.slane %v4951, 3
      %v5266 = vrot.slane %v4951, 4
      %v5267 = vrot.slane %v4951, 5
      %v5268 = vrot.slane %v4951, 6
      %v5269 = vrot.slane %v4974, 1
      %v5270 = vrot.slane %v4974, 2
      %v5271 = vrot.slane %v4974, 3
      %v5272 = vrot.slane %v4974, 4
      %v5273 = vrot.slane %v4974, 5
      %v5274 = vrot.slane %v4974, 6
      %v5275 = vrot.slane %v4997, 1
      %v5276 = vrot.slane %v4997, 2
      %v5277 = vrot.slane %v4997, 3
      %v5278 = vrot.slane %v4997, 4
      %v5279 = vrot.slane %v4997, 5
      %v5280 = vrot.slane %v4997, 6
      %v5281 = vrot.slane %v5020, 1
      %v5282 = vrot.slane %v5020, 2
      %v5283 = vrot.slane %v5020, 3
      %v5284 = vrot.slane %v5020, 4
      %v5285 = vrot.slane %v5020, 5
      %v5286 = vrot.slane %v5020, 6
      %v5287 = vrot.slane %v5043, 1
      %v5288 = vrot.slane %v5043, 2
      %v5289 = vrot.slane %v5043, 3
      %v5290 = vrot.slane %v5043, 4
      %v5291 = vrot.slane %v5043, 5
      %v5292 = vrot.slane %v5043, 6
      %v5293 = vrot.slane %v5066, 1
      %v5294 = vrot.slane %v5066, 2
      %v5295 = vrot.slane %v5066, 3
      %v5296 = vrot.slane %v5066, 4
      %v5297 = vrot.slane %v5066, 5
      %v5298 = vrot.slane %v5066, 6
      %v5299 = vrot.slane %v5089, 1
      %v5300 = vrot.slane %v5089, 2
      %v5301 = vrot.slane %v5089, 3
      %v5302 = vrot.slane %v5089, 4
      %v5303 = vrot.slane %v5089, 5
      %v5304 = vrot.slane %v5089, 6
      %v5305 = vrot.slane %v5112, 1
      %v5306 = vrot.slane %v5112, 2
      %v5307 = vrot.slane %v5112, 3
      %v5308 = vrot.slane %v5112, 4
      %v5309 = vrot.slane %v5112, 5
      %v5310 = vrot.slane %v5112, 6
      %v5311 = vrot.slane %v5135, 1
      %v5312 = vrot.slane %v5135, 2
      %v5313 = vrot.slane %v5135, 3
      %v5314 = vrot.slane %v5135, 4
      %v5315 = vrot.slane %v5135, 5
      %v5316 = vrot.slane %v5135, 6
      %v5317 = vrot.slane %v5158, 1
      %v5318 = vrot.slane %v5158, 2
      %v5319 = vrot.slane %v5158, 3
      %v5320 = vrot.slane %v5158, 4
      %v5321 = vrot.slane %v5158, 5
      %v5322 = vrot.slane %v5158, 6
      %v5323 = vrot.slane %v5181, 1
      %v5324 = vrot.slane %v5181, 2
      %v5325 = vrot.slane %v5181, 3
      %v5326 = vrot.slane %v5181, 4
      %v5327 = vrot.slane %v5181, 5
      %v5328 = vrot.slane %v5181, 6
      %v5329 = vrot.slane %v5204, 1
      %v5330 = vrot.slane %v5204, 2
      %v5331 = vrot.slane %v5204, 3
      %v5332 = vrot.slane %v5204, 4
      %v5333 = vrot.slane %v5204, 5
      %v5334 = vrot.slane %v5204, 6
      %v5335 = vrot.slane %v5227, 1
      %v5336 = vrot.slane %v5227, 2
      %v5337 = vrot.slane %v5227, 3
      %v5338 = vrot.slane %v5227, 4
      %v5339 = vrot.slane %v5227, 5
      %v5340 = vrot.slane %v5227, 6
      %5341 = vst [vmem:[#allocation1] ss:$9 sm:$0xff] %v4882
      %s5342 = scalar_lea.vmem [#allocation1], 1
      %5343 = vst [vmem:[%s5342] ss:$9 sm:$0xff] %v5245
      %s5344 = scalar_lea.vmem [#allocation1], 2
      %5345 = vst [vmem:[%s5344] ss:$9 sm:$0xff] %v5246
      %s5346 = scalar_lea.vmem [#allocation1], 3
      %5347 = vst [vmem:[%s5346] ss:$9 sm:$0xff] %v5247
      %s5348 = scalar_lea.vmem [#allocation1], 4
      %5349 = vst [vmem:[%s5348] ss:$9 sm:$0xff] %v5248
      %s5350 = scalar_lea.vmem [#allocation1], 5
      %5351 = vst [vmem:[%s5350] ss:$9 sm:$0xff] %v5249
      %s5352 = scalar_lea.vmem [#allocation1], 6
      %5353 = vst [vmem:[%s5352] ss:$9 sm:$0xff] %v5250
      %s5354 = scalar_lea.vmem [#allocation1], 7
      %5355 = vst [vmem:[%s5354] ss:$9 sm:$0xff] %v4905
      %v5356 = vld [vmem:[#allocation1] sm:$0xff]
      %5357 = vst [vmem:[#allocation1] ss:$9 sm:$0xff] %v5251
      %5358 = vst [vmem:[%s5342] ss:$9 sm:$0xff] %v5252
      %5359 = vst [vmem:[%s5344] ss:$9 sm:$0xff] %v5253
      %5360 = vst [vmem:[%s5346] ss:$9 sm:$0xff] %v5254
      %5361 = vst [vmem:[%s5348] ss:$9 sm:$0xff] %v5255
      %5362 = vst [vmem:[%s5350] ss:$9 sm:$0xff] %v5256
      %5363 = vst [vmem:[%s5352] ss:$9 sm:$0xff] %v4928
      %5364 = vst [vmem:[%s5354] ss:$9 sm:$0xff] %v5257
      %v5365 = vld [vmem:[#allocation1] sm:$0xff]
      %5366 = vst [vmem:[#allocation1] ss:$9 sm:$0xff] %v5258
      %5367 = vst [vmem:[%s5342] ss:$9 sm:$0xff] %v5259
      %5368 = vst [vmem:[%s5344] ss:$9 sm:$0xff] %v5260
      %5369 = vst [vmem:[%s5346] ss:$9 sm:$0xff] %v5261
      %5370 = vst [vmem:[%s5348] ss:$9 sm:$0xff] %v5262
      %5371 = vst [vmem:[%s5350] ss:$9 sm:$0xff] %v4951
      %5372 = vst [vmem:[%s5352] ss:$9 sm:$0xff] %v5263
      %5373 = vst [vmem:[%s5354] ss:$9 sm:$0xff] %v5264
      %v5374 = vld [vmem:[#allocation1] sm:$0xff]
      %5375 = vst [vmem:[#allocation1] ss:$9 sm:$0xff] %v5265
      %5376 = vst [vmem:[%s5342] ss:$9 sm:$0xff] %v5266
      %5377 = vst [vmem:[%s5344] ss:$9 sm:$0xff] %v5267
      %5378 = vst [vmem:[%s5346] ss:$9 sm:$0xff] %v5268
      %5379 = vst [vmem:[%s5348] ss:$9 sm:$0xff] %v4974
      %5380 = vst [vmem:[%s5350] ss:$9 sm:$0xff] %v5269
      %5381 = vst [vmem:[%s5352] ss:$9 sm:$0xff] %v5270
      %5382 = vst [vmem:[%s5354] ss:$9 sm:$0xff] %v5271
      %v5383 = vld [vmem:[#allocation1] sm:$0xff]
      %5384 = vst [vmem:[#allocation1] ss:$9 sm:$0xff] %v5272
      %5385 = vst [vmem:[%s5342] ss:$9 sm:$0xff] %v5273
      %5386 = vst [vmem:[%s5344] ss:$9 sm:$0xff] %v5274
      %5387 = vst [vmem:[%s5346] ss:$9 sm:$0xff] %v4997
      %5388 = vst [vmem:[%s5348] ss:$9 sm:$0xff] %v5275
      %5389 = vst [vmem:[%s5350] ss:$9 sm:$0xff] %v5276
      %5390 = vst [vmem:[%s5352] ss:$9 sm:$0xff] %v5277
      %5391 = vst [vmem:[%s5354] ss:$9 sm:$0xff] %v5278
      %v5392 = vld [vmem:[#allocation1] sm:$0xff]
      %5393 = vst [vmem:[#allocation1] ss:$9 sm:$0xff] %v5279
      %5394 = vst [vmem:[%s5342] ss:$9 sm:$0xff] %v5280
      %5395 = vst [vmem:[%s5344] ss:$9 sm:$0xff] %v5020
      %5396 = vst [vmem:[%s5346] ss:$9 sm:$0xff] %v5281
      %5397 = vst [vmem:[%s5348] ss:$9 sm:$0xff] %v5282
      %5398 = vst [vmem:[%s5350] ss:$9 sm:$0xff] %v5283
      %5399 = vst [vmem:[%s5352] ss:$9 sm:$0xff] %v5284
      %5400 = vst [vmem:[%s5354] ss:$9 sm:$0xff] %v5285
      %v5401 = vld [vmem:[#allocation1] sm:$0xff]
      %5402 = vst [vmem:[#allocation1] ss:$9 sm:$0xff] %v5286
      %5403 = vst [vmem:[%s5342] ss:$9 sm:$0xff] %v5043
      %5404 = vst [vmem:[%s5344] ss:$9 sm:$0xff] %v5287
      %5405 = vst [vmem:[%s5346] ss:$9 sm:$0xff] %v5288
      %5406 = vst [vmem:[%s5348] ss:$9 sm:$0xff] %v5289
      %5407 = vst [vmem:[%s5350] ss:$9 sm:$0xff] %v5290
      %5408 = vst [vmem:[%s5352] ss:$9 sm:$0xff] %v5291
      %5409 = vst [vmem:[%s5354] ss:$9 sm:$0xff] %v5292
      %v5410 = vld [vmem:[#allocation1] sm:$0xff]
      %5411 = vst [vmem:[#allocation1] ss:$9 sm:$0xff] %v5066
      %5412 = vst [vmem:[%s5342] ss:$9 sm:$0xff] %v5293
      %5413 = vst [vmem:[%s5344] ss:$9 sm:$0xff] %v5294
      %5414 = vst [vmem:[%s5346] ss:$9 sm:$0xff] %v5295
      %5415 = vst [vmem:[%s5348] ss:$9 sm:$0xff] %v5296
      %5416 = vst [vmem:[%s5350] ss:$9 sm:$0xff] %v5297
      %5417 = vst [vmem:[%s5352] ss:$9 sm:$0xff] %v5298
      %5418 = vst [vmem:[%s5354] ss:$9 sm:$0xff] %v5089
      %v5419 = vld [vmem:[#allocation1] sm:$0xff]
      %5420 = vst [vmem:[#allocation1] ss:$9 sm:$0xff] %v5299
      %5421 = vst [vmem:[%s5342] ss:$9 sm:$0xff] %v5300
      %5422 = vst [vmem:[%s5344] ss:$9 sm:$0xff] %v5301
      %5423 = vst [vmem:[%s5346] ss:$9 sm:$0xff] %v5302
      %5424 = vst [vmem:[%s5348] ss:$9 sm:$0xff] %v5303
      %5425 = vst [vmem:[%s5350] ss:$9 sm:$0xff] %v5304
      %5426 = vst [vmem:[%s5352] ss:$9 sm:$0xff] %v5112
      %5427 = vst [vmem:[%s5354] ss:$9 sm:$0xff] %v5305
      %v5428 = vld [vmem:[#allocation1] sm:$0xff]
      %5429 = vst [vmem:[#allocation1] ss:$9 sm:$0xff] %v5306
      %5430 = vst [vmem:[%s5342] ss:$9 sm:$0xff] %v5307
      %5431 = vst [vmem:[%s5344] ss:$9 sm:$0xff] %v5308
      %5432 = vst [vmem:[%s5346] ss:$9 sm:$0xff] %v5309
      %5433 = vst [vmem:[%s5348] ss:$9 sm:$0xff] %v5310
      %5434 = vst [vmem:[%s5350] ss:$9 sm:$0xff] %v5135
      %5435 = vst [vmem:[%s5352] ss:$9 sm:$0xff] %v5311
      %5436 = vst [vmem:[%s5354] ss:$9 sm:$0xff] %v5312
      %v5437 = vld [vmem:[#allocation1] sm:$0xff]
      %5438 = vst [vmem:[#allocation1] ss:$9 sm:$0xff] %v5313
      %5439 = vst [vmem:[%s5342] ss:$9 sm:$0xff] %v5314
      %5440 = vst [vmem:[%s5344] ss:$9 sm:$0xff] %v5315
      %5441 = vst [vmem:[%s5346] ss:$9 sm:$0xff] %v5316
      %5442 = vst [vmem:[%s5348] ss:$9 sm:$0xff] %v5158
      %5443 = vst [vmem:[%s5350] ss:$9 sm:$0xff] %v5317
      %5444 = vst [vmem:[%s5352] ss:$9 sm:$0xff] %v5318
      %5445 = vst [vmem:[%s5354] ss:$9 sm:$0xff] %v5319
      %v5446 = vld [vmem:[#allocation1] sm:$0xff]
      %5447 = vst [vmem:[#allocation1] ss:$9 sm:$0xff] %v5320
      %5448 = vst [vmem:[%s5342] ss:$9 sm:$0xff] %v5321
      %5449 = vst [vmem:[%s5344] ss:$9 sm:$0xff] %v5322
      %5450 = vst [vmem:[%s5346] ss:$9 sm:$0xff] %v5181
      %5451 = vst [vmem:[%s5348] ss:$9 sm:$0xff] %v5323
      %5452 = vst [vmem:[%s5350] ss:$9 sm:$0xff] %v5324
      %5453 = vst [vmem:[%s5352] ss:$9 sm:$0xff] %v5325
      %5454 = vst [vmem:[%s5354] ss:$9 sm:$0xff] %v5326
      %v5455 = vld [vmem:[#allocation1] sm:$0xff]
      %5456 = vst [vmem:[#allocation1] ss:$9 sm:$0xff] %v5327
      %5457 = vst [vmem:[%s5342] ss:$9 sm:$0xff] %v5328
      %5458 = vst [vmem:[%s5344] ss:$9 sm:$0xff] %v5204
      %5459 = vst [vmem:[%s5346] ss:$9 sm:$0xff] %v5329
      %5460 = vst [vmem:[%s5348] ss:$9 sm:$0xff] %v5330
      %5461 = vst [vmem:[%s5350] ss:$9 sm:$0xff] %v5331
      %5462 = vst [vmem:[%s5352] ss:$9 sm:$0xff] %v5332
      %5463 = vst [vmem:[%s5354] ss:$9 sm:$0xff] %v5333
      %v5464 = vld [vmem:[#allocation1] sm:$0xff]
      %5465 = vst [vmem:[#allocation1] ss:$9 sm:$0xff] %v5334
      %5466 = vst [vmem:[%s5342] ss:$9 sm:$0xff] %v5227
      %5467 = vst [vmem:[%s5344] ss:$9 sm:$0xff] %v5335
      %5468 = vst [vmem:[%s5346] ss:$9 sm:$0xff] %v5336
      %5469 = vst [vmem:[%s5348] ss:$9 sm:$0xff] %v5337
      %5470 = vst [vmem:[%s5350] ss:$9 sm:$0xff] %v5338
      %5471 = vst [vmem:[%s5352] ss:$9 sm:$0xff] %v5339
      %5472 = vst [vmem:[%s5354] ss:$9 sm:$0xff] %v5340
      %v5473 = vld [vmem:[#allocation1] sm:$0xff]
      %5488 = vst.msk [vmem:[%s181 + $0x150] sm:$0xff] %vm3513, %v5356
      %5489 = vst.msk [vmem:[%s181 + $0x158] sm:$0xff] %vm3513, %v5365
      %5490 = vst.msk [vmem:[%s181 + $0x160] sm:$0xff] %vm3513, %v5374
      %5491 = vst.msk [vmem:[%s181 + $0x168] sm:$0xff] %vm3513, %v5383
      %5492 = vst.msk [vmem:[%s181 + $0x170] sm:$0xff] %vm3513, %v5392
      %5493 = vst.msk [vmem:[%s181 + $0x178] sm:$0xff] %vm3513, %v5401
      %5494 = vst.msk [vmem:[%s181 + $0x180] sm:$0xff] %vm3513, %v5410
      %5495 = vst.msk [vmem:[%s181 + $0x188] sm:$0xff] %vm3513, %v5419
      %5496 = vst.msk [vmem:[%s181 + $0x190] sm:$0xff] %vm3513, %v5428
      %5497 = vst.msk [vmem:[%s181 + $0x198] sm:$0xff] %vm3513, %v5437
      %5498 = vst.msk [vmem:[%s181 + $0x1a0] sm:$0xff] %vm3513, %v5446
      %5499 = vst.msk [vmem:[%s181 + $0x1a8] sm:$0xff] %vm3513, %v5455
      %5500 = vst.msk [vmem:[%s181 + $0x1b0] sm:$0xff] %vm3513, %v5464
      %5501 = vst.msk [vmem:[%s181 + $0x1b8] sm:$0xff] %vm3513, %v5473
      %s5502 = scalar_lea.vmem [#allocation2], 256
      %v5503 = vld [vmem:[%s5502] sm:$0xf]
      %v5504 = vld [vmem:[%s5502 + $0x4] sm:$0xf]
      %v5505 = vld [vmem:[%s5502 + $0x8] sm:$0xf]
      %v5506 = vld [vmem:[%s5502 + $0xc] sm:$0xf]
      %v5507 = vld [vmem:[%s5502 + $0x10] sm:$0xf]
      %v5508 = vld [vmem:[%s5502 + $0x14] sm:$0xf]
      %v5509 = vld [vmem:[%s5502 + $0x18] sm:$0xf]
      %v5510 = vld [vmem:[%s5502 + $0x1c] sm:$0xf]
      %v5511 = vld [vmem:[%s5502 + $0x20] sm:$0xf]
      %v5512 = vld [vmem:[%s5502 + $0x24] sm:$0xf]
      %v5513 = vld [vmem:[%s5502 + $0x28] sm:$0xf]
      %v5514 = vld [vmem:[%s5502 + $0x2c] sm:$0xf]
      %v5515 = vld [vmem:[%s5502 + $0x30] sm:$0xf]
      %v5516 = vld [vmem:[%s5502 + $0x34] sm:$0xf]
      %v5517 = vld [vmem:[%s5502 + $0x38] sm:$0xf]
      %v5518 = vld [vmem:[%s5502 + $0x3c] sm:$0xf]
      %v5520 = vsel %vm1682, %v5503, 0
      %5522 = vmatpush.xpose.msra.mxu0 0.0
      %5523 = vmatpush.xpose.msra.mxu0 0.0
      %5524 = vmatpush.xpose.msra.mxu0 0.0
      %5525 = vmatpush.xpose.msra.mxu0 0.0
      %5526 = vmatpush.xpose.msra.mxu0 0.0
      %5527 = vmatpush.xpose.msra.mxu0 0.0
      %5528 = vmatpush.xpose.msra.mxu0 0.0
      %5529 = vmatpush.xpose.msra.mxu0 0.0
      %5530 = vmatpush.xpose.msra.mxu0 0.0
      %5531 = vmatpush.xpose.msra.mxu0 0.0
      %5532 = vmatpush.xpose.msra.mxu0 0.0
      %5533 = vmatpush.xpose.msra.mxu0 0.0
      %5534 = vmatpush.xpose.msra.mxu0 0.0
      %5535 = vmatpush.xpose.msra.mxu0 0.0
      %5536 = vmatpush.xpose.msra.mxu0 0.0
      %5537 = vmatpush.xpose.msra.mxu0 %v5520
      %5538 = vmatmul.f32.gmra.mxu0 %v2839
      %v5539 = vpop.f32.mrf.mxu0
      %v5540 = vadd.f32 0.0, %v5539
      %5541 = vdwg.mxu0
      %v5543 = vsel %vm1682, %v5504, 0
      %5545 = vmatpush.xpose.msra.mxu0 0.0
      %5546 = vmatpush.xpose.msra.mxu0 0.0
      %5547 = vmatpush.xpose.msra.mxu0 0.0
      %5548 = vmatpush.xpose.msra.mxu0 0.0
      %5549 = vmatpush.xpose.msra.mxu0 0.0
      %5550 = vmatpush.xpose.msra.mxu0 0.0
      %5551 = vmatpush.xpose.msra.mxu0 0.0
      %5552 = vmatpush.xpose.msra.mxu0 0.0
      %5553 = vmatpush.xpose.msra.mxu0 0.0
      %5554 = vmatpush.xpose.msra.mxu0 0.0
      %5555 = vmatpush.xpose.msra.mxu0 0.0
      %5556 = vmatpush.xpose.msra.mxu0 0.0
      %5557 = vmatpush.xpose.msra.mxu0 0.0
      %5558 = vmatpush.xpose.msra.mxu0 0.0
      %5559 = vmatpush.xpose.msra.mxu0 0.0
      %5560 = vmatpush.xpose.msra.mxu0 %v5543
      %5561 = vmatmul.f32.gmra.mxu0 %v2865
      %v5562 = vpop.f32.mrf.mxu0
      %v5563 = vadd.f32 0.0, %v5562
      %5564 = vdwg.mxu0
      %v5566 = vsel %vm1682, %v5505, 0
      %5568 = vmatpush.xpose.msra.mxu0 0.0
      %5569 = vmatpush.xpose.msra.mxu0 0.0
      %5570 = vmatpush.xpose.msra.mxu0 0.0
      %5571 = vmatpush.xpose.msra.mxu0 0.0
      %5572 = vmatpush.xpose.msra.mxu0 0.0
      %5573 = vmatpush.xpose.msra.mxu0 0.0
      %5574 = vmatpush.xpose.msra.mxu0 0.0
      %5575 = vmatpush.xpose.msra.mxu0 0.0
      %5576 = vmatpush.xpose.msra.mxu0 0.0
      %5577 = vmatpush.xpose.msra.mxu0 0.0
      %5578 = vmatpush.xpose.msra.mxu0 0.0
      %5579 = vmatpush.xpose.msra.mxu0 0.0
      %5580 = vmatpush.xpose.msra.mxu0 0.0
      %5581 = vmatpush.xpose.msra.mxu0 0.0
      %5582 = vmatpush.xpose.msra.mxu0 0.0
      %5583 = vmatpush.xpose.msra.mxu0 %v5566
      %5584 = vmatmul.f32.gmra.mxu0 %v2891
      %v5585 = vpop.f32.mrf.mxu0
      %v5586 = vadd.f32 0.0, %v5585
      %5587 = vdwg.mxu0
      %v5589 = vsel %vm1682, %v5506, 0
      %5591 = vmatpush.xpose.msra.mxu0 0.0
      %5592 = vmatpush.xpose.msra.mxu0 0.0
      %5593 = vmatpush.xpose.msra.mxu0 0.0
      %5594 = vmatpush.xpose.msra.mxu0 0.0
      %5595 = vmatpush.xpose.msra.mxu0 0.0
      %5596 = vmatpush.xpose.msra.mxu0 0.0
      %5597 = vmatpush.xpose.msra.mxu0 0.0
      %5598 = vmatpush.xpose.msra.mxu0 0.0
      %5599 = vmatpush.xpose.msra.mxu0 0.0
      %5600 = vmatpush.xpose.msra.mxu0 0.0
      %5601 = vmatpush.xpose.msra.mxu0 0.0
      %5602 = vmatpush.xpose.msra.mxu0 0.0
      %5603 = vmatpush.xpose.msra.mxu0 0.0
      %5604 = vmatpush.xpose.msra.mxu0 0.0
      %5605 = vmatpush.xpose.msra.mxu0 0.0
      %5606 = vmatpush.xpose.msra.mxu0 %v5589
      %5607 = vmatmul.f32.gmra.mxu0 %v2917
      %v5608 = vpop.f32.mrf.mxu0
      %v5609 = vadd.f32 0.0, %v5608
      %5610 = vdwg.mxu0
      %v5612 = vsel %vm1682, %v5507, 0
      %5614 = vmatpush.xpose.msra.mxu0 0.0
      %5615 = vmatpush.xpose.msra.mxu0 0.0
      %5616 = vmatpush.xpose.msra.mxu0 0.0
      %5617 = vmatpush.xpose.msra.mxu0 0.0
      %5618 = vmatpush.xpose.msra.mxu0 0.0
      %5619 = vmatpush.xpose.msra.mxu0 0.0
      %5620 = vmatpush.xpose.msra.mxu0 0.0
      %5621 = vmatpush.xpose.msra.mxu0 0.0
      %5622 = vmatpush.xpose.msra.mxu0 0.0
      %5623 = vmatpush.xpose.msra.mxu0 0.0
      %5624 = vmatpush.xpose.msra.mxu0 0.0
      %5625 = vmatpush.xpose.msra.mxu0 0.0
      %5626 = vmatpush.xpose.msra.mxu0 0.0
      %5627 = vmatpush.xpose.msra.mxu0 0.0
      %5628 = vmatpush.xpose.msra.mxu0 0.0
      %5629 = vmatpush.xpose.msra.mxu0 %v5612
      %5630 = vmatmul.f32.gmra.mxu0 %v2943
      %v5631 = vpop.f32.mrf.mxu0
      %v5632 = vadd.f32 0.0, %v5631
      %5633 = vdwg.mxu0
      %v5635 = vsel %vm1682, %v5508, 0
      %5637 = vmatpush.xpose.msra.mxu0 0.0
      %5638 = vmatpush.xpose.msra.mxu0 0.0
      %5639 = vmatpush.xpose.msra.mxu0 0.0
      %5640 = vmatpush.xpose.msra.mxu0 0.0
      %5641 = vmatpush.xpose.msra.mxu0 0.0
      %5642 = vmatpush.xpose.msra.mxu0 0.0
      %5643 = vmatpush.xpose.msra.mxu0 0.0
      %5644 = vmatpush.xpose.msra.mxu0 0.0
      %5645 = vmatpush.xpose.msra.mxu0 0.0
      %5646 = vmatpush.xpose.msra.mxu0 0.0
      %5647 = vmatpush.xpose.msra.mxu0 0.0
      %5648 = vmatpush.xpose.msra.mxu0 0.0
      %5649 = vmatpush.xpose.msra.mxu0 0.0
      %5650 = vmatpush.xpose.msra.mxu0 0.0
      %5651 = vmatpush.xpose.msra.mxu0 0.0
      %5652 = vmatpush.xpose.msra.mxu0 %v5635
      %5653 = vmatmul.f32.gmra.mxu0 %v2969
      %v5654 = vpop.f32.mrf.mxu0
      %v5655 = vadd.f32 0.0, %v5654
      %5656 = vdwg.mxu0
      %v5658 = vsel %vm1682, %v5509, 0
      %5660 = vmatpush.xpose.msra.mxu0 0.0
      %5661 = vmatpush.xpose.msra.mxu0 0.0
      %5662 = vmatpush.xpose.msra.mxu0 0.0
      %5663 = vmatpush.xpose.msra.mxu0 0.0
      %5664 = vmatpush.xpose.msra.mxu0 0.0
      %5665 = vmatpush.xpose.msra.mxu0 0.0
      %5666 = vmatpush.xpose.msra.mxu0 0.0
      %5667 = vmatpush.xpose.msra.mxu0 0.0
      %5668 = vmatpush.xpose.msra.mxu0 0.0
      %5669 = vmatpush.xpose.msra.mxu0 0.0
      %5670 = vmatpush.xpose.msra.mxu0 0.0
      %5671 = vmatpush.xpose.msra.mxu0 0.0
      %5672 = vmatpush.xpose.msra.mxu0 0.0
      %5673 = vmatpush.xpose.msra.mxu0 0.0
      %5674 = vmatpush.xpose.msra.mxu0 0.0
      %5675 = vmatpush.xpose.msra.mxu0 %v5658
      %5676 = vmatmul.f32.gmra.mxu0 %v2995
      %v5677 = vpop.f32.mrf.mxu0
      %v5678 = vadd.f32 0.0, %v5677
      %5679 = vdwg.mxu0
      %v5681 = vsel %vm1682, %v5510, 0
      %5683 = vmatpush.xpose.msra.mxu0 0.0
      %5684 = vmatpush.xpose.msra.mxu0 0.0
      %5685 = vmatpush.xpose.msra.mxu0 0.0
      %5686 = vmatpush.xpose.msra.mxu0 0.0
      %5687 = vmatpush.xpose.msra.mxu0 0.0
      %5688 = vmatpush.xpose.msra.mxu0 0.0
      %5689 = vmatpush.xpose.msra.mxu0 0.0
      %5690 = vmatpush.xpose.msra.mxu0 0.0
      %5691 = vmatpush.xpose.msra.mxu0 0.0
      %5692 = vmatpush.xpose.msra.mxu0 0.0
      %5693 = vmatpush.xpose.msra.mxu0 0.0
      %5694 = vmatpush.xpose.msra.mxu0 0.0
      %5695 = vmatpush.xpose.msra.mxu0 0.0
      %5696 = vmatpush.xpose.msra.mxu0 0.0
      %5697 = vmatpush.xpose.msra.mxu0 0.0
      %5698 = vmatpush.xpose.msra.mxu0 %v5681
      %5699 = vmatmul.f32.gmra.mxu0 %v3021
      %v5700 = vpop.f32.mrf.mxu0
      %v5701 = vadd.f32 0.0, %v5700
      %5702 = vdwg.mxu0
      %v5704 = vsel %vm1682, %v5511, 0
      %5706 = vmatpush.xpose.msra.mxu0 0.0
      %5707 = vmatpush.xpose.msra.mxu0 0.0
      %5708 = vmatpush.xpose.msra.mxu0 0.0
      %5709 = vmatpush.xpose.msra.mxu0 0.0
      %5710 = vmatpush.xpose.msra.mxu0 0.0
      %5711 = vmatpush.xpose.msra.mxu0 0.0
      %5712 = vmatpush.xpose.msra.mxu0 0.0
      %5713 = vmatpush.xpose.msra.mxu0 0.0
      %5714 = vmatpush.xpose.msra.mxu0 0.0
      %5715 = vmatpush.xpose.msra.mxu0 0.0
      %5716 = vmatpush.xpose.msra.mxu0 0.0
      %5717 = vmatpush.xpose.msra.mxu0 0.0
      %5718 = vmatpush.xpose.msra.mxu0 0.0
      %5719 = vmatpush.xpose.msra.mxu0 0.0
      %5720 = vmatpush.xpose.msra.mxu0 0.0
      %5721 = vmatpush.xpose.msra.mxu0 %v5704
      %5722 = vmatmul.f32.gmra.mxu0 %v3047
      %v5723 = vpop.f32.mrf.mxu0
      %v5724 = vadd.f32 0.0, %v5723
      %5725 = vdwg.mxu0
      %v5727 = vsel %vm1682, %v5512, 0
      %5729 = vmatpush.xpose.msra.mxu0 0.0
      %5730 = vmatpush.xpose.msra.mxu0 0.0
      %5731 = vmatpush.xpose.msra.mxu0 0.0
      %5732 = vmatpush.xpose.msra.mxu0 0.0
      %5733 = vmatpush.xpose.msra.mxu0 0.0
      %5734 = vmatpush.xpose.msra.mxu0 0.0
      %5735 = vmatpush.xpose.msra.mxu0 0.0
      %5736 = vmatpush.xpose.msra.mxu0 0.0
      %5737 = vmatpush.xpose.msra.mxu0 0.0
      %5738 = vmatpush.xpose.msra.mxu0 0.0
      %5739 = vmatpush.xpose.msra.mxu0 0.0
      %5740 = vmatpush.xpose.msra.mxu0 0.0
      %5741 = vmatpush.xpose.msra.mxu0 0.0
      %5742 = vmatpush.xpose.msra.mxu0 0.0
      %5743 = vmatpush.xpose.msra.mxu0 0.0
      %5744 = vmatpush.xpose.msra.mxu0 %v5727
      %5745 = vmatmul.f32.gmra.mxu0 %v3073
      %v5746 = vpop.f32.mrf.mxu0
      %v5747 = vadd.f32 0.0, %v5746
      %5748 = vdwg.mxu0
      %v5750 = vsel %vm1682, %v5513, 0
      %5752 = vmatpush.xpose.msra.mxu0 0.0
      %5753 = vmatpush.xpose.msra.mxu0 0.0
      %5754 = vmatpush.xpose.msra.mxu0 0.0
      %5755 = vmatpush.xpose.msra.mxu0 0.0
      %5756 = vmatpush.xpose.msra.mxu0 0.0
      %5757 = vmatpush.xpose.msra.mxu0 0.0
      %5758 = vmatpush.xpose.msra.mxu0 0.0
      %5759 = vmatpush.xpose.msra.mxu0 0.0
      %5760 = vmatpush.xpose.msra.mxu0 0.0
      %5761 = vmatpush.xpose.msra.mxu0 0.0
      %5762 = vmatpush.xpose.msra.mxu0 0.0
      %5763 = vmatpush.xpose.msra.mxu0 0.0
      %5764 = vmatpush.xpose.msra.mxu0 0.0
      %5765 = vmatpush.xpose.msra.mxu0 0.0
      %5766 = vmatpush.xpose.msra.mxu0 0.0
      %5767 = vmatpush.xpose.msra.mxu0 %v5750
      %5768 = vmatmul.f32.gmra.mxu0 %v3099
      %v5769 = vpop.f32.mrf.mxu0
      %v5770 = vadd.f32 0.0, %v5769
      %5771 = vdwg.mxu0
      %v5773 = vsel %vm1682, %v5514, 0
      %5775 = vmatpush.xpose.msra.mxu0 0.0
      %5776 = vmatpush.xpose.msra.mxu0 0.0
      %5777 = vmatpush.xpose.msra.mxu0 0.0
      %5778 = vmatpush.xpose.msra.mxu0 0.0
      %5779 = vmatpush.xpose.msra.mxu0 0.0
      %5780 = vmatpush.xpose.msra.mxu0 0.0
      %5781 = vmatpush.xpose.msra.mxu0 0.0
      %5782 = vmatpush.xpose.msra.mxu0 0.0
      %5783 = vmatpush.xpose.msra.mxu0 0.0
      %5784 = vmatpush.xpose.msra.mxu0 0.0
      %5785 = vmatpush.xpose.msra.mxu0 0.0
      %5786 = vmatpush.xpose.msra.mxu0 0.0
      %5787 = vmatpush.xpose.msra.mxu0 0.0
      %5788 = vmatpush.xpose.msra.mxu0 0.0
      %5789 = vmatpush.xpose.msra.mxu0 0.0
      %5790 = vmatpush.xpose.msra.mxu0 %v5773
      %5791 = vmatmul.f32.gmra.mxu0 %v3125
      %v5792 = vpop.f32.mrf.mxu0
      %v5793 = vadd.f32 0.0, %v5792
      %5794 = vdwg.mxu0
      %v5796 = vsel %vm1682, %v5515, 0
      %5798 = vmatpush.xpose.msra.mxu0 0.0
      %5799 = vmatpush.xpose.msra.mxu0 0.0
      %5800 = vmatpush.xpose.msra.mxu0 0.0
      %5801 = vmatpush.xpose.msra.mxu0 0.0
      %5802 = vmatpush.xpose.msra.mxu0 0.0
      %5803 = vmatpush.xpose.msra.mxu0 0.0
      %5804 = vmatpush.xpose.msra.mxu0 0.0
      %5805 = vmatpush.xpose.msra.mxu0 0.0
      %5806 = vmatpush.xpose.msra.mxu0 0.0
      %5807 = vmatpush.xpose.msra.mxu0 0.0
      %5808 = vmatpush.xpose.msra.mxu0 0.0
      %5809 = vmatpush.xpose.msra.mxu0 0.0
      %5810 = vmatpush.xpose.msra.mxu0 0.0
      %5811 = vmatpush.xpose.msra.mxu0 0.0
      %5812 = vmatpush.xpose.msra.mxu0 0.0
      %5813 = vmatpush.xpose.msra.mxu0 %v5796
      %5814 = vmatmul.f32.gmra.mxu0 %v3151
      %v5815 = vpop.f32.mrf.mxu0
      %v5816 = vadd.f32 0.0, %v5815
      %5817 = vdwg.mxu0
      %v5819 = vsel %vm1682, %v5516, 0
      %5821 = vmatpush.xpose.msra.mxu0 0.0
      %5822 = vmatpush.xpose.msra.mxu0 0.0
      %5823 = vmatpush.xpose.msra.mxu0 0.0
      %5824 = vmatpush.xpose.msra.mxu0 0.0
      %5825 = vmatpush.xpose.msra.mxu0 0.0
      %5826 = vmatpush.xpose.msra.mxu0 0.0
      %5827 = vmatpush.xpose.msra.mxu0 0.0
      %5828 = vmatpush.xpose.msra.mxu0 0.0
      %5829 = vmatpush.xpose.msra.mxu0 0.0
      %5830 = vmatpush.xpose.msra.mxu0 0.0
      %5831 = vmatpush.xpose.msra.mxu0 0.0
      %5832 = vmatpush.xpose.msra.mxu0 0.0
      %5833 = vmatpush.xpose.msra.mxu0 0.0
      %5834 = vmatpush.xpose.msra.mxu0 0.0
      %5835 = vmatpush.xpose.msra.mxu0 0.0
      %5836 = vmatpush.xpose.msra.mxu0 %v5819
      %5837 = vmatmul.f32.gmra.mxu0 %v3177
      %v5838 = vpop.f32.mrf.mxu0
      %v5839 = vadd.f32 0.0, %v5838
      %5840 = vdwg.mxu0
      %v5842 = vsel %vm1682, %v5517, 0
      %5844 = vmatpush.xpose.msra.mxu0 0.0
      %5845 = vmatpush.xpose.msra.mxu0 0.0
      %5846 = vmatpush.xpose.msra.mxu0 0.0
      %5847 = vmatpush.xpose.msra.mxu0 0.0
      %5848 = vmatpush.xpose.msra.mxu0 0.0
      %5849 = vmatpush.xpose.msra.mxu0 0.0
      %5850 = vmatpush.xpose.msra.mxu0 0.0
      %5851 = vmatpush.xpose.msra.mxu0 0.0
      %5852 = vmatpush.xpose.msra.mxu0 0.0
      %5853 = vmatpush.xpose.msra.mxu0 0.0
      %5854 = vmatpush.xpose.msra.mxu0 0.0
      %5855 = vmatpush.xpose.msra.mxu0 0.0
      %5856 = vmatpush.xpose.msra.mxu0 0.0
      %5857 = vmatpush.xpose.msra.mxu0 0.0
      %5858 = vmatpush.xpose.msra.mxu0 0.0
      %5859 = vmatpush.xpose.msra.mxu0 %v5842
      %5860 = vmatmul.f32.gmra.mxu0 %v3203
      %v5861 = vpop.f32.mrf.mxu0
      %v5862 = vadd.f32 0.0, %v5861
      %5863 = vdwg.mxu0
      %v5865 = vsel %vm1682, %v5518, 0
      %5867 = vmatpush.xpose.msra.mxu0 0.0
      %5868 = vmatpush.xpose.msra.mxu0 0.0
      %5869 = vmatpush.xpose.msra.mxu0 0.0
      %5870 = vmatpush.xpose.msra.mxu0 0.0
      %5871 = vmatpush.xpose.msra.mxu0 0.0
      %5872 = vmatpush.xpose.msra.mxu0 0.0
      %5873 = vmatpush.xpose.msra.mxu0 0.0
      %5874 = vmatpush.xpose.msra.mxu0 0.0
      %5875 = vmatpush.xpose.msra.mxu0 0.0
      %5876 = vmatpush.xpose.msra.mxu0 0.0
      %5877 = vmatpush.xpose.msra.mxu0 0.0
      %5878 = vmatpush.xpose.msra.mxu0 0.0
      %5879 = vmatpush.xpose.msra.mxu0 0.0
      %5880 = vmatpush.xpose.msra.mxu0 0.0
      %5881 = vmatpush.xpose.msra.mxu0 0.0
      %5882 = vmatpush.xpose.msra.mxu0 %v5865
      %5883 = vmatmul.f32.gmra.mxu0 %v3229
      %v5884 = vpop.f32.mrf.mxu0
      %v5885 = vadd.f32 0.0, %v5884
      %5886 = vdwg.mxu0
      %v5903 = vrot.slane %v5540, 1
      %v5904 = vrot.slane %v5540, 2
      %v5905 = vrot.slane %v5540, 3
      %v5906 = vrot.slane %v5540, 4
      %v5907 = vrot.slane %v5540, 5
      %v5908 = vrot.slane %v5540, 6
      %v5909 = vrot.slane %v5563, 1
      %v5910 = vrot.slane %v5563, 2
      %v5911 = vrot.slane %v5563, 3
      %v5912 = vrot.slane %v5563, 4
      %v5913 = vrot.slane %v5563, 5
      %v5914 = vrot.slane %v5563, 6
      %v5915 = vrot.slane %v5586, 1
      %v5916 = vrot.slane %v5586, 2
      %v5917 = vrot.slane %v5586, 3
      %v5918 = vrot.slane %v5586, 4
      %v5919 = vrot.slane %v5586, 5
      %v5920 = vrot.slane %v5586, 6
      %v5921 = vrot.slane %v5609, 1
      %v5922 = vrot.slane %v5609, 2
      %v5923 = vrot.slane %v5609, 3
      %v5924 = vrot.slane %v5609, 4
      %v5925 = vrot.slane %v5609, 5
      %v5926 = vrot.slane %v5609, 6
      %v5927 = vrot.slane %v5632, 1
      %v5928 = vrot.slane %v5632, 2
      %v5929 = vrot.slane %v5632, 3
      %v5930 = vrot.slane %v5632, 4
      %v5931 = vrot.slane %v5632, 5
      %v5932 = vrot.slane %v5632, 6
      %v5933 = vrot.slane %v5655, 1
      %v5934 = vrot.slane %v5655, 2
      %v5935 = vrot.slane %v5655, 3
      %v5936 = vrot.slane %v5655, 4
      %v5937 = vrot.slane %v5655, 5
      %v5938 = vrot.slane %v5655, 6
      %v5939 = vrot.slane %v5678, 1
      %v5940 = vrot.slane %v5678, 2
      %v5941 = vrot.slane %v5678, 3
      %v5942 = vrot.slane %v5678, 4
      %v5943 = vrot.slane %v5678, 5
      %v5944 = vrot.slane %v5678, 6
      %v5945 = vrot.slane %v5701, 1
      %v5946 = vrot.slane %v5701, 2
      %v5947 = vrot.slane %v5701, 3
      %v5948 = vrot.slane %v5701, 4
      %v5949 = vrot.slane %v5701, 5
      %v5950 = vrot.slane %v5701, 6
      %v5951 = vrot.slane %v5724, 1
      %v5952 = vrot.slane %v5724, 2
      %v5953 = vrot.slane %v5724, 3
      %v5954 = vrot.slane %v5724, 4
      %v5955 = vrot.slane %v5724, 5
      %v5956 = vrot.slane %v5724, 6
      %v5957 = vrot.slane %v5747, 1
      %v5958 = vrot.slane %v5747, 2
      %v5959 = vrot.slane %v5747, 3
      %v5960 = vrot.slane %v5747, 4
      %v5961 = vrot.slane %v5747, 5
      %v5962 = vrot.slane %v5747, 6
      %v5963 = vrot.slane %v5770, 1
      %v5964 = vrot.slane %v5770, 2
      %v5965 = vrot.slane %v5770, 3
      %v5966 = vrot.slane %v5770, 4
      %v5967 = vrot.slane %v5770, 5
      %v5968 = vrot.slane %v5770, 6
      %v5969 = vrot.slane %v5793, 1
      %v5970 = vrot.slane %v5793, 2
      %v5971 = vrot.slane %v5793, 3
      %v5972 = vrot.slane %v5793, 4
      %v5973 = vrot.slane %v5793, 5
      %v5974 = vrot.slane %v5793, 6
      %v5975 = vrot.slane %v5816, 1
      %v5976 = vrot.slane %v5816, 2
      %v5977 = vrot.slane %v5816, 3
      %v5978 = vrot.slane %v5816, 4
      %v5979 = vrot.slane %v5816, 5
      %v5980 = vrot.slane %v5816, 6
      %v5981 = vrot.slane %v5839, 1
      %v5982 = vrot.slane %v5839, 2
      %v5983 = vrot.slane %v5839, 3
      %v5984 = vrot.slane %v5839, 4
      %v5985 = vrot.slane %v5839, 5
      %v5986 = vrot.slane %v5839, 6
      %v5987 = vrot.slane %v5862, 1
      %v5988 = vrot.slane %v5862, 2
      %v5989 = vrot.slane %v5862, 3
      %v5990 = vrot.slane %v5862, 4
      %v5991 = vrot.slane %v5862, 5
      %v5992 = vrot.slane %v5862, 6
      %v5993 = vrot.slane %v5885, 1
      %v5994 = vrot.slane %v5885, 2
      %v5995 = vrot.slane %v5885, 3
      %v5996 = vrot.slane %v5885, 4
      %v5997 = vrot.slane %v5885, 5
      %v5998 = vrot.slane %v5885, 6
      %5999 = vst [vmem:[#allocation1] ss:$9 sm:$0xff] %v5540
      %s6000 = scalar_lea.vmem [#allocation1], 1
      %6001 = vst [vmem:[%s6000] ss:$9 sm:$0xff] %v5903
      %s6002 = scalar_lea.vmem [#allocation1], 2
      %6003 = vst [vmem:[%s6002] ss:$9 sm:$0xff] %v5904
      %s6004 = scalar_lea.vmem [#allocation1], 3
      %6005 = vst [vmem:[%s6004] ss:$9 sm:$0xff] %v5905
      %s6006 = scalar_lea.vmem [#allocation1], 4
      %6007 = vst [vmem:[%s6006] ss:$9 sm:$0xff] %v5906
      %s6008 = scalar_lea.vmem [#allocation1], 5
      %6009 = vst [vmem:[%s6008] ss:$9 sm:$0xff] %v5907
      %s6010 = scalar_lea.vmem [#allocation1], 6
      %6011 = vst [vmem:[%s6010] ss:$9 sm:$0xff] %v5908
      %s6012 = scalar_lea.vmem [#allocation1], 7
      %6013 = vst [vmem:[%s6012] ss:$9 sm:$0xff] %v5563
      %v6014 = vld [vmem:[#allocation1] sm:$0xff]
      %6015 = vst [vmem:[#allocation1] ss:$9 sm:$0xff] %v5909
      %6016 = vst [vmem:[%s6000] ss:$9 sm:$0xff] %v5910
      %6017 = vst [vmem:[%s6002] ss:$9 sm:$0xff] %v5911
      %6018 = vst [vmem:[%s6004] ss:$9 sm:$0xff] %v5912
      %6019 = vst [vmem:[%s6006] ss:$9 sm:$0xff] %v5913
      %6020 = vst [vmem:[%s6008] ss:$9 sm:$0xff] %v5914
      %6021 = vst [vmem:[%s6010] ss:$9 sm:$0xff] %v5586
      %6022 = vst [vmem:[%s6012] ss:$9 sm:$0xff] %v5915
      %v6023 = vld [vmem:[#allocation1] sm:$0xff]
      %6024 = vst [vmem:[#allocation1] ss:$9 sm:$0xff] %v5916
      %6025 = vst [vmem:[%s6000] ss:$9 sm:$0xff] %v5917
      %6026 = vst [vmem:[%s6002] ss:$9 sm:$0xff] %v5918
      %6027 = vst [vmem:[%s6004] ss:$9 sm:$0xff] %v5919
      %6028 = vst [vmem:[%s6006] ss:$9 sm:$0xff] %v5920
      %6029 = vst [vmem:[%s6008] ss:$9 sm:$0xff] %v5609
      %6030 = vst [vmem:[%s6010] ss:$9 sm:$0xff] %v5921
      %6031 = vst [vmem:[%s6012] ss:$9 sm:$0xff] %v5922
      %v6032 = vld [vmem:[#allocation1] sm:$0xff]
      %6033 = vst [vmem:[#allocation1] ss:$9 sm:$0xff] %v5923
      %6034 = vst [vmem:[%s6000] ss:$9 sm:$0xff] %v5924
      %6035 = vst [vmem:[%s6002] ss:$9 sm:$0xff] %v5925
      %6036 = vst [vmem:[%s6004] ss:$9 sm:$0xff] %v5926
      %6037 = vst [vmem:[%s6006] ss:$9 sm:$0xff] %v5632
      %6038 = vst [vmem:[%s6008] ss:$9 sm:$0xff] %v5927
      %6039 = vst [vmem:[%s6010] ss:$9 sm:$0xff] %v5928
      %6040 = vst [vmem:[%s6012] ss:$9 sm:$0xff] %v5929
      %v6041 = vld [vmem:[#allocation1] sm:$0xff]
      %6042 = vst [vmem:[#allocation1] ss:$9 sm:$0xff] %v5930
      %6043 = vst [vmem:[%s6000] ss:$9 sm:$0xff] %v5931
      %6044 = vst [vmem:[%s6002] ss:$9 sm:$0xff] %v5932
      %6045 = vst [vmem:[%s6004] ss:$9 sm:$0xff] %v5655
      %6046 = vst [vmem:[%s6006] ss:$9 sm:$0xff] %v5933
      %6047 = vst [vmem:[%s6008] ss:$9 sm:$0xff] %v5934
      %6048 = vst [vmem:[%s6010] ss:$9 sm:$0xff] %v5935
      %6049 = vst [vmem:[%s6012] ss:$9 sm:$0xff] %v5936
      %v6050 = vld [vmem:[#allocation1] sm:$0xff]
      %6051 = vst [vmem:[#allocation1] ss:$9 sm:$0xff] %v5937
      %6052 = vst [vmem:[%s6000] ss:$9 sm:$0xff] %v5938
      %6053 = vst [vmem:[%s6002] ss:$9 sm:$0xff] %v5678
      %6054 = vst [vmem:[%s6004] ss:$9 sm:$0xff] %v5939
      %6055 = vst [vmem:[%s6006] ss:$9 sm:$0xff] %v5940
      %6056 = vst [vmem:[%s6008] ss:$9 sm:$0xff] %v5941
      %6057 = vst [vmem:[%s6010] ss:$9 sm:$0xff] %v5942
      %6058 = vst [vmem:[%s6012] ss:$9 sm:$0xff] %v5943
      %v6059 = vld [vmem:[#allocation1] sm:$0xff]
      %6060 = vst [vmem:[#allocation1] ss:$9 sm:$0xff] %v5944
      %6061 = vst [vmem:[%s6000] ss:$9 sm:$0xff] %v5701
      %6062 = vst [vmem:[%s6002] ss:$9 sm:$0xff] %v5945
      %6063 = vst [vmem:[%s6004] ss:$9 sm:$0xff] %v5946
      %6064 = vst [vmem:[%s6006] ss:$9 sm:$0xff] %v5947
      %6065 = vst [vmem:[%s6008] ss:$9 sm:$0xff] %v5948
      %6066 = vst [vmem:[%s6010] ss:$9 sm:$0xff] %v5949
      %6067 = vst [vmem:[%s6012] ss:$9 sm:$0xff] %v5950
      %v6068 = vld [vmem:[#allocation1] sm:$0xff]
      %6069 = vst [vmem:[#allocation1] ss:$9 sm:$0xff] %v5724
      %6070 = vst [vmem:[%s6000] ss:$9 sm:$0xff] %v5951
      %6071 = vst [vmem:[%s6002] ss:$9 sm:$0xff] %v5952
      %6072 = vst [vmem:[%s6004] ss:$9 sm:$0xff] %v5953
      %6073 = vst [vmem:[%s6006] ss:$9 sm:$0xff] %v5954
      %6074 = vst [vmem:[%s6008] ss:$9 sm:$0xff] %v5955
      %6075 = vst [vmem:[%s6010] ss:$9 sm:$0xff] %v5956
      %6076 = vst [vmem:[%s6012] ss:$9 sm:$0xff] %v5747
      %v6077 = vld [vmem:[#allocation1] sm:$0xff]
      %6078 = vst [vmem:[#allocation1] ss:$9 sm:$0xff] %v5957
      %6079 = vst [vmem:[%s6000] ss:$9 sm:$0xff] %v5958
      %6080 = vst [vmem:[%s6002] ss:$9 sm:$0xff] %v5959
      %6081 = vst [vmem:[%s6004] ss:$9 sm:$0xff] %v5960
      %6082 = vst [vmem:[%s6006] ss:$9 sm:$0xff] %v5961
      %6083 = vst [vmem:[%s6008] ss:$9 sm:$0xff] %v5962
      %6084 = vst [vmem:[%s6010] ss:$9 sm:$0xff] %v5770
      %6085 = vst [vmem:[%s6012] ss:$9 sm:$0xff] %v5963
      %v6086 = vld [vmem:[#allocation1] sm:$0xff]
      %6087 = vst [vmem:[#allocation1] ss:$9 sm:$0xff] %v5964
      %6088 = vst [vmem:[%s6000] ss:$9 sm:$0xff] %v5965
      %6089 = vst [vmem:[%s6002] ss:$9 sm:$0xff] %v5966
      %6090 = vst [vmem:[%s6004] ss:$9 sm:$0xff] %v5967
      %6091 = vst [vmem:[%s6006] ss:$9 sm:$0xff] %v5968
      %6092 = vst [vmem:[%s6008] ss:$9 sm:$0xff] %v5793
      %6093 = vst [vmem:[%s6010] ss:$9 sm:$0xff] %v5969
      %6094 = vst [vmem:[%s6012] ss:$9 sm:$0xff] %v5970
      %v6095 = vld [vmem:[#allocation1] sm:$0xff]
      %6096 = vst [vmem:[#allocation1] ss:$9 sm:$0xff] %v5971
      %6097 = vst [vmem:[%s6000] ss:$9 sm:$0xff] %v5972
      %6098 = vst [vmem:[%s6002] ss:$9 sm:$0xff] %v5973
      %6099 = vst [vmem:[%s6004] ss:$9 sm:$0xff] %v5974
      %6100 = vst [vmem:[%s6006] ss:$9 sm:$0xff] %v5816
      %6101 = vst [vmem:[%s6008] ss:$9 sm:$0xff] %v5975
      %6102 = vst [vmem:[%s6010] ss:$9 sm:$0xff] %v5976
      %6103 = vst [vmem:[%s6012] ss:$9 sm:$0xff] %v5977
      %v6104 = vld [vmem:[#allocation1] sm:$0xff]
      %6105 = vst [vmem:[#allocation1] ss:$9 sm:$0xff] %v5978
      %6106 = vst [vmem:[%s6000] ss:$9 sm:$0xff] %v5979
      %6107 = vst [vmem:[%s6002] ss:$9 sm:$0xff] %v5980
      %6108 = vst [vmem:[%s6004] ss:$9 sm:$0xff] %v5839
      %6109 = vst [vmem:[%s6006] ss:$9 sm:$0xff] %v5981
      %6110 = vst [vmem:[%s6008] ss:$9 sm:$0xff] %v5982
      %6111 = vst [vmem:[%s6010] ss:$9 sm:$0xff] %v5983
      %6112 = vst [vmem:[%s6012] ss:$9 sm:$0xff] %v5984
      %v6113 = vld [vmem:[#allocation1] sm:$0xff]
      %6114 = vst [vmem:[#allocation1] ss:$9 sm:$0xff] %v5985
      %6115 = vst [vmem:[%s6000] ss:$9 sm:$0xff] %v5986
      %6116 = vst [vmem:[%s6002] ss:$9 sm:$0xff] %v5862
      %6117 = vst [vmem:[%s6004] ss:$9 sm:$0xff] %v5987
      %6118 = vst [vmem:[%s6006] ss:$9 sm:$0xff] %v5988
      %6119 = vst [vmem:[%s6008] ss:$9 sm:$0xff] %v5989
      %6120 = vst [vmem:[%s6010] ss:$9 sm:$0xff] %v5990
      %6121 = vst [vmem:[%s6012] ss:$9 sm:$0xff] %v5991
      %v6122 = vld [vmem:[#allocation1] sm:$0xff]
      %6123 = vst [vmem:[#allocation1] ss:$9 sm:$0xff] %v5992
      %6124 = vst [vmem:[%s6000] ss:$9 sm:$0xff] %v5885
      %6125 = vst [vmem:[%s6002] ss:$9 sm:$0xff] %v5993
      %6126 = vst [vmem:[%s6004] ss:$9 sm:$0xff] %v5994
      %6127 = vst [vmem:[%s6006] ss:$9 sm:$0xff] %v5995
      %6128 = vst [vmem:[%s6008] ss:$9 sm:$0xff] %v5996
      %6129 = vst [vmem:[%s6010] ss:$9 sm:$0xff] %v5997
      %6130 = vst [vmem:[%s6012] ss:$9 sm:$0xff] %v5998
      %v6131 = vld [vmem:[#allocation1] sm:$0xff]
      %6146 = vst.msk [vmem:[%s181 + $0x1c0] sm:$0xff] %vm3513, %v6014
      %6147 = vst.msk [vmem:[%s181 + $0x1c8] sm:$0xff] %vm3513, %v6023
      %6148 = vst.msk [vmem:[%s181 + $0x1d0] sm:$0xff] %vm3513, %v6032
      %6149 = vst.msk [vmem:[%s181 + $0x1d8] sm:$0xff] %vm3513, %v6041
      %6150 = vst.msk [vmem:[%s181 + $0x1e0] sm:$0xff] %vm3513, %v6050
      %6151 = vst.msk [vmem:[%s181 + $0x1e8] sm:$0xff] %vm3513, %v6059
      %6152 = vst.msk [vmem:[%s181 + $0x1f0] sm:$0xff] %vm3513, %v6068
      %6153 = vst.msk [vmem:[%s181 + $0x1f8] sm:$0xff] %vm3513, %v6077
      %6154 = vst.msk [vmem:[%s181 + $0x200] sm:$0xff] %vm3513, %v6086
      %6155 = vst.msk [vmem:[%s181 + $0x208] sm:$0xff] %vm3513, %v6095
      %6156 = vst.msk [vmem:[%s181 + $0x210] sm:$0xff] %vm3513, %v6104
      %6157 = vst.msk [vmem:[%s181 + $0x218] sm:$0xff] %vm3513, %v6113
      %6158 = vst.msk [vmem:[%s181 + $0x220] sm:$0xff] %vm3513, %v6122
      %6159 = vst.msk [vmem:[%s181 + $0x228] sm:$0xff] %vm3513, %v6131
      %s6160 = scalar_lea.vmem [#allocation2], 320
      %v6161 = vld [vmem:[%s6160] sm:$0xf]
      %v6162 = vld [vmem:[%s6160 + $0x4] sm:$0xf]
      %v6163 = vld [vmem:[%s6160 + $0x8] sm:$0xf]
      %v6164 = vld [vmem:[%s6160 + $0xc] sm:$0xf]
      %v6165 = vld [vmem:[%s6160 + $0x10] sm:$0xf]
      %v6166 = vld [vmem:[%s6160 + $0x14] sm:$0xf]
      %v6167 = vld [vmem:[%s6160 + $0x18] sm:$0xf]
      %v6168 = vld [vmem:[%s6160 + $0x1c] sm:$0xf]
      %v6169 = vld [vmem:[%s6160 + $0x20] sm:$0xf]
      %v6170 = vld [vmem:[%s6160 + $0x24] sm:$0xf]
      %v6171 = vld [vmem:[%s6160 + $0x28] sm:$0xf]
      %v6172 = vld [vmem:[%s6160 + $0x2c] sm:$0xf]
      %v6173 = vld [vmem:[%s6160 + $0x30] sm:$0xf]
      %v6174 = vld [vmem:[%s6160 + $0x34] sm:$0xf]
      %v6175 = vld [vmem:[%s6160 + $0x38] sm:$0xf]
      %v6176 = vld [vmem:[%s6160 + $0x3c] sm:$0xf]
      %v6178 = vsel %vm1682, %v6161, 0
      %6180 = vmatpush.xpose.msra.mxu0 0.0
      %6181 = vmatpush.xpose.msra.mxu0 0.0
      %6182 = vmatpush.xpose.msra.mxu0 0.0
      %6183 = vmatpush.xpose.msra.mxu0 0.0
      %6184 = vmatpush.xpose.msra.mxu0 0.0
      %6185 = vmatpush.xpose.msra.mxu0 0.0
      %6186 = vmatpush.xpose.msra.mxu0 0.0
      %6187 = vmatpush.xpose.msra.mxu0 0.0
      %6188 = vmatpush.xpose.msra.mxu0 0.0
      %6189 = vmatpush.xpose.msra.mxu0 0.0
      %6190 = vmatpush.xpose.msra.mxu0 0.0
      %6191 = vmatpush.xpose.msra.mxu0 0.0
      %6192 = vmatpush.xpose.msra.mxu0 0.0
      %6193 = vmatpush.xpose.msra.mxu0 0.0
      %6194 = vmatpush.xpose.msra.mxu0 0.0
      %6195 = vmatpush.xpose.msra.mxu0 %v6178
      %6196 = vmatmul.f32.gmra.mxu0 %v2839
      %v6197 = vpop.f32.mrf.mxu0
      %v6198 = vadd.f32 0.0, %v6197
      %6199 = vdwg.mxu0
      %v6201 = vsel %vm1682, %v6162, 0
      %6203 = vmatpush.xpose.msra.mxu0 0.0
      %6204 = vmatpush.xpose.msra.mxu0 0.0
      %6205 = vmatpush.xpose.msra.mxu0 0.0
      %6206 = vmatpush.xpose.msra.mxu0 0.0
      %6207 = vmatpush.xpose.msra.mxu0 0.0
      %6208 = vmatpush.xpose.msra.mxu0 0.0
      %6209 = vmatpush.xpose.msra.mxu0 0.0
      %6210 = vmatpush.xpose.msra.mxu0 0.0
      %6211 = vmatpush.xpose.msra.mxu0 0.0
      %6212 = vmatpush.xpose.msra.mxu0 0.0
      %6213 = vmatpush.xpose.msra.mxu0 0.0
      %6214 = vmatpush.xpose.msra.mxu0 0.0
      %6215 = vmatpush.xpose.msra.mxu0 0.0
      %6216 = vmatpush.xpose.msra.mxu0 0.0
      %6217 = vmatpush.xpose.msra.mxu0 0.0
      %6218 = vmatpush.xpose.msra.mxu0 %v6201
      %6219 = vmatmul.f32.gmra.mxu0 %v2865
      %v6220 = vpop.f32.mrf.mxu0
      %v6221 = vadd.f32 0.0, %v6220
      %6222 = vdwg.mxu0
      %v6224 = vsel %vm1682, %v6163, 0
      %6226 = vmatpush.xpose.msra.mxu0 0.0
      %6227 = vmatpush.xpose.msra.mxu0 0.0
      %6228 = vmatpush.xpose.msra.mxu0 0.0
      %6229 = vmatpush.xpose.msra.mxu0 0.0
      %6230 = vmatpush.xpose.msra.mxu0 0.0
      %6231 = vmatpush.xpose.msra.mxu0 0.0
      %6232 = vmatpush.xpose.msra.mxu0 0.0
      %6233 = vmatpush.xpose.msra.mxu0 0.0
      %6234 = vmatpush.xpose.msra.mxu0 0.0
      %6235 = vmatpush.xpose.msra.mxu0 0.0
      %6236 = vmatpush.xpose.msra.mxu0 0.0
      %6237 = vmatpush.xpose.msra.mxu0 0.0
      %6238 = vmatpush.xpose.msra.mxu0 0.0
      %6239 = vmatpush.xpose.msra.mxu0 0.0
      %6240 = vmatpush.xpose.msra.mxu0 0.0
      %6241 = vmatpush.xpose.msra.mxu0 %v6224
      %6242 = vmatmul.f32.gmra.mxu0 %v2891
      %v6243 = vpop.f32.mrf.mxu0
      %v6244 = vadd.f32 0.0, %v6243
      %6245 = vdwg.mxu0
      %v6247 = vsel %vm1682, %v6164, 0
      %6249 = vmatpush.xpose.msra.mxu0 0.0
      %6250 = vmatpush.xpose.msra.mxu0 0.0
      %6251 = vmatpush.xpose.msra.mxu0 0.0
      %6252 = vmatpush.xpose.msra.mxu0 0.0
      %6253 = vmatpush.xpose.msra.mxu0 0.0
      %6254 = vmatpush.xpose.msra.mxu0 0.0
      %6255 = vmatpush.xpose.msra.mxu0 0.0
      %6256 = vmatpush.xpose.msra.mxu0 0.0
      %6257 = vmatpush.xpose.msra.mxu0 0.0
      %6258 = vmatpush.xpose.msra.mxu0 0.0
      %6259 = vmatpush.xpose.msra.mxu0 0.0
      %6260 = vmatpush.xpose.msra.mxu0 0.0
      %6261 = vmatpush.xpose.msra.mxu0 0.0
      %6262 = vmatpush.xpose.msra.mxu0 0.0
      %6263 = vmatpush.xpose.msra.mxu0 0.0
      %6264 = vmatpush.xpose.msra.mxu0 %v6247
      %6265 = vmatmul.f32.gmra.mxu0 %v2917
      %v6266 = vpop.f32.mrf.mxu0
      %v6267 = vadd.f32 0.0, %v6266
      %6268 = vdwg.mxu0
      %v6270 = vsel %vm1682, %v6165, 0
      %6272 = vmatpush.xpose.msra.mxu0 0.0
      %6273 = vmatpush.xpose.msra.mxu0 0.0
      %6274 = vmatpush.xpose.msra.mxu0 0.0
      %6275 = vmatpush.xpose.msra.mxu0 0.0
      %6276 = vmatpush.xpose.msra.mxu0 0.0
      %6277 = vmatpush.xpose.msra.mxu0 0.0
      %6278 = vmatpush.xpose.msra.mxu0 0.0
      %6279 = vmatpush.xpose.msra.mxu0 0.0
      %6280 = vmatpush.xpose.msra.mxu0 0.0
      %6281 = vmatpush.xpose.msra.mxu0 0.0
      %6282 = vmatpush.xpose.msra.mxu0 0.0
      %6283 = vmatpush.xpose.msra.mxu0 0.0
      %6284 = vmatpush.xpose.msra.mxu0 0.0
      %6285 = vmatpush.xpose.msra.mxu0 0.0
      %6286 = vmatpush.xpose.msra.mxu0 0.0
      %6287 = vmatpush.xpose.msra.mxu0 %v6270
      %6288 = vmatmul.f32.gmra.mxu0 %v2943
      %v6289 = vpop.f32.mrf.mxu0
      %v6290 = vadd.f32 0.0, %v6289
      %6291 = vdwg.mxu0
      %v6293 = vsel %vm1682, %v6166, 0
      %6295 = vmatpush.xpose.msra.mxu0 0.0
      %6296 = vmatpush.xpose.msra.mxu0 0.0
      %6297 = vmatpush.xpose.msra.mxu0 0.0
      %6298 = vmatpush.xpose.msra.mxu0 0.0
      %6299 = vmatpush.xpose.msra.mxu0 0.0
      %6300 = vmatpush.xpose.msra.mxu0 0.0
      %6301 = vmatpush.xpose.msra.mxu0 0.0
      %6302 = vmatpush.xpose.msra.mxu0 0.0
      %6303 = vmatpush.xpose.msra.mxu0 0.0
      %6304 = vmatpush.xpose.msra.mxu0 0.0
      %6305 = vmatpush.xpose.msra.mxu0 0.0
      %6306 = vmatpush.xpose.msra.mxu0 0.0
      %6307 = vmatpush.xpose.msra.mxu0 0.0
      %6308 = vmatpush.xpose.msra.mxu0 0.0
      %6309 = vmatpush.xpose.msra.mxu0 0.0
      %6310 = vmatpush.xpose.msra.mxu0 %v6293
      %6311 = vmatmul.f32.gmra.mxu0 %v2969
      %v6312 = vpop.f32.mrf.mxu0
      %v6313 = vadd.f32 0.0, %v6312
      %6314 = vdwg.mxu0
      %v6316 = vsel %vm1682, %v6167, 0
      %6318 = vmatpush.xpose.msra.mxu0 0.0
      %6319 = vmatpush.xpose.msra.mxu0 0.0
      %6320 = vmatpush.xpose.msra.mxu0 0.0
      %6321 = vmatpush.xpose.msra.mxu0 0.0
      %6322 = vmatpush.xpose.msra.mxu0 0.0
      %6323 = vmatpush.xpose.msra.mxu0 0.0
      %6324 = vmatpush.xpose.msra.mxu0 0.0
      %6325 = vmatpush.xpose.msra.mxu0 0.0
      %6326 = vmatpush.xpose.msra.mxu0 0.0
      %6327 = vmatpush.xpose.msra.mxu0 0.0
      %6328 = vmatpush.xpose.msra.mxu0 0.0
      %6329 = vmatpush.xpose.msra.mxu0 0.0
      %6330 = vmatpush.xpose.msra.mxu0 0.0
      %6331 = vmatpush.xpose.msra.mxu0 0.0
      %6332 = vmatpush.xpose.msra.mxu0 0.0
      %6333 = vmatpush.xpose.msra.mxu0 %v6316
      %6334 = vmatmul.f32.gmra.mxu0 %v2995
      %v6335 = vpop.f32.mrf.mxu0
      %v6336 = vadd.f32 0.0, %v6335
      %6337 = vdwg.mxu0
      %v6339 = vsel %vm1682, %v6168, 0
      %6341 = vmatpush.xpose.msra.mxu0 0.0
      %6342 = vmatpush.xpose.msra.mxu0 0.0
      %6343 = vmatpush.xpose.msra.mxu0 0.0
      %6344 = vmatpush.xpose.msra.mxu0 0.0
      %6345 = vmatpush.xpose.msra.mxu0 0.0
      %6346 = vmatpush.xpose.msra.mxu0 0.0
      %6347 = vmatpush.xpose.msra.mxu0 0.0
      %6348 = vmatpush.xpose.msra.mxu0 0.0
      %6349 = vmatpush.xpose.msra.mxu0 0.0
      %6350 = vmatpush.xpose.msra.mxu0 0.0
      %6351 = vmatpush.xpose.msra.mxu0 0.0
      %6352 = vmatpush.xpose.msra.mxu0 0.0
      %6353 = vmatpush.xpose.msra.mxu0 0.0
      %6354 = vmatpush.xpose.msra.mxu0 0.0
      %6355 = vmatpush.xpose.msra.mxu0 0.0
      %6356 = vmatpush.xpose.msra.mxu0 %v6339
      %6357 = vmatmul.f32.gmra.mxu0 %v3021
      %v6358 = vpop.f32.mrf.mxu0
      %v6359 = vadd.f32 0.0, %v6358
      %6360 = vdwg.mxu0
      %v6362 = vsel %vm1682, %v6169, 0
      %6364 = vmatpush.xpose.msra.mxu0 0.0
      %6365 = vmatpush.xpose.msra.mxu0 0.0
      %6366 = vmatpush.xpose.msra.mxu0 0.0
      %6367 = vmatpush.xpose.msra.mxu0 0.0
      %6368 = vmatpush.xpose.msra.mxu0 0.0
      %6369 = vmatpush.xpose.msra.mxu0 0.0
      %6370 = vmatpush.xpose.msra.mxu0 0.0
      %6371 = vmatpush.xpose.msra.mxu0 0.0
      %6372 = vmatpush.xpose.msra.mxu0 0.0
      %6373 = vmatpush.xpose.msra.mxu0 0.0
      %6374 = vmatpush.xpose.msra.mxu0 0.0
      %6375 = vmatpush.xpose.msra.mxu0 0.0
      %6376 = vmatpush.xpose.msra.mxu0 0.0
      %6377 = vmatpush.xpose.msra.mxu0 0.0
      %6378 = vmatpush.xpose.msra.mxu0 0.0
      %6379 = vmatpush.xpose.msra.mxu0 %v6362
      %6380 = vmatmul.f32.gmra.mxu0 %v3047
      %v6381 = vpop.f32.mrf.mxu0
      %v6382 = vadd.f32 0.0, %v6381
      %6383 = vdwg.mxu0
      %v6385 = vsel %vm1682, %v6170, 0
      %6387 = vmatpush.xpose.msra.mxu0 0.0
      %6388 = vmatpush.xpose.msra.mxu0 0.0
      %6389 = vmatpush.xpose.msra.mxu0 0.0
      %6390 = vmatpush.xpose.msra.mxu0 0.0
      %6391 = vmatpush.xpose.msra.mxu0 0.0
      %6392 = vmatpush.xpose.msra.mxu0 0.0
      %6393 = vmatpush.xpose.msra.mxu0 0.0
      %6394 = vmatpush.xpose.msra.mxu0 0.0
      %6395 = vmatpush.xpose.msra.mxu0 0.0
      %6396 = vmatpush.xpose.msra.mxu0 0.0
      %6397 = vmatpush.xpose.msra.mxu0 0.0
      %6398 = vmatpush.xpose.msra.mxu0 0.0
      %6399 = vmatpush.xpose.msra.mxu0 0.0
      %6400 = vmatpush.xpose.msra.mxu0 0.0
      %6401 = vmatpush.xpose.msra.mxu0 0.0
      %6402 = vmatpush.xpose.msra.mxu0 %v6385
      %6403 = vmatmul.f32.gmra.mxu0 %v3073
      %v6404 = vpop.f32.mrf.mxu0
      %v6405 = vadd.f32 0.0, %v6404
      %6406 = vdwg.mxu0
      %v6408 = vsel %vm1682, %v6171, 0
      %6410 = vmatpush.xpose.msra.mxu0 0.0
      %6411 = vmatpush.xpose.msra.mxu0 0.0
      %6412 = vmatpush.xpose.msra.mxu0 0.0
      %6413 = vmatpush.xpose.msra.mxu0 0.0
      %6414 = vmatpush.xpose.msra.mxu0 0.0
      %6415 = vmatpush.xpose.msra.mxu0 0.0
      %6416 = vmatpush.xpose.msra.mxu0 0.0
      %6417 = vmatpush.xpose.msra.mxu0 0.0
      %6418 = vmatpush.xpose.msra.mxu0 0.0
      %6419 = vmatpush.xpose.msra.mxu0 0.0
      %6420 = vmatpush.xpose.msra.mxu0 0.0
      %6421 = vmatpush.xpose.msra.mxu0 0.0
      %6422 = vmatpush.xpose.msra.mxu0 0.0
      %6423 = vmatpush.xpose.msra.mxu0 0.0
      %6424 = vmatpush.xpose.msra.mxu0 0.0
      %6425 = vmatpush.xpose.msra.mxu0 %v6408
      %6426 = vmatmul.f32.gmra.mxu0 %v3099
      %v6427 = vpop.f32.mrf.mxu0
      %v6428 = vadd.f32 0.0, %v6427
      %6429 = vdwg.mxu0
      %v6431 = vsel %vm1682, %v6172, 0
      %6433 = vmatpush.xpose.msra.mxu0 0.0
      %6434 = vmatpush.xpose.msra.mxu0 0.0
      %6435 = vmatpush.xpose.msra.mxu0 0.0
      %6436 = vmatpush.xpose.msra.mxu0 0.0
      %6437 = vmatpush.xpose.msra.mxu0 0.0
      %6438 = vmatpush.xpose.msra.mxu0 0.0
      %6439 = vmatpush.xpose.msra.mxu0 0.0
      %6440 = vmatpush.xpose.msra.mxu0 0.0
      %6441 = vmatpush.xpose.msra.mxu0 0.0
      %6442 = vmatpush.xpose.msra.mxu0 0.0
      %6443 = vmatpush.xpose.msra.mxu0 0.0
      %6444 = vmatpush.xpose.msra.mxu0 0.0
      %6445 = vmatpush.xpose.msra.mxu0 0.0
      %6446 = vmatpush.xpose.msra.mxu0 0.0
      %6447 = vmatpush.xpose.msra.mxu0 0.0
      %6448 = vmatpush.xpose.msra.mxu0 %v6431
      %6449 = vmatmul.f32.gmra.mxu0 %v3125
      %v6450 = vpop.f32.mrf.mxu0
      %v6451 = vadd.f32 0.0, %v6450
      %6452 = vdwg.mxu0
      %v6454 = vsel %vm1682, %v6173, 0
      %6456 = vmatpush.xpose.msra.mxu0 0.0
      %6457 = vmatpush.xpose.msra.mxu0 0.0
      %6458 = vmatpush.xpose.msra.mxu0 0.0
      %6459 = vmatpush.xpose.msra.mxu0 0.0
      %6460 = vmatpush.xpose.msra.mxu0 0.0
      %6461 = vmatpush.xpose.msra.mxu0 0.0
      %6462 = vmatpush.xpose.msra.mxu0 0.0
      %6463 = vmatpush.xpose.msra.mxu0 0.0
      %6464 = vmatpush.xpose.msra.mxu0 0.0
      %6465 = vmatpush.xpose.msra.mxu0 0.0
      %6466 = vmatpush.xpose.msra.mxu0 0.0
      %6467 = vmatpush.xpose.msra.mxu0 0.0
      %6468 = vmatpush.xpose.msra.mxu0 0.0
      %6469 = vmatpush.xpose.msra.mxu0 0.0
      %6470 = vmatpush.xpose.msra.mxu0 0.0
      %6471 = vmatpush.xpose.msra.mxu0 %v6454
      %6472 = vmatmul.f32.gmra.mxu0 %v3151
      %v6473 = vpop.f32.mrf.mxu0
      %v6474 = vadd.f32 0.0, %v6473
      %6475 = vdwg.mxu0
      %v6477 = vsel %vm1682, %v6174, 0
      %6479 = vmatpush.xpose.msra.mxu0 0.0
      %6480 = vmatpush.xpose.msra.mxu0 0.0
      %6481 = vmatpush.xpose.msra.mxu0 0.0
      %6482 = vmatpush.xpose.msra.mxu0 0.0
      %6483 = vmatpush.xpose.msra.mxu0 0.0
      %6484 = vmatpush.xpose.msra.mxu0 0.0
      %6485 = vmatpush.xpose.msra.mxu0 0.0
      %6486 = vmatpush.xpose.msra.mxu0 0.0
      %6487 = vmatpush.xpose.msra.mxu0 0.0
      %6488 = vmatpush.xpose.msra.mxu0 0.0
      %6489 = vmatpush.xpose.msra.mxu0 0.0
      %6490 = vmatpush.xpose.msra.mxu0 0.0
      %6491 = vmatpush.xpose.msra.mxu0 0.0
      %6492 = vmatpush.xpose.msra.mxu0 0.0
      %6493 = vmatpush.xpose.msra.mxu0 0.0
      %6494 = vmatpush.xpose.msra.mxu0 %v6477
      %6495 = vmatmul.f32.gmra.mxu0 %v3177
      %v6496 = vpop.f32.mrf.mxu0
      %v6497 = vadd.f32 0.0, %v6496
      %6498 = vdwg.mxu0
      %v6500 = vsel %vm1682, %v6175, 0
      %6502 = vmatpush.xpose.msra.mxu0 0.0
      %6503 = vmatpush.xpose.msra.mxu0 0.0
      %6504 = vmatpush.xpose.msra.mxu0 0.0
      %6505 = vmatpush.xpose.msra.mxu0 0.0
      %6506 = vmatpush.xpose.msra.mxu0 0.0
      %6507 = vmatpush.xpose.msra.mxu0 0.0
      %6508 = vmatpush.xpose.msra.mxu0 0.0
      %6509 = vmatpush.xpose.msra.mxu0 0.0
      %6510 = vmatpush.xpose.msra.mxu0 0.0
      %6511 = vmatpush.xpose.msra.mxu0 0.0
      %6512 = vmatpush.xpose.msra.mxu0 0.0
      %6513 = vmatpush.xpose.msra.mxu0 0.0
      %6514 = vmatpush.xpose.msra.mxu0 0.0
      %6515 = vmatpush.xpose.msra.mxu0 0.0
      %6516 = vmatpush.xpose.msra.mxu0 0.0
      %6517 = vmatpush.xpose.msra.mxu0 %v6500
      %6518 = vmatmul.f32.gmra.mxu0 %v3203
      %v6519 = vpop.f32.mrf.mxu0
      %v6520 = vadd.f32 0.0, %v6519
      %6521 = vdwg.mxu0
      %v6523 = vsel %vm1682, %v6176, 0
      %6525 = vmatpush.xpose.msra.mxu0 0.0
      %6526 = vmatpush.xpose.msra.mxu0 0.0
      %6527 = vmatpush.xpose.msra.mxu0 0.0
      %6528 = vmatpush.xpose.msra.mxu0 0.0
      %6529 = vmatpush.xpose.msra.mxu0 0.0
      %6530 = vmatpush.xpose.msra.mxu0 0.0
      %6531 = vmatpush.xpose.msra.mxu0 0.0
      %6532 = vmatpush.xpose.msra.mxu0 0.0
      %6533 = vmatpush.xpose.msra.mxu0 0.0
      %6534 = vmatpush.xpose.msra.mxu0 0.0
      %6535 = vmatpush.xpose.msra.mxu0 0.0
      %6536 = vmatpush.xpose.msra.mxu0 0.0
      %6537 = vmatpush.xpose.msra.mxu0 0.0
      %6538 = vmatpush.xpose.msra.mxu0 0.0
      %6539 = vmatpush.xpose.msra.mxu0 0.0
      %6540 = vmatpush.xpose.msra.mxu0 %v6523
      %6541 = vmatmul.f32.gmra.mxu0 %v3229
      %v6542 = vpop.f32.mrf.mxu0
      %v6543 = vadd.f32 0.0, %v6542
      %6544 = vdwg.mxu0
      %v6561 = vrot.slane %v6198, 1
      %v6562 = vrot.slane %v6198, 2
      %v6563 = vrot.slane %v6198, 3
      %v6564 = vrot.slane %v6198, 4
      %v6565 = vrot.slane %v6198, 5
      %v6566 = vrot.slane %v6198, 6
      %v6567 = vrot.slane %v6221, 1
      %v6568 = vrot.slane %v6221, 2
      %v6569 = vrot.slane %v6221, 3
      %v6570 = vrot.slane %v6221, 4
      %v6571 = vrot.slane %v6221, 5
      %v6572 = vrot.slane %v6221, 6
      %v6573 = vrot.slane %v6244, 1
      %v6574 = vrot.slane %v6244, 2
      %v6575 = vrot.slane %v6244, 3
      %v6576 = vrot.slane %v6244, 4
      %v6577 = vrot.slane %v6244, 5
      %v6578 = vrot.slane %v6244, 6
      %v6579 = vrot.slane %v6267, 1
      %v6580 = vrot.slane %v6267, 2
      %v6581 = vrot.slane %v6267, 3
      %v6582 = vrot.slane %v6267, 4
      %v6583 = vrot.slane %v6267, 5
      %v6584 = vrot.slane %v6267, 6
      %v6585 = vrot.slane %v6290, 1
      %v6586 = vrot.slane %v6290, 2
      %v6587 = vrot.slane %v6290, 3
      %v6588 = vrot.slane %v6290, 4
      %v6589 = vrot.slane %v6290, 5
      %v6590 = vrot.slane %v6290, 6
      %v6591 = vrot.slane %v6313, 1
      %v6592 = vrot.slane %v6313, 2
      %v6593 = vrot.slane %v6313, 3
      %v6594 = vrot.slane %v6313, 4
      %v6595 = vrot.slane %v6313, 5
      %v6596 = vrot.slane %v6313, 6
      %v6597 = vrot.slane %v6336, 1
      %v6598 = vrot.slane %v6336, 2
      %v6599 = vrot.slane %v6336, 3
      %v6600 = vrot.slane %v6336, 4
      %v6601 = vrot.slane %v6336, 5
      %v6602 = vrot.slane %v6336, 6
      %v6603 = vrot.slane %v6359, 1
      %v6604 = vrot.slane %v6359, 2
      %v6605 = vrot.slane %v6359, 3
      %v6606 = vrot.slane %v6359, 4
      %v6607 = vrot.slane %v6359, 5
      %v6608 = vrot.slane %v6359, 6
      %v6609 = vrot.slane %v6382, 1
      %v6610 = vrot.slane %v6382, 2
      %v6611 = vrot.slane %v6382, 3
      %v6612 = vrot.slane %v6382, 4
      %v6613 = vrot.slane %v6382, 5
      %v6614 = vrot.slane %v6382, 6
      %v6615 = vrot.slane %v6405, 1
      %v6616 = vrot.slane %v6405, 2
      %v6617 = vrot.slane %v6405, 3
      %v6618 = vrot.slane %v6405, 4
      %v6619 = vrot.slane %v6405, 5
      %v6620 = vrot.slane %v6405, 6
      %v6621 = vrot.slane %v6428, 1
      %v6622 = vrot.slane %v6428, 2
      %v6623 = vrot.slane %v6428, 3
      %v6624 = vrot.slane %v6428, 4
      %v6625 = vrot.slane %v6428, 5
      %v6626 = vrot.slane %v6428, 6
      %v6627 = vrot.slane %v6451, 1
      %v6628 = vrot.slane %v6451, 2
      %v6629 = vrot.slane %v6451, 3
      %v6630 = vrot.slane %v6451, 4
      %v6631 = vrot.slane %v6451, 5
      %v6632 = vrot.slane %v6451, 6
      %v6633 = vrot.slane %v6474, 1
      %v6634 = vrot.slane %v6474, 2
      %v6635 = vrot.slane %v6474, 3
      %v6636 = vrot.slane %v6474, 4
      %v6637 = vrot.slane %v6474, 5
      %v6638 = vrot.slane %v6474, 6
      %v6639 = vrot.slane %v6497, 1
      %v6640 = vrot.slane %v6497, 2
      %v6641 = vrot.slane %v6497, 3
      %v6642 = vrot.slane %v6497, 4
      %v6643 = vrot.slane %v6497, 5
      %v6644 = vrot.slane %v6497, 6
      %v6645 = vrot.slane %v6520, 1
      %v6646 = vrot.slane %v6520, 2
      %v6647 = vrot.slane %v6520, 3
      %v6648 = vrot.slane %v6520, 4
      %v6649 = vrot.slane %v6520, 5
      %v6650 = vrot.slane %v6520, 6
      %v6651 = vrot.slane %v6543, 1
      %v6652 = vrot.slane %v6543, 2
      %v6653 = vrot.slane %v6543, 3
      %v6654 = vrot.slane %v6543, 4
      %v6655 = vrot.slane %v6543, 5
      %v6656 = vrot.slane %v6543, 6
      %6657 = vst [vmem:[#allocation1] ss:$9 sm:$0xff] %v6198
      %s6658 = scalar_lea.vmem [#allocation1], 1
      %6659 = vst [vmem:[%s6658] ss:$9 sm:$0xff] %v6561
      %s6660 = scalar_lea.vmem [#allocation1], 2
      %6661 = vst [vmem:[%s6660] ss:$9 sm:$0xff] %v6562
      %s6662 = scalar_lea.vmem [#allocation1], 3
      %6663 = vst [vmem:[%s6662] ss:$9 sm:$0xff] %v6563
      %s6664 = scalar_lea.vmem [#allocation1], 4
      %6665 = vst [vmem:[%s6664] ss:$9 sm:$0xff] %v6564
      %s6666 = scalar_lea.vmem [#allocation1], 5
      %6667 = vst [vmem:[%s6666] ss:$9 sm:$0xff] %v6565
      %s6668 = scalar_lea.vmem [#allocation1], 6
      %6669 = vst [vmem:[%s6668] ss:$9 sm:$0xff] %v6566
      %s6670 = scalar_lea.vmem [#allocation1], 7
      %6671 = vst [vmem:[%s6670] ss:$9 sm:$0xff] %v6221
      %v6672 = vld [vmem:[#allocation1] sm:$0xff]
      %6673 = vst [vmem:[#allocation1] ss:$9 sm:$0xff] %v6567
      %6674 = vst [vmem:[%s6658] ss:$9 sm:$0xff] %v6568
      %6675 = vst [vmem:[%s6660] ss:$9 sm:$0xff] %v6569
      %6676 = vst [vmem:[%s6662] ss:$9 sm:$0xff] %v6570
      %6677 = vst [vmem:[%s6664] ss:$9 sm:$0xff] %v6571
      %6678 = vst [vmem:[%s6666] ss:$9 sm:$0xff] %v6572
      %6679 = vst [vmem:[%s6668] ss:$9 sm:$0xff] %v6244
      %6680 = vst [vmem:[%s6670] ss:$9 sm:$0xff] %v6573
      %v6681 = vld [vmem:[#allocation1] sm:$0xff]
      %6682 = vst [vmem:[#allocation1] ss:$9 sm:$0xff] %v6574
      %6683 = vst [vmem:[%s6658] ss:$9 sm:$0xff] %v6575
      %6684 = vst [vmem:[%s6660] ss:$9 sm:$0xff] %v6576
      %6685 = vst [vmem:[%s6662] ss:$9 sm:$0xff] %v6577
      %6686 = vst [vmem:[%s6664] ss:$9 sm:$0xff] %v6578
      %6687 = vst [vmem:[%s6666] ss:$9 sm:$0xff] %v6267
      %6688 = vst [vmem:[%s6668] ss:$9 sm:$0xff] %v6579
      %6689 = vst [vmem:[%s6670] ss:$9 sm:$0xff] %v6580
      %v6690 = vld [vmem:[#allocation1] sm:$0xff]
      %6691 = vst [vmem:[#allocation1] ss:$9 sm:$0xff] %v6581
      %6692 = vst [vmem:[%s6658] ss:$9 sm:$0xff] %v6582
      %6693 = vst [vmem:[%s6660] ss:$9 sm:$0xff] %v6583
      %6694 = vst [vmem:[%s6662] ss:$9 sm:$0xff] %v6584
      %6695 = vst [vmem:[%s6664] ss:$9 sm:$0xff] %v6290
      %6696 = vst [vmem:[%s6666] ss:$9 sm:$0xff] %v6585
      %6697 = vst [vmem:[%s6668] ss:$9 sm:$0xff] %v6586
      %6698 = vst [vmem:[%s6670] ss:$9 sm:$0xff] %v6587
      %v6699 = vld [vmem:[#allocation1] sm:$0xff]
      %6700 = vst [vmem:[#allocation1] ss:$9 sm:$0xff] %v6588
      %6701 = vst [vmem:[%s6658] ss:$9 sm:$0xff] %v6589
      %6702 = vst [vmem:[%s6660] ss:$9 sm:$0xff] %v6590
      %6703 = vst [vmem:[%s6662] ss:$9 sm:$0xff] %v6313
      %6704 = vst [vmem:[%s6664] ss:$9 sm:$0xff] %v6591
      %6705 = vst [vmem:[%s6666] ss:$9 sm:$0xff] %v6592
      %6706 = vst [vmem:[%s6668] ss:$9 sm:$0xff] %v6593
      %6707 = vst [vmem:[%s6670] ss:$9 sm:$0xff] %v6594
      %v6708 = vld [vmem:[#allocation1] sm:$0xff]
      %6709 = vst [vmem:[#allocation1] ss:$9 sm:$0xff] %v6595
      %6710 = vst [vmem:[%s6658] ss:$9 sm:$0xff] %v6596
      %6711 = vst [vmem:[%s6660] ss:$9 sm:$0xff] %v6336
      %6712 = vst [vmem:[%s6662] ss:$9 sm:$0xff] %v6597
      %6713 = vst [vmem:[%s6664] ss:$9 sm:$0xff] %v6598
      %6714 = vst [vmem:[%s6666] ss:$9 sm:$0xff] %v6599
      %6715 = vst [vmem:[%s6668] ss:$9 sm:$0xff] %v6600
      %6716 = vst [vmem:[%s6670] ss:$9 sm:$0xff] %v6601
      %v6717 = vld [vmem:[#allocation1] sm:$0xff]
      %6718 = vst [vmem:[#allocation1] ss:$9 sm:$0xff] %v6602
      %6719 = vst [vmem:[%s6658] ss:$9 sm:$0xff] %v6359
      %6720 = vst [vmem:[%s6660] ss:$9 sm:$0xff] %v6603
      %6721 = vst [vmem:[%s6662] ss:$9 sm:$0xff] %v6604
      %6722 = vst [vmem:[%s6664] ss:$9 sm:$0xff] %v6605
      %6723 = vst [vmem:[%s6666] ss:$9 sm:$0xff] %v6606
      %6724 = vst [vmem:[%s6668] ss:$9 sm:$0xff] %v6607
      %6725 = vst [vmem:[%s6670] ss:$9 sm:$0xff] %v6608
      %v6726 = vld [vmem:[#allocation1] sm:$0xff]
      %6727 = vst [vmem:[#allocation1] ss:$9 sm:$0xff] %v6382
      %6728 = vst [vmem:[%s6658] ss:$9 sm:$0xff] %v6609
      %6729 = vst [vmem:[%s6660] ss:$9 sm:$0xff] %v6610
      %6730 = vst [vmem:[%s6662] ss:$9 sm:$0xff] %v6611
      %6731 = vst [vmem:[%s6664] ss:$9 sm:$0xff] %v6612
      %6732 = vst [vmem:[%s6666] ss:$9 sm:$0xff] %v6613
      %6733 = vst [vmem:[%s6668] ss:$9 sm:$0xff] %v6614
      %6734 = vst [vmem:[%s6670] ss:$9 sm:$0xff] %v6405
      %v6735 = vld [vmem:[#allocation1] sm:$0xff]
      %6736 = vst [vmem:[#allocation1] ss:$9 sm:$0xff] %v6615
      %6737 = vst [vmem:[%s6658] ss:$9 sm:$0xff] %v6616
      %6738 = vst [vmem:[%s6660] ss:$9 sm:$0xff] %v6617
      %6739 = vst [vmem:[%s6662] ss:$9 sm:$0xff] %v6618
      %6740 = vst [vmem:[%s6664] ss:$9 sm:$0xff] %v6619
      %6741 = vst [vmem:[%s6666] ss:$9 sm:$0xff] %v6620
      %6742 = vst [vmem:[%s6668] ss:$9 sm:$0xff] %v6428
      %6743 = vst [vmem:[%s6670] ss:$9 sm:$0xff] %v6621
      %v6744 = vld [vmem:[#allocation1] sm:$0xff]
      %6745 = vst [vmem:[#allocation1] ss:$9 sm:$0xff] %v6622
      %6746 = vst [vmem:[%s6658] ss:$9 sm:$0xff] %v6623
      %6747 = vst [vmem:[%s6660] ss:$9 sm:$0xff] %v6624
      %6748 = vst [vmem:[%s6662] ss:$9 sm:$0xff] %v6625
      %6749 = vst [vmem:[%s6664] ss:$9 sm:$0xff] %v6626
      %6750 = vst [vmem:[%s6666] ss:$9 sm:$0xff] %v6451
      %6751 = vst [vmem:[%s6668] ss:$9 sm:$0xff] %v6627
      %6752 = vst [vmem:[%s6670] ss:$9 sm:$0xff] %v6628
      %v6753 = vld [vmem:[#allocation1] sm:$0xff]
      %6754 = vst [vmem:[#allocation1] ss:$9 sm:$0xff] %v6629
      %6755 = vst [vmem:[%s6658] ss:$9 sm:$0xff] %v6630
      %6756 = vst [vmem:[%s6660] ss:$9 sm:$0xff] %v6631
      %6757 = vst [vmem:[%s6662] ss:$9 sm:$0xff] %v6632
      %6758 = vst [vmem:[%s6664] ss:$9 sm:$0xff] %v6474
      %6759 = vst [vmem:[%s6666] ss:$9 sm:$0xff] %v6633
      %6760 = vst [vmem:[%s6668] ss:$9 sm:$0xff] %v6634
      %6761 = vst [vmem:[%s6670] ss:$9 sm:$0xff] %v6635
      %v6762 = vld [vmem:[#allocation1] sm:$0xff]
      %6763 = vst [vmem:[#allocation1] ss:$9 sm:$0xff] %v6636
      %6764 = vst [vmem:[%s6658] ss:$9 sm:$0xff] %v6637
      %6765 = vst [vmem:[%s6660] ss:$9 sm:$0xff] %v6638
      %6766 = vst [vmem:[%s6662] ss:$9 sm:$0xff] %v6497
      %6767 = vst [vmem:[%s6664] ss:$9 sm:$0xff] %v6639
      %6768 = vst [vmem:[%s6666] ss:$9 sm:$0xff] %v6640
      %6769 = vst [vmem:[%s6668] ss:$9 sm:$0xff] %v6641
      %6770 = vst [vmem:[%s6670] ss:$9 sm:$0xff] %v6642
      %v6771 = vld [vmem:[#allocation1] sm:$0xff]
      %6772 = vst [vmem:[#allocation1] ss:$9 sm:$0xff] %v6643
      %6773 = vst [vmem:[%s6658] ss:$9 sm:$0xff] %v6644
      %6774 = vst [vmem:[%s6660] ss:$9 sm:$0xff] %v6520
      %6775 = vst [vmem:[%s6662] ss:$9 sm:$0xff] %v6645
      %6776 = vst [vmem:[%s6664] ss:$9 sm:$0xff] %v6646
      %6777 = vst [vmem:[%s6666] ss:$9 sm:$0xff] %v6647
      %6778 = vst [vmem:[%s6668] ss:$9 sm:$0xff] %v6648
      %6779 = vst [vmem:[%s6670] ss:$9 sm:$0xff] %v6649
      %v6780 = vld [vmem:[#allocation1] sm:$0xff]
      %6781 = vst [vmem:[#allocation1] ss:$9 sm:$0xff] %v6650
      %6782 = vst [vmem:[%s6658] ss:$9 sm:$0xff] %v6543
      %6783 = vst [vmem:[%s6660] ss:$9 sm:$0xff] %v6651
      %6784 = vst [vmem:[%s6662] ss:$9 sm:$0xff] %v6652
      %6785 = vst [vmem:[%s6664] ss:$9 sm:$0xff] %v6653
      %6786 = vst [vmem:[%s6666] ss:$9 sm:$0xff] %v6654
      %6787 = vst [vmem:[%s6668] ss:$9 sm:$0xff] %v6655
      %6788 = vst [vmem:[%s6670] ss:$9 sm:$0xff] %v6656
      %v6789 = vld [vmem:[#allocation1] sm:$0xff]
      %6804 = vst.msk [vmem:[%s181 + $0x230] sm:$0xff] %vm3513, %v6672
      %6805 = vst.msk [vmem:[%s181 + $0x238] sm:$0xff] %vm3513, %v6681
      %6806 = vst.msk [vmem:[%s181 + $0x240] sm:$0xff] %vm3513, %v6690
      %6807 = vst.msk [vmem:[%s181 + $0x248] sm:$0xff] %vm3513, %v6699
      %6808 = vst.msk [vmem:[%s181 + $0x250] sm:$0xff] %vm3513, %v6708
      %6809 = vst.msk [vmem:[%s181 + $0x258] sm:$0xff] %vm3513, %v6717
      %6810 = vst.msk [vmem:[%s181 + $0x260] sm:$0xff] %vm3513, %v6726
      %6811 = vst.msk [vmem:[%s181 + $0x268] sm:$0xff] %vm3513, %v6735
      %6812 = vst.msk [vmem:[%s181 + $0x270] sm:$0xff] %vm3513, %v6744
      %6813 = vst.msk [vmem:[%s181 + $0x278] sm:$0xff] %vm3513, %v6753
      %6814 = vst.msk [vmem:[%s181 + $0x280] sm:$0xff] %vm3513, %v6762
      %6815 = vst.msk [vmem:[%s181 + $0x288] sm:$0xff] %vm3513, %v6771
      %6816 = vst.msk [vmem:[%s181 + $0x290] sm:$0xff] %vm3513, %v6780
      %6817 = vst.msk [vmem:[%s181 + $0x298] sm:$0xff] %vm3513, %v6789
      %s6818 = scalar_lea.vmem [#allocation2], 384
      %v6819 = vld [vmem:[%s6818] sm:$0xf]
      %v6820 = vld [vmem:[%s6818 + $0x4] sm:$0xf]
      %v6821 = vld [vmem:[%s6818 + $0x8] sm:$0xf]
      %v6822 = vld [vmem:[%s6818 + $0xc] sm:$0xf]
      %v6823 = vld [vmem:[%s6818 + $0x10] sm:$0xf]
      %v6824 = vld [vmem:[%s6818 + $0x14] sm:$0xf]
      %v6825 = vld [vmem:[%s6818 + $0x18] sm:$0xf]
      %v6826 = vld [vmem:[%s6818 + $0x1c] sm:$0xf]
      %v6827 = vld [vmem:[%s6818 + $0x20] sm:$0xf]
      %v6828 = vld [vmem:[%s6818 + $0x24] sm:$0xf]
      %v6829 = vld [vmem:[%s6818 + $0x28] sm:$0xf]
      %v6830 = vld [vmem:[%s6818 + $0x2c] sm:$0xf]
      %v6831 = vld [vmem:[%s6818 + $0x30] sm:$0xf]
      %v6832 = vld [vmem:[%s6818 + $0x34] sm:$0xf]
      %v6833 = vld [vmem:[%s6818 + $0x38] sm:$0xf]
      %v6834 = vld [vmem:[%s6818 + $0x3c] sm:$0xf]
      %v6836 = vsel %vm1682, %v6819, 0
      %6838 = vmatpush.xpose.msra.mxu0 0.0
      %6839 = vmatpush.xpose.msra.mxu0 0.0
      %6840 = vmatpush.xpose.msra.mxu0 0.0
      %6841 = vmatpush.xpose.msra.mxu0 0.0
      %6842 = vmatpush.xpose.msra.mxu0 0.0
      %6843 = vmatpush.xpose.msra.mxu0 0.0
      %6844 = vmatpush.xpose.msra.mxu0 0.0
      %6845 = vmatpush.xpose.msra.mxu0 0.0
      %6846 = vmatpush.xpose.msra.mxu0 0.0
      %6847 = vmatpush.xpose.msra.mxu0 0.0
      %6848 = vmatpush.xpose.msra.mxu0 0.0
      %6849 = vmatpush.xpose.msra.mxu0 0.0
      %6850 = vmatpush.xpose.msra.mxu0 0.0
      %6851 = vmatpush.xpose.msra.mxu0 0.0
      %6852 = vmatpush.xpose.msra.mxu0 0.0
      %6853 = vmatpush.xpose.msra.mxu0 %v6836
      %6854 = vmatmul.f32.gmra.mxu0 %v2839
      %v6855 = vpop.f32.mrf.mxu0
      %v6856 = vadd.f32 0.0, %v6855
      %6857 = vdwg.mxu0
      %v6859 = vsel %vm1682, %v6820, 0
      %6861 = vmatpush.xpose.msra.mxu0 0.0
      %6862 = vmatpush.xpose.msra.mxu0 0.0
      %6863 = vmatpush.xpose.msra.mxu0 0.0
      %6864 = vmatpush.xpose.msra.mxu0 0.0
      %6865 = vmatpush.xpose.msra.mxu0 0.0
      %6866 = vmatpush.xpose.msra.mxu0 0.0
      %6867 = vmatpush.xpose.msra.mxu0 0.0
      %6868 = vmatpush.xpose.msra.mxu0 0.0
      %6869 = vmatpush.xpose.msra.mxu0 0.0
      %6870 = vmatpush.xpose.msra.mxu0 0.0
      %6871 = vmatpush.xpose.msra.mxu0 0.0
      %6872 = vmatpush.xpose.msra.mxu0 0.0
      %6873 = vmatpush.xpose.msra.mxu0 0.0
      %6874 = vmatpush.xpose.msra.mxu0 0.0
      %6875 = vmatpush.xpose.msra.mxu0 0.0
      %6876 = vmatpush.xpose.msra.mxu0 %v6859
      %6877 = vmatmul.f32.gmra.mxu0 %v2865
      %v6878 = vpop.f32.mrf.mxu0
      %v6879 = vadd.f32 0.0, %v6878
      %6880 = vdwg.mxu0
      %v6882 = vsel %vm1682, %v6821, 0
      %6884 = vmatpush.xpose.msra.mxu0 0.0
      %6885 = vmatpush.xpose.msra.mxu0 0.0
      %6886 = vmatpush.xpose.msra.mxu0 0.0
      %6887 = vmatpush.xpose.msra.mxu0 0.0
      %6888 = vmatpush.xpose.msra.mxu0 0.0
      %6889 = vmatpush.xpose.msra.mxu0 0.0
      %6890 = vmatpush.xpose.msra.mxu0 0.0
      %6891 = vmatpush.xpose.msra.mxu0 0.0
      %6892 = vmatpush.xpose.msra.mxu0 0.0
      %6893 = vmatpush.xpose.msra.mxu0 0.0
      %6894 = vmatpush.xpose.msra.mxu0 0.0
      %6895 = vmatpush.xpose.msra.mxu0 0.0
      %6896 = vmatpush.xpose.msra.mxu0 0.0
      %6897 = vmatpush.xpose.msra.mxu0 0.0
      %6898 = vmatpush.xpose.msra.mxu0 0.0
      %6899 = vmatpush.xpose.msra.mxu0 %v6882
      %6900 = vmatmul.f32.gmra.mxu0 %v2891
      %v6901 = vpop.f32.mrf.mxu0
      %v6902 = vadd.f32 0.0, %v6901
      %6903 = vdwg.mxu0
      %v6905 = vsel %vm1682, %v6822, 0
      %6907 = vmatpush.xpose.msra.mxu0 0.0
      %6908 = vmatpush.xpose.msra.mxu0 0.0
      %6909 = vmatpush.xpose.msra.mxu0 0.0
      %6910 = vmatpush.xpose.msra.mxu0 0.0
      %6911 = vmatpush.xpose.msra.mxu0 0.0
      %6912 = vmatpush.xpose.msra.mxu0 0.0
      %6913 = vmatpush.xpose.msra.mxu0 0.0
      %6914 = vmatpush.xpose.msra.mxu0 0.0
      %6915 = vmatpush.xpose.msra.mxu0 0.0
      %6916 = vmatpush.xpose.msra.mxu0 0.0
      %6917 = vmatpush.xpose.msra.mxu0 0.0
      %6918 = vmatpush.xpose.msra.mxu0 0.0
      %6919 = vmatpush.xpose.msra.mxu0 0.0
      %6920 = vmatpush.xpose.msra.mxu0 0.0
      %6921 = vmatpush.xpose.msra.mxu0 0.0
      %6922 = vmatpush.xpose.msra.mxu0 %v6905
      %6923 = vmatmul.f32.gmra.mxu0 %v2917
      %v6924 = vpop.f32.mrf.mxu0
      %v6925 = vadd.f32 0.0, %v6924
      %6926 = vdwg.mxu0
      %v6928 = vsel %vm1682, %v6823, 0
      %6930 = vmatpush.xpose.msra.mxu0 0.0
      %6931 = vmatpush.xpose.msra.mxu0 0.0
      %6932 = vmatpush.xpose.msra.mxu0 0.0
      %6933 = vmatpush.xpose.msra.mxu0 0.0
      %6934 = vmatpush.xpose.msra.mxu0 0.0
      %6935 = vmatpush.xpose.msra.mxu0 0.0
      %6936 = vmatpush.xpose.msra.mxu0 0.0
      %6937 = vmatpush.xpose.msra.mxu0 0.0
      %6938 = vmatpush.xpose.msra.mxu0 0.0
      %6939 = vmatpush.xpose.msra.mxu0 0.0
      %6940 = vmatpush.xpose.msra.mxu0 0.0
      %6941 = vmatpush.xpose.msra.mxu0 0.0
      %6942 = vmatpush.xpose.msra.mxu0 0.0
      %6943 = vmatpush.xpose.msra.mxu0 0.0
      %6944 = vmatpush.xpose.msra.mxu0 0.0
      %6945 = vmatpush.xpose.msra.mxu0 %v6928
      %6946 = vmatmul.f32.gmra.mxu0 %v2943
      %v6947 = vpop.f32.mrf.mxu0
      %v6948 = vadd.f32 0.0, %v6947
      %6949 = vdwg.mxu0
      %v6951 = vsel %vm1682, %v6824, 0
      %6953 = vmatpush.xpose.msra.mxu0 0.0
      %6954 = vmatpush.xpose.msra.mxu0 0.0
      %6955 = vmatpush.xpose.msra.mxu0 0.0
      %6956 = vmatpush.xpose.msra.mxu0 0.0
      %6957 = vmatpush.xpose.msra.mxu0 0.0
      %6958 = vmatpush.xpose.msra.mxu0 0.0
      %6959 = vmatpush.xpose.msra.mxu0 0.0
      %6960 = vmatpush.xpose.msra.mxu0 0.0
      %6961 = vmatpush.xpose.msra.mxu0 0.0
      %6962 = vmatpush.xpose.msra.mxu0 0.0
      %6963 = vmatpush.xpose.msra.mxu0 0.0
      %6964 = vmatpush.xpose.msra.mxu0 0.0
      %6965 = vmatpush.xpose.msra.mxu0 0.0
      %6966 = vmatpush.xpose.msra.mxu0 0.0
      %6967 = vmatpush.xpose.msra.mxu0 0.0
      %6968 = vmatpush.xpose.msra.mxu0 %v6951
      %6969 = vmatmul.f32.gmra.mxu0 %v2969
      %v6970 = vpop.f32.mrf.mxu0
      %v6971 = vadd.f32 0.0, %v6970
      %6972 = vdwg.mxu0
      %v6974 = vsel %vm1682, %v6825, 0
      %6976 = vmatpush.xpose.msra.mxu0 0.0
      %6977 = vmatpush.xpose.msra.mxu0 0.0
      %6978 = vmatpush.xpose.msra.mxu0 0.0
      %6979 = vmatpush.xpose.msra.mxu0 0.0
      %6980 = vmatpush.xpose.msra.mxu0 0.0
      %6981 = vmatpush.xpose.msra.mxu0 0.0
      %6982 = vmatpush.xpose.msra.mxu0 0.0
      %6983 = vmatpush.xpose.msra.mxu0 0.0
      %6984 = vmatpush.xpose.msra.mxu0 0.0
      %6985 = vmatpush.xpose.msra.mxu0 0.0
      %6986 = vmatpush.xpose.msra.mxu0 0.0
      %6987 = vmatpush.xpose.msra.mxu0 0.0
      %6988 = vmatpush.xpose.msra.mxu0 0.0
      %6989 = vmatpush.xpose.msra.mxu0 0.0
      %6990 = vmatpush.xpose.msra.mxu0 0.0
      %6991 = vmatpush.xpose.msra.mxu0 %v6974
      %6992 = vmatmul.f32.gmra.mxu0 %v2995
      %v6993 = vpop.f32.mrf.mxu0
      %v6994 = vadd.f32 0.0, %v6993
      %6995 = vdwg.mxu0
      %v6997 = vsel %vm1682, %v6826, 0
      %6999 = vmatpush.xpose.msra.mxu0 0.0
      %7000 = vmatpush.xpose.msra.mxu0 0.0
      %7001 = vmatpush.xpose.msra.mxu0 0.0
      %7002 = vmatpush.xpose.msra.mxu0 0.0
      %7003 = vmatpush.xpose.msra.mxu0 0.0
      %7004 = vmatpush.xpose.msra.mxu0 0.0
      %7005 = vmatpush.xpose.msra.mxu0 0.0
      %7006 = vmatpush.xpose.msra.mxu0 0.0
      %7007 = vmatpush.xpose.msra.mxu0 0.0
      %7008 = vmatpush.xpose.msra.mxu0 0.0
      %7009 = vmatpush.xpose.msra.mxu0 0.0
      %7010 = vmatpush.xpose.msra.mxu0 0.0
      %7011 = vmatpush.xpose.msra.mxu0 0.0
      %7012 = vmatpush.xpose.msra.mxu0 0.0
      %7013 = vmatpush.xpose.msra.mxu0 0.0
      %7014 = vmatpush.xpose.msra.mxu0 %v6997
      %7015 = vmatmul.f32.gmra.mxu0 %v3021
      %v7016 = vpop.f32.mrf.mxu0
      %v7017 = vadd.f32 0.0, %v7016
      %7018 = vdwg.mxu0
      %v7020 = vsel %vm1682, %v6827, 0
      %7022 = vmatpush.xpose.msra.mxu0 0.0
      %7023 = vmatpush.xpose.msra.mxu0 0.0
      %7024 = vmatpush.xpose.msra.mxu0 0.0
      %7025 = vmatpush.xpose.msra.mxu0 0.0
      %7026 = vmatpush.xpose.msra.mxu0 0.0
      %7027 = vmatpush.xpose.msra.mxu0 0.0
      %7028 = vmatpush.xpose.msra.mxu0 0.0
      %7029 = vmatpush.xpose.msra.mxu0 0.0
      %7030 = vmatpush.xpose.msra.mxu0 0.0
      %7031 = vmatpush.xpose.msra.mxu0 0.0
      %7032 = vmatpush.xpose.msra.mxu0 0.0
      %7033 = vmatpush.xpose.msra.mxu0 0.0
      %7034 = vmatpush.xpose.msra.mxu0 0.0
      %7035 = vmatpush.xpose.msra.mxu0 0.0
      %7036 = vmatpush.xpose.msra.mxu0 0.0
      %7037 = vmatpush.xpose.msra.mxu0 %v7020
      %7038 = vmatmul.f32.gmra.mxu0 %v3047
      %v7039 = vpop.f32.mrf.mxu0
      %v7040 = vadd.f32 0.0, %v7039
      %7041 = vdwg.mxu0
      %v7043 = vsel %vm1682, %v6828, 0
      %7045 = vmatpush.xpose.msra.mxu0 0.0
      %7046 = vmatpush.xpose.msra.mxu0 0.0
      %7047 = vmatpush.xpose.msra.mxu0 0.0
      %7048 = vmatpush.xpose.msra.mxu0 0.0
      %7049 = vmatpush.xpose.msra.mxu0 0.0
      %7050 = vmatpush.xpose.msra.mxu0 0.0
      %7051 = vmatpush.xpose.msra.mxu0 0.0
      %7052 = vmatpush.xpose.msra.mxu0 0.0
      %7053 = vmatpush.xpose.msra.mxu0 0.0
      %7054 = vmatpush.xpose.msra.mxu0 0.0
      %7055 = vmatpush.xpose.msra.mxu0 0.0
      %7056 = vmatpush.xpose.msra.mxu0 0.0
      %7057 = vmatpush.xpose.msra.mxu0 0.0
      %7058 = vmatpush.xpose.msra.mxu0 0.0
      %7059 = vmatpush.xpose.msra.mxu0 0.0
      %7060 = vmatpush.xpose.msra.mxu0 %v7043
      %7061 = vmatmul.f32.gmra.mxu0 %v3073
      %v7062 = vpop.f32.mrf.mxu0
      %v7063 = vadd.f32 0.0, %v7062
      %7064 = vdwg.mxu0
      %v7066 = vsel %vm1682, %v6829, 0
      %7068 = vmatpush.xpose.msra.mxu0 0.0
      %7069 = vmatpush.xpose.msra.mxu0 0.0
      %7070 = vmatpush.xpose.msra.mxu0 0.0
      %7071 = vmatpush.xpose.msra.mxu0 0.0
      %7072 = vmatpush.xpose.msra.mxu0 0.0
      %7073 = vmatpush.xpose.msra.mxu0 0.0
      %7074 = vmatpush.xpose.msra.mxu0 0.0
      %7075 = vmatpush.xpose.msra.mxu0 0.0
      %7076 = vmatpush.xpose.msra.mxu0 0.0
      %7077 = vmatpush.xpose.msra.mxu0 0.0
      %7078 = vmatpush.xpose.msra.mxu0 0.0
      %7079 = vmatpush.xpose.msra.mxu0 0.0
      %7080 = vmatpush.xpose.msra.mxu0 0.0
      %7081 = vmatpush.xpose.msra.mxu0 0.0
      %7082 = vmatpush.xpose.msra.mxu0 0.0
      %7083 = vmatpush.xpose.msra.mxu0 %v7066
      %7084 = vmatmul.f32.gmra.mxu0 %v3099
      %v7085 = vpop.f32.mrf.mxu0
      %v7086 = vadd.f32 0.0, %v7085
      %7087 = vdwg.mxu0
      %v7089 = vsel %vm1682, %v6830, 0
      %7091 = vmatpush.xpose.msra.mxu0 0.0
      %7092 = vmatpush.xpose.msra.mxu0 0.0
      %7093 = vmatpush.xpose.msra.mxu0 0.0
      %7094 = vmatpush.xpose.msra.mxu0 0.0
      %7095 = vmatpush.xpose.msra.mxu0 0.0
      %7096 = vmatpush.xpose.msra.mxu0 0.0
      %7097 = vmatpush.xpose.msra.mxu0 0.0
      %7098 = vmatpush.xpose.msra.mxu0 0.0
      %7099 = vmatpush.xpose.msra.mxu0 0.0
      %7100 = vmatpush.xpose.msra.mxu0 0.0
      %7101 = vmatpush.xpose.msra.mxu0 0.0
      %7102 = vmatpush.xpose.msra.mxu0 0.0
      %7103 = vmatpush.xpose.msra.mxu0 0.0
      %7104 = vmatpush.xpose.msra.mxu0 0.0
      %7105 = vmatpush.xpose.msra.mxu0 0.0
      %7106 = vmatpush.xpose.msra.mxu0 %v7089
      %7107 = vmatmul.f32.gmra.mxu0 %v3125
      %v7108 = vpop.f32.mrf.mxu0
      %v7109 = vadd.f32 0.0, %v7108
      %7110 = vdwg.mxu0
      %v7112 = vsel %vm1682, %v6831, 0
      %7114 = vmatpush.xpose.msra.mxu0 0.0
      %7115 = vmatpush.xpose.msra.mxu0 0.0
      %7116 = vmatpush.xpose.msra.mxu0 0.0
      %7117 = vmatpush.xpose.msra.mxu0 0.0
      %7118 = vmatpush.xpose.msra.mxu0 0.0
      %7119 = vmatpush.xpose.msra.mxu0 0.0
      %7120 = vmatpush.xpose.msra.mxu0 0.0
      %7121 = vmatpush.xpose.msra.mxu0 0.0
      %7122 = vmatpush.xpose.msra.mxu0 0.0
      %7123 = vmatpush.xpose.msra.mxu0 0.0
      %7124 = vmatpush.xpose.msra.mxu0 0.0
      %7125 = vmatpush.xpose.msra.mxu0 0.0
      %7126 = vmatpush.xpose.msra.mxu0 0.0
      %7127 = vmatpush.xpose.msra.mxu0 0.0
      %7128 = vmatpush.xpose.msra.mxu0 0.0
      %7129 = vmatpush.xpose.msra.mxu0 %v7112
      %7130 = vmatmul.f32.gmra.mxu0 %v3151
      %v7131 = vpop.f32.mrf.mxu0
      %v7132 = vadd.f32 0.0, %v7131
      %7133 = vdwg.mxu0
      %v7135 = vsel %vm1682, %v6832, 0
      %7137 = vmatpush.xpose.msra.mxu0 0.0
      %7138 = vmatpush.xpose.msra.mxu0 0.0
      %7139 = vmatpush.xpose.msra.mxu0 0.0
      %7140 = vmatpush.xpose.msra.mxu0 0.0
      %7141 = vmatpush.xpose.msra.mxu0 0.0
      %7142 = vmatpush.xpose.msra.mxu0 0.0
      %7143 = vmatpush.xpose.msra.mxu0 0.0
      %7144 = vmatpush.xpose.msra.mxu0 0.0
      %7145 = vmatpush.xpose.msra.mxu0 0.0
      %7146 = vmatpush.xpose.msra.mxu0 0.0
      %7147 = vmatpush.xpose.msra.mxu0 0.0
      %7148 = vmatpush.xpose.msra.mxu0 0.0
      %7149 = vmatpush.xpose.msra.mxu0 0.0
      %7150 = vmatpush.xpose.msra.mxu0 0.0
      %7151 = vmatpush.xpose.msra.mxu0 0.0
      %7152 = vmatpush.xpose.msra.mxu0 %v7135
      %7153 = vmatmul.f32.gmra.mxu0 %v3177
      %v7154 = vpop.f32.mrf.mxu0
      %v7155 = vadd.f32 0.0, %v7154
      %7156 = vdwg.mxu0
      %v7158 = vsel %vm1682, %v6833, 0
      %7160 = vmatpush.xpose.msra.mxu0 0.0
      %7161 = vmatpush.xpose.msra.mxu0 0.0
      %7162 = vmatpush.xpose.msra.mxu0 0.0
      %7163 = vmatpush.xpose.msra.mxu0 0.0
      %7164 = vmatpush.xpose.msra.mxu0 0.0
      %7165 = vmatpush.xpose.msra.mxu0 0.0
      %7166 = vmatpush.xpose.msra.mxu0 0.0
      %7167 = vmatpush.xpose.msra.mxu0 0.0
      %7168 = vmatpush.xpose.msra.mxu0 0.0
      %7169 = vmatpush.xpose.msra.mxu0 0.0
      %7170 = vmatpush.xpose.msra.mxu0 0.0
      %7171 = vmatpush.xpose.msra.mxu0 0.0
      %7172 = vmatpush.xpose.msra.mxu0 0.0
      %7173 = vmatpush.xpose.msra.mxu0 0.0
      %7174 = vmatpush.xpose.msra.mxu0 0.0
      %7175 = vmatpush.xpose.msra.mxu0 %v7158
      %7176 = vmatmul.f32.gmra.mxu0 %v3203
      %v7177 = vpop.f32.mrf.mxu0
      %v7178 = vadd.f32 0.0, %v7177
      %7179 = vdwg.mxu0
      %v7181 = vsel %vm1682, %v6834, 0
      %7183 = vmatpush.xpose.msra.mxu0 0.0
      %7184 = vmatpush.xpose.msra.mxu0 0.0
      %7185 = vmatpush.xpose.msra.mxu0 0.0
      %7186 = vmatpush.xpose.msra.mxu0 0.0
      %7187 = vmatpush.xpose.msra.mxu0 0.0
      %7188 = vmatpush.xpose.msra.mxu0 0.0
      %7189 = vmatpush.xpose.msra.mxu0 0.0
      %7190 = vmatpush.xpose.msra.mxu0 0.0
      %7191 = vmatpush.xpose.msra.mxu0 0.0
      %7192 = vmatpush.xpose.msra.mxu0 0.0
      %7193 = vmatpush.xpose.msra.mxu0 0.0
      %7194 = vmatpush.xpose.msra.mxu0 0.0
      %7195 = vmatpush.xpose.msra.mxu0 0.0
      %7196 = vmatpush.xpose.msra.mxu0 0.0
      %7197 = vmatpush.xpose.msra.mxu0 0.0
      %7198 = vmatpush.xpose.msra.mxu0 %v7181
      %7199 = vmatmul.f32.gmra.mxu0 %v3229
      %v7200 = vpop.f32.mrf.mxu0
      %v7201 = vadd.f32 0.0, %v7200
      %7202 = vdwg.mxu0
      %v7219 = vrot.slane %v6856, 1
      %v7220 = vrot.slane %v6856, 2
      %v7221 = vrot.slane %v6856, 3
      %v7222 = vrot.slane %v6856, 4
      %v7223 = vrot.slane %v6856, 5
      %v7224 = vrot.slane %v6856, 6
      %v7225 = vrot.slane %v6879, 1
      %v7226 = vrot.slane %v6879, 2
      %v7227 = vrot.slane %v6879, 3
      %v7228 = vrot.slane %v6879, 4
      %v7229 = vrot.slane %v6879, 5
      %v7230 = vrot.slane %v6879, 6
      %v7231 = vrot.slane %v6902, 1
      %v7232 = vrot.slane %v6902, 2
      %v7233 = vrot.slane %v6902, 3
      %v7234 = vrot.slane %v6902, 4
      %v7235 = vrot.slane %v6902, 5
      %v7236 = vrot.slane %v6902, 6
      %v7237 = vrot.slane %v6925, 1
      %v7238 = vrot.slane %v6925, 2
      %v7239 = vrot.slane %v6925, 3
      %v7240 = vrot.slane %v6925, 4
      %v7241 = vrot.slane %v6925, 5
      %v7242 = vrot.slane %v6925, 6
      %v7243 = vrot.slane %v6948, 1
      %v7244 = vrot.slane %v6948, 2
      %v7245 = vrot.slane %v6948, 3
      %v7246 = vrot.slane %v6948, 4
      %v7247 = vrot.slane %v6948, 5
      %v7248 = vrot.slane %v6948, 6
      %v7249 = vrot.slane %v6971, 1
      %v7250 = vrot.slane %v6971, 2
      %v7251 = vrot.slane %v6971, 3
      %v7252 = vrot.slane %v6971, 4
      %v7253 = vrot.slane %v6971, 5
      %v7254 = vrot.slane %v6971, 6
      %v7255 = vrot.slane %v6994, 1
      %v7256 = vrot.slane %v6994, 2
      %v7257 = vrot.slane %v6994, 3
      %v7258 = vrot.slane %v6994, 4
      %v7259 = vrot.slane %v6994, 5
      %v7260 = vrot.slane %v6994, 6
      %v7261 = vrot.slane %v7017, 1
      %v7262 = vrot.slane %v7017, 2
      %v7263 = vrot.slane %v7017, 3
      %v7264 = vrot.slane %v7017, 4
      %v7265 = vrot.slane %v7017, 5
      %v7266 = vrot.slane %v7017, 6
      %v7267 = vrot.slane %v7040, 1
      %v7268 = vrot.slane %v7040, 2
      %v7269 = vrot.slane %v7040, 3
      %v7270 = vrot.slane %v7040, 4
      %v7271 = vrot.slane %v7040, 5
      %v7272 = vrot.slane %v7040, 6
      %v7273 = vrot.slane %v7063, 1
      %v7274 = vrot.slane %v7063, 2
      %v7275 = vrot.slane %v7063, 3
      %v7276 = vrot.slane %v7063, 4
      %v7277 = vrot.slane %v7063, 5
      %v7278 = vrot.slane %v7063, 6
      %v7279 = vrot.slane %v7086, 1
      %v7280 = vrot.slane %v7086, 2
      %v7281 = vrot.slane %v7086, 3
      %v7282 = vrot.slane %v7086, 4
      %v7283 = vrot.slane %v7086, 5
      %v7284 = vrot.slane %v7086, 6
      %v7285 = vrot.slane %v7109, 1
      %v7286 = vrot.slane %v7109, 2
      %v7287 = vrot.slane %v7109, 3
      %v7288 = vrot.slane %v7109, 4
      %v7289 = vrot.slane %v7109, 5
      %v7290 = vrot.slane %v7109, 6
      %v7291 = vrot.slane %v7132, 1
      %v7292 = vrot.slane %v7132, 2
      %v7293 = vrot.slane %v7132, 3
      %v7294 = vrot.slane %v7132, 4
      %v7295 = vrot.slane %v7132, 5
      %v7296 = vrot.slane %v7132, 6
      %v7297 = vrot.slane %v7155, 1
      %v7298 = vrot.slane %v7155, 2
      %v7299 = vrot.slane %v7155, 3
      %v7300 = vrot.slane %v7155, 4
      %v7301 = vrot.slane %v7155, 5
      %v7302 = vrot.slane %v7155, 6
      %v7303 = vrot.slane %v7178, 1
      %v7304 = vrot.slane %v7178, 2
      %v7305 = vrot.slane %v7178, 3
      %v7306 = vrot.slane %v7178, 4
      %v7307 = vrot.slane %v7178, 5
      %v7308 = vrot.slane %v7178, 6
      %v7309 = vrot.slane %v7201, 1
      %v7310 = vrot.slane %v7201, 2
      %v7311 = vrot.slane %v7201, 3
      %v7312 = vrot.slane %v7201, 4
      %v7313 = vrot.slane %v7201, 5
      %v7314 = vrot.slane %v7201, 6
      %7315 = vst [vmem:[#allocation1] ss:$9 sm:$0xff] %v6856
      %s7316 = scalar_lea.vmem [#allocation1], 1
      %7317 = vst [vmem:[%s7316] ss:$9 sm:$0xff] %v7219
      %s7318 = scalar_lea.vmem [#allocation1], 2
      %7319 = vst [vmem:[%s7318] ss:$9 sm:$0xff] %v7220
      %s7320 = scalar_lea.vmem [#allocation1], 3
      %7321 = vst [vmem:[%s7320] ss:$9 sm:$0xff] %v7221
      %s7322 = scalar_lea.vmem [#allocation1], 4
      %7323 = vst [vmem:[%s7322] ss:$9 sm:$0xff] %v7222
      %s7324 = scalar_lea.vmem [#allocation1], 5
      %7325 = vst [vmem:[%s7324] ss:$9 sm:$0xff] %v7223
      %s7326 = scalar_lea.vmem [#allocation1], 6
      %7327 = vst [vmem:[%s7326] ss:$9 sm:$0xff] %v7224
      %s7328 = scalar_lea.vmem [#allocation1], 7
      %7329 = vst [vmem:[%s7328] ss:$9 sm:$0xff] %v6879
      %v7330 = vld [vmem:[#allocation1] sm:$0xff]
      %7331 = vst [vmem:[#allocation1] ss:$9 sm:$0xff] %v7225
      %7332 = vst [vmem:[%s7316] ss:$9 sm:$0xff] %v7226
      %7333 = vst [vmem:[%s7318] ss:$9 sm:$0xff] %v7227
      %7334 = vst [vmem:[%s7320] ss:$9 sm:$0xff] %v7228
      %7335 = vst [vmem:[%s7322] ss:$9 sm:$0xff] %v7229
      %7336 = vst [vmem:[%s7324] ss:$9 sm:$0xff] %v7230
      %7337 = vst [vmem:[%s7326] ss:$9 sm:$0xff] %v6902
      %7338 = vst [vmem:[%s7328] ss:$9 sm:$0xff] %v7231
      %v7339 = vld [vmem:[#allocation1] sm:$0xff]
      %7340 = vst [vmem:[#allocation1] ss:$9 sm:$0xff] %v7232
      %7341 = vst [vmem:[%s7316] ss:$9 sm:$0xff] %v7233
      %7342 = vst [vmem:[%s7318] ss:$9 sm:$0xff] %v7234
      %7343 = vst [vmem:[%s7320] ss:$9 sm:$0xff] %v7235
      %7344 = vst [vmem:[%s7322] ss:$9 sm:$0xff] %v7236
      %7345 = vst [vmem:[%s7324] ss:$9 sm:$0xff] %v6925
      %7346 = vst [vmem:[%s7326] ss:$9 sm:$0xff] %v7237
      %7347 = vst [vmem:[%s7328] ss:$9 sm:$0xff] %v7238
      %v7348 = vld [vmem:[#allocation1] sm:$0xff]
      %7349 = vst [vmem:[#allocation1] ss:$9 sm:$0xff] %v7239
      %7350 = vst [vmem:[%s7316] ss:$9 sm:$0xff] %v7240
      %7351 = vst [vmem:[%s7318] ss:$9 sm:$0xff] %v7241
      %7352 = vst [vmem:[%s7320] ss:$9 sm:$0xff] %v7242
      %7353 = vst [vmem:[%s7322] ss:$9 sm:$0xff] %v6948
      %7354 = vst [vmem:[%s7324] ss:$9 sm:$0xff] %v7243
      %7355 = vst [vmem:[%s7326] ss:$9 sm:$0xff] %v7244
      %7356 = vst [vmem:[%s7328] ss:$9 sm:$0xff] %v7245
      %v7357 = vld [vmem:[#allocation1] sm:$0xff]
      %7358 = vst [vmem:[#allocation1] ss:$9 sm:$0xff] %v7246
      %7359 = vst [vmem:[%s7316] ss:$9 sm:$0xff] %v7247
      %7360 = vst [vmem:[%s7318] ss:$9 sm:$0xff] %v7248
      %7361 = vst [vmem:[%s7320] ss:$9 sm:$0xff] %v6971
      %7362 = vst [vmem:[%s7322] ss:$9 sm:$0xff] %v7249
      %7363 = vst [vmem:[%s7324] ss:$9 sm:$0xff] %v7250
      %7364 = vst [vmem:[%s7326] ss:$9 sm:$0xff] %v7251
      %7365 = vst [vmem:[%s7328] ss:$9 sm:$0xff] %v7252
      %v7366 = vld [vmem:[#allocation1] sm:$0xff]
      %7367 = vst [vmem:[#allocation1] ss:$9 sm:$0xff] %v7253
      %7368 = vst [vmem:[%s7316] ss:$9 sm:$0xff] %v7254
      %7369 = vst [vmem:[%s7318] ss:$9 sm:$0xff] %v6994
      %7370 = vst [vmem:[%s7320] ss:$9 sm:$0xff] %v7255
      %7371 = vst [vmem:[%s7322] ss:$9 sm:$0xff] %v7256
      %7372 = vst [vmem:[%s7324] ss:$9 sm:$0xff] %v7257
      %7373 = vst [vmem:[%s7326] ss:$9 sm:$0xff] %v7258
      %7374 = vst [vmem:[%s7328] ss:$9 sm:$0xff] %v7259
      %v7375 = vld [vmem:[#allocation1] sm:$0xff]
      %7376 = vst [vmem:[#allocation1] ss:$9 sm:$0xff] %v7260
      %7377 = vst [vmem:[%s7316] ss:$9 sm:$0xff] %v7017
      %7378 = vst [vmem:[%s7318] ss:$9 sm:$0xff] %v7261
      %7379 = vst [vmem:[%s7320] ss:$9 sm:$0xff] %v7262
      %7380 = vst [vmem:[%s7322] ss:$9 sm:$0xff] %v7263
      %7381 = vst [vmem:[%s7324] ss:$9 sm:$0xff] %v7264
      %7382 = vst [vmem:[%s7326] ss:$9 sm:$0xff] %v7265
      %7383 = vst [vmem:[%s7328] ss:$9 sm:$0xff] %v7266
      %v7384 = vld [vmem:[#allocation1] sm:$0xff]
      %7385 = vst [vmem:[#allocation1] ss:$9 sm:$0xff] %v7040
      %7386 = vst [vmem:[%s7316] ss:$9 sm:$0xff] %v7267
      %7387 = vst [vmem:[%s7318] ss:$9 sm:$0xff] %v7268
      %7388 = vst [vmem:[%s7320] ss:$9 sm:$0xff] %v7269
      %7389 = vst [vmem:[%s7322] ss:$9 sm:$0xff] %v7270
      %7390 = vst [vmem:[%s7324] ss:$9 sm:$0xff] %v7271
      %7391 = vst [vmem:[%s7326] ss:$9 sm:$0xff] %v7272
      %7392 = vst [vmem:[%s7328] ss:$9 sm:$0xff] %v7063
      %v7393 = vld [vmem:[#allocation1] sm:$0xff]
      %7394 = vst [vmem:[#allocation1] ss:$9 sm:$0xff] %v7273
      %7395 = vst [vmem:[%s7316] ss:$9 sm:$0xff] %v7274
      %7396 = vst [vmem:[%s7318] ss:$9 sm:$0xff] %v7275
      %7397 = vst [vmem:[%s7320] ss:$9 sm:$0xff] %v7276
      %7398 = vst [vmem:[%s7322] ss:$9 sm:$0xff] %v7277
      %7399 = vst [vmem:[%s7324] ss:$9 sm:$0xff] %v7278
      %7400 = vst [vmem:[%s7326] ss:$9 sm:$0xff] %v7086
      %7401 = vst [vmem:[%s7328] ss:$9 sm:$0xff] %v7279
      %v7402 = vld [vmem:[#allocation1] sm:$0xff]
      %7403 = vst [vmem:[#allocation1] ss:$9 sm:$0xff] %v7280
      %7404 = vst [vmem:[%s7316] ss:$9 sm:$0xff] %v7281
      %7405 = vst [vmem:[%s7318] ss:$9 sm:$0xff] %v7282
      %7406 = vst [vmem:[%s7320] ss:$9 sm:$0xff] %v7283
      %7407 = vst [vmem:[%s7322] ss:$9 sm:$0xff] %v7284
      %7408 = vst [vmem:[%s7324] ss:$9 sm:$0xff] %v7109
      %7409 = vst [vmem:[%s7326] ss:$9 sm:$0xff] %v7285
      %7410 = vst [vmem:[%s7328] ss:$9 sm:$0xff] %v7286
      %v7411 = vld [vmem:[#allocation1] sm:$0xff]
      %7412 = vst [vmem:[#allocation1] ss:$9 sm:$0xff] %v7287
      %7413 = vst [vmem:[%s7316] ss:$9 sm:$0xff] %v7288
      %7414 = vst [vmem:[%s7318] ss:$9 sm:$0xff] %v7289
      %7415 = vst [vmem:[%s7320] ss:$9 sm:$0xff] %v7290
      %7416 = vst [vmem:[%s7322] ss:$9 sm:$0xff] %v7132
      %7417 = vst [vmem:[%s7324] ss:$9 sm:$0xff] %v7291
      %7418 = vst [vmem:[%s7326] ss:$9 sm:$0xff] %v7292
      %7419 = vst [vmem:[%s7328] ss:$9 sm:$0xff] %v7293
      %v7420 = vld [vmem:[#allocation1] sm:$0xff]
      %7421 = vst [vmem:[#allocation1] ss:$9 sm:$0xff] %v7294
      %7422 = vst [vmem:[%s7316] ss:$9 sm:$0xff] %v7295
      %7423 = vst [vmem:[%s7318] ss:$9 sm:$0xff] %v7296
      %7424 = vst [vmem:[%s7320] ss:$9 sm:$0xff] %v7155
      %7425 = vst [vmem:[%s7322] ss:$9 sm:$0xff] %v7297
      %7426 = vst [vmem:[%s7324] ss:$9 sm:$0xff] %v7298
      %7427 = vst [vmem:[%s7326] ss:$9 sm:$0xff] %v7299
      %7428 = vst [vmem:[%s7328] ss:$9 sm:$0xff] %v7300
      %v7429 = vld [vmem:[#allocation1] sm:$0xff]
      %7430 = vst [vmem:[#allocation1] ss:$9 sm:$0xff] %v7301
      %7431 = vst [vmem:[%s7316] ss:$9 sm:$0xff] %v7302
      %7432 = vst [vmem:[%s7318] ss:$9 sm:$0xff] %v7178
      %7433 = vst [vmem:[%s7320] ss:$9 sm:$0xff] %v7303
      %7434 = vst [vmem:[%s7322] ss:$9 sm:$0xff] %v7304
      %7435 = vst [vmem:[%s7324] ss:$9 sm:$0xff] %v7305
      %7436 = vst [vmem:[%s7326] ss:$9 sm:$0xff] %v7306
      %7437 = vst [vmem:[%s7328] ss:$9 sm:$0xff] %v7307
      %v7438 = vld [vmem:[#allocation1] sm:$0xff]
      %7439 = vst [vmem:[#allocation1] ss:$9 sm:$0xff] %v7308
      %7440 = vst [vmem:[%s7316] ss:$9 sm:$0xff] %v7201
      %7441 = vst [vmem:[%s7318] ss:$9 sm:$0xff] %v7309
      %7442 = vst [vmem:[%s7320] ss:$9 sm:$0xff] %v7310
      %7443 = vst [vmem:[%s7322] ss:$9 sm:$0xff] %v7311
      %7444 = vst [vmem:[%s7324] ss:$9 sm:$0xff] %v7312
      %7445 = vst [vmem:[%s7326] ss:$9 sm:$0xff] %v7313
      %7446 = vst [vmem:[%s7328] ss:$9 sm:$0xff] %v7314
      %v7447 = vld [vmem:[#allocation1] sm:$0xff]
      %7462 = vst.msk [vmem:[%s181 + $0x2a0] sm:$0xff] %vm3513, %v7330
      %7463 = vst.msk [vmem:[%s181 + $0x2a8] sm:$0xff] %vm3513, %v7339
      %7464 = vst.msk [vmem:[%s181 + $0x2b0] sm:$0xff] %vm3513, %v7348
      %7465 = vst.msk [vmem:[%s181 + $0x2b8] sm:$0xff] %vm3513, %v7357
      %7466 = vst.msk [vmem:[%s181 + $0x2c0] sm:$0xff] %vm3513, %v7366
      %7467 = vst.msk [vmem:[%s181 + $0x2c8] sm:$0xff] %vm3513, %v7375
      %7468 = vst.msk [vmem:[%s181 + $0x2d0] sm:$0xff] %vm3513, %v7384
      %7469 = vst.msk [vmem:[%s181 + $0x2d8] sm:$0xff] %vm3513, %v7393
      %7470 = vst.msk [vmem:[%s181 + $0x2e0] sm:$0xff] %vm3513, %v7402
      %7471 = vst.msk [vmem:[%s181 + $0x2e8] sm:$0xff] %vm3513, %v7411
      %7472 = vst.msk [vmem:[%s181 + $0x2f0] sm:$0xff] %vm3513, %v7420
      %7473 = vst.msk [vmem:[%s181 + $0x2f8] sm:$0xff] %vm3513, %v7429
      %7474 = vst.msk [vmem:[%s181 + $0x300] sm:$0xff] %vm3513, %v7438
      %7475 = vst.msk [vmem:[%s181 + $0x308] sm:$0xff] %vm3513, %v7447
      %s7476 = smul.u32 98, %s22
      %p7477 = scmp.lt.s32.totalorder %s7476, 195
      %s7478 = scalar_select %p7477, %s7476, 195
      %s7479 = smul.addr %s7478, 8
      %s7480 = scalar_lea.vmem %s3, %s7479
      // Predicated region
      $region29: #{tpu_custom_call.1} parent=27 // pred_check
        %p7481 = pneg %p94
      $region30: #{tpu_custom_call.1} parent=27 // pred_check_branch
        %7483 = sbr.rel (%p7481) target = $region32
      $region31: #{tpu_custom_call.1} parent=27 // pred_region
        %s7484 = smul.u32 98, %s22
      $region32: #{tpu_custom_call.1} parent=27 // pred_fallthru
        _
    $region28: #{tpu_custom_call.1} parent=5 // pred_fallthru
      _
    %p7485 = scmp.le.s32.totalorder 2, %s17
    // Predicated region
    $region33: #{tpu_custom_call.1} parent=5 // pred_check
      %p7486 = pneg %p7485
    $region34: #{tpu_custom_call.1} parent=5 // pred_check_branch
      %7488 = sbr.rel (%p7486) target = $region36
    $region35: #{tpu_custom_call.1} parent=5 // pred_region
      %s7489 = ssub.s32 %s17, 2
      // Predicated region
      $region37: #{tpu_custom_call.1} parent=35 // pred_check
        %p7490 = pneg %p100
      $region38: #{tpu_custom_call.1} parent=35 // pred_check_branch
        %7492 = sbr.rel (%p7490) target = $region40
      $region39: #{tpu_custom_call.1} parent=35 // pred_region
        %s7493 = smul.u32 98, %s23
        %p7494 = scmp.lt.s32.totalorder %s7493, 195
        %s7495 = scalar_select %p7494, %s7493, 195
        %s7496 = smul.addr %s7495, 8
        %s7497 = scalar_lea.vmem %s3, %s7496
      $region40: #{tpu_custom_call.1} parent=35 // pred_fallthru
        _
    $region36: #{tpu_custom_call.1} parent=5 // pred_fallthru
      _
  $region6: #{tpu_custom_call.1} parent=0 // loop_footer
    %s21 = sadd.s32 1, %s17
  $region7: #{tpu_custom_call.1} parent=0 // loop_footer_branch
    %16 = sbr.rel target = $region3
  $region8: #{tpu_custom_call.1} parent=0 // loop_exit
    _

</llo_original>
